<compile_context>
chip_gen: v5e
topology: v5e:2x2
jax: 0.10.0
libtpu: 0.0.40
codegen_flags: <defaults>
</compile_context>

<pallas_src>
import functools

import jax
import jax.numpy as jnp
import numpy as np
from jax import lax
from jax.experimental import pallas as pl
from jax.experimental.pallas import tpu as pltpu

BN_EPS = 1e-5


# ------------------------------- fused kernel ------------------------------- #

def _fused_residual_kernel(*refs, Wp, stride, m_rows, off_h, has_projection):
    """One grid step == one image.

    Flat layout: conv output position m = i*Wp + j (i < Ho, j < Wp; columns j >= Wo are
    junk) reads input flat row  tap_off + stride*m  for tap offset tap_off = dy*Wp + dx.
    """
    if has_projection:
        (x_ref, mask_ref, w1_ref, b1_ref, w2_ref, ws_ref, shift_ref,
         o_ref, xb_ref, h_ref, acc_ref) = refs
    else:
        (x_ref, mask_ref, w1_ref, b1_ref, w2_ref, shift_ref,
         o_ref, xb_ref, h_ref, acc_ref) = refs
        ws_ref = None

    def in_rows(off):
        # rows of the padded input image feeding the m_rows conv output positions
        if stride == 1:
            return pl.ds(off, m_rows)
        # TODO(synk): stride>1 path (sublane-strided loads) is implemented but only
        #             stride=1 is exercised/validated in __main__.
        return pl.ds(off, m_rows, stride)

    # Cast the padded input to bf16 once (MXU operand); keep the f32 copy for the
    # exact identity-shortcut add.
    xb_ref[...] = x_ref[...].astype(jnp.bfloat16)

    # ---- conv1 (3x3, stride, pad=1) + bias + ReLU;  Dropout(eval) == identity ----
    acc_ref[...] = jnp.dot(xb_ref[in_rows(0), :], w1_ref[0],
                           preferred_element_type=jnp.float32)
    for t in range(1, 9):
        dy, dx = divmod(t, 3)
        acc_ref[...] += jnp.dot(xb_ref[in_rows(dy * Wp + dx), :], w1_ref[t],
                                preferred_element_type=jnp.float32)
    h = jnp.maximum(acc_ref[...] + b1_ref[...], 0.0)

    # Hand conv1's output to conv2 entirely inside VMEM, re-establishing the zero
    # padding conv2 needs (junk columns masked to zero; interior stored at the
    # sublane-aligned offset off_h).
    h_ref[...] = jnp.zeros_like(h_ref)
    h_ref[pl.ds(off_h, m_rows), :] = (h * mask_ref[...]).astype(h_ref.dtype)

    # ---- conv2 (3x3, stride=1, pad=1); BN2 scale pre-folded into w2's columns ----
    base = off_h - (Wp + 1)
    acc_ref[...] = jnp.dot(h_ref[pl.ds(base, m_rows), :], w2_ref[0],
                           preferred_element_type=jnp.float32)
    for t in range(1, 9):
        dy, dx = divmod(t, 3)
        acc_ref[...] += jnp.dot(h_ref[pl.ds(base + dy * Wp + dx, m_rows), :],
                                w2_ref[t], preferred_element_type=jnp.float32)
    out = acc_ref[...] + shift_ref[...]          # combined BN2 (+ shortcut BN) shift

    # ---- shortcut ----
    if has_projection:
        # 1x1 strided conv with its BN scale folded into ws
        out = out + jnp.dot(xb_ref[in_rows(Wp + 1), :], ws_ref[...],
                            preferred_element_type=jnp.float32)
    else:
        # identity shortcut: exact f32 add (no identity-matrix matmul)
        out = out + x_ref[pl.ds(Wp + 1, m_rows), :]

    o_ref[...] = jnp.maximum(out, 0.0).astype(o_ref.dtype)


# ---------------------------- forward (wrapper) ------------------------------ #

def _round_up(v, m):
    return -(-v // m) * m


def residual_block_forward(x_nchw, params, stride=1):
    """Eval-mode ResidualBlock forward.  Input/output are NCHW float32."""
    # TODO(synk): training-mode dropout (RNG mask) and batch-statistics BatchNorm are
    #             not implemented; inference semantics are reproduced.
    x = jnp.transpose(x_nchw, (0, 2, 3, 1)).astype(jnp.float32)      # NHWC
    N, H, W, Cin = x.shape
    Cout = params["w1"].shape[0]
    has_projection = (stride != 1) or (Cin != Cout)

    Ho = (H - 1) // stride + 1
    Wo = (W - 1) // stride + 1
    Hp, Wp = H + 2, W + 2          # zero-padded image; Wp is the flat row stride
    m_rows = Ho * Wp               # conv output rows per image (cols j >= Wo are junk)

    # flattened zero-padded image, with enough trailing zero rows for every tap window
    x_pad = jnp.pad(x, ((0, 0), (1, 1), (1, 1), (0, 0)))
    need = 2 * Wp + 2 + stride * (m_rows - 1) + 1
    L1 = _round_up(max(Hp * Wp, need), 16)
    x_flat = jnp.pad(x_pad.reshape(N, Hp * Wp, Cin),
                     ((0, 0), (0, L1 - Hp * Wp), (0, 0)))

    off_h = _round_up(Wp + 1, 16)                  # aligned start of h's interior rows
    L2 = _round_up(off_h + Wp + 1 + m_rows, 16)    # rows of the padded conv1-out scratch

    # valid-column mask (j < Wo) for the conv1 -> conv2 handoff
    mask = ((jnp.arange(m_rows, dtype=jnp.int32) % Wp) < Wo)
    mask = mask.astype(jnp.float32).reshape(m_rows, 1)

    # weights: tap-major (dy,dx), channel-minor; BN folded in; bf16 operands for the MXU
    w1 = jnp.transpose(params["w1"], (2, 3, 1, 0)).reshape(9, Cin, Cout)
    w1 = w1.astype(jnp.bfloat16)
    b1 = params["b1"].reshape(1, Cout).astype(jnp.float32)

    s2 = params["g2"] / jnp.sqrt(params["v2"] + BN_EPS)
    shift = params["be2"] - params["m2"] * s2
    w2 = jnp.transpose(params["w2"], (2, 3, 1, 0)).reshape(9, Cout, Cout)
    w2 = (w2 * s2[None, None, :]).astype(jnp.bfloat16)

    inputs = [x_flat, mask, w1, b1, w2]
    in_specs = [
        pl.BlockSpec((None, L1, Cin), lambda n: (n, 0, 0)),
        pl.BlockSpec((m_rows, 1), lambda n: (0, 0)),
        pl.BlockSpec((9, Cin, Cout), lambda n: (0, 0, 0)),
        pl.BlockSpec((1, Cout), lambda n: (0, 0)),
        pl.BlockSpec((9, Cout, Cout), lambda n: (0, 0, 0)),
    ]
    if has_projection:
        ss = params["gs"] / jnp.sqrt(params["vs"] + BN_EPS)
        ws = (params["ws"][:, :, 0, 0].T * ss[None, :]).astype(jnp.bfloat16)  # (Cin,Cout)
        shift = shift + (params["bes"] - params["ms"] * ss)
        inputs.append(ws)
        in_specs.append(pl.BlockSpec((Cin, Cout), lambda n: (0, 0)))
    shift = shift.reshape(1, Cout).astype(jnp.float32)
    inputs.append(shift)
    in_specs.append(pl.BlockSpec((1, Cout), lambda n: (0, 0)))

    kernel = functools.partial(
        _fused_residual_kernel, Wp=Wp, stride=stride, m_rows=m_rows,
        off_h=off_h, has_projection=has_projection)

    out_flat = pl.pallas_call(
        kernel,
        out_shape=jax.ShapeDtypeStruct((N, m_rows, Cout), jnp.float32),
        grid_spec=pltpu.PrefetchScalarGridSpec(
            num_scalar_prefetch=0,
            grid=(N,),
            in_specs=in_specs,
            out_specs=pl.BlockSpec((None, m_rows, Cout), lambda n: (n, 0, 0)),
            scratch_shapes=[
                pltpu.VMEM((L1, Cin), jnp.bfloat16),      # bf16 copy of padded input
                pltpu.VMEM((L2, Cout), jnp.bfloat16),     # zero-padded conv1 output
                pltpu.VMEM((m_rows, Cout), jnp.float32),  # shared f32 accumulator
            ]),
        compiler_params=pltpu.CompilerParams(
            dimension_semantics=("parallel",),
            vmem_limit_bytes=32 * 1024 * 1024),
    )(*inputs)

    out = out_flat.reshape(N, Ho, Wp, Cout)[:, :, :Wo, :]
    return jnp.transpose(out, (0, 3, 1, 2))                          # back to NCHW


# --------------------------- pure-JAX reference ------------------------------ #

def _ref_forward(x, p, stride):
    hi = lax.Precision.HIGHEST

    def conv(inp, w, strides, pad):
        dn = lax.conv_dimension_numbers(inp.shape, w.shape, ("NCHW", "OIHW", "NCHW"))
        return lax.conv_general_dilated(inp, w, strides, pad,
                                        dimension_numbers=dn, precision=hi)

    out = conv(x, p["w1"], (stride, stride), ((1, 1), (1, 1))) + p["b1"][None, :, None, None]
    out = jnp.maximum(out, 0.0)
    out = conv(out, p["w2"], (1, 1), ((1, 1), (1, 1)))
    s2 = p["g2"] / jnp.sqrt(p["v2"] + BN_EPS)
    out = out * s2[None, :, None, None] + (p["be2"] - p["m2"] * s2)[None, :, None, None]
    Cin, Cout = x.shape[1], p["w1"].shape[0]
    if stride != 1 or Cin != Cout:
        sc = conv(x, p["ws"], (stride, stride), ((0, 0), (0, 0)))
        ss = p["gs"] / jnp.sqrt(p["vs"] + BN_EPS)
        sc = sc * ss[None, :, None, None] + (p["bes"] - p["ms"] * ss)[None, :, None, None]
    else:
        sc = x
    return jnp.maximum(out + sc, 0.0)


# ----------------------------------- main ------------------------------------ #

def _make_params(key, cin, cout):
    ks = jax.random.split(key, 12)
    f32 = jnp.float32
    return {
        "w1": 0.1 * jax.random.normal(ks[0], (cout, cin, 3, 3), f32),
        "b1": 0.1 * jax.random.normal(ks[1], (cout,), f32),
        "w2": 0.1 * jax.random.normal(ks[2], (cout, cout, 3, 3), f32),
        "g2": 1.0 + 0.1 * jax.random.normal(ks[3], (cout,), f32),
        "be2": 0.1 * jax.random.normal(ks[4], (cout,), f32),
        "m2": 0.1 * jax.random.normal(ks[5], (cout,), f32),
        "v2": 0.5 + jnp.abs(jax.random.normal(ks[6], (cout,), f32)),
        "ws": 0.1 * jax.random.normal(ks[7], (cout, cin, 1, 1), f32),
        "gs": 1.0 + 0.1 * jax.random.normal(ks[8], (cout,), f32),
        "bes": 0.1 * jax.random.normal(ks[9], (cout,), f32),
        "ms": 0.1 * jax.random.normal(ks[10], (cout,), f32),
        "vs": 0.5 + jnp.abs(jax.random.normal(ks[11], (cout,), f32)),
    }


if __name__ == "__main__":
    key = jax.random.PRNGKey(0)
    k_x1, k_p1, k_x2, k_p2 = jax.random.split(key, 4)
    N, H, W = 2, 16, 16

    # Tolerances: bf16 MXU operands with f32 accumulation vs an f32 HIGHEST-precision
    # reference -> allow ~1% relative error.
    RTOL, ATOL = 2e-2, 2e-2

    # Case 1: projection shortcut (Cin != Cout), stride=1.
    x1 = jax.random.normal(k_x1, (N, 4, H, W), jnp.float32)
    p1 = _make_params(k_p1, 4, 8)
    out1 = jax.block_until_ready(residual_block_forward(x1, p1, stride=1))
    ref1 = jax.block_until_ready(_ref_forward(x1, p1, 1))
    assert out1.shape == ref1.shape, (out1.shape, ref1.shape)
    np.testing.assert_allclose(np.asarray(out1), np.asarray(ref1), rtol=RTOL, atol=ATOL)

    # Case 2: identity shortcut (Cin == Cout), stride=1 — exercises the no-matmul path.
    x2 = jax.random.normal(k_x2, (N, 8, H, W), jnp.float32)
    p2 = _make_params(k_p2, 8, 8)
    out2 = jax.block_until_ready(residual_block_forward(x2, p2, stride=1))
    ref2 = jax.block_until_ready(_ref_forward(x2, p2, 1))
    assert out2.shape == ref2.shape, (out2.shape, ref2.shape)
    np.testing.assert_allclose(np.asarray(out2), np.asarray(ref2), rtol=RTOL, atol=ATOL)

    print("KERNEL_OK")
</pallas_src>

<mosaic_0001>
module attributes {stable_mosaic.version = 11 : i64} {
  func.func @_fused_residual_kernel(%arg0: i32, %arg1: memref<1x336x4xf32, #tpu.memory_space<vmem>>, %arg2: memref<288x1xf32, #tpu.memory_space<vmem>>, %arg3: memref<9x4x8xbf16, #tpu.memory_space<vmem>>, %arg4: memref<1x8xf32, #tpu.memory_space<vmem>>, %arg5: memref<9x8x8xbf16, #tpu.memory_space<vmem>>, %arg6: memref<4x8xbf16, #tpu.memory_space<vmem>>, %arg7: memref<1x8xf32, #tpu.memory_space<vmem>>, %arg8: memref<1x288x8xf32, #tpu.memory_space<vmem>>, %arg9: memref<336x4xbf16, #tpu.memory_space<vmem>>, %arg10: memref<352x8xbf16, #tpu.memory_space<vmem>>, %arg11: memref<288x8xf32, #tpu.memory_space<vmem>>) attributes {dimension_semantics = [#tpu.dimension_semantics<parallel>], iteration_bounds = array<i64: 2>, scalar_prefetch = 0 : i64, scratch_operands = 3 : i64, tpu.core_type = #tpu.core_type<tc>, window_params = [{transform_indices = @transform_0, window_bounds = array<i64: 1, 336, 4>}, {pipeline_mode = #tpu.pipeline_mode<synchronous>, transform_indices = @transform_1, window_bounds = array<i64: 288, 1>}, {pipeline_mode = #tpu.pipeline_mode<synchronous>, transform_indices = @transform_2, window_bounds = array<i64: 9, 4, 8>}, {pipeline_mode = #tpu.pipeline_mode<synchronous>, transform_indices = @transform_3, window_bounds = array<i64: 1, 8>}, {pipeline_mode = #tpu.pipeline_mode<synchronous>, transform_indices = @transform_4, window_bounds = array<i64: 9, 8, 8>}, {pipeline_mode = #tpu.pipeline_mode<synchronous>, transform_indices = @transform_5, window_bounds = array<i64: 4, 8>}, {pipeline_mode = #tpu.pipeline_mode<synchronous>, transform_indices = @transform_6, window_bounds = array<i64: 1, 8>}, {transform_indices = @transform_7, window_bounds = array<i64: 1, 288, 8>}]} {
    %c0 = arith.constant 0 : index
    %c0_0 = arith.constant 0 : index
    %c0_1 = arith.constant 0 : index
    %0 = vector.load %arg1[%c0, %c0_0, %c0_1] : memref<1x336x4xf32, #tpu.memory_space<vmem>>, vector<1x336x4xf32>
    %1 = vector.shape_cast %0 : vector<1x336x4xf32> to vector<336x4xf32>
    %2 = arith.truncf %1 : vector<336x4xf32> to vector<336x4xbf16>
    %c0_2 = arith.constant 0 : index
    %c0_3 = arith.constant 0 : index
    %3 = vector.load %arg9[%c0_2, %c0_3] : memref<336x4xbf16, #tpu.memory_space<vmem>>, vector<336x4xbf16>
    tpu.vector_store %arg9[%c0_2, %c0_3], %2 {strides = array<i32>} : memref<336x4xbf16, #tpu.memory_space<vmem>>, vector<336x4xbf16>,
    %c0_4 = arith.constant 0 : index
    %c0_5 = arith.constant 0 : index
    %4 = vector.load %arg9[%c0_4, %c0_5] : memref<336x4xbf16, #tpu.memory_space<vmem>>, vector<288x4xbf16>
    %c0_6 = arith.constant 0 : index
    %c0_7 = arith.constant 0 : index
    %c0_8 = arith.constant 0 : index
    %5 = vector.load %arg3[%c0_6, %c0_7, %c0_8] : memref<9x4x8xbf16, #tpu.memory_space<vmem>>, vector<1x4x8xbf16>
    %6 = vector.shape_cast %5 : vector<1x4x8xbf16> to vector<4x8xbf16>
    %cst = arith.constant dense<0.000000e+00> : vector<288x8xf32>
    %7 = tpu.matmul %4, %6, %cst {dimension_numbers = #tpu.dot_dimension_numbers<[1], [0], [0], [1], [0, 0, 1, 1], [], []>} : vector<288x4xbf16>, vector<4x8xbf16>, vector<288x8xf32> -> vector<288x8xf32>
    %c0_9 = arith.constant 0 : index
    %c0_10 = arith.constant 0 : index
    %8 = vector.load %arg11[%c0_9, %c0_10] : memref<288x8xf32, #tpu.memory_space<vmem>>, vector<288x8xf32>
    tpu.vector_store %arg11[%c0_9, %c0_10], %7 {strides = array<i32>} : memref<288x8xf32, #tpu.memory_space<vmem>>, vector<288x8xf32>,
    %c0_11 = arith.constant 0 : index
    %c0_12 = arith.constant 0 : index
    %9 = vector.load %arg11[%c0_11, %c0_12] : memref<288x8xf32, #tpu.memory_space<vmem>>, vector<288x8xf32>
    %c1 = arith.constant 1 : index
    %c0_13 = arith.constant 0 : index
    %10 = vector.load %arg9[%c1, %c0_13] : memref<336x4xbf16, #tpu.memory_space<vmem>>, vector<288x4xbf16>
    %c1_14 = arith.constant 1 : index
    %c0_15 = arith.constant 0 : index
    %c0_16 = arith.constant 0 : index
    %11 = vector.load %arg3[%c1_14, %c0_15, %c0_16] : memref<9x4x8xbf16, #tpu.memory_space<vmem>>, vector<1x4x8xbf16>
    %12 = vector.shape_cast %11 : vector<1x4x8xbf16> to vector<4x8xbf16>
    %cst_17 = arith.constant dense<0.000000e+00> : vector<288x8xf32>
    %13 = tpu.matmul %10, %12, %cst_17 {dimension_numbers = #tpu.dot_dimension_numbers<[1], [0], [0], [1], [0, 0, 1, 1], [], []>} : vector<288x4xbf16>, vector<4x8xbf16>, vector<288x8xf32> -> vector<288x8xf32>
    %14 = arith.addf %9, %13 : vector<288x8xf32>
    %c0_18 = arith.constant 0 : index
    %c0_19 = arith.constant 0 : index
    %15 = vector.load %arg11[%c0_18, %c0_19] : memref<288x8xf32, #tpu.memory_space<vmem>>, vector<288x8xf32>
    tpu.vector_store %arg11[%c0_18, %c0_19], %14 {strides = array<i32>} : memref<288x8xf32, #tpu.memory_space<vmem>>, vector<288x8xf32>,
    %c0_20 = arith.constant 0 : index
    %c0_21 = arith.constant 0 : index
    %16 = vector.load %arg11[%c0_20, %c0_21] : memref<288x8xf32, #tpu.memory_space<vmem>>, vector<288x8xf32>
    %c2 = arith.constant 2 : index
    %c0_22 = arith.constant 0 : index
    %17 = vector.load %arg9[%c2, %c0_22] : memref<336x4xbf16, #tpu.memory_space<vmem>>, vector<288x4xbf16>
    %c2_23 = arith.constant 2 : index
    %c0_24 = arith.constant 0 : index
    %c0_25 = arith.constant 0 : index
    %18 = vector.load %arg3[%c2_23, %c0_24, %c0_25] : memref<9x4x8xbf16, #tpu.memory_space<vmem>>, vector<1x4x8xbf16>
    %19 = vector.shape_cast %18 : vector<1x4x8xbf16> to vector<4x8xbf16>
    %cst_26 = arith.constant dense<0.000000e+00> : vector<288x8xf32>
    %20 = tpu.matmul %17, %19, %cst_26 {dimension_numbers = #tpu.dot_dimension_numbers<[1], [0], [0], [1], [0, 0, 1, 1], [], []>} : vector<288x4xbf16>, vector<4x8xbf16>, vector<288x8xf32> -> vector<288x8xf32>
    %21 = arith.addf %16, %20 : vector<288x8xf32>
    %c0_27 = arith.constant 0 : index
    %c0_28 = arith.constant 0 : index
    %22 = vector.load %arg11[%c0_27, %c0_28] : memref<288x8xf32, #tpu.memory_space<vmem>>, vector<288x8xf32>
    tpu.vector_store %arg11[%c0_27, %c0_28], %21 {strides = array<i32>} : memref<288x8xf32, #tpu.memory_space<vmem>>, vector<288x8xf32>,
    %c0_29 = arith.constant 0 : index
    %c0_30 = arith.constant 0 : index
    %23 = vector.load %arg11[%c0_29, %c0_30] : memref<288x8xf32, #tpu.memory_space<vmem>>, vector<288x8xf32>
    %c18 = arith.constant 18 : index
    %c0_31 = arith.constant 0 : index
    %24 = vector.load %arg9[%c18, %c0_31] : memref<336x4xbf16, #tpu.memory_space<vmem>>, vector<288x4xbf16>
    %c3 = arith.constant 3 : index
    %c0_32 = arith.constant 0 : index
    %c0_33 = arith.constant 0 : index
    %25 = vector.load %arg3[%c3, %c0_32, %c0_33] : memref<9x4x8xbf16, #tpu.memory_space<vmem>>, vector<1x4x8xbf16>
    %26 = vector.shape_cast %25 : vector<1x4x8xbf16> to vector<4x8xbf16>
    %cst_34 = arith.constant dense<0.000000e+00> : vector<288x8xf32>
    %27 = tpu.matmul %24, %26, %cst_34 {dimension_numbers = #tpu.dot_dimension_numbers<[1], [0], [0], [1], [0, 0, 1, 1], [], []>} : vector<288x4xbf16>, vector<4x8xbf16>, vector<288x8xf32> -> vector<288x8xf32>
    %28 = arith.addf %23, %27 : vector<288x8xf32>
    %c0_35 = arith.constant 0 : index
    %c0_36 = arith.constant 0 : index
    %29 = vector.load %arg11[%c0_35, %c0_36] : memref<288x8xf32, #tpu.memory_space<vmem>>, vector<288x8xf32>
    tpu.vector_store %arg11[%c0_35, %c0_36], %28 {strides = array<i32>} : memref<288x8xf32, #tpu.memory_space<vmem>>, vector<288x8xf32>,
    %c0_37 = arith.constant 0 : index
    %c0_38 = arith.constant 0 : index
    %30 = vector.load %arg11[%c0_37, %c0_38] : memref<288x8xf32, #tpu.memory_space<vmem>>, vector<288x8xf32>
    %c19 = arith.constant 19 : index
    %c0_39 = arith.constant 0 : index
    %31 = vector.load %arg9[%c19, %c0_39] : memref<336x4xbf16, #tpu.memory_space<vmem>>, vector<288x4xbf16>
    %c4 = arith.constant 4 : index
    %c0_40 = arith.constant 0 : index
    %c0_41 = arith.constant 0 : index
    %32 = vector.load %arg3[%c4, %c0_40, %c0_41] : memref<9x4x8xbf16, #tpu.memory_space<vmem>>, vector<1x4x8xbf16>
    %33 = vector.shape_cast %32 : vector<1x4x8xbf16> to vector<4x8xbf16>
    %cst_42 = arith.constant dense<0.000000e+00> : vector<288x8xf32>
    %34 = tpu.matmul %31, %33, %cst_42 {dimension_numbers = #tpu.dot_dimension_numbers<[1], [0], [0], [1], [0, 0, 1, 1], [], []>} : vector<288x4xbf16>, vector<4x8xbf16>, vector<288x8xf32> -> vector<288x8xf32>
    %35 = arith.addf %30, %34 : vector<288x8xf32>
    %c0_43 = arith.constant 0 : index
    %c0_44 = arith.constant 0 : index
    %36 = vector.load %arg11[%c0_43, %c0_44] : memref<288x8xf32, #tpu.memory_space<vmem>>, vector<288x8xf32>
    tpu.vector_store %arg11[%c0_43, %c0_44], %35 {strides = array<i32>} : memref<288x8xf32, #tpu.memory_space<vmem>>, vector<288x8xf32>,
    %c0_45 = arith.constant 0 : index
    %c0_46 = arith.constant 0 : index
    %37 = vector.load %arg11[%c0_45, %c0_46] : memref<288x8xf32, #tpu.memory_space<vmem>>, vector<288x8xf32>
    %c20 = arith.constant 20 : index
    %c0_47 = arith.constant 0 : index
    %38 = vector.load %arg9[%c20, %c0_47] : memref<336x4xbf16, #tpu.memory_space<vmem>>, vector<288x4xbf16>
    %c5 = arith.constant 5 : index
    %c0_48 = arith.constant 0 : index
    %c0_49 = arith.constant 0 : index
    %39 = vector.load %arg3[%c5, %c0_48, %c0_49] : memref<9x4x8xbf16, #tpu.memory_space<vmem>>, vector<1x4x8xbf16>
    %40 = vector.shape_cast %39 : vector<1x4x8xbf16> to vector<4x8xbf16>
    %cst_50 = arith.constant dense<0.000000e+00> : vector<288x8xf32>
    %41 = tpu.matmul %38, %40, %cst_50 {dimension_numbers = #tpu.dot_dimension_numbers<[1], [0], [0], [1], [0, 0, 1, 1], [], []>} : vector<288x4xbf16>, vector<4x8xbf16>, vector<288x8xf32> -> vector<288x8xf32>
    %42 = arith.addf %37, %41 : vector<288x8xf32>
    %c0_51 = arith.constant 0 : index
    %c0_52 = arith.constant 0 : index
    %43 = vector.load %arg11[%c0_51, %c0_52] : memref<288x8xf32, #tpu.memory_space<vmem>>, vector<288x8xf32>
    tpu.vector_store %arg11[%c0_51, %c0_52], %42 {strides = array<i32>} : memref<288x8xf32, #tpu.memory_space<vmem>>, vector<288x8xf32>,
    %c0_53 = arith.constant 0 : index
    %c0_54 = arith.constant 0 : index
    %44 = vector.load %arg11[%c0_53, %c0_54] : memref<288x8xf32, #tpu.memory_space<vmem>>, vector<288x8xf32>
    %c36 = arith.constant 36 : index
    %c0_55 = arith.constant 0 : index
    %45 = vector.load %arg9[%c36, %c0_55] : memref<336x4xbf16, #tpu.memory_space<vmem>>, vector<288x4xbf16>
    %c6 = arith.constant 6 : index
    %c0_56 = arith.constant 0 : index
    %c0_57 = arith.constant 0 : index
    %46 = vector.load %arg3[%c6, %c0_56, %c0_57] : memref<9x4x8xbf16, #tpu.memory_space<vmem>>, vector<1x4x8xbf16>
    %47 = vector.shape_cast %46 : vector<1x4x8xbf16> to vector<4x8xbf16>
    %cst_58 = arith.constant dense<0.000000e+00> : vector<288x8xf32>
    %48 = tpu.matmul %45, %47, %cst_58 {dimension_numbers = #tpu.dot_dimension_numbers<[1], [0], [0], [1], [0, 0, 1, 1], [], []>} : vector<288x4xbf16>, vector<4x8xbf16>, vector<288x8xf32> -> vector<288x8xf32>
    %49 = arith.addf %44, %48 : vector<288x8xf32>
    %c0_59 = arith.constant 0 : index
    %c0_60 = arith.constant 0 : index
    %50 = vector.load %arg11[%c0_59, %c0_60] : memref<288x8xf32, #tpu.memory_space<vmem>>, vector<288x8xf32>
    tpu.vector_store %arg11[%c0_59, %c0_60], %49 {strides = array<i32>} : memref<288x8xf32, #tpu.memory_space<vmem>>, vector<288x8xf32>,
    %c0_61 = arith.constant 0 : index
    %c0_62 = arith.constant 0 : index
    %51 = vector.load %arg11[%c0_61, %c0_62] : memref<288x8xf32, #tpu.memory_space<vmem>>, vector<288x8xf32>
    %c37 = arith.constant 37 : index
    %c0_63 = arith.constant 0 : index
    %52 = vector.load %arg9[%c37, %c0_63] : memref<336x4xbf16, #tpu.memory_space<vmem>>, vector<288x4xbf16>
    %c7 = arith.constant 7 : index
    %c0_64 = arith.constant 0 : index
    %c0_65 = arith.constant 0 : index
    %53 = vector.load %arg3[%c7, %c0_64, %c0_65] : memref<9x4x8xbf16, #tpu.memory_space<vmem>>, vector<1x4x8xbf16>
    %54 = vector.shape_cast %53 : vector<1x4x8xbf16> to vector<4x8xbf16>
    %cst_66 = arith.constant dense<0.000000e+00> : vector<288x8xf32>
    %55 = tpu.matmul %52, %54, %cst_66 {dimension_numbers = #tpu.dot_dimension_numbers<[1], [0], [0], [1], [0, 0, 1, 1], [], []>} : vector<288x4xbf16>, vector<4x8xbf16>, vector<288x8xf32> -> vector<288x8xf32>
    %56 = arith.addf %51, %55 : vector<288x8xf32>
    %c0_67 = arith.constant 0 : index
    %c0_68 = arith.constant 0 : index
    %57 = vector.load %arg11[%c0_67, %c0_68] : memref<288x8xf32, #tpu.memory_space<vmem>>, vector<288x8xf32>
    tpu.vector_store %arg11[%c0_67, %c0_68], %56 {strides = array<i32>} : memref<288x8xf32, #tpu.memory_space<vmem>>, vector<288x8xf32>,
    %c0_69 = arith.constant 0 : index
    %c0_70 = arith.constant 0 : index
    %58 = vector.load %arg11[%c0_69, %c0_70] : memref<288x8xf32, #tpu.memory_space<vmem>>, vector<288x8xf32>
    %c38 = arith.constant 38 : index
    %c0_71 = arith.constant 0 : index
    %59 = vector.load %arg9[%c38, %c0_71] : memref<336x4xbf16, #tpu.memory_space<vmem>>, vector<288x4xbf16>
    %c8 = arith.constant 8 : index
    %c0_72 = arith.constant 0 : index
    %c0_73 = arith.constant 0 : index
    %60 = vector.load %arg3[%c8, %c0_72, %c0_73] : memref<9x4x8xbf16, #tpu.memory_space<vmem>>, vector<1x4x8xbf16>
    %61 = vector.shape_cast %60 : vector<1x4x8xbf16> to vector<4x8xbf16>
    %cst_74 = arith.constant dense<0.000000e+00> : vector<288x8xf32>
    %62 = tpu.matmul %59, %61, %cst_74 {dimension_numbers = #tpu.dot_dimension_numbers<[1], [0], [0], [1], [0, 0, 1, 1], [], []>} : vector<288x4xbf16>, vector<4x8xbf16>, vector<288x8xf32> -> vector<288x8xf32>
    %63 = arith.addf %58, %62 : vector<288x8xf32>
    %c0_75 = arith.constant 0 : index
    %c0_76 = arith.constant 0 : index
    %64 = vector.load %arg11[%c0_75, %c0_76] : memref<288x8xf32, #tpu.memory_space<vmem>>, vector<288x8xf32>
    tpu.vector_store %arg11[%c0_75, %c0_76], %63 {strides = array<i32>} : memref<288x8xf32, #tpu.memory_space<vmem>>, vector<288x8xf32>,
    %c0_77 = arith.constant 0 : index
    %c0_78 = arith.constant 0 : index
    %65 = vector.load %arg11[%c0_77, %c0_78] : memref<288x8xf32, #tpu.memory_space<vmem>>, vector<288x8xf32>
    %c0_79 = arith.constant 0 : index
    %c0_80 = arith.constant 0 : index
    %66 = vector.load %arg4[%c0_79, %c0_80] : memref<1x8xf32, #tpu.memory_space<vmem>>, vector<1x8xf32>
    %67 = vector.broadcast %66 : vector<1x8xf32> to vector<288x8xf32>
    %68 = arith.addf %65, %67 : vector<288x8xf32>
    %cst_81 = arith.constant 0.000000e+00 : f32
    %69 = vector.broadcast %cst_81 : f32 to vector<288x8xf32>
    %70 = arith.maximumf %68, %69 : vector<288x8xf32>
    %cst_82 = arith.constant 0.000000e+00 : bf16
    %71 = vector.broadcast %cst_82 : bf16 to vector<352x8xbf16>
    %c0_83 = arith.constant 0 : index
    %c0_84 = arith.constant 0 : index
    %72 = vector.load %arg10[%c0_83, %c0_84] : memref<352x8xbf16, #tpu.memory_space<vmem>>, vector<352x8xbf16>
    tpu.vector_store %arg10[%c0_83, %c0_84], %71 {strides = array<i32>} : memref<352x8xbf16, #tpu.memory_space<vmem>>, vector<352x8xbf16>,
    %c0_85 = arith.constant 0 : index
    %c0_86 = arith.constant 0 : index
    %73 = vector.load %arg2[%c0_85, %c0_86] : memref<288x1xf32, #tpu.memory_space<vmem>>, vector<288x1xf32>
    %74 = vector.broadcast %73 : vector<288x1xf32> to vector<288x8xf32>
    %75 = arith.mulf %70, %74 : vector<288x8xf32>
    %76 = arith.truncf %75 : vector<288x8xf32> to vector<288x8xbf16>
    %c32 = arith.constant 32 : index
    %c0_87 = arith.constant 0 : index
    %77 = vector.load %arg10[%c32, %c0_87] : memref<352x8xbf16, #tpu.memory_space<vmem>>, vector<288x8xbf16>
    tpu.vector_store %arg10[%c32, %c0_87], %76 {strides = array<i32>} : memref<352x8xbf16, #tpu.memory_space<vmem>>, vector<288x8xbf16>,
    %c13 = arith.constant 13 : index
    %c0_88 = arith.constant 0 : index
    %78 = vector.load %arg10[%c13, %c0_88] : memref<352x8xbf16, #tpu.memory_space<vmem>>, vector<288x8xbf16>
    %c0_89 = arith.constant 0 : index
    %c0_90 = arith.constant 0 : index
    %c0_91 = arith.constant 0 : index
    %79 = vector.load %arg5[%c0_89, %c0_90, %c0_91] : memref<9x8x8xbf16, #tpu.memory_space<vmem>>, vector<1x8x8xbf16>
    %80 = vector.shape_cast %79 : vector<1x8x8xbf16> to vector<8x8xbf16>
    %cst_92 = arith.constant dense<0.000000e+00> : vector<288x8xf32>
    %81 = tpu.matmul %78, %80, %cst_92 {dimension_numbers = #tpu.dot_dimension_numbers<[1], [0], [0], [1], [0, 0, 1, 1], [], []>} : vector<288x8xbf16>, vector<8x8xbf16>, vector<288x8xf32> -> vector<288x8xf32>
    %c0_93 = arith.constant 0 : index
    %c0_94 = arith.constant 0 : index
    %82 = vector.load %arg11[%c0_93, %c0_94] : memref<288x8xf32, #tpu.memory_space<vmem>>, vector<288x8xf32>
    tpu.vector_store %arg11[%c0_93, %c0_94], %81 {strides = array<i32>} : memref<288x8xf32, #tpu.memory_space<vmem>>, vector<288x8xf32>,
    %c0_95 = arith.constant 0 : index
    %c0_96 = arith.constant 0 : index
    %83 = vector.load %arg11[%c0_95, %c0_96] : memref<288x8xf32, #tpu.memory_space<vmem>>, vector<288x8xf32>
    %c14 = arith.constant 14 : index
    %c0_97 = arith.constant 0 : index
    %84 = vector.load %arg10[%c14, %c0_97] : memref<352x8xbf16, #tpu.memory_space<vmem>>, vector<288x8xbf16>
    %c1_98 = arith.constant 1 : index
    %c0_99 = arith.constant 0 : index
    %c0_100 = arith.constant 0 : index
    %85 = vector.load %arg5[%c1_98, %c0_99, %c0_100] : memref<9x8x8xbf16, #tpu.memory_space<vmem>>, vector<1x8x8xbf16>
    %86 = vector.shape_cast %85 : vector<1x8x8xbf16> to vector<8x8xbf16>
    %cst_101 = arith.constant dense<0.000000e+00> : vector<288x8xf32>
    %87 = tpu.matmul %84, %86, %cst_101 {dimension_numbers = #tpu.dot_dimension_numbers<[1], [0], [0], [1], [0, 0, 1, 1], [], []>} : vector<288x8xbf16>, vector<8x8xbf16>, vector<288x8xf32> -> vector<288x8xf32>
    %88 = arith.addf %83, %87 : vector<288x8xf32>
    %c0_102 = arith.constant 0 : index
    %c0_103 = arith.constant 0 : index
    %89 = vector.load %arg11[%c0_102, %c0_103] : memref<288x8xf32, #tpu.memory_space<vmem>>, vector<288x8xf32>
    tpu.vector_store %arg11[%c0_102, %c0_103], %88 {strides = array<i32>} : memref<288x8xf32, #tpu.memory_space<vmem>>, vector<288x8xf32>,
    %c0_104 = arith.constant 0 : index
    %c0_105 = arith.constant 0 : index
    %90 = vector.load %arg11[%c0_104, %c0_105] : memref<288x8xf32, #tpu.memory_space<vmem>>, vector<288x8xf32>
    %c15 = arith.constant 15 : index
    %c0_106 = arith.constant 0 : index
    %91 = vector.load %arg10[%c15, %c0_106] : memref<352x8xbf16, #tpu.memory_space<vmem>>, vector<288x8xbf16>
    %c2_107 = arith.constant 2 : index
    %c0_108 = arith.constant 0 : index
    %c0_109 = arith.constant 0 : index
    %92 = vector.load %arg5[%c2_107, %c0_108, %c0_109] : memref<9x8x8xbf16, #tpu.memory_space<vmem>>, vector<1x8x8xbf16>
    %93 = vector.shape_cast %92 : vector<1x8x8xbf16> to vector<8x8xbf16>
    %cst_110 = arith.constant dense<0.000000e+00> : vector<288x8xf32>
    %94 = tpu.matmul %91, %93, %cst_110 {dimension_numbers = #tpu.dot_dimension_numbers<[1], [0], [0], [1], [0, 0, 1, 1], [], []>} : vector<288x8xbf16>, vector<8x8xbf16>, vector<288x8xf32> -> vector<288x8xf32>
    %95 = arith.addf %90, %94 : vector<288x8xf32>
    %c0_111 = arith.constant 0 : index
    %c0_112 = arith.constant 0 : index
    %96 = vector.load %arg11[%c0_111, %c0_112] : memref<288x8xf32, #tpu.memory_space<vmem>>, vector<288x8xf32>
    tpu.vector_store %arg11[%c0_111, %c0_112], %95 {strides = array<i32>} : memref<288x8xf32, #tpu.memory_space<vmem>>, vector<288x8xf32>,
    %c0_113 = arith.constant 0 : index
    %c0_114 = arith.constant 0 : index
    %97 = vector.load %arg11[%c0_113, %c0_114] : memref<288x8xf32, #tpu.memory_space<vmem>>, vector<288x8xf32>
    %c31 = arith.constant 31 : index
    %c0_115 = arith.constant 0 : index
    %98 = vector.load %arg10[%c31, %c0_115] : memref<352x8xbf16, #tpu.memory_space<vmem>>, vector<288x8xbf16>
    %c3_116 = arith.constant 3 : index
    %c0_117 = arith.constant 0 : index
    %c0_118 = arith.constant 0 : index
    %99 = vector.load %arg5[%c3_116, %c0_117, %c0_118] : memref<9x8x8xbf16, #tpu.memory_space<vmem>>, vector<1x8x8xbf16>
    %100 = vector.shape_cast %99 : vector<1x8x8xbf16> to vector<8x8xbf16>
    %cst_119 = arith.constant dense<0.000000e+00> : vector<288x8xf32>
    %101 = tpu.matmul %98, %100, %cst_119 {dimension_numbers = #tpu.dot_dimension_numbers<[1], [0], [0], [1], [0, 0, 1, 1], [], []>} : vector<288x8xbf16>, vector<8x8xbf16>, vector<288x8xf32> -> vector<288x8xf32>
    %102 = arith.addf %97, %101 : vector<288x8xf32>
    %c0_120 = arith.constant 0 : index
    %c0_121 = arith.constant 0 : index
    %103 = vector.load %arg11[%c0_120, %c0_121] : memref<288x8xf32, #tpu.memory_space<vmem>>, vector<288x8xf32>
    tpu.vector_store %arg11[%c0_120, %c0_121], %102 {strides = array<i32>} : memref<288x8xf32, #tpu.memory_space<vmem>>, vector<288x8xf32>,
    %c0_122 = arith.constant 0 : index
    %c0_123 = arith.constant 0 : index
    %104 = vector.load %arg11[%c0_122, %c0_123] : memref<288x8xf32, #tpu.memory_space<vmem>>, vector<288x8xf32>
    %c32_124 = arith.constant 32 : index
    %c0_125 = arith.constant 0 : index
    %105 = vector.load %arg10[%c32_124, %c0_125] : memref<352x8xbf16, #tpu.memory_space<vmem>>, vector<288x8xbf16>
    %c4_126 = arith.constant 4 : index
    %c0_127 = arith.constant 0 : index
    %c0_128 = arith.constant 0 : index
    %106 = vector.load %arg5[%c4_126, %c0_127, %c0_128] : memref<9x8x8xbf16, #tpu.memory_space<vmem>>, vector<1x8x8xbf16>
    %107 = vector.shape_cast %106 : vector<1x8x8xbf16> to vector<8x8xbf16>
    %cst_129 = arith.constant dense<0.000000e+00> : vector<288x8xf32>
    %108 = tpu.matmul %105, %107, %cst_129 {dimension_numbers = #tpu.dot_dimension_numbers<[1], [0], [0], [1], [0, 0, 1, 1], [], []>} : vector<288x8xbf16>, vector<8x8xbf16>, vector<288x8xf32> -> vector<288x8xf32>
    %109 = arith.addf %104, %108 : vector<288x8xf32>
    %c0_130 = arith.constant 0 : index
    %c0_131 = arith.constant 0 : index
    %110 = vector.load %arg11[%c0_130, %c0_131] : memref<288x8xf32, #tpu.memory_space<vmem>>, vector<288x8xf32>
    tpu.vector_store %arg11[%c0_130, %c0_131], %109 {strides = array<i32>} : memref<288x8xf32, #tpu.memory_space<vmem>>, vector<288x8xf32>,
    %c0_132 = arith.constant 0 : index
    %c0_133 = arith.constant 0 : index
    %111 = vector.load %arg11[%c0_132, %c0_133] : memref<288x8xf32, #tpu.memory_space<vmem>>, vector<288x8xf32>
    %c33 = arith.constant 33 : index
    %c0_134 = arith.constant 0 : index
    %112 = vector.load %arg10[%c33, %c0_134] : memref<352x8xbf16, #tpu.memory_space<vmem>>, vector<288x8xbf16>
    %c5_135 = arith.constant 5 : index
    %c0_136 = arith.constant 0 : index
    %c0_137 = arith.constant 0 : index
    %113 = vector.load %arg5[%c5_135, %c0_136, %c0_137] : memref<9x8x8xbf16, #tpu.memory_space<vmem>>, vector<1x8x8xbf16>
    %114 = vector.shape_cast %113 : vector<1x8x8xbf16> to vector<8x8xbf16>
    %cst_138 = arith.constant dense<0.000000e+00> : vector<288x8xf32>
    %115 = tpu.matmul %112, %114, %cst_138 {dimension_numbers = #tpu.dot_dimension_numbers<[1], [0], [0], [1], [0, 0, 1, 1], [], []>} : vector<288x8xbf16>, vector<8x8xbf16>, vector<288x8xf32> -> vector<288x8xf32>
    %116 = arith.addf %111, %115 : vector<288x8xf32>
    %c0_139 = arith.constant 0 : index
    %c0_140 = arith.constant 0 : index
    %117 = vector.load %arg11[%c0_139, %c0_140] : memref<288x8xf32, #tpu.memory_space<vmem>>, vector<288x8xf32>
    tpu.vector_store %arg11[%c0_139, %c0_140], %116 {strides = array<i32>} : memref<288x8xf32, #tpu.memory_space<vmem>>, vector<288x8xf32>,
    %c0_141 = arith.constant 0 : index
    %c0_142 = arith.constant 0 : index
    %118 = vector.load %arg11[%c0_141, %c0_142] : memref<288x8xf32, #tpu.memory_space<vmem>>, vector<288x8xf32>
    %c49 = arith.constant 49 : index
    %c0_143 = arith.constant 0 : index
    %119 = vector.load %arg10[%c49, %c0_143] : memref<352x8xbf16, #tpu.memory_space<vmem>>, vector<288x8xbf16>
    %c6_144 = arith.constant 6 : index
    %c0_145 = arith.constant 0 : index
    %c0_146 = arith.constant 0 : index
    %120 = vector.load %arg5[%c6_144, %c0_145, %c0_146] : memref<9x8x8xbf16, #tpu.memory_space<vmem>>, vector<1x8x8xbf16>
    %121 = vector.shape_cast %120 : vector<1x8x8xbf16> to vector<8x8xbf16>
    %cst_147 = arith.constant dense<0.000000e+00> : vector<288x8xf32>
    %122 = tpu.matmul %119, %121, %cst_147 {dimension_numbers = #tpu.dot_dimension_numbers<[1], [0], [0], [1], [0, 0, 1, 1], [], []>} : vector<288x8xbf16>, vector<8x8xbf16>, vector<288x8xf32> -> vector<288x8xf32>
    %123 = arith.addf %118, %122 : vector<288x8xf32>
    %c0_148 = arith.constant 0 : index
    %c0_149 = arith.constant 0 : index
    %124 = vector.load %arg11[%c0_148, %c0_149] : memref<288x8xf32, #tpu.memory_space<vmem>>, vector<288x8xf32>
    tpu.vector_store %arg11[%c0_148, %c0_149], %123 {strides = array<i32>} : memref<288x8xf32, #tpu.memory_space<vmem>>, vector<288x8xf32>,
    %c0_150 = arith.constant 0 : index
    %c0_151 = arith.constant 0 : index
    %125 = vector.load %arg11[%c0_150, %c0_151] : memref<288x8xf32, #tpu.memory_space<vmem>>, vector<288x8xf32>
    %c50 = arith.constant 50 : index
    %c0_152 = arith.constant 0 : index
    %126 = vector.load %arg10[%c50, %c0_152] : memref<352x8xbf16, #tpu.memory_space<vmem>>, vector<288x8xbf16>
    %c7_153 = arith.constant 7 : index
    %c0_154 = arith.constant 0 : index
    %c0_155 = arith.constant 0 : index
    %127 = vector.load %arg5[%c7_153, %c0_154, %c0_155] : memref<9x8x8xbf16, #tpu.memory_space<vmem>>, vector<1x8x8xbf16>
    %128 = vector.shape_cast %127 : vector<1x8x8xbf16> to vector<8x8xbf16>
    %cst_156 = arith.constant dense<0.000000e+00> : vector<288x8xf32>
    %129 = tpu.matmul %126, %128, %cst_156 {dimension_numbers = #tpu.dot_dimension_numbers<[1], [0], [0], [1], [0, 0, 1, 1], [], []>} : vector<288x8xbf16>, vector<8x8xbf16>, vector<288x8xf32> -> vector<288x8xf32>
    %130 = arith.addf %125, %129 : vector<288x8xf32>
    %c0_157 = arith.constant 0 : index
    %c0_158 = arith.constant 0 : index
    %131 = vector.load %arg11[%c0_157, %c0_158] : memref<288x8xf32, #tpu.memory_space<vmem>>, vector<288x8xf32>
    tpu.vector_store %arg11[%c0_157, %c0_158], %130 {strides = array<i32>} : memref<288x8xf32, #tpu.memory_space<vmem>>, vector<288x8xf32>,
    %c0_159 = arith.constant 0 : index
    %c0_160 = arith.constant 0 : index
    %132 = vector.load %arg11[%c0_159, %c0_160] : memref<288x8xf32, #tpu.memory_space<vmem>>, vector<288x8xf32>
    %c51 = arith.constant 51 : index
    %c0_161 = arith.constant 0 : index
    %133 = vector.load %arg10[%c51, %c0_161] : memref<352x8xbf16, #tpu.memory_space<vmem>>, vector<288x8xbf16>
    %c8_162 = arith.constant 8 : index
    %c0_163 = arith.constant 0 : index
    %c0_164 = arith.constant 0 : index
    %134 = vector.load %arg5[%c8_162, %c0_163, %c0_164] : memref<9x8x8xbf16, #tpu.memory_space<vmem>>, vector<1x8x8xbf16>
    %135 = vector.shape_cast %134 : vector<1x8x8xbf16> to vector<8x8xbf16>
    %cst_165 = arith.constant dense<0.000000e+00> : vector<288x8xf32>
    %136 = tpu.matmul %133, %135, %cst_165 {dimension_numbers = #tpu.dot_dimension_numbers<[1], [0], [0], [1], [0, 0, 1, 1], [], []>} : vector<288x8xbf16>, vector<8x8xbf16>, vector<288x8xf32> -> vector<288x8xf32>
    %137 = arith.addf %132, %136 : vector<288x8xf32>
    %c0_166 = arith.constant 0 : index
    %c0_167 = arith.constant 0 : index
    %138 = vector.load %arg11[%c0_166, %c0_167] : memref<288x8xf32, #tpu.memory_space<vmem>>, vector<288x8xf32>
    tpu.vector_store %arg11[%c0_166, %c0_167], %137 {strides = array<i32>} : memref<288x8xf32, #tpu.memory_space<vmem>>, vector<288x8xf32>,
    %c0_168 = arith.constant 0 : index
    %c0_169 = arith.constant 0 : index
    %139 = vector.load %arg11[%c0_168, %c0_169] : memref<288x8xf32, #tpu.memory_space<vmem>>, vector<288x8xf32>
    %c0_170 = arith.constant 0 : index
    %c0_171 = arith.constant 0 : index
    %140 = vector.load %arg7[%c0_170, %c0_171] : memref<1x8xf32, #tpu.memory_space<vmem>>, vector<1x8xf32>
    %141 = vector.broadcast %140 : vector<1x8xf32> to vector<288x8xf32>
    %142 = arith.addf %139, %141 : vector<288x8xf32>
    %c19_172 = arith.constant 19 : index
    %c0_173 = arith.constant 0 : index
    %143 = vector.load %arg9[%c19_172, %c0_173] : memref<336x4xbf16, #tpu.memory_space<vmem>>, vector<288x4xbf16>
    %c0_174 = arith.constant 0 : index
    %c0_175 = arith.constant 0 : index
    %144 = vector.load %arg6[%c0_174, %c0_175] : memref<4x8xbf16, #tpu.memory_space<vmem>>, vector<4x8xbf16>
    %cst_176 = arith.constant dense<0.000000e+00> : vector<288x8xf32>
    %145 = tpu.matmul %143, %144, %cst_176 {dimension_numbers = #tpu.dot_dimension_numbers<[1], [0], [0], [1], [0, 0, 1, 1], [], []>} : vector<288x4xbf16>, vector<4x8xbf16>, vector<288x8xf32> -> vector<288x8xf32>
    %146 = arith.addf %142, %145 : vector<288x8xf32>
    %cst_177 = arith.constant 0.000000e+00 : f32
    %147 = vector.broadcast %cst_177 : f32 to vector<288x8xf32>
    %148 = arith.maximumf %146, %147 : vector<288x8xf32>
    %c0_178 = arith.constant 0 : index
    %c0_179 = arith.constant 0 : index
    %c0_180 = arith.constant 0 : index
    %149 = vector.load %arg8[%c0_178, %c0_179, %c0_180] : memref<1x288x8xf32, #tpu.memory_space<vmem>>, vector<1x288x8xf32>
    %150 = vector.shape_cast %149 : vector<1x288x8xf32> to vector<288x8xf32>
    %151 = vector.shape_cast %148 : vector<288x8xf32> to vector<1x288x8xf32>
    tpu.vector_store %arg8[%c0_178, %c0_179, %c0_180], %151 {strides = array<i32>} : memref<1x288x8xf32, #tpu.memory_space<vmem>>, vector<1x288x8xf32>,
    return
  }
  func.func @transform_0(%arg0: i32) -> (i32, i32, i32) {
    %c0_i32 = arith.constant 0 : i32
    %c0_i32_0 = arith.constant 0 : i32
    %c0_i32_1 = arith.constant 0 : i32
    return %arg0, %c0_i32, %c0_i32_0 : i32, i32, i32
  }
  func.func @transform_1(%arg0: i32) -> (i32, i32) {
    %c0_i32 = arith.constant 0 : i32
    %c0_i32_0 = arith.constant 0 : i32
    %c0_i32_1 = arith.constant 0 : i32
    return %c0_i32, %c0_i32_0 : i32, i32
  }
  func.func @transform_2(%arg0: i32) -> (i32, i32, i32) {
    %c0_i32 = arith.constant 0 : i32
    %c0_i32_0 = arith.constant 0 : i32
    %c0_i32_1 = arith.constant 0 : i32
    %c0_i32_2 = arith.constant 0 : i32
    return %c0_i32, %c0_i32_0, %c0_i32_1 : i32, i32, i32
  }
  func.func @transform_3(%arg0: i32) -> (i32, i32) {
    %c0_i32 = arith.constant 0 : i32
    %c0_i32_0 = arith.constant 0 : i32
    %c0_i32_1 = arith.constant 0 : i32
    return %c0_i32, %c0_i32_0 : i32, i32
  }
  func.func @transform_4(%arg0: i32) -> (i32, i32, i32) {
    %c0_i32 = arith.constant 0 : i32
    %c0_i32_0 = arith.constant 0 : i32
    %c0_i32_1 = arith.constant 0 : i32
    %c0_i32_2 = arith.constant 0 : i32
    return %c0_i32, %c0_i32_0, %c0_i32_1 : i32, i32, i32
  }
  func.func @transform_5(%arg0: i32) -> (i32, i32) {
    %c0_i32 = arith.constant 0 : i32
    %c0_i32_0 = arith.constant 0 : i32
    %c0_i32_1 = arith.constant 0 : i32
    return %c0_i32, %c0_i32_0 : i32, i32
  }
  func.func @transform_6(%arg0: i32) -> (i32, i32) {
    %c0_i32 = arith.constant 0 : i32
    %c0_i32_0 = arith.constant 0 : i32
    %c0_i32_1 = arith.constant 0 : i32
    return %c0_i32, %c0_i32_0 : i32, i32
  }
  func.func @transform_7(%arg0: i32) -> (i32, i32, i32) {
    %c0_i32 = arith.constant 0 : i32
    %c0_i32_0 = arith.constant 0 : i32
    %c0_i32_1 = arith.constant 0 : i32
    return %arg0, %c0_i32, %c0_i32_0 : i32, i32, i32
  }
}

</mosaic_0001>

<llo_original>
// kernel: tpu_custom_call.1
$region0: #{tpu_custom_call.1}
  #allocation0 [shape = 'u32[]', space=smem, size = 0x4, offset = 0x4, fixed_abs, tag = 'smem constant byte address 0x4 - core index']
  #allocation1 [shape = 'u32[72,128]{1,0:T(1,128)}', space=vmem, size = 0x9000, scoped, tag = 'internal scratch']
  #allocation2 [shape = 'bf16[336,4]{1,0:T(8,128)(2,1)}', space=vmem, size = 0x15000, scoped, tag = 'scratch operand']
  #allocation3 [shape = 'bf16[352,8]{1,0:T(8,128)(2,1)}', space=vmem, size = 0x16000, scoped, tag = 'scratch operand']
  #allocation4 [shape = 'f32[288,8]{1,0:T(8,128)}', space=vmem, size = 0x24000, scoped, tag = 'scratch operand']
  %s0 = inlined_call_operand.vmem [shape: f32[2,336,4], index: 0, kind: input, shape index: {}]
  %s1 = inlined_call_operand.vmem [shape: f32[288,1], index: 1, kind: input, shape index: {}]
  %s2 = inlined_call_operand.vmem [shape: bf16[9,4,8], index: 2, kind: input, shape index: {}]
  %s3 = inlined_call_operand.vmem [shape: f32[1,8], index: 3, kind: input, shape index: {}]
  %s4 = inlined_call_operand.vmem [shape: bf16[9,8,8], index: 4, kind: input, shape index: {}]
  %s5 = inlined_call_operand.vmem [shape: bf16[4,8], index: 5, kind: input, shape index: {}]
  %s6 = inlined_call_operand.vmem [shape: f32[1,8], index: 6, kind: input, shape index: {}]
  %s7 = inlined_call_operand.vmem [shape: f32[2,288,8], index: 7, kind: output, shape index: {}]
  %s8 = sld [smem:[#allocation0]]
  $region61: #{tpu_custom_call.1} parent=0
    _
  %s10 = ssub.s32 1, %s8
  %s11 = scalar_select 0, %s10, %s8
  loop: start=0, step=1, limit=4
  $region2: #{tpu_custom_call.1} parent=0 // loop_pre_header
    _
  $region3: #{tpu_custom_call.1} parent=0 // loop_header
    %s13 = sphi 0, %s17
    %p14 = scmp.ge.s32.totalorder %s13, 4
    %s23 = sphi 0, %s25
    %s26 = sphi 0, %s23
    %s27 = sphi 0, %s26
    %s43 = sphi 0, %s27
    %s47 = sphi 0, %s47
    %s49 = sphi 0, %s47
    %s50 = sphi 0, %s49
    %s64 = sphi 0, %s50
    %s68 = sphi 0, %s68
    %s70 = sphi 0, %s68
    %s71 = sphi 0, %s70
    %s85 = sphi 0, %s71
    %s89 = sphi 0, %s89
    %s91 = sphi 0, %s89
    %s92 = sphi 0, %s91
    %s106 = sphi 0, %s92
    %s110 = sphi 0, %s110
    %s112 = sphi 0, %s110
    %s113 = sphi 0, %s112
    %s127 = sphi 0, %s113
    %s131 = sphi 0, %s131
    %s133 = sphi 0, %s131
    %s134 = sphi 0, %s133
    %s148 = sphi 0, %s134
    %s152 = sphi 0, %s152
    %s154 = sphi 0, %s152
    %s155 = sphi 0, %s154
    %s169 = sphi 0, %s155
    %s175 = sphi 0, %s177
    %s178 = sphi 0, %s175
    %s179 = sphi 0, %s178
    %s195 = sphi 0, %s179
  $region4: #{tpu_custom_call.1} parent=0 // loop_header_branch
    %16 = sbr.rel (%p14) target = $region8
  $region5: #{tpu_custom_call.1} parent=0 // loop_body
    %s18 = ssub.s32 %s13, 1
    %s19 = ssub.s32 %s13, 2
    %s20 = sadd.s32 %s13, 1
    %s21 = ssub.s32 %s13, %s20
    %p22 = scmp.eq.s32.totalorder %s21, 0
    %s24 = sadd.s32 %s23, 1
    %s25 = scalar_select %p22, %s23, %s24
    %p28 = pneg %p22
    %p29 = scmp.eq.s32.totalorder %s13, 1
    %p30 = por %p28, %p29
    %p31 = scmp.ne.s32.totalorder %s23, %s26
    %p32 = scmp.eq.s32.totalorder %s13, 0
    %p33 = por %p31, %p32
    %p34 = scmp.ne.s32.totalorder %s23, %s26
    %p35 = scmp.eq.s32.totalorder %s18, 1
    %p36 = por %p34, %p35
    %p37 = scmp.ne.s32.totalorder %s26, %s27
    %p38 = scmp.eq.s32.totalorder %s18, 0
    %p39 = por %p37, %p38
    %p40 = scmp.ne.s32.totalorder %s26, %s27
    %p41 = scmp.eq.s32.totalorder %s19, 1
    %p42 = por %p40, %p41
    %p44 = scmp.ne.s32.totalorder %s27, %s43
    %p45 = scmp.eq.s32.totalorder %s19, 0
    %p46 = por %p44, %p45
    %s48 = sadd.s32 %s47, 1
    %p51 = scmp.eq.s32.totalorder %s13, 1
    %p52 = scmp.ne.s32.totalorder %s47, %s49
    %p53 = scmp.eq.s32.totalorder %s13, 0
    %p54 = por %p52, %p53
    %p55 = scmp.ne.s32.totalorder %s47, %s49
    %p56 = scmp.eq.s32.totalorder %s18, 1
    %p57 = por %p55, %p56
    %p58 = scmp.ne.s32.totalorder %s49, %s50
    %p59 = scmp.eq.s32.totalorder %s18, 0
    %p60 = por %p58, %p59
    %p61 = scmp.ne.s32.totalorder %s49, %s50
    %p62 = scmp.eq.s32.totalorder %s19, 1
    %p63 = por %p61, %p62
    %p65 = scmp.ne.s32.totalorder %s50, %s64
    %p66 = scmp.eq.s32.totalorder %s19, 0
    %p67 = por %p65, %p66
    %s69 = sadd.s32 %s68, 1
    %p72 = scmp.eq.s32.totalorder %s13, 1
    %p73 = scmp.ne.s32.totalorder %s68, %s70
    %p74 = scmp.eq.s32.totalorder %s13, 0
    %p75 = por %p73, %p74
    %p76 = scmp.ne.s32.totalorder %s68, %s70
    %p77 = scmp.eq.s32.totalorder %s18, 1
    %p78 = por %p76, %p77
    %p79 = scmp.ne.s32.totalorder %s70, %s71
    %p80 = scmp.eq.s32.totalorder %s18, 0
    %p81 = por %p79, %p80
    %p82 = scmp.ne.s32.totalorder %s70, %s71
    %p83 = scmp.eq.s32.totalorder %s19, 1
    %p84 = por %p82, %p83
    %p86 = scmp.ne.s32.totalorder %s71, %s85
    %p87 = scmp.eq.s32.totalorder %s19, 0
    %p88 = por %p86, %p87
    %s90 = sadd.s32 %s89, 1
    %p93 = scmp.eq.s32.totalorder %s13, 1
    %p94 = scmp.ne.s32.totalorder %s89, %s91
    %p95 = scmp.eq.s32.totalorder %s13, 0
    %p96 = por %p94, %p95
    %p97 = scmp.ne.s32.totalorder %s89, %s91
    %p98 = scmp.eq.s32.totalorder %s18, 1
    %p99 = por %p97, %p98
    %p100 = scmp.ne.s32.totalorder %s91, %s92
    %p101 = scmp.eq.s32.totalorder %s18, 0
    %p102 = por %p100, %p101
    %p103 = scmp.ne.s32.totalorder %s91, %s92
    %p104 = scmp.eq.s32.totalorder %s19, 1
    %p105 = por %p103, %p104
    %p107 = scmp.ne.s32.totalorder %s92, %s106
    %p108 = scmp.eq.s32.totalorder %s19, 0
    %p109 = por %p107, %p108
    %s111 = sadd.s32 %s110, 1
    %p114 = scmp.eq.s32.totalorder %s13, 1
    %p115 = scmp.ne.s32.totalorder %s110, %s112
    %p116 = scmp.eq.s32.totalorder %s13, 0
    %p117 = por %p115, %p116
    %p118 = scmp.ne.s32.totalorder %s110, %s112
    %p119 = scmp.eq.s32.totalorder %s18, 1
    %p120 = por %p118, %p119
    %p121 = scmp.ne.s32.totalorder %s112, %s113
    %p122 = scmp.eq.s32.totalorder %s18, 0
    %p123 = por %p121, %p122
    %p124 = scmp.ne.s32.totalorder %s112, %s113
    %p125 = scmp.eq.s32.totalorder %s19, 1
    %p126 = por %p124, %p125
    %p128 = scmp.ne.s32.totalorder %s113, %s127
    %p129 = scmp.eq.s32.totalorder %s19, 0
    %p130 = por %p128, %p129
    %s132 = sadd.s32 %s131, 1
    %p135 = scmp.eq.s32.totalorder %s13, 1
    %p136 = scmp.ne.s32.totalorder %s131, %s133
    %p137 = scmp.eq.s32.totalorder %s13, 0
    %p138 = por %p136, %p137
    %p139 = scmp.ne.s32.totalorder %s131, %s133
    %p140 = scmp.eq.s32.totalorder %s18, 1
    %p141 = por %p139, %p140
    %p142 = scmp.ne.s32.totalorder %s133, %s134
    %p143 = scmp.eq.s32.totalorder %s18, 0
    %p144 = por %p142, %p143
    %p145 = scmp.ne.s32.totalorder %s133, %s134
    %p146 = scmp.eq.s32.totalorder %s19, 1
    %p147 = por %p145, %p146
    %p149 = scmp.ne.s32.totalorder %s134, %s148
    %p150 = scmp.eq.s32.totalorder %s19, 0
    %p151 = por %p149, %p150
    %s153 = sadd.s32 %s152, 1
    %p156 = scmp.eq.s32.totalorder %s13, 1
    %p157 = scmp.ne.s32.totalorder %s152, %s154
    %p158 = scmp.eq.s32.totalorder %s13, 0
    %p159 = por %p157, %p158
    %p160 = scmp.ne.s32.totalorder %s152, %s154
    %p161 = scmp.eq.s32.totalorder %s18, 1
    %p162 = por %p160, %p161
    %p163 = scmp.ne.s32.totalorder %s154, %s155
    %p164 = scmp.eq.s32.totalorder %s18, 0
    %p165 = por %p163, %p164
    %p166 = scmp.ne.s32.totalorder %s154, %s155
    %p167 = scmp.eq.s32.totalorder %s19, 1
    %p168 = por %p166, %p167
    %p170 = scmp.ne.s32.totalorder %s155, %s169
    %p171 = scmp.eq.s32.totalorder %s19, 0
    %p172 = por %p170, %p171
    %s173 = ssub.s32 %s13, %s20
    %p174 = scmp.eq.s32.totalorder %s173, 0
    %s176 = sadd.s32 %s175, 1
    %s177 = scalar_select %p174, %s175, %s176
    %p180 = pneg %p174
    %p181 = scmp.eq.s32.totalorder %s13, 1
    %p182 = por %p180, %p181
    %p183 = scmp.ne.s32.totalorder %s175, %s178
    %p184 = scmp.eq.s32.totalorder %s13, 0
    %p185 = por %p183, %p184
    %p186 = scmp.ne.s32.totalorder %s175, %s178
    %p187 = scmp.eq.s32.totalorder %s18, 1
    %p188 = por %p186, %p187
    %p189 = scmp.ne.s32.totalorder %s178, %s179
    %p190 = scmp.eq.s32.totalorder %s18, 0
    %p191 = por %p189, %p190
    %p192 = scmp.ne.s32.totalorder %s178, %s179
    %p193 = scmp.eq.s32.totalorder %s19, 1
    %p194 = por %p192, %p193
    %p196 = scmp.ne.s32.totalorder %s179, %s195
    %p197 = scmp.eq.s32.totalorder %s19, 0
    %p198 = por %p196, %p197
    %p199 = scmp.le.s32.totalorder 1, %s13
    %p200 = scmp.lt.s32.totalorder %s13, 3
    %p201 = pnand %p199, %p200
    %p202 = pneg %p201
    // Predicated region
    $region9: #{tpu_custom_call.1} parent=5 // pred_check
      _
    $region10: #{tpu_custom_call.1} parent=5 // pred_check_branch
      %204 = sbr.rel (%p201) target = $region12
    $region11: #{tpu_custom_call.1} parent=5 // pred_region
      %s205 = ssub.s32 %s13, 1
      // Predicated region
      $region13: #{tpu_custom_call.1} parent=11 // pred_check
        %p206 = pneg %p60
      $region14: #{tpu_custom_call.1} parent=11 // pred_check_branch
        %208 = sbr.rel (%p206) target = $region16
      $region15: #{tpu_custom_call.1} parent=11 // pred_region
        _
      $region16: #{tpu_custom_call.1} parent=11 // pred_fallthru
        _
      // Predicated region
      $region17: #{tpu_custom_call.1} parent=11 // pred_check
        %p209 = pneg %p81
      $region18: #{tpu_custom_call.1} parent=11 // pred_check_branch
        %211 = sbr.rel (%p209) target = $region20
      $region19: #{tpu_custom_call.1} parent=11 // pred_region
        _
      $region20: #{tpu_custom_call.1} parent=11 // pred_fallthru
        _
      // Predicated region
      $region21: #{tpu_custom_call.1} parent=11 // pred_check
        %p212 = pneg %p102
      $region22: #{tpu_custom_call.1} parent=11 // pred_check_branch
        %214 = sbr.rel (%p212) target = $region24
      $region23: #{tpu_custom_call.1} parent=11 // pred_region
        _
      $region24: #{tpu_custom_call.1} parent=11 // pred_fallthru
        _
      // Predicated region
      $region25: #{tpu_custom_call.1} parent=11 // pred_check
        %p215 = pneg %p123
      $region26: #{tpu_custom_call.1} parent=11 // pred_check_branch
        %217 = sbr.rel (%p215) target = $region28
      $region27: #{tpu_custom_call.1} parent=11 // pred_region
        _
      $region28: #{tpu_custom_call.1} parent=11 // pred_fallthru
        _
      // Predicated region
      $region29: #{tpu_custom_call.1} parent=11 // pred_check
        %p218 = pneg %p144
      $region30: #{tpu_custom_call.1} parent=11 // pred_check_branch
        %220 = sbr.rel (%p218) target = $region32
      $region31: #{tpu_custom_call.1} parent=11 // pred_region
        _
      $region32: #{tpu_custom_call.1} parent=11 // pred_fallthru
        _
      // Predicated region
      $region33: #{tpu_custom_call.1} parent=11 // pred_check
        %p221 = pneg %p165
      $region34: #{tpu_custom_call.1} parent=11 // pred_check_branch
        %223 = sbr.rel (%p221) target = $region36
      $region35: #{tpu_custom_call.1} parent=11 // pred_region
        _
      $region36: #{tpu_custom_call.1} parent=11 // pred_fallthru
        _
    $region12: #{tpu_custom_call.1} parent=5 // pred_fallthru
      _
    %p224 = scmp.lt.s32.totalorder %s13, 2
    // Predicated region
    $region37: #{tpu_custom_call.1} parent=5 // pred_check
      %p225 = pneg %p224
    $region38: #{tpu_custom_call.1} parent=5 // pred_check_branch
      %227 = sbr.rel (%p225) target = $region40
    $region39: #{tpu_custom_call.1} parent=5 // pred_region
      // Predicated region
      $region41: #{tpu_custom_call.1} parent=39 // pred_check
        %p228 = pneg %p33
      $region42: #{tpu_custom_call.1} parent=39 // pred_check_branch
        %230 = sbr.rel (%p228) target = $region44
      $region43: #{tpu_custom_call.1} parent=39 // pred_region
        %p231 = scmp.lt.s32.totalorder %s13, 1
        %s232 = scalar_select %p231, %s13, 1
        %s233 = smul.addr %s232, 42
        %s234 = smul.addr %s233, 8
        %s235 = scalar_lea.vmem %s0, %s234
      $region44: #{tpu_custom_call.1} parent=39 // pred_fallthru
        _
    $region40: #{tpu_custom_call.1} parent=5 // pred_fallthru
      _
    %p236 = scmp.le.s32.totalorder 1, %s13
    %p237 = scmp.lt.s32.totalorder %s13, 3
    %p238 = pnand %p236, %p237
    %p239 = pneg %p238
    // Predicated region
    $region45: #{tpu_custom_call.1} parent=5 // pred_check
      _
    $region46: #{tpu_custom_call.1} parent=5 // pred_check_branch
      %241 = sbr.rel (%p238) target = $region48
    $region47: #{tpu_custom_call.1} parent=5 // pred_region
      %s242 = ssub.s32 %s13, 1
      %p243 = scmp.lt.s32.totalorder %s18, 1
      %s244 = scalar_select %p243, %s18, 1
      %s245 = smul.addr %s244, 42
      %s246 = smul.addr %s245, 8
      %s247 = scalar_lea.vmem %s0, %s246
      %p248 = pneg %p39
      %p249 = pneg %p36
      %p250 = pneg %p60
      %p251 = pneg %p57
      %p252 = pneg %p81
      %p253 = pneg %p78
      %p254 = pneg %p102
      %p255 = pneg %p99
      %p256 = pneg %p123
      %p257 = pneg %p120
      %p258 = pneg %p144
      %p259 = pneg %p141
      %p260 = pneg %p165
      %p261 = pneg %p162
      %p262 = pneg %p191
      %p263 = pneg %p188
      %p264 = scmp.lt.s32.totalorder %s18, 1
      %s265 = scalar_select %p264, %s18, 1
      %s266 = smul.addr %s265, 36
      %s267 = smul.addr %s266, 8
      %s268 = scalar_lea.vmem %s7, %s267
      %p269 = scmp.lt.s32.totalorder %s18, 1
      %s270 = scalar_select %p269, %s18, 1
      %s271 = smul.addr %s270, 42
      %s272 = smul.addr %s271, 8
      %s273 = scalar_lea.vmem %s0, %s272
      %p274 = scmp.lt.s32.totalorder %s18, 1
      %s275 = scalar_select %p274, %s18, 1
      %s276 = smul.addr %s275, 36
      %s277 = smul.addr %s276, 8
      %s278 = scalar_lea.vmem %s7, %s277
      %v280 = vld [vmem:[%s273] sm:$0xff]
      %v281 = vld [vmem:[%s273 + $0x8] sm:$0xff]
      %v282 = vld [vmem:[%s273 + $0x10] sm:$0xff]
      %v283 = vld [vmem:[%s273 + $0x18] sm:$0xff]
      %v284 = vld [vmem:[%s273 + $0x20] sm:$0xff]
      %v285 = vld [vmem:[%s273 + $0x28] sm:$0xff]
      %v286 = vld [vmem:[%s273 + $0x30] sm:$0xff]
      %v287 = vld [vmem:[%s273 + $0x38] sm:$0xff]
      %v288 = vld [vmem:[%s273 + $0x40] sm:$0xff]
      %v289 = vld [vmem:[%s273 + $0x48] sm:$0xff]
      %v290 = vld [vmem:[%s273 + $0x50] sm:$0xff]
      %v291 = vld [vmem:[%s273 + $0x58] sm:$0xff]
      %v292 = vld [vmem:[%s273 + $0x60] sm:$0xff]
      %v293 = vld [vmem:[%s273 + $0x68] sm:$0xff]
      %v294 = vld [vmem:[%s273 + $0x70] sm:$0xff]
      %v295 = vld [vmem:[%s273 + $0x78] sm:$0xff]
      %v296 = vld [vmem:[%s273 + $0x80] sm:$0xff]
      %v297 = vld [vmem:[%s273 + $0x88] sm:$0xff]
      %v298 = vld [vmem:[%s273 + $0x90] sm:$0xff]
      %v299 = vld [vmem:[%s273 + $0x98] sm:$0xff]
      %v300 = vld [vmem:[%s273 + $0xa0] sm:$0xff]
      %v301 = vld [vmem:[%s273 + $0xa8] sm:$0xff]
      %v302 = vld [vmem:[%s273 + $0xb0] sm:$0xff]
      %v303 = vld [vmem:[%s273 + $0xb8] sm:$0xff]
      %v304 = vld [vmem:[%s273 + $0xc0] sm:$0xff]
      %v305 = vld [vmem:[%s273 + $0xc8] sm:$0xff]
      %v306 = vld [vmem:[%s273 + $0xd0] sm:$0xff]
      %v307 = vld [vmem:[%s273 + $0xd8] sm:$0xff]
      %v308 = vld [vmem:[%s273 + $0xe0] sm:$0xff]
      %v309 = vld [vmem:[%s273 + $0xe8] sm:$0xff]
      %v310 = vld [vmem:[%s273 + $0xf0] sm:$0xff]
      %v311 = vld [vmem:[%s273 + $0xf8] sm:$0xff]
      %v312 = vld [vmem:[%s273 + $0x100] sm:$0xff]
      %v313 = vld [vmem:[%s273 + $0x108] sm:$0xff]
      %v314 = vld [vmem:[%s273 + $0x110] sm:$0xff]
      %v315 = vld [vmem:[%s273 + $0x118] sm:$0xff]
      %v316 = vld [vmem:[%s273 + $0x120] sm:$0xff]
      %v317 = vld [vmem:[%s273 + $0x128] sm:$0xff]
      %v318 = vld [vmem:[%s273 + $0x130] sm:$0xff]
      %v319 = vld [vmem:[%s273 + $0x138] sm:$0xff]
      %v320 = vld [vmem:[%s273 + $0x140] sm:$0xff]
      %v321 = vld [vmem:[%s273 + $0x148] sm:$0xff]
      %v322 = vpack.c.bf16 %v280, %v280
      %v323 = vpack.c.bf16 %v281, %v281
      %v324 = vpack.c.bf16 %v282, %v282
      %v325 = vpack.c.bf16 %v283, %v283
      %v326 = vpack.c.bf16 %v284, %v284
      %v327 = vpack.c.bf16 %v285, %v285
      %v328 = vpack.c.bf16 %v286, %v286
      %v329 = vpack.c.bf16 %v287, %v287
      %v330 = vpack.c.bf16 %v288, %v288
      %v331 = vpack.c.bf16 %v289, %v289
      %v332 = vpack.c.bf16 %v290, %v290
      %v333 = vpack.c.bf16 %v291, %v291
      %v334 = vpack.c.bf16 %v292, %v292
      %v335 = vpack.c.bf16 %v293, %v293
      %v336 = vpack.c.bf16 %v294, %v294
      %v337 = vpack.c.bf16 %v295, %v295
      %v338 = vpack.c.bf16 %v296, %v296
      %v339 = vpack.c.bf16 %v297, %v297
      %v340 = vpack.c.bf16 %v298, %v298
      %v341 = vpack.c.bf16 %v299, %v299
      %v342 = vpack.c.bf16 %v300, %v300
      %v343 = vpack.c.bf16 %v301, %v301
      %v344 = vpack.c.bf16 %v302, %v302
      %v345 = vpack.c.bf16 %v303, %v303
      %v346 = vpack.c.bf16 %v304, %v304
      %v347 = vpack.c.bf16 %v305, %v305
      %v348 = vpack.c.bf16 %v306, %v306
      %v349 = vpack.c.bf16 %v307, %v307
      %v350 = vpack.c.bf16 %v308, %v308
      %v351 = vpack.c.bf16 %v309, %v309
      %v352 = vpack.c.bf16 %v310, %v310
      %v353 = vpack.c.bf16 %v311, %v311
      %v354 = vpack.c.bf16 %v312, %v312
      %v355 = vpack.c.bf16 %v313, %v313
      %v356 = vpack.c.bf16 %v314, %v314
      %v357 = vpack.c.bf16 %v315, %v315
      %v358 = vpack.c.bf16 %v316, %v316
      %v359 = vpack.c.bf16 %v317, %v317
      %v360 = vpack.c.bf16 %v318, %v318
      %v361 = vpack.c.bf16 %v319, %v319
      %v362 = vpack.c.bf16 %v320, %v320
      %v363 = vpack.c.bf16 %v321, %v321
      %vm364 = vcmask 27648
      %365 = vst.msk [vmem:[#allocation2] sm:$0xf] %vm364, %v322
      %366 = vst.msk [vmem:[#allocation2 + $0x4] sm:$0xf] %vm364, %v323
      %367 = vst.msk [vmem:[#allocation2 + $0x8] sm:$0xf] %vm364, %v324
      %368 = vst.msk [vmem:[#allocation2 + $0xc] sm:$0xf] %vm364, %v325
      %369 = vst.msk [vmem:[#allocation2 + $0x10] sm:$0xf] %vm364, %v326
      %370 = vst.msk [vmem:[#allocation2 + $0x14] sm:$0xf] %vm364, %v327
      %371 = vst.msk [vmem:[#allocation2 + $0x18] sm:$0xf] %vm364, %v328
      %372 = vst.msk [vmem:[#allocation2 + $0x1c] sm:$0xf] %vm364, %v329
      %373 = vst.msk [vmem:[#allocation2 + $0x20] sm:$0xf] %vm364, %v330
      %374 = vst.msk [vmem:[#allocation2 + $0x24] sm:$0xf] %vm364, %v331
      %375 = vst.msk [vmem:[#allocation2 + $0x28] sm:$0xf] %vm364, %v332
      %376 = vst.msk [vmem:[#allocation2 + $0x2c] sm:$0xf] %vm364, %v333
      %377 = vst.msk [vmem:[#allocation2 + $0x30] sm:$0xf] %vm364, %v334
      %378 = vst.msk [vmem:[#allocation2 + $0x34] sm:$0xf] %vm364, %v335
      %379 = vst.msk [vmem:[#allocation2 + $0x38] sm:$0xf] %vm364, %v336
      %380 = vst.msk [vmem:[#allocation2 + $0x3c] sm:$0xf] %vm364, %v337
      %381 = vst.msk [vmem:[#allocation2 + $0x40] sm:$0xf] %vm364, %v338
      %382 = vst.msk [vmem:[#allocation2 + $0x44] sm:$0xf] %vm364, %v339
      %383 = vst.msk [vmem:[#allocation2 + $0x48] sm:$0xf] %vm364, %v340
      %384 = vst.msk [vmem:[#allocation2 + $0x4c] sm:$0xf] %vm364, %v341
      %385 = vst.msk [vmem:[#allocation2 + $0x50] sm:$0xf] %vm364, %v342
      %386 = vst.msk [vmem:[#allocation2 + $0x54] sm:$0xf] %vm364, %v343
      %387 = vst.msk [vmem:[#allocation2 + $0x58] sm:$0xf] %vm364, %v344
      %388 = vst.msk [vmem:[#allocation2 + $0x5c] sm:$0xf] %vm364, %v345
      %389 = vst.msk [vmem:[#allocation2 + $0x60] sm:$0xf] %vm364, %v346
      %390 = vst.msk [vmem:[#allocation2 + $0x64] sm:$0xf] %vm364, %v347
      %391 = vst.msk [vmem:[#allocation2 + $0x68] sm:$0xf] %vm364, %v348
      %392 = vst.msk [vmem:[#allocation2 + $0x6c] sm:$0xf] %vm364, %v349
      %393 = vst.msk [vmem:[#allocation2 + $0x70] sm:$0xf] %vm364, %v350
      %394 = vst.msk [vmem:[#allocation2 + $0x74] sm:$0xf] %vm364, %v351
      %395 = vst.msk [vmem:[#allocation2 + $0x78] sm:$0xf] %vm364, %v352
      %396 = vst.msk [vmem:[#allocation2 + $0x7c] sm:$0xf] %vm364, %v353
      %397 = vst.msk [vmem:[#allocation2 + $0x80] sm:$0xf] %vm364, %v354
      %398 = vst.msk [vmem:[#allocation2 + $0x84] sm:$0xf] %vm364, %v355
      %399 = vst.msk [vmem:[#allocation2 + $0x88] sm:$0xf] %vm364, %v356
      %400 = vst.msk [vmem:[#allocation2 + $0x8c] sm:$0xf] %vm364, %v357
      %401 = vst.msk [vmem:[#allocation2 + $0x90] sm:$0xf] %vm364, %v358
      %402 = vst.msk [vmem:[#allocation2 + $0x94] sm:$0xf] %vm364, %v359
      %403 = vst.msk [vmem:[#allocation2 + $0x98] sm:$0xf] %vm364, %v360
      %404 = vst.msk [vmem:[#allocation2 + $0x9c] sm:$0xf] %vm364, %v361
      %405 = vst.msk [vmem:[#allocation2 + $0xa0] sm:$0xf] %vm364, %v362
      %406 = vst.msk [vmem:[#allocation2 + $0xa4] sm:$0xf] %vm364, %v363
      %v407 = vld [vmem:[#allocation2] sm:$0xf]
      %v408 = vld [vmem:[#allocation2 + $0x4] sm:$0xf]
      %v409 = vld [vmem:[#allocation2 + $0x8] sm:$0xf]
      %v410 = vld [vmem:[#allocation2 + $0xc] sm:$0xf]
      %v411 = vld [vmem:[#allocation2 + $0x10] sm:$0xf]
      %v412 = vld [vmem:[#allocation2 + $0x14] sm:$0xf]
      %v413 = vld [vmem:[#allocation2 + $0x18] sm:$0xf]
      %v414 = vld [vmem:[#allocation2 + $0x1c] sm:$0xf]
      %v415 = vld [vmem:[#allocation2 + $0x20] sm:$0xf]
      %v416 = vld [vmem:[#allocation2 + $0x24] sm:$0xf]
      %v417 = vld [vmem:[#allocation2 + $0x28] sm:$0xf]
      %v418 = vld [vmem:[#allocation2 + $0x2c] sm:$0xf]
      %v419 = vld [vmem:[#allocation2 + $0x30] sm:$0xf]
      %v420 = vld [vmem:[#allocation2 + $0x34] sm:$0xf]
      %v421 = vld [vmem:[#allocation2 + $0x38] sm:$0xf]
      %v422 = vld [vmem:[#allocation2 + $0x3c] sm:$0xf]
      %v423 = vld [vmem:[#allocation2 + $0x40] sm:$0xf]
      %v424 = vld [vmem:[#allocation2 + $0x44] sm:$0xf]
      %v425 = vld [vmem:[#allocation2 + $0x48] sm:$0xf]
      %v426 = vld [vmem:[#allocation2 + $0x4c] sm:$0xf]
      %v427 = vld [vmem:[#allocation2 + $0x50] sm:$0xf]
      %v428 = vld [vmem:[#allocation2 + $0x54] sm:$0xf]
      %v429 = vld [vmem:[#allocation2 + $0x58] sm:$0xf]
      %v430 = vld [vmem:[#allocation2 + $0x5c] sm:$0xf]
      %v431 = vld [vmem:[#allocation2 + $0x60] sm:$0xf]
      %v432 = vld [vmem:[#allocation2 + $0x64] sm:$0xf]
      %v433 = vld [vmem:[#allocation2 + $0x68] sm:$0xf]
      %v434 = vld [vmem:[#allocation2 + $0x6c] sm:$0xf]
      %v435 = vld [vmem:[#allocation2 + $0x70] sm:$0xf]
      %v436 = vld [vmem:[#allocation2 + $0x74] sm:$0xf]
      %v437 = vld [vmem:[#allocation2 + $0x78] sm:$0xf]
      %v438 = vld [vmem:[#allocation2 + $0x7c] sm:$0xf]
      %v439 = vld [vmem:[#allocation2 + $0x80] sm:$0xf]
      %v440 = vld [vmem:[#allocation2 + $0x84] sm:$0xf]
      %v441 = vld [vmem:[#allocation2 + $0x88] sm:$0xf]
      %v442 = vld [vmem:[#allocation2 + $0x8c] sm:$0xf]
      %v443 = vld [vmem:[%s2] sm:$0x3]
      %v480 = vunpack.c.l.b16 %v407
      %v481 = vunpack.c.l.b16 %v408
      %v482 = vunpack.c.l.b16 %v409
      %v483 = vunpack.c.l.b16 %v410
      %v484 = vunpack.c.l.b16 %v411
      %v485 = vunpack.c.l.b16 %v412
      %v486 = vunpack.c.l.b16 %v413
      %v487 = vunpack.c.l.b16 %v414
      %v488 = vunpack.c.l.b16 %v415
      %v489 = vunpack.c.l.b16 %v416
      %v490 = vunpack.c.l.b16 %v417
      %v491 = vunpack.c.l.b16 %v418
      %v492 = vunpack.c.l.b16 %v419
      %v493 = vunpack.c.l.b16 %v420
      %v494 = vunpack.c.l.b16 %v421
      %v495 = vunpack.c.l.b16 %v422
      %v496 = vunpack.c.l.b16 %v423
      %v497 = vunpack.c.l.b16 %v424
      %v498 = vunpack.c.l.b16 %v425
      %v499 = vunpack.c.l.b16 %v426
      %v500 = vunpack.c.l.b16 %v427
      %v501 = vunpack.c.l.b16 %v428
      %v502 = vunpack.c.l.b16 %v429
      %v503 = vunpack.c.l.b16 %v430
      %v504 = vunpack.c.l.b16 %v431
      %v505 = vunpack.c.l.b16 %v432
      %v506 = vunpack.c.l.b16 %v433
      %v507 = vunpack.c.l.b16 %v434
      %v508 = vunpack.c.l.b16 %v435
      %v509 = vunpack.c.l.b16 %v436
      %v510 = vunpack.c.l.b16 %v437
      %v511 = vunpack.c.l.b16 %v438
      %v512 = vunpack.c.l.b16 %v439
      %v513 = vunpack.c.l.b16 %v440
      %v514 = vunpack.c.l.b16 %v441
      %v515 = vunpack.c.l.b16 %v442
      %v516 = vpack.c.b16 %v481, %v480
      %v517 = vpack.c.b16 %v483, %v482
      %v518 = vpack.c.b16 %v485, %v484
      %v519 = vpack.c.b16 %v487, %v486
      %v520 = vpack.c.b16 %v489, %v488
      %v521 = vpack.c.b16 %v491, %v490
      %v522 = vpack.c.b16 %v493, %v492
      %v523 = vpack.c.b16 %v495, %v494
      %v524 = vpack.c.b16 %v497, %v496
      %v525 = vpack.c.b16 %v499, %v498
      %v526 = vpack.c.b16 %v501, %v500
      %v527 = vpack.c.b16 %v503, %v502
      %v528 = vpack.c.b16 %v505, %v504
      %v529 = vpack.c.b16 %v507, %v506
      %v530 = vpack.c.b16 %v509, %v508
      %v531 = vpack.c.b16 %v511, %v510
      %v532 = vpack.c.b16 %v513, %v512
      %v533 = vpack.c.b16 %v515, %v514
      %vm534 = vcmask 31744
      %v536 = vsel %vm534, %v516, 0
      %v539 = vsel %vm534, %v517, 0
      %v542 = vsel %vm534, %v518, 0
      %v545 = vsel %vm534, %v519, 0
      %v548 = vsel %vm534, %v520, 0
      %v551 = vsel %vm534, %v521, 0
      %v554 = vsel %vm534, %v522, 0
      %v557 = vsel %vm534, %v523, 0
      %v560 = vsel %vm534, %v524, 0
      %v563 = vsel %vm534, %v525, 0
      %v566 = vsel %vm534, %v526, 0
      %v569 = vsel %vm534, %v527, 0
      %v572 = vsel %vm534, %v528, 0
      %v575 = vsel %vm534, %v529, 0
      %v578 = vsel %vm534, %v530, 0
      %v581 = vsel %vm534, %v531, 0
      %v584 = vsel %vm534, %v532, 0
      %v587 = vsel %vm534, %v533, 0
      %vm589 = vcmask 1041408
      %v591 = vsel %vm589, %v443, 0
      %593 = vmatpush.bf16.msra.mxu0 0
      %594 = vmatpush.bf16.msra.mxu0 0
      %595 = vmatpush.bf16.msra.mxu0 0
      %596 = vmatpush.bf16.msra.mxu0 0
      %597 = vmatpush.bf16.msra.mxu0 0
      %598 = vmatpush.bf16.msra.mxu0 0
      %599 = vmatpush.bf16.msra.mxu0 0
      %600 = vmatpush.bf16.msra.mxu0 %v591
      %601 = vmatmul.bf16.gmra.mxu0 %v536
      %v602 = vpop.f32.mrf.mxu0
      %v603 = vadd.f32 0.0, %v602
      %v604 = vpop.f32.mrf.mxu0
      %v605 = vadd.f32 0.0, %v604
      %606 = vmatmul.bf16.gmra.mxu0 %v539
      %v607 = vpop.f32.mrf.mxu0
      %v608 = vadd.f32 0.0, %v607
      %v609 = vpop.f32.mrf.mxu0
      %v610 = vadd.f32 0.0, %v609
      %611 = vmatmul.bf16.gmra.mxu0 %v542
      %v612 = vpop.f32.mrf.mxu0
      %v613 = vadd.f32 0.0, %v612
      %v614 = vpop.f32.mrf.mxu0
      %v615 = vadd.f32 0.0, %v614
      %616 = vmatmul.bf16.gmra.mxu0 %v545
      %v617 = vpop.f32.mrf.mxu0
      %v618 = vadd.f32 0.0, %v617
      %v619 = vpop.f32.mrf.mxu0
      %v620 = vadd.f32 0.0, %v619
      %621 = vmatmul.bf16.gmra.mxu0 %v548
      %v622 = vpop.f32.mrf.mxu0
      %v623 = vadd.f32 0.0, %v622
      %v624 = vpop.f32.mrf.mxu0
      %v625 = vadd.f32 0.0, %v624
      %626 = vmatmul.bf16.gmra.mxu0 %v551
      %v627 = vpop.f32.mrf.mxu0
      %v628 = vadd.f32 0.0, %v627
      %v629 = vpop.f32.mrf.mxu0
      %v630 = vadd.f32 0.0, %v629
      %631 = vmatmul.bf16.gmra.mxu0 %v554
      %v632 = vpop.f32.mrf.mxu0
      %v633 = vadd.f32 0.0, %v632
      %v634 = vpop.f32.mrf.mxu0
      %v635 = vadd.f32 0.0, %v634
      %636 = vmatmul.bf16.gmra.mxu0 %v557
      %v637 = vpop.f32.mrf.mxu0
      %v638 = vadd.f32 0.0, %v637
      %v639 = vpop.f32.mrf.mxu0
      %v640 = vadd.f32 0.0, %v639
      %641 = vmatmul.bf16.gmra.mxu0 %v560
      %v642 = vpop.f32.mrf.mxu0
      %v643 = vadd.f32 0.0, %v642
      %v644 = vpop.f32.mrf.mxu0
      %v645 = vadd.f32 0.0, %v644
      %646 = vmatmul.bf16.gmra.mxu0 %v563
      %v647 = vpop.f32.mrf.mxu0
      %v648 = vadd.f32 0.0, %v647
      %v649 = vpop.f32.mrf.mxu0
      %v650 = vadd.f32 0.0, %v649
      %651 = vmatmul.bf16.gmra.mxu0 %v566
      %v652 = vpop.f32.mrf.mxu0
      %v653 = vadd.f32 0.0, %v652
      %v654 = vpop.f32.mrf.mxu0
      %v655 = vadd.f32 0.0, %v654
      %656 = vmatmul.bf16.gmra.mxu0 %v569
      %v657 = vpop.f32.mrf.mxu0
      %v658 = vadd.f32 0.0, %v657
      %v659 = vpop.f32.mrf.mxu0
      %v660 = vadd.f32 0.0, %v659
      %661 = vmatmul.bf16.gmra.mxu0 %v572
      %v662 = vpop.f32.mrf.mxu0
      %v663 = vadd.f32 0.0, %v662
      %v664 = vpop.f32.mrf.mxu0
      %v665 = vadd.f32 0.0, %v664
      %666 = vmatmul.bf16.gmra.mxu0 %v575
      %v667 = vpop.f32.mrf.mxu0
      %v668 = vadd.f32 0.0, %v667
      %v669 = vpop.f32.mrf.mxu0
      %v670 = vadd.f32 0.0, %v669
      %671 = vmatmul.bf16.gmra.mxu0 %v578
      %v672 = vpop.f32.mrf.mxu0
      %v673 = vadd.f32 0.0, %v672
      %v674 = vpop.f32.mrf.mxu0
      %v675 = vadd.f32 0.0, %v674
      %676 = vmatmul.bf16.gmra.mxu0 %v581
      %v677 = vpop.f32.mrf.mxu0
      %v678 = vadd.f32 0.0, %v677
      %v679 = vpop.f32.mrf.mxu0
      %v680 = vadd.f32 0.0, %v679
      %681 = vmatmul.bf16.gmra.mxu0 %v584
      %v682 = vpop.f32.mrf.mxu0
      %v683 = vadd.f32 0.0, %v682
      %v684 = vpop.f32.mrf.mxu0
      %v685 = vadd.f32 0.0, %v684
      %686 = vmatmul.bf16.gmra.mxu0 %v587
      %v687 = vpop.f32.mrf.mxu0
      %v688 = vadd.f32 0.0, %v687
      %v689 = vpop.f32.mrf.mxu0
      %v690 = vadd.f32 0.0, %v689
      %691 = vdwg.mxu0
      %vm692 = vcmask 64512
      %693 = vst.msk [vmem:[#allocation4] sm:$0xff] %vm692, %v603
      %694 = vst.msk [vmem:[#allocation4 + $0x8] sm:$0xff] %vm692, %v605
      %695 = vst.msk [vmem:[#allocation4 + $0x10] sm:$0xff] %vm692, %v608
      %696 = vst.msk [vmem:[#allocation4 + $0x18] sm:$0xff] %vm692, %v610
      %697 = vst.msk [vmem:[#allocation4 + $0x20] sm:$0xff] %vm692, %v613
      %698 = vst.msk [vmem:[#allocation4 + $0x28] sm:$0xff] %vm692, %v615
      %699 = vst.msk [vmem:[#allocation4 + $0x30] sm:$0xff] %vm692, %v618
      %700 = vst.msk [vmem:[#allocation4 + $0x38] sm:$0xff] %vm692, %v620
      %701 = vst.msk [vmem:[#allocation4 + $0x40] sm:$0xff] %vm692, %v623
      %702 = vst.msk [vmem:[#allocation4 + $0x48] sm:$0xff] %vm692, %v625
      %703 = vst.msk [vmem:[#allocation4 + $0x50] sm:$0xff] %vm692, %v628
      %704 = vst.msk [vmem:[#allocation4 + $0x58] sm:$0xff] %vm692, %v630
      %705 = vst.msk [vmem:[#allocation4 + $0x60] sm:$0xff] %vm692, %v633
      %706 = vst.msk [vmem:[#allocation4 + $0x68] sm:$0xff] %vm692, %v635
      %707 = vst.msk [vmem:[#allocation4 + $0x70] sm:$0xff] %vm692, %v638
      %708 = vst.msk [vmem:[#allocation4 + $0x78] sm:$0xff] %vm692, %v640
      %709 = vst.msk [vmem:[#allocation4 + $0x80] sm:$0xff] %vm692, %v643
      %710 = vst.msk [vmem:[#allocation4 + $0x88] sm:$0xff] %vm692, %v645
      %711 = vst.msk [vmem:[#allocation4 + $0x90] sm:$0xff] %vm692, %v648
      %712 = vst.msk [vmem:[#allocation4 + $0x98] sm:$0xff] %vm692, %v650
      %713 = vst.msk [vmem:[#allocation4 + $0xa0] sm:$0xff] %vm692, %v653
      %714 = vst.msk [vmem:[#allocation4 + $0xa8] sm:$0xff] %vm692, %v655
      %715 = vst.msk [vmem:[#allocation4 + $0xb0] sm:$0xff] %vm692, %v658
      %716 = vst.msk [vmem:[#allocation4 + $0xb8] sm:$0xff] %vm692, %v660
      %717 = vst.msk [vmem:[#allocation4 + $0xc0] sm:$0xff] %vm692, %v663
      %718 = vst.msk [vmem:[#allocation4 + $0xc8] sm:$0xff] %vm692, %v665
      %719 = vst.msk [vmem:[#allocation4 + $0xd0] sm:$0xff] %vm692, %v668
      %720 = vst.msk [vmem:[#allocation4 + $0xd8] sm:$0xff] %vm692, %v670
      %721 = vst.msk [vmem:[#allocation4 + $0xe0] sm:$0xff] %vm692, %v673
      %722 = vst.msk [vmem:[#allocation4 + $0xe8] sm:$0xff] %vm692, %v675
      %723 = vst.msk [vmem:[#allocation4 + $0xf0] sm:$0xff] %vm692, %v678
      %724 = vst.msk [vmem:[#allocation4 + $0xf8] sm:$0xff] %vm692, %v680
      %725 = vst.msk [vmem:[#allocation4 + $0x100] sm:$0xff] %vm692, %v683
      %726 = vst.msk [vmem:[#allocation4 + $0x108] sm:$0xff] %vm692, %v685
      %727 = vst.msk [vmem:[#allocation4 + $0x110] sm:$0xff] %vm692, %v688
      %728 = vst.msk [vmem:[#allocation4 + $0x118] sm:$0xff] %vm692, %v690
      %v729 = vld [vmem:[#allocation4] sm:$0xff]
      %v730 = vld [vmem:[#allocation4 + $0x8] sm:$0xff]
      %v731 = vld [vmem:[#allocation4 + $0x10] sm:$0xff]
      %v732 = vld [vmem:[#allocation4 + $0x18] sm:$0xff]
      %v733 = vld [vmem:[#allocation4 + $0x20] sm:$0xff]
      %v734 = vld [vmem:[#allocation4 + $0x28] sm:$0xff]
      %v735 = vld [vmem:[#allocation4 + $0x30] sm:$0xff]
      %v736 = vld [vmem:[#allocation4 + $0x38] sm:$0xff]
      %v737 = vld [vmem:[#allocation4 + $0x40] sm:$0xff]
      %v738 = vld [vmem:[#allocation4 + $0x48] sm:$0xff]
      %v739 = vld [vmem:[#allocation4 + $0x50] sm:$0xff]
      %v740 = vld [vmem:[#allocation4 + $0x58] sm:$0xff]
      %v741 = vld [vmem:[#allocation4 + $0x60] sm:$0xff]
      %v742 = vld [vmem:[#allocation4 + $0x68] sm:$0xff]
      %v743 = vld [vmem:[#allocation4 + $0x70] sm:$0xff]
      %v744 = vld [vmem:[#allocation4 + $0x78] sm:$0xff]
      %v745 = vld [vmem:[#allocation4 + $0x80] sm:$0xff]
      %v746 = vld [vmem:[#allocation4 + $0x88] sm:$0xff]
      %v747 = vld [vmem:[#allocation4 + $0x90] sm:$0xff]
      %v748 = vld [vmem:[#allocation4 + $0x98] sm:$0xff]
      %v749 = vld [vmem:[#allocation4 + $0xa0] sm:$0xff]
      %v750 = vld [vmem:[#allocation4 + $0xa8] sm:$0xff]
      %v751 = vld [vmem:[#allocation4 + $0xb0] sm:$0xff]
      %v752 = vld [vmem:[#allocation4 + $0xb8] sm:$0xff]
      %v753 = vld [vmem:[#allocation4 + $0xc0] sm:$0xff]
      %v754 = vld [vmem:[#allocation4 + $0xc8] sm:$0xff]
      %v755 = vld [vmem:[#allocation4 + $0xd0] sm:$0xff]
      %v756 = vld [vmem:[#allocation4 + $0xd8] sm:$0xff]
      %v757 = vld [vmem:[#allocation4 + $0xe0] sm:$0xff]
      %v758 = vld [vmem:[#allocation4 + $0xe8] sm:$0xff]
      %v759 = vld [vmem:[#allocation4 + $0xf0] sm:$0xff]
      %v760 = vld [vmem:[#allocation4 + $0xf8] sm:$0xff]
      %v761 = vld [vmem:[#allocation4 + $0x100] sm:$0xff]
      %v762 = vld [vmem:[#allocation4 + $0x108] sm:$0xff]
      %v763 = vld [vmem:[#allocation4 + $0x110] sm:$0xff]
      %v764 = vld [vmem:[#allocation4 + $0x118] sm:$0xff]
      %v765 = vld [vmem:[#allocation2] sm:$0xf]
      %v766 = vld [vmem:[#allocation2 + $0x4] sm:$0xf]
      %v767 = vld [vmem:[#allocation2 + $0x8] sm:$0xf]
      %v768 = vld [vmem:[#allocation2 + $0xc] sm:$0xf]
      %v769 = vld [vmem:[#allocation2 + $0x10] sm:$0xf]
      %v770 = vld [vmem:[#allocation2 + $0x14] sm:$0xf]
      %v771 = vld [vmem:[#allocation2 + $0x18] sm:$0xf]
      %v772 = vld [vmem:[#allocation2 + $0x1c] sm:$0xf]
      %v773 = vld [vmem:[#allocation2 + $0x20] sm:$0xf]
      %v774 = vld [vmem:[#allocation2 + $0x24] sm:$0xf]
      %v775 = vld [vmem:[#allocation2 + $0x28] sm:$0xf]
      %v776 = vld [vmem:[#allocation2 + $0x2c] sm:$0xf]
      %v777 = vld [vmem:[#allocation2 + $0x30] sm:$0xf]
      %v778 = vld [vmem:[#allocation2 + $0x34] sm:$0xf]
      %v779 = vld [vmem:[#allocation2 + $0x38] sm:$0xf]
      %v780 = vld [vmem:[#allocation2 + $0x3c] sm:$0xf]
      %v781 = vld [vmem:[#allocation2 + $0x40] sm:$0xf]
      %v782 = vld [vmem:[#allocation2 + $0x44] sm:$0xf]
      %v783 = vld [vmem:[#allocation2 + $0x48] sm:$0xf]
      %v784 = vld [vmem:[#allocation2 + $0x4c] sm:$0xf]
      %v785 = vld [vmem:[#allocation2 + $0x50] sm:$0xf]
      %v786 = vld [vmem:[#allocation2 + $0x54] sm:$0xf]
      %v787 = vld [vmem:[#allocation2 + $0x58] sm:$0xf]
      %v788 = vld [vmem:[#allocation2 + $0x5c] sm:$0xf]
      %v789 = vld [vmem:[#allocation2 + $0x60] sm:$0xf]
      %v790 = vld [vmem:[#allocation2 + $0x64] sm:$0xf]
      %v791 = vld [vmem:[#allocation2 + $0x68] sm:$0xf]
      %v792 = vld [vmem:[#allocation2 + $0x6c] sm:$0xf]
      %v793 = vld [vmem:[#allocation2 + $0x70] sm:$0xf]
      %v794 = vld [vmem:[#allocation2 + $0x74] sm:$0xf]
      %v795 = vld [vmem:[#allocation2 + $0x78] sm:$0xf]
      %v796 = vld [vmem:[#allocation2 + $0x7c] sm:$0xf]
      %v797 = vld [vmem:[#allocation2 + $0x80] sm:$0xf]
      %v798 = vld [vmem:[#allocation2 + $0x84] sm:$0xf]
      %v799 = vld [vmem:[#allocation2 + $0x88] sm:$0xf]
      %v800 = vld [vmem:[#allocation2 + $0x8c] sm:$0xf]
      %v801 = vld [vmem:[#allocation2 + $0x90] sm:$0x1]
      %s802 = scalar_lea.vmem %s2, 2
      %v803 = vld [vmem:[%s802] sm:$0x3]
      %v841 = vunpack.c.l.b16 %v765
      %v842 = vunpack.c.l.b16 %v766
      %v843 = vunpack.c.l.b16 %v767
      %v844 = vunpack.c.l.b16 %v768
      %v845 = vunpack.c.l.b16 %v769
      %v846 = vunpack.c.l.b16 %v770
      %v847 = vunpack.c.l.b16 %v771
      %v848 = vunpack.c.l.b16 %v772
      %v849 = vunpack.c.l.b16 %v773
      %v850 = vunpack.c.l.b16 %v774
      %v851 = vunpack.c.l.b16 %v775
      %v852 = vunpack.c.l.b16 %v776
      %v853 = vunpack.c.l.b16 %v777
      %v854 = vunpack.c.l.b16 %v778
      %v855 = vunpack.c.l.b16 %v779
      %v856 = vunpack.c.l.b16 %v780
      %v857 = vunpack.c.l.b16 %v781
      %v858 = vunpack.c.l.b16 %v782
      %v859 = vunpack.c.l.b16 %v783
      %v860 = vunpack.c.l.b16 %v784
      %v861 = vunpack.c.l.b16 %v785
      %v862 = vunpack.c.l.b16 %v786
      %v863 = vunpack.c.l.b16 %v787
      %v864 = vunpack.c.l.b16 %v788
      %v865 = vunpack.c.l.b16 %v789
      %v866 = vunpack.c.l.b16 %v790
      %v867 = vunpack.c.l.b16 %v791
      %v868 = vunpack.c.l.b16 %v792
      %v869 = vunpack.c.l.b16 %v793
      %v870 = vunpack.c.l.b16 %v794
      %v871 = vunpack.c.l.b16 %v795
      %v872 = vunpack.c.l.b16 %v796
      %v873 = vunpack.c.l.b16 %v797
      %v874 = vunpack.c.l.b16 %v798
      %v875 = vunpack.c.l.b16 %v799
      %v876 = vunpack.c.l.b16 %v800
      %v877 = vunpack.c.l.b16 %v801
      %v878 = vpack.c.b16 %v842, %v841
      %v879 = vpack.c.b16 %v844, %v843
      %v880 = vpack.c.b16 %v846, %v845
      %v881 = vpack.c.b16 %v848, %v847
      %v882 = vpack.c.b16 %v850, %v849
      %v883 = vpack.c.b16 %v852, %v851
      %v884 = vpack.c.b16 %v854, %v853
      %v885 = vpack.c.b16 %v856, %v855
      %v886 = vpack.c.b16 %v858, %v857
      %v887 = vpack.c.b16 %v860, %v859
      %v888 = vpack.c.b16 %v862, %v861
      %v889 = vpack.c.b16 %v864, %v863
      %v890 = vpack.c.b16 %v866, %v865
      %v891 = vpack.c.b16 %v868, %v867
      %v892 = vpack.c.b16 %v870, %v869
      %v893 = vpack.c.b16 %v872, %v871
      %v894 = vpack.c.b16 %v874, %v873
      %v895 = vpack.c.b16 %v876, %v875
      %v896 = vpack.c.b16 %v877, %v877
      %vm897 = vsmask.f32 7424
      %v899 = vshrl.u32 %v878, 16
      %v901 = vshll.u32 %v878, 16
      %v903 = vrot.slane %v901, 1
      %v904 = vor.u32 %v899, %v903
      %v906 = vshll.u32 %v879, 16
      %v908 = vrot.slane %v906, 1
      %v909 = vsel %vm897, %v904, %v908
      %v910 = vshrl.u32 %v879, 16
      %v912 = vor.u32 %v910, %v908
      %v914 = vshll.u32 %v880, 16
      %v916 = vrot.slane %v914, 1
      %v917 = vsel %vm897, %v912, %v916
      %v918 = vshrl.u32 %v880, 16
      %v920 = vor.u32 %v918, %v916
      %v922 = vshll.u32 %v881, 16
      %v924 = vrot.slane %v922, 1
      %v925 = vsel %vm897, %v920, %v924
      %v926 = vshrl.u32 %v881, 16
      %v928 = vor.u32 %v926, %v924
      %v930 = vshll.u32 %v882, 16
      %v932 = vrot.slane %v930, 1
      %v933 = vsel %vm897, %v928, %v932
      %v934 = vshrl.u32 %v882, 16
      %v936 = vor.u32 %v934, %v932
      %v938 = vshll.u32 %v883, 16
      %v940 = vrot.slane %v938, 1
      %v941 = vsel %vm897, %v936, %v940
      %v942 = vshrl.u32 %v883, 16
      %v944 = vor.u32 %v942, %v940
      %v946 = vshll.u32 %v884, 16
      %v948 = vrot.slane %v946, 1
      %v949 = vsel %vm897, %v944, %v948
      %v950 = vshrl.u32 %v884, 16
      %v952 = vor.u32 %v950, %v948
      %v954 = vshll.u32 %v885, 16
      %v956 = vrot.slane %v954, 1
      %v957 = vsel %vm897, %v952, %v956
      %v958 = vshrl.u32 %v885, 16
      %v960 = vor.u32 %v958, %v956
      %v962 = vshll.u32 %v886, 16
      %v964 = vrot.slane %v962, 1
      %v965 = vsel %vm897, %v960, %v964
      %v966 = vshrl.u32 %v886, 16
      %v968 = vor.u32 %v966, %v964
      %v970 = vshll.u32 %v887, 16
      %v972 = vrot.slane %v970, 1
      %v973 = vsel %vm897, %v968, %v972
      %v974 = vshrl.u32 %v887, 16
      %v976 = vor.u32 %v974, %v972
      %v978 = vshll.u32 %v888, 16
      %v980 = vrot.slane %v978, 1
      %v981 = vsel %vm897, %v976, %v980
      %v982 = vshrl.u32 %v888, 16
      %v984 = vor.u32 %v982, %v980
      %v986 = vshll.u32 %v889, 16
      %v988 = vrot.slane %v986, 1
      %v989 = vsel %vm897, %v984, %v988
      %v990 = vshrl.u32 %v889, 16
      %v992 = vor.u32 %v990, %v988
      %v994 = vshll.u32 %v890, 16
      %v996 = vrot.slane %v994, 1
      %v997 = vsel %vm897, %v992, %v996
      %v998 = vshrl.u32 %v890, 16
      %v1000 = vor.u32 %v998, %v996
      %v1002 = vshll.u32 %v891, 16
      %v1004 = vrot.slane %v1002, 1
      %v1005 = vsel %vm897, %v1000, %v1004
      %v1006 = vshrl.u32 %v891, 16
      %v1008 = vor.u32 %v1006, %v1004
      %v1010 = vshll.u32 %v892, 16
      %v1012 = vrot.slane %v1010, 1
      %v1013 = vsel %vm897, %v1008, %v1012
      %v1014 = vshrl.u32 %v892, 16
      %v1016 = vor.u32 %v1014, %v1012
      %v1018 = vshll.u32 %v893, 16
      %v1020 = vrot.slane %v1018, 1
      %v1021 = vsel %vm897, %v1016, %v1020
      %v1022 = vshrl.u32 %v893, 16
      %v1024 = vor.u32 %v1022, %v1020
      %v1026 = vshll.u32 %v894, 16
      %v1028 = vrot.slane %v1026, 1
      %v1029 = vsel %vm897, %v1024, %v1028
      %v1030 = vshrl.u32 %v894, 16
      %v1032 = vor.u32 %v1030, %v1028
      %v1034 = vshll.u32 %v895, 16
      %v1036 = vrot.slane %v1034, 1
      %v1037 = vsel %vm897, %v1032, %v1036
      %v1038 = vshrl.u32 %v895, 16
      %v1040 = vor.u32 %v1038, %v1036
      %v1042 = vshll.u32 %v896, 16
      %v1044 = vrot.slane %v1042, 1
      %v1045 = vsel %vm897, %v1040, %v1044
      %v1047 = vsel %vm534, %v909, 0
      %v1050 = vsel %vm534, %v917, 0
      %v1053 = vsel %vm534, %v925, 0
      %v1056 = vsel %vm534, %v933, 0
      %v1059 = vsel %vm534, %v941, 0
      %v1062 = vsel %vm534, %v949, 0
      %v1065 = vsel %vm534, %v957, 0
      %v1068 = vsel %vm534, %v965, 0
      %v1071 = vsel %vm534, %v973, 0
      %v1074 = vsel %vm534, %v981, 0
      %v1077 = vsel %vm534, %v989, 0
      %v1080 = vsel %vm534, %v997, 0
      %v1083 = vsel %vm534, %v1005, 0
      %v1086 = vsel %vm534, %v1013, 0
      %v1089 = vsel %vm534, %v1021, 0
      %v1092 = vsel %vm534, %v1029, 0
      %v1095 = vsel %vm534, %v1037, 0
      %v1098 = vsel %vm534, %v1045, 0
      %v1101 = vsel %vm589, %v803, 0
      %1103 = vmatpush.bf16.msra.mxu0 0
      %1104 = vmatpush.bf16.msra.mxu0 0
      %1105 = vmatpush.bf16.msra.mxu0 0
      %1106 = vmatpush.bf16.msra.mxu0 0
      %1107 = vmatpush.bf16.msra.mxu0 0
      %1108 = vmatpush.bf16.msra.mxu0 0
      %1109 = vmatpush.bf16.msra.mxu0 0
      %1110 = vmatpush.bf16.msra.mxu0 %v1101
      %1111 = vmatmul.bf16.gmra.mxu0 %v1047
      %v1112 = vpop.f32.mrf.mxu0
      %v1113 = vadd.f32 0.0, %v1112
      %v1114 = vpop.f32.mrf.mxu0
      %v1115 = vadd.f32 0.0, %v1114
      %1116 = vmatmul.bf16.gmra.mxu0 %v1050
      %v1117 = vpop.f32.mrf.mxu0
      %v1118 = vadd.f32 0.0, %v1117
      %v1119 = vpop.f32.mrf.mxu0
      %v1120 = vadd.f32 0.0, %v1119
      %1121 = vmatmul.bf16.gmra.mxu0 %v1053
      %v1122 = vpop.f32.mrf.mxu0
      %v1123 = vadd.f32 0.0, %v1122
      %v1124 = vpop.f32.mrf.mxu0
      %v1125 = vadd.f32 0.0, %v1124
      %1126 = vmatmul.bf16.gmra.mxu0 %v1056
      %v1127 = vpop.f32.mrf.mxu0
      %v1128 = vadd.f32 0.0, %v1127
      %v1129 = vpop.f32.mrf.mxu0
      %v1130 = vadd.f32 0.0, %v1129
      %1131 = vmatmul.bf16.gmra.mxu0 %v1059
      %v1132 = vpop.f32.mrf.mxu0
      %v1133 = vadd.f32 0.0, %v1132
      %v1134 = vpop.f32.mrf.mxu0
      %v1135 = vadd.f32 0.0, %v1134
      %1136 = vmatmul.bf16.gmra.mxu0 %v1062
      %v1137 = vpop.f32.mrf.mxu0
      %v1138 = vadd.f32 0.0, %v1137
      %v1139 = vpop.f32.mrf.mxu0
      %v1140 = vadd.f32 0.0, %v1139
      %1141 = vmatmul.bf16.gmra.mxu0 %v1065
      %v1142 = vpop.f32.mrf.mxu0
      %v1143 = vadd.f32 0.0, %v1142
      %v1144 = vpop.f32.mrf.mxu0
      %v1145 = vadd.f32 0.0, %v1144
      %1146 = vmatmul.bf16.gmra.mxu0 %v1068
      %v1147 = vpop.f32.mrf.mxu0
      %v1148 = vadd.f32 0.0, %v1147
      %v1149 = vpop.f32.mrf.mxu0
      %v1150 = vadd.f32 0.0, %v1149
      %1151 = vmatmul.bf16.gmra.mxu0 %v1071
      %v1152 = vpop.f32.mrf.mxu0
      %v1153 = vadd.f32 0.0, %v1152
      %v1154 = vpop.f32.mrf.mxu0
      %v1155 = vadd.f32 0.0, %v1154
      %1156 = vmatmul.bf16.gmra.mxu0 %v1074
      %v1157 = vpop.f32.mrf.mxu0
      %v1158 = vadd.f32 0.0, %v1157
      %v1159 = vpop.f32.mrf.mxu0
      %v1160 = vadd.f32 0.0, %v1159
      %1161 = vmatmul.bf16.gmra.mxu0 %v1077
      %v1162 = vpop.f32.mrf.mxu0
      %v1163 = vadd.f32 0.0, %v1162
      %v1164 = vpop.f32.mrf.mxu0
      %v1165 = vadd.f32 0.0, %v1164
      %1166 = vmatmul.bf16.gmra.mxu0 %v1080
      %v1167 = vpop.f32.mrf.mxu0
      %v1168 = vadd.f32 0.0, %v1167
      %v1169 = vpop.f32.mrf.mxu0
      %v1170 = vadd.f32 0.0, %v1169
      %1171 = vmatmul.bf16.gmra.mxu0 %v1083
      %v1172 = vpop.f32.mrf.mxu0
      %v1173 = vadd.f32 0.0, %v1172
      %v1174 = vpop.f32.mrf.mxu0
      %v1175 = vadd.f32 0.0, %v1174
      %1176 = vmatmul.bf16.gmra.mxu0 %v1086
      %v1177 = vpop.f32.mrf.mxu0
      %v1178 = vadd.f32 0.0, %v1177
      %v1179 = vpop.f32.mrf.mxu0
      %v1180 = vadd.f32 0.0, %v1179
      %1181 = vmatmul.bf16.gmra.mxu0 %v1089
      %v1182 = vpop.f32.mrf.mxu0
      %v1183 = vadd.f32 0.0, %v1182
      %v1184 = vpop.f32.mrf.mxu0
      %v1185 = vadd.f32 0.0, %v1184
      %1186 = vmatmul.bf16.gmra.mxu0 %v1092
      %v1187 = vpop.f32.mrf.mxu0
      %v1188 = vadd.f32 0.0, %v1187
      %v1189 = vpop.f32.mrf.mxu0
      %v1190 = vadd.f32 0.0, %v1189
      %1191 = vmatmul.bf16.gmra.mxu0 %v1095
      %v1192 = vpop.f32.mrf.mxu0
      %v1193 = vadd.f32 0.0, %v1192
      %v1194 = vpop.f32.mrf.mxu0
      %v1195 = vadd.f32 0.0, %v1194
      %1196 = vmatmul.bf16.gmra.mxu0 %v1098
      %v1197 = vpop.f32.mrf.mxu0
      %v1198 = vadd.f32 0.0, %v1197
      %v1199 = vpop.f32.mrf.mxu0
      %v1200 = vadd.f32 0.0, %v1199
      %1201 = vdwg.mxu0
      %v1202 = vadd.f32 %v729, %v1113
      %v1203 = vadd.f32 %v730, %v1115
      %v1204 = vadd.f32 %v731, %v1118
      %v1205 = vadd.f32 %v732, %v1120
      %v1206 = vadd.f32 %v733, %v1123
      %v1207 = vadd.f32 %v734, %v1125
      %v1208 = vadd.f32 %v735, %v1128
      %v1209 = vadd.f32 %v736, %v1130
      %v1210 = vadd.f32 %v737, %v1133
      %v1211 = vadd.f32 %v738, %v1135
      %v1212 = vadd.f32 %v739, %v1138
      %v1213 = vadd.f32 %v740, %v1140
      %v1214 = vadd.f32 %v741, %v1143
      %v1215 = vadd.f32 %v742, %v1145
      %v1216 = vadd.f32 %v743, %v1148
      %v1217 = vadd.f32 %v744, %v1150
      %v1218 = vadd.f32 %v745, %v1153
      %v1219 = vadd.f32 %v746, %v1155
      %v1220 = vadd.f32 %v747, %v1158
      %v1221 = vadd.f32 %v748, %v1160
      %v1222 = vadd.f32 %v749, %v1163
      %v1223 = vadd.f32 %v750, %v1165
      %v1224 = vadd.f32 %v751, %v1168
      %v1225 = vadd.f32 %v752, %v1170
      %v1226 = vadd.f32 %v753, %v1173
      %v1227 = vadd.f32 %v754, %v1175
      %v1228 = vadd.f32 %v755, %v1178
      %v1229 = vadd.f32 %v756, %v1180
      %v1230 = vadd.f32 %v757, %v1183
      %v1231 = vadd.f32 %v758, %v1185
      %v1232 = vadd.f32 %v759, %v1188
      %v1233 = vadd.f32 %v760, %v1190
      %v1234 = vadd.f32 %v761, %v1193
      %v1235 = vadd.f32 %v762, %v1195
      %v1236 = vadd.f32 %v763, %v1198
      %v1237 = vadd.f32 %v764, %v1200
      %1238 = vst.msk [vmem:[#allocation4] sm:$0xff] %vm692, %v1202
      %1239 = vst.msk [vmem:[#allocation4 + $0x8] sm:$0xff] %vm692, %v1203
      %1240 = vst.msk [vmem:[#allocation4 + $0x10] sm:$0xff] %vm692, %v1204
      %1241 = vst.msk [vmem:[#allocation4 + $0x18] sm:$0xff] %vm692, %v1205
      %1242 = vst.msk [vmem:[#allocation4 + $0x20] sm:$0xff] %vm692, %v1206
      %1243 = vst.msk [vmem:[#allocation4 + $0x28] sm:$0xff] %vm692, %v1207
      %1244 = vst.msk [vmem:[#allocation4 + $0x30] sm:$0xff] %vm692, %v1208
      %1245 = vst.msk [vmem:[#allocation4 + $0x38] sm:$0xff] %vm692, %v1209
      %1246 = vst.msk [vmem:[#allocation4 + $0x40] sm:$0xff] %vm692, %v1210
      %1247 = vst.msk [vmem:[#allocation4 + $0x48] sm:$0xff] %vm692, %v1211
      %1248 = vst.msk [vmem:[#allocation4 + $0x50] sm:$0xff] %vm692, %v1212
      %1249 = vst.msk [vmem:[#allocation4 + $0x58] sm:$0xff] %vm692, %v1213
      %1250 = vst.msk [vmem:[#allocation4 + $0x60] sm:$0xff] %vm692, %v1214
      %1251 = vst.msk [vmem:[#allocation4 + $0x68] sm:$0xff] %vm692, %v1215
      %1252 = vst.msk [vmem:[#allocation4 + $0x70] sm:$0xff] %vm692, %v1216
      %1253 = vst.msk [vmem:[#allocation4 + $0x78] sm:$0xff] %vm692, %v1217
      %1254 = vst.msk [vmem:[#allocation4 + $0x80] sm:$0xff] %vm692, %v1218
      %1255 = vst.msk [vmem:[#allocation4 + $0x88] sm:$0xff] %vm692, %v1219
      %1256 = vst.msk [vmem:[#allocation4 + $0x90] sm:$0xff] %vm692, %v1220
      %1257 = vst.msk [vmem:[#allocation4 + $0x98] sm:$0xff] %vm692, %v1221
      %1258 = vst.msk [vmem:[#allocation4 + $0xa0] sm:$0xff] %vm692, %v1222
      %1259 = vst.msk [vmem:[#allocation4 + $0xa8] sm:$0xff] %vm692, %v1223
      %1260 = vst.msk [vmem:[#allocation4 + $0xb0] sm:$0xff] %vm692, %v1224
      %1261 = vst.msk [vmem:[#allocation4 + $0xb8] sm:$0xff] %vm692, %v1225
      %1262 = vst.msk [vmem:[#allocation4 + $0xc0] sm:$0xff] %vm692, %v1226
      %1263 = vst.msk [vmem:[#allocation4 + $0xc8] sm:$0xff] %vm692, %v1227
      %1264 = vst.msk [vmem:[#allocation4 + $0xd0] sm:$0xff] %vm692, %v1228
      %1265 = vst.msk [vmem:[#allocation4 + $0xd8] sm:$0xff] %vm692, %v1229
      %1266 = vst.msk [vmem:[#allocation4 + $0xe0] sm:$0xff] %vm692, %v1230
      %1267 = vst.msk [vmem:[#allocation4 + $0xe8] sm:$0xff] %vm692, %v1231
      %1268 = vst.msk [vmem:[#allocation4 + $0xf0] sm:$0xff] %vm692, %v1232
      %1269 = vst.msk [vmem:[#allocation4 + $0xf8] sm:$0xff] %vm692, %v1233
      %1270 = vst.msk [vmem:[#allocation4 + $0x100] sm:$0xff] %vm692, %v1234
      %1271 = vst.msk [vmem:[#allocation4 + $0x108] sm:$0xff] %vm692, %v1235
      %1272 = vst.msk [vmem:[#allocation4 + $0x110] sm:$0xff] %vm692, %v1236
      %1273 = vst.msk [vmem:[#allocation4 + $0x118] sm:$0xff] %vm692, %v1237
      %v1274 = vld [vmem:[#allocation4] sm:$0xff]
      %v1275 = vld [vmem:[#allocation4 + $0x8] sm:$0xff]
      %v1276 = vld [vmem:[#allocation4 + $0x10] sm:$0xff]
      %v1277 = vld [vmem:[#allocation4 + $0x18] sm:$0xff]
      %v1278 = vld [vmem:[#allocation4 + $0x20] sm:$0xff]
      %v1279 = vld [vmem:[#allocation4 + $0x28] sm:$0xff]
      %v1280 = vld [vmem:[#allocation4 + $0x30] sm:$0xff]
      %v1281 = vld [vmem:[#allocation4 + $0x38] sm:$0xff]
      %v1282 = vld [vmem:[#allocation4 + $0x40] sm:$0xff]
      %v1283 = vld [vmem:[#allocation4 + $0x48] sm:$0xff]
      %v1284 = vld [vmem:[#allocation4 + $0x50] sm:$0xff]
      %v1285 = vld [vmem:[#allocation4 + $0x58] sm:$0xff]
      %v1286 = vld [vmem:[#allocation4 + $0x60] sm:$0xff]
      %v1287 = vld [vmem:[#allocation4 + $0x68] sm:$0xff]
      %v1288 = vld [vmem:[#allocation4 + $0x70] sm:$0xff]
      %v1289 = vld [vmem:[#allocation4 + $0x78] sm:$0xff]
      %v1290 = vld [vmem:[#allocation4 + $0x80] sm:$0xff]
      %v1291 = vld [vmem:[#allocation4 + $0x88] sm:$0xff]
      %v1292 = vld [vmem:[#allocation4 + $0x90] sm:$0xff]
      %v1293 = vld [vmem:[#allocation4 + $0x98] sm:$0xff]
      %v1294 = vld [vmem:[#allocation4 + $0xa0] sm:$0xff]
      %v1295 = vld [vmem:[#allocation4 + $0xa8] sm:$0xff]
      %v1296 = vld [vmem:[#allocation4 + $0xb0] sm:$0xff]
      %v1297 = vld [vmem:[#allocation4 + $0xb8] sm:$0xff]
      %v1298 = vld [vmem:[#allocation4 + $0xc0] sm:$0xff]
      %v1299 = vld [vmem:[#allocation4 + $0xc8] sm:$0xff]
      %v1300 = vld [vmem:[#allocation4 + $0xd0] sm:$0xff]
      %v1301 = vld [vmem:[#allocation4 + $0xd8] sm:$0xff]
      %v1302 = vld [vmem:[#allocation4 + $0xe0] sm:$0xff]
      %v1303 = vld [vmem:[#allocation4 + $0xe8] sm:$0xff]
      %v1304 = vld [vmem:[#allocation4 + $0xf0] sm:$0xff]
      %v1305 = vld [vmem:[#allocation4 + $0xf8] sm:$0xff]
      %v1306 = vld [vmem:[#allocation4 + $0x100] sm:$0xff]
      %v1307 = vld [vmem:[#allocation4 + $0x108] sm:$0xff]
      %v1308 = vld [vmem:[#allocation4 + $0x110] sm:$0xff]
      %v1309 = vld [vmem:[#allocation4 + $0x118] sm:$0xff]
      %v1310 = vld [vmem:[#allocation2] sm:$0xe]
      %v1311 = vld [vmem:[#allocation2 + $0x4] sm:$0xf]
      %v1312 = vld [vmem:[#allocation2 + $0x8] sm:$0xf]
      %v1313 = vld [vmem:[#allocation2 + $0xc] sm:$0xf]
      %v1314 = vld [vmem:[#allocation2 + $0x10] sm:$0xf]
      %v1315 = vld [vmem:[#allocation2 + $0x14] sm:$0xf]
      %v1316 = vld [vmem:[#allocation2 + $0x18] sm:$0xf]
      %v1317 = vld [vmem:[#allocation2 + $0x1c] sm:$0xf]
      %v1318 = vld [vmem:[#allocation2 + $0x20] sm:$0xf]
      %v1319 = vld [vmem:[#allocation2 + $0x24] sm:$0xf]
      %v1320 = vld [vmem:[#allocation2 + $0x28] sm:$0xf]
      %v1321 = vld [vmem:[#allocation2 + $0x2c] sm:$0xf]
      %v1322 = vld [vmem:[#allocation2 + $0x30] sm:$0xf]
      %v1323 = vld [vmem:[#allocation2 + $0x34] sm:$0xf]
      %v1324 = vld [vmem:[#allocation2 + $0x38] sm:$0xf]
      %v1325 = vld [vmem:[#allocation2 + $0x3c] sm:$0xf]
      %v1326 = vld [vmem:[#allocation2 + $0x40] sm:$0xf]
      %v1327 = vld [vmem:[#allocation2 + $0x44] sm:$0xf]
      %v1328 = vld [vmem:[#allocation2 + $0x48] sm:$0xf]
      %v1329 = vld [vmem:[#allocation2 + $0x4c] sm:$0xf]
      %v1330 = vld [vmem:[#allocation2 + $0x50] sm:$0xf]
      %v1331 = vld [vmem:[#allocation2 + $0x54] sm:$0xf]
      %v1332 = vld [vmem:[#allocation2 + $0x58] sm:$0xf]
      %v1333 = vld [vmem:[#allocation2 + $0x5c] sm:$0xf]
      %v1334 = vld [vmem:[#allocation2 + $0x60] sm:$0xf]
      %v1335 = vld [vmem:[#allocation2 + $0x64] sm:$0xf]
      %v1336 = vld [vmem:[#allocation2 + $0x68] sm:$0xf]
      %v1337 = vld [vmem:[#allocation2 + $0x6c] sm:$0xf]
      %v1338 = vld [vmem:[#allocation2 + $0x70] sm:$0xf]
      %v1339 = vld [vmem:[#allocation2 + $0x74] sm:$0xf]
      %v1340 = vld [vmem:[#allocation2 + $0x78] sm:$0xf]
      %v1341 = vld [vmem:[#allocation2 + $0x7c] sm:$0xf]
      %v1342 = vld [vmem:[#allocation2 + $0x80] sm:$0xf]
      %v1343 = vld [vmem:[#allocation2 + $0x84] sm:$0xf]
      %v1344 = vld [vmem:[#allocation2 + $0x88] sm:$0xf]
      %v1345 = vld [vmem:[#allocation2 + $0x8c] sm:$0xf]
      %v1346 = vld [vmem:[#allocation2 + $0x90] sm:$0x1]
      %s1347 = scalar_lea.vmem %s2, 4
      %v1348 = vld [vmem:[%s1347] sm:$0x3]
      %v1386 = vunpack.c.l.b16 %v1310
      %v1387 = vunpack.c.l.b16 %v1311
      %v1388 = vunpack.c.l.b16 %v1312
      %v1389 = vunpack.c.l.b16 %v1313
      %v1390 = vunpack.c.l.b16 %v1314
      %v1391 = vunpack.c.l.b16 %v1315
      %v1392 = vunpack.c.l.b16 %v1316
      %v1393 = vunpack.c.l.b16 %v1317
      %v1394 = vunpack.c.l.b16 %v1318
      %v1395 = vunpack.c.l.b16 %v1319
      %v1396 = vunpack.c.l.b16 %v1320
      %v1397 = vunpack.c.l.b16 %v1321
      %v1398 = vunpack.c.l.b16 %v1322
      %v1399 = vunpack.c.l.b16 %v1323
      %v1400 = vunpack.c.l.b16 %v1324
      %v1401 = vunpack.c.l.b16 %v1325
      %v1402 = vunpack.c.l.b16 %v1326
      %v1403 = vunpack.c.l.b16 %v1327
      %v1404 = vunpack.c.l.b16 %v1328
      %v1405 = vunpack.c.l.b16 %v1329
      %v1406 = vunpack.c.l.b16 %v1330
      %v1407 = vunpack.c.l.b16 %v1331
      %v1408 = vunpack.c.l.b16 %v1332
      %v1409 = vunpack.c.l.b16 %v1333
      %v1410 = vunpack.c.l.b16 %v1334
      %v1411 = vunpack.c.l.b16 %v1335
      %v1412 = vunpack.c.l.b16 %v1336
      %v1413 = vunpack.c.l.b16 %v1337
      %v1414 = vunpack.c.l.b16 %v1338
      %v1415 = vunpack.c.l.b16 %v1339
      %v1416 = vunpack.c.l.b16 %v1340
      %v1417 = vunpack.c.l.b16 %v1341
      %v1418 = vunpack.c.l.b16 %v1342
      %v1419 = vunpack.c.l.b16 %v1343
      %v1420 = vunpack.c.l.b16 %v1344
      %v1421 = vunpack.c.l.b16 %v1345
      %v1422 = vunpack.c.l.b16 %v1346
      %v1423 = vpack.c.b16 %v1387, %v1386
      %v1424 = vpack.c.b16 %v1389, %v1388
      %v1425 = vpack.c.b16 %v1391, %v1390
      %v1426 = vpack.c.b16 %v1393, %v1392
      %v1427 = vpack.c.b16 %v1395, %v1394
      %v1428 = vpack.c.b16 %v1397, %v1396
      %v1429 = vpack.c.b16 %v1399, %v1398
      %v1430 = vpack.c.b16 %v1401, %v1400
      %v1431 = vpack.c.b16 %v1403, %v1402
      %v1432 = vpack.c.b16 %v1405, %v1404
      %v1433 = vpack.c.b16 %v1407, %v1406
      %v1434 = vpack.c.b16 %v1409, %v1408
      %v1435 = vpack.c.b16 %v1411, %v1410
      %v1436 = vpack.c.b16 %v1413, %v1412
      %v1437 = vpack.c.b16 %v1415, %v1414
      %v1438 = vpack.c.b16 %v1417, %v1416
      %v1439 = vpack.c.b16 %v1419, %v1418
      %v1440 = vpack.c.b16 %v1421, %v1420
      %v1441 = vpack.c.b16 %v1422, %v1422
      %vm1442 = vcmask 1046528
      %v1443 = vrot.slane %v1423, 1
      %v1444 = vrot.slane %v1424, 1
      %v1445 = vsel %vm1442, %v1443, %v1444
      %v1446 = vrot.slane %v1425, 1
      %v1447 = vsel %vm1442, %v1444, %v1446
      %v1448 = vrot.slane %v1426, 1
      %v1449 = vsel %vm1442, %v1446, %v1448
      %v1450 = vrot.slane %v1427, 1
      %v1451 = vsel %vm1442, %v1448, %v1450
      %v1452 = vrot.slane %v1428, 1
      %v1453 = vsel %vm1442, %v1450, %v1452
      %v1454 = vrot.slane %v1429, 1
      %v1455 = vsel %vm1442, %v1452, %v1454
      %v1456 = vrot.slane %v1430, 1
      %v1457 = vsel %vm1442, %v1454, %v1456
      %v1458 = vrot.slane %v1431, 1
      %v1459 = vsel %vm1442, %v1456, %v1458
      %v1460 = vrot.slane %v1432, 1
      %v1461 = vsel %vm1442, %v1458, %v1460
      %v1462 = vrot.slane %v1433, 1
      %v1463 = vsel %vm1442, %v1460, %v1462
      %v1464 = vrot.slane %v1434, 1
      %v1465 = vsel %vm1442, %v1462, %v1464
      %v1466 = vrot.slane %v1435, 1
      %v1467 = vsel %vm1442, %v1464, %v1466
      %v1468 = vrot.slane %v1436, 1
      %v1469 = vsel %vm1442, %v1466, %v1468
      %v1470 = vrot.slane %v1437, 1
      %v1471 = vsel %vm1442, %v1468, %v1470
      %v1472 = vrot.slane %v1438, 1
      %v1473 = vsel %vm1442, %v1470, %v1472
      %v1474 = vrot.slane %v1439, 1
      %v1475 = vsel %vm1442, %v1472, %v1474
      %v1476 = vrot.slane %v1440, 1
      %v1477 = vsel %vm1442, %v1474, %v1476
      %v1478 = vrot.slane %v1441, 1
      %v1479 = vsel %vm1442, %v1476, %v1478
      %v1481 = vsel %vm534, %v1445, 0
      %v1484 = vsel %vm534, %v1447, 0
      %v1487 = vsel %vm534, %v1449, 0
      %v1490 = vsel %vm534, %v1451, 0
      %v1493 = vsel %vm534, %v1453, 0
      %v1496 = vsel %vm534, %v1455, 0
      %v1499 = vsel %vm534, %v1457, 0
      %v1502 = vsel %vm534, %v1459, 0
      %v1505 = vsel %vm534, %v1461, 0
      %v1508 = vsel %vm534, %v1463, 0
      %v1511 = vsel %vm534, %v1465, 0
      %v1514 = vsel %vm534, %v1467, 0
      %v1517 = vsel %vm534, %v1469, 0
      %v1520 = vsel %vm534, %v1471, 0
      %v1523 = vsel %vm534, %v1473, 0
      %v1526 = vsel %vm534, %v1475, 0
      %v1529 = vsel %vm534, %v1477, 0
      %v1532 = vsel %vm534, %v1479, 0
      %v1535 = vsel %vm589, %v1348, 0
      %1537 = vmatpush.bf16.msra.mxu0 0
      %1538 = vmatpush.bf16.msra.mxu0 0
      %1539 = vmatpush.bf16.msra.mxu0 0
      %1540 = vmatpush.bf16.msra.mxu0 0
      %1541 = vmatpush.bf16.msra.mxu0 0
      %1542 = vmatpush.bf16.msra.mxu0 0
      %1543 = vmatpush.bf16.msra.mxu0 0
      %1544 = vmatpush.bf16.msra.mxu0 %v1535
      %1545 = vmatmul.bf16.gmra.mxu0 %v1481
      %v1546 = vpop.f32.mrf.mxu0
      %v1547 = vadd.f32 0.0, %v1546
      %v1548 = vpop.f32.mrf.mxu0
      %v1549 = vadd.f32 0.0, %v1548
      %1550 = vmatmul.bf16.gmra.mxu0 %v1484
      %v1551 = vpop.f32.mrf.mxu0
      %v1552 = vadd.f32 0.0, %v1551
      %v1553 = vpop.f32.mrf.mxu0
      %v1554 = vadd.f32 0.0, %v1553
      %1555 = vmatmul.bf16.gmra.mxu0 %v1487
      %v1556 = vpop.f32.mrf.mxu0
      %v1557 = vadd.f32 0.0, %v1556
      %v1558 = vpop.f32.mrf.mxu0
      %v1559 = vadd.f32 0.0, %v1558
      %1560 = vmatmul.bf16.gmra.mxu0 %v1490
      %v1561 = vpop.f32.mrf.mxu0
      %v1562 = vadd.f32 0.0, %v1561
      %v1563 = vpop.f32.mrf.mxu0
      %v1564 = vadd.f32 0.0, %v1563
      %1565 = vmatmul.bf16.gmra.mxu0 %v1493
      %v1566 = vpop.f32.mrf.mxu0
      %v1567 = vadd.f32 0.0, %v1566
      %v1568 = vpop.f32.mrf.mxu0
      %v1569 = vadd.f32 0.0, %v1568
      %1570 = vmatmul.bf16.gmra.mxu0 %v1496
      %v1571 = vpop.f32.mrf.mxu0
      %v1572 = vadd.f32 0.0, %v1571
      %v1573 = vpop.f32.mrf.mxu0
      %v1574 = vadd.f32 0.0, %v1573
      %1575 = vmatmul.bf16.gmra.mxu0 %v1499
      %v1576 = vpop.f32.mrf.mxu0
      %v1577 = vadd.f32 0.0, %v1576
      %v1578 = vpop.f32.mrf.mxu0
      %v1579 = vadd.f32 0.0, %v1578
      %1580 = vmatmul.bf16.gmra.mxu0 %v1502
      %v1581 = vpop.f32.mrf.mxu0
      %v1582 = vadd.f32 0.0, %v1581
      %v1583 = vpop.f32.mrf.mxu0
      %v1584 = vadd.f32 0.0, %v1583
      %1585 = vmatmul.bf16.gmra.mxu0 %v1505
      %v1586 = vpop.f32.mrf.mxu0
      %v1587 = vadd.f32 0.0, %v1586
      %v1588 = vpop.f32.mrf.mxu0
      %v1589 = vadd.f32 0.0, %v1588
      %1590 = vmatmul.bf16.gmra.mxu0 %v1508
      %v1591 = vpop.f32.mrf.mxu0
      %v1592 = vadd.f32 0.0, %v1591
      %v1593 = vpop.f32.mrf.mxu0
      %v1594 = vadd.f32 0.0, %v1593
      %1595 = vmatmul.bf16.gmra.mxu0 %v1511
      %v1596 = vpop.f32.mrf.mxu0
      %v1597 = vadd.f32 0.0, %v1596
      %v1598 = vpop.f32.mrf.mxu0
      %v1599 = vadd.f32 0.0, %v1598
      %1600 = vmatmul.bf16.gmra.mxu0 %v1514
      %v1601 = vpop.f32.mrf.mxu0
      %v1602 = vadd.f32 0.0, %v1601
      %v1603 = vpop.f32.mrf.mxu0
      %v1604 = vadd.f32 0.0, %v1603
      %1605 = vmatmul.bf16.gmra.mxu0 %v1517
      %v1606 = vpop.f32.mrf.mxu0
      %v1607 = vadd.f32 0.0, %v1606
      %v1608 = vpop.f32.mrf.mxu0
      %v1609 = vadd.f32 0.0, %v1608
      %1610 = vmatmul.bf16.gmra.mxu0 %v1520
      %v1611 = vpop.f32.mrf.mxu0
      %v1612 = vadd.f32 0.0, %v1611
      %v1613 = vpop.f32.mrf.mxu0
      %v1614 = vadd.f32 0.0, %v1613
      %1615 = vmatmul.bf16.gmra.mxu0 %v1523
      %v1616 = vpop.f32.mrf.mxu0
      %v1617 = vadd.f32 0.0, %v1616
      %v1618 = vpop.f32.mrf.mxu0
      %v1619 = vadd.f32 0.0, %v1618
      %1620 = vmatmul.bf16.gmra.mxu0 %v1526
      %v1621 = vpop.f32.mrf.mxu0
      %v1622 = vadd.f32 0.0, %v1621
      %v1623 = vpop.f32.mrf.mxu0
      %v1624 = vadd.f32 0.0, %v1623
      %1625 = vmatmul.bf16.gmra.mxu0 %v1529
      %v1626 = vpop.f32.mrf.mxu0
      %v1627 = vadd.f32 0.0, %v1626
      %v1628 = vpop.f32.mrf.mxu0
      %v1629 = vadd.f32 0.0, %v1628
      %1630 = vmatmul.bf16.gmra.mxu0 %v1532
      %v1631 = vpop.f32.mrf.mxu0
      %v1632 = vadd.f32 0.0, %v1631
      %v1633 = vpop.f32.mrf.mxu0
      %v1634 = vadd.f32 0.0, %v1633
      %1635 = vdwg.mxu0
      %v1636 = vadd.f32 %v1274, %v1547
      %v1637 = vadd.f32 %v1275, %v1549
      %v1638 = vadd.f32 %v1276, %v1552
      %v1639 = vadd.f32 %v1277, %v1554
      %v1640 = vadd.f32 %v1278, %v1557
      %v1641 = vadd.f32 %v1279, %v1559
      %v1642 = vadd.f32 %v1280, %v1562
      %v1643 = vadd.f32 %v1281, %v1564
      %v1644 = vadd.f32 %v1282, %v1567
      %v1645 = vadd.f32 %v1283, %v1569
      %v1646 = vadd.f32 %v1284, %v1572
      %v1647 = vadd.f32 %v1285, %v1574
      %v1648 = vadd.f32 %v1286, %v1577
      %v1649 = vadd.f32 %v1287, %v1579
      %v1650 = vadd.f32 %v1288, %v1582
      %v1651 = vadd.f32 %v1289, %v1584
      %v1652 = vadd.f32 %v1290, %v1587
      %v1653 = vadd.f32 %v1291, %v1589
      %v1654 = vadd.f32 %v1292, %v1592
      %v1655 = vadd.f32 %v1293, %v1594
      %v1656 = vadd.f32 %v1294, %v1597
      %v1657 = vadd.f32 %v1295, %v1599
      %v1658 = vadd.f32 %v1296, %v1602
      %v1659 = vadd.f32 %v1297, %v1604
      %v1660 = vadd.f32 %v1298, %v1607
      %v1661 = vadd.f32 %v1299, %v1609
      %v1662 = vadd.f32 %v1300, %v1612
      %v1663 = vadd.f32 %v1301, %v1614
      %v1664 = vadd.f32 %v1302, %v1617
      %v1665 = vadd.f32 %v1303, %v1619
      %v1666 = vadd.f32 %v1304, %v1622
      %v1667 = vadd.f32 %v1305, %v1624
      %v1668 = vadd.f32 %v1306, %v1627
      %v1669 = vadd.f32 %v1307, %v1629
      %v1670 = vadd.f32 %v1308, %v1632
      %v1671 = vadd.f32 %v1309, %v1634
      %1672 = vst.msk [vmem:[#allocation4] sm:$0xff] %vm692, %v1636
      %1673 = vst.msk [vmem:[#allocation4 + $0x8] sm:$0xff] %vm692, %v1637
      %1674 = vst.msk [vmem:[#allocation4 + $0x10] sm:$0xff] %vm692, %v1638
      %1675 = vst.msk [vmem:[#allocation4 + $0x18] sm:$0xff] %vm692, %v1639
      %1676 = vst.msk [vmem:[#allocation4 + $0x20] sm:$0xff] %vm692, %v1640
      %1677 = vst.msk [vmem:[#allocation4 + $0x28] sm:$0xff] %vm692, %v1641
      %1678 = vst.msk [vmem:[#allocation4 + $0x30] sm:$0xff] %vm692, %v1642
      %1679 = vst.msk [vmem:[#allocation4 + $0x38] sm:$0xff] %vm692, %v1643
      %1680 = vst.msk [vmem:[#allocation4 + $0x40] sm:$0xff] %vm692, %v1644
      %1681 = vst.msk [vmem:[#allocation4 + $0x48] sm:$0xff] %vm692, %v1645
      %1682 = vst.msk [vmem:[#allocation4 + $0x50] sm:$0xff] %vm692, %v1646
      %1683 = vst.msk [vmem:[#allocation4 + $0x58] sm:$0xff] %vm692, %v1647
      %1684 = vst.msk [vmem:[#allocation4 + $0x60] sm:$0xff] %vm692, %v1648
      %1685 = vst.msk [vmem:[#allocation4 + $0x68] sm:$0xff] %vm692, %v1649
      %1686 = vst.msk [vmem:[#allocation4 + $0x70] sm:$0xff] %vm692, %v1650
      %1687 = vst.msk [vmem:[#allocation4 + $0x78] sm:$0xff] %vm692, %v1651
      %1688 = vst.msk [vmem:[#allocation4 + $0x80] sm:$0xff] %vm692, %v1652
      %1689 = vst.msk [vmem:[#allocation4 + $0x88] sm:$0xff] %vm692, %v1653
      %1690 = vst.msk [vmem:[#allocation4 + $0x90] sm:$0xff] %vm692, %v1654
      %1691 = vst.msk [vmem:[#allocation4 + $0x98] sm:$0xff] %vm692, %v1655
      %1692 = vst.msk [vmem:[#allocation4 + $0xa0] sm:$0xff] %vm692, %v1656
      %1693 = vst.msk [vmem:[#allocation4 + $0xa8] sm:$0xff] %vm692, %v1657
      %1694 = vst.msk [vmem:[#allocation4 + $0xb0] sm:$0xff] %vm692, %v1658
      %1695 = vst.msk [vmem:[#allocation4 + $0xb8] sm:$0xff] %vm692, %v1659
      %1696 = vst.msk [vmem:[#allocation4 + $0xc0] sm:$0xff] %vm692, %v1660
      %1697 = vst.msk [vmem:[#allocation4 + $0xc8] sm:$0xff] %vm692, %v1661
      %1698 = vst.msk [vmem:[#allocation4 + $0xd0] sm:$0xff] %vm692, %v1662
      %1699 = vst.msk [vmem:[#allocation4 + $0xd8] sm:$0xff] %vm692, %v1663
      %1700 = vst.msk [vmem:[#allocation4 + $0xe0] sm:$0xff] %vm692, %v1664
      %1701 = vst.msk [vmem:[#allocation4 + $0xe8] sm:$0xff] %vm692, %v1665
      %1702 = vst.msk [vmem:[#allocation4 + $0xf0] sm:$0xff] %vm692, %v1666
      %1703 = vst.msk [vmem:[#allocation4 + $0xf8] sm:$0xff] %vm692, %v1667
      %1704 = vst.msk [vmem:[#allocation4 + $0x100] sm:$0xff] %vm692, %v1668
      %1705 = vst.msk [vmem:[#allocation4 + $0x108] sm:$0xff] %vm692, %v1669
      %1706 = vst.msk [vmem:[#allocation4 + $0x110] sm:$0xff] %vm692, %v1670
      %1707 = vst.msk [vmem:[#allocation4 + $0x118] sm:$0xff] %vm692, %v1671
      %v1708 = vld [vmem:[#allocation4] sm:$0xff]
      %v1709 = vld [vmem:[#allocation4 + $0x8] sm:$0xff]
      %v1710 = vld [vmem:[#allocation4 + $0x10] sm:$0xff]
      %v1711 = vld [vmem:[#allocation4 + $0x18] sm:$0xff]
      %v1712 = vld [vmem:[#allocation4 + $0x20] sm:$0xff]
      %v1713 = vld [vmem:[#allocation4 + $0x28] sm:$0xff]
      %v1714 = vld [vmem:[#allocation4 + $0x30] sm:$0xff]
      %v1715 = vld [vmem:[#allocation4 + $0x38] sm:$0xff]
      %v1716 = vld [vmem:[#allocation4 + $0x40] sm:$0xff]
      %v1717 = vld [vmem:[#allocation4 + $0x48] sm:$0xff]
      %v1718 = vld [vmem:[#allocation4 + $0x50] sm:$0xff]
      %v1719 = vld [vmem:[#allocation4 + $0x58] sm:$0xff]
      %v1720 = vld [vmem:[#allocation4 + $0x60] sm:$0xff]
      %v1721 = vld [vmem:[#allocation4 + $0x68] sm:$0xff]
      %v1722 = vld [vmem:[#allocation4 + $0x70] sm:$0xff]
      %v1723 = vld [vmem:[#allocation4 + $0x78] sm:$0xff]
      %v1724 = vld [vmem:[#allocation4 + $0x80] sm:$0xff]
      %v1725 = vld [vmem:[#allocation4 + $0x88] sm:$0xff]
      %v1726 = vld [vmem:[#allocation4 + $0x90] sm:$0xff]
      %v1727 = vld [vmem:[#allocation4 + $0x98] sm:$0xff]
      %v1728 = vld [vmem:[#allocation4 + $0xa0] sm:$0xff]
      %v1729 = vld [vmem:[#allocation4 + $0xa8] sm:$0xff]
      %v1730 = vld [vmem:[#allocation4 + $0xb0] sm:$0xff]
      %v1731 = vld [vmem:[#allocation4 + $0xb8] sm:$0xff]
      %v1732 = vld [vmem:[#allocation4 + $0xc0] sm:$0xff]
      %v1733 = vld [vmem:[#allocation4 + $0xc8] sm:$0xff]
      %v1734 = vld [vmem:[#allocation4 + $0xd0] sm:$0xff]
      %v1735 = vld [vmem:[#allocation4 + $0xd8] sm:$0xff]
      %v1736 = vld [vmem:[#allocation4 + $0xe0] sm:$0xff]
      %v1737 = vld [vmem:[#allocation4 + $0xe8] sm:$0xff]
      %v1738 = vld [vmem:[#allocation4 + $0xf0] sm:$0xff]
      %v1739 = vld [vmem:[#allocation4 + $0xf8] sm:$0xff]
      %v1740 = vld [vmem:[#allocation4 + $0x100] sm:$0xff]
      %v1741 = vld [vmem:[#allocation4 + $0x108] sm:$0xff]
      %v1742 = vld [vmem:[#allocation4 + $0x110] sm:$0xff]
      %v1743 = vld [vmem:[#allocation4 + $0x118] sm:$0xff]
      %v1744 = vld [vmem:[#allocation2 + $0x8] sm:$0xe]
      %v1745 = vld [vmem:[#allocation2 + $0xc] sm:$0xf]
      %v1746 = vld [vmem:[#allocation2 + $0x10] sm:$0xf]
      %v1747 = vld [vmem:[#allocation2 + $0x14] sm:$0xf]
      %v1748 = vld [vmem:[#allocation2 + $0x18] sm:$0xf]
      %v1749 = vld [vmem:[#allocation2 + $0x1c] sm:$0xf]
      %v1750 = vld [vmem:[#allocation2 + $0x20] sm:$0xf]
      %v1751 = vld [vmem:[#allocation2 + $0x24] sm:$0xf]
      %v1752 = vld [vmem:[#allocation2 + $0x28] sm:$0xf]
      %v1753 = vld [vmem:[#allocation2 + $0x2c] sm:$0xf]
      %v1754 = vld [vmem:[#allocation2 + $0x30] sm:$0xf]
      %v1755 = vld [vmem:[#allocation2 + $0x34] sm:$0xf]
      %v1756 = vld [vmem:[#allocation2 + $0x38] sm:$0xf]
      %v1757 = vld [vmem:[#allocation2 + $0x3c] sm:$0xf]
      %v1758 = vld [vmem:[#allocation2 + $0x40] sm:$0xf]
      %v1759 = vld [vmem:[#allocation2 + $0x44] sm:$0xf]
      %v1760 = vld [vmem:[#allocation2 + $0x48] sm:$0xf]
      %v1761 = vld [vmem:[#allocation2 + $0x4c] sm:$0xf]
      %v1762 = vld [vmem:[#allocation2 + $0x50] sm:$0xf]
      %v1763 = vld [vmem:[#allocation2 + $0x54] sm:$0xf]
      %v1764 = vld [vmem:[#allocation2 + $0x58] sm:$0xf]
      %v1765 = vld [vmem:[#allocation2 + $0x5c] sm:$0xf]
      %v1766 = vld [vmem:[#allocation2 + $0x60] sm:$0xf]
      %v1767 = vld [vmem:[#allocation2 + $0x64] sm:$0xf]
      %v1768 = vld [vmem:[#allocation2 + $0x68] sm:$0xf]
      %v1769 = vld [vmem:[#allocation2 + $0x6c] sm:$0xf]
      %v1770 = vld [vmem:[#allocation2 + $0x70] sm:$0xf]
      %v1771 = vld [vmem:[#allocation2 + $0x74] sm:$0xf]
      %v1772 = vld [vmem:[#allocation2 + $0x78] sm:$0xf]
      %v1773 = vld [vmem:[#allocation2 + $0x7c] sm:$0xf]
      %v1774 = vld [vmem:[#allocation2 + $0x80] sm:$0xf]
      %v1775 = vld [vmem:[#allocation2 + $0x84] sm:$0xf]
      %v1776 = vld [vmem:[#allocation2 + $0x88] sm:$0xf]
      %v1777 = vld [vmem:[#allocation2 + $0x8c] sm:$0xf]
      %v1778 = vld [vmem:[#allocation2 + $0x90] sm:$0xf]
      %v1779 = vld [vmem:[#allocation2 + $0x94] sm:$0xf]
      %v1780 = vld [vmem:[#allocation2 + $0x98] sm:$0x1]
      %s1781 = scalar_lea.vmem %s2, 6
      %v1782 = vld [vmem:[%s1781] sm:$0x3]
      %v1820 = vunpack.c.l.b16 %v1744
      %v1821 = vunpack.c.l.b16 %v1745
      %v1822 = vunpack.c.l.b16 %v1746
      %v1823 = vunpack.c.l.b16 %v1747
      %v1824 = vunpack.c.l.b16 %v1748
      %v1825 = vunpack.c.l.b16 %v1749
      %v1826 = vunpack.c.l.b16 %v1750
      %v1827 = vunpack.c.l.b16 %v1751
      %v1828 = vunpack.c.l.b16 %v1752
      %v1829 = vunpack.c.l.b16 %v1753
      %v1830 = vunpack.c.l.b16 %v1754
      %v1831 = vunpack.c.l.b16 %v1755
      %v1832 = vunpack.c.l.b16 %v1756
      %v1833 = vunpack.c.l.b16 %v1757
      %v1834 = vunpack.c.l.b16 %v1758
      %v1835 = vunpack.c.l.b16 %v1759
      %v1836 = vunpack.c.l.b16 %v1760
      %v1837 = vunpack.c.l.b16 %v1761
      %v1838 = vunpack.c.l.b16 %v1762
      %v1839 = vunpack.c.l.b16 %v1763
      %v1840 = vunpack.c.l.b16 %v1764
      %v1841 = vunpack.c.l.b16 %v1765
      %v1842 = vunpack.c.l.b16 %v1766
      %v1843 = vunpack.c.l.b16 %v1767
      %v1844 = vunpack.c.l.b16 %v1768
      %v1845 = vunpack.c.l.b16 %v1769
      %v1846 = vunpack.c.l.b16 %v1770
      %v1847 = vunpack.c.l.b16 %v1771
      %v1848 = vunpack.c.l.b16 %v1772
      %v1849 = vunpack.c.l.b16 %v1773
      %v1850 = vunpack.c.l.b16 %v1774
      %v1851 = vunpack.c.l.b16 %v1775
      %v1852 = vunpack.c.l.b16 %v1776
      %v1853 = vunpack.c.l.b16 %v1777
      %v1854 = vunpack.c.l.b16 %v1778
      %v1855 = vunpack.c.l.b16 %v1779
      %v1856 = vunpack.c.l.b16 %v1780
      %v1857 = vpack.c.b16 %v1821, %v1820
      %v1858 = vpack.c.b16 %v1823, %v1822
      %v1859 = vpack.c.b16 %v1825, %v1824
      %v1860 = vpack.c.b16 %v1827, %v1826
      %v1861 = vpack.c.b16 %v1829, %v1828
      %v1862 = vpack.c.b16 %v1831, %v1830
      %v1863 = vpack.c.b16 %v1833, %v1832
      %v1864 = vpack.c.b16 %v1835, %v1834
      %v1865 = vpack.c.b16 %v1837, %v1836
      %v1866 = vpack.c.b16 %v1839, %v1838
      %v1867 = vpack.c.b16 %v1841, %v1840
      %v1868 = vpack.c.b16 %v1843, %v1842
      %v1869 = vpack.c.b16 %v1845, %v1844
      %v1870 = vpack.c.b16 %v1847, %v1846
      %v1871 = vpack.c.b16 %v1849, %v1848
      %v1872 = vpack.c.b16 %v1851, %v1850
      %v1873 = vpack.c.b16 %v1853, %v1852
      %v1874 = vpack.c.b16 %v1855, %v1854
      %v1875 = vpack.c.b16 %v1856, %v1856
      %v1876 = vrot.slane %v1857, 1
      %v1877 = vrot.slane %v1858, 1
      %v1878 = vsel %vm1442, %v1876, %v1877
      %v1879 = vrot.slane %v1859, 1
      %v1880 = vsel %vm1442, %v1877, %v1879
      %v1881 = vrot.slane %v1860, 1
      %v1882 = vsel %vm1442, %v1879, %v1881
      %v1883 = vrot.slane %v1861, 1
      %v1884 = vsel %vm1442, %v1881, %v1883
      %v1885 = vrot.slane %v1862, 1
      %v1886 = vsel %vm1442, %v1883, %v1885
      %v1887 = vrot.slane %v1863, 1
      %v1888 = vsel %vm1442, %v1885, %v1887
      %v1889 = vrot.slane %v1864, 1
      %v1890 = vsel %vm1442, %v1887, %v1889
      %v1891 = vrot.slane %v1865, 1
      %v1892 = vsel %vm1442, %v1889, %v1891
      %v1893 = vrot.slane %v1866, 1
      %v1894 = vsel %vm1442, %v1891, %v1893
      %v1895 = vrot.slane %v1867, 1
      %v1896 = vsel %vm1442, %v1893, %v1895
      %v1897 = vrot.slane %v1868, 1
      %v1898 = vsel %vm1442, %v1895, %v1897
      %v1899 = vrot.slane %v1869, 1
      %v1900 = vsel %vm1442, %v1897, %v1899
      %v1901 = vrot.slane %v1870, 1
      %v1902 = vsel %vm1442, %v1899, %v1901
      %v1903 = vrot.slane %v1871, 1
      %v1904 = vsel %vm1442, %v1901, %v1903
      %v1905 = vrot.slane %v1872, 1
      %v1906 = vsel %vm1442, %v1903, %v1905
      %v1907 = vrot.slane %v1873, 1
      %v1908 = vsel %vm1442, %v1905, %v1907
      %v1909 = vrot.slane %v1874, 1
      %v1910 = vsel %vm1442, %v1907, %v1909
      %v1911 = vrot.slane %v1875, 1
      %v1912 = vsel %vm1442, %v1909, %v1911
      %v1914 = vsel %vm534, %v1878, 0
      %v1917 = vsel %vm534, %v1880, 0
      %v1920 = vsel %vm534, %v1882, 0
      %v1923 = vsel %vm534, %v1884, 0
      %v1926 = vsel %vm534, %v1886, 0
      %v1929 = vsel %vm534, %v1888, 0
      %v1932 = vsel %vm534, %v1890, 0
      %v1935 = vsel %vm534, %v1892, 0
      %v1938 = vsel %vm534, %v1894, 0
      %v1941 = vsel %vm534, %v1896, 0
      %v1944 = vsel %vm534, %v1898, 0
      %v1947 = vsel %vm534, %v1900, 0
      %v1950 = vsel %vm534, %v1902, 0
      %v1953 = vsel %vm534, %v1904, 0
      %v1956 = vsel %vm534, %v1906, 0
      %v1959 = vsel %vm534, %v1908, 0
      %v1962 = vsel %vm534, %v1910, 0
      %v1965 = vsel %vm534, %v1912, 0
      %v1968 = vsel %vm589, %v1782, 0
      %1970 = vmatpush.bf16.msra.mxu0 0
      %1971 = vmatpush.bf16.msra.mxu0 0
      %1972 = vmatpush.bf16.msra.mxu0 0
      %1973 = vmatpush.bf16.msra.mxu0 0
      %1974 = vmatpush.bf16.msra.mxu0 0
      %1975 = vmatpush.bf16.msra.mxu0 0
      %1976 = vmatpush.bf16.msra.mxu0 0
      %1977 = vmatpush.bf16.msra.mxu0 %v1968
      %1978 = vmatmul.bf16.gmra.mxu0 %v1914
      %v1979 = vpop.f32.mrf.mxu0
      %v1980 = vadd.f32 0.0, %v1979
      %v1981 = vpop.f32.mrf.mxu0
      %v1982 = vadd.f32 0.0, %v1981
      %1983 = vmatmul.bf16.gmra.mxu0 %v1917
      %v1984 = vpop.f32.mrf.mxu0
      %v1985 = vadd.f32 0.0, %v1984
      %v1986 = vpop.f32.mrf.mxu0
      %v1987 = vadd.f32 0.0, %v1986
      %1988 = vmatmul.bf16.gmra.mxu0 %v1920
      %v1989 = vpop.f32.mrf.mxu0
      %v1990 = vadd.f32 0.0, %v1989
      %v1991 = vpop.f32.mrf.mxu0
      %v1992 = vadd.f32 0.0, %v1991
      %1993 = vmatmul.bf16.gmra.mxu0 %v1923
      %v1994 = vpop.f32.mrf.mxu0
      %v1995 = vadd.f32 0.0, %v1994
      %v1996 = vpop.f32.mrf.mxu0
      %v1997 = vadd.f32 0.0, %v1996
      %1998 = vmatmul.bf16.gmra.mxu0 %v1926
      %v1999 = vpop.f32.mrf.mxu0
      %v2000 = vadd.f32 0.0, %v1999
      %v2001 = vpop.f32.mrf.mxu0
      %v2002 = vadd.f32 0.0, %v2001
      %2003 = vmatmul.bf16.gmra.mxu0 %v1929
      %v2004 = vpop.f32.mrf.mxu0
      %v2005 = vadd.f32 0.0, %v2004
      %v2006 = vpop.f32.mrf.mxu0
      %v2007 = vadd.f32 0.0, %v2006
      %2008 = vmatmul.bf16.gmra.mxu0 %v1932
      %v2009 = vpop.f32.mrf.mxu0
      %v2010 = vadd.f32 0.0, %v2009
      %v2011 = vpop.f32.mrf.mxu0
      %v2012 = vadd.f32 0.0, %v2011
      %2013 = vmatmul.bf16.gmra.mxu0 %v1935
      %v2014 = vpop.f32.mrf.mxu0
      %v2015 = vadd.f32 0.0, %v2014
      %v2016 = vpop.f32.mrf.mxu0
      %v2017 = vadd.f32 0.0, %v2016
      %2018 = vmatmul.bf16.gmra.mxu0 %v1938
      %v2019 = vpop.f32.mrf.mxu0
      %v2020 = vadd.f32 0.0, %v2019
      %v2021 = vpop.f32.mrf.mxu0
      %v2022 = vadd.f32 0.0, %v2021
      %2023 = vmatmul.bf16.gmra.mxu0 %v1941
      %v2024 = vpop.f32.mrf.mxu0
      %v2025 = vadd.f32 0.0, %v2024
      %v2026 = vpop.f32.mrf.mxu0
      %v2027 = vadd.f32 0.0, %v2026
      %2028 = vmatmul.bf16.gmra.mxu0 %v1944
      %v2029 = vpop.f32.mrf.mxu0
      %v2030 = vadd.f32 0.0, %v2029
      %v2031 = vpop.f32.mrf.mxu0
      %v2032 = vadd.f32 0.0, %v2031
      %2033 = vmatmul.bf16.gmra.mxu0 %v1947
      %v2034 = vpop.f32.mrf.mxu0
      %v2035 = vadd.f32 0.0, %v2034
      %v2036 = vpop.f32.mrf.mxu0
      %v2037 = vadd.f32 0.0, %v2036
      %2038 = vmatmul.bf16.gmra.mxu0 %v1950
      %v2039 = vpop.f32.mrf.mxu0
      %v2040 = vadd.f32 0.0, %v2039
      %v2041 = vpop.f32.mrf.mxu0
      %v2042 = vadd.f32 0.0, %v2041
      %2043 = vmatmul.bf16.gmra.mxu0 %v1953
      %v2044 = vpop.f32.mrf.mxu0
      %v2045 = vadd.f32 0.0, %v2044
      %v2046 = vpop.f32.mrf.mxu0
      %v2047 = vadd.f32 0.0, %v2046
      %2048 = vmatmul.bf16.gmra.mxu0 %v1956
      %v2049 = vpop.f32.mrf.mxu0
      %v2050 = vadd.f32 0.0, %v2049
      %v2051 = vpop.f32.mrf.mxu0
      %v2052 = vadd.f32 0.0, %v2051
      %2053 = vmatmul.bf16.gmra.mxu0 %v1959
      %v2054 = vpop.f32.mrf.mxu0
      %v2055 = vadd.f32 0.0, %v2054
      %v2056 = vpop.f32.mrf.mxu0
      %v2057 = vadd.f32 0.0, %v2056
      %2058 = vmatmul.bf16.gmra.mxu0 %v1962
      %v2059 = vpop.f32.mrf.mxu0
      %v2060 = vadd.f32 0.0, %v2059
      %v2061 = vpop.f32.mrf.mxu0
      %v2062 = vadd.f32 0.0, %v2061
      %2063 = vmatmul.bf16.gmra.mxu0 %v1965
      %v2064 = vpop.f32.mrf.mxu0
      %v2065 = vadd.f32 0.0, %v2064
      %v2066 = vpop.f32.mrf.mxu0
      %v2067 = vadd.f32 0.0, %v2066
      %2068 = vdwg.mxu0
      %v2069 = vadd.f32 %v1708, %v1980
      %v2070 = vadd.f32 %v1709, %v1982
      %v2071 = vadd.f32 %v1710, %v1985
      %v2072 = vadd.f32 %v1711, %v1987
      %v2073 = vadd.f32 %v1712, %v1990
      %v2074 = vadd.f32 %v1713, %v1992
      %v2075 = vadd.f32 %v1714, %v1995
      %v2076 = vadd.f32 %v1715, %v1997
      %v2077 = vadd.f32 %v1716, %v2000
      %v2078 = vadd.f32 %v1717, %v2002
      %v2079 = vadd.f32 %v1718, %v2005
      %v2080 = vadd.f32 %v1719, %v2007
      %v2081 = vadd.f32 %v1720, %v2010
      %v2082 = vadd.f32 %v1721, %v2012
      %v2083 = vadd.f32 %v1722, %v2015
      %v2084 = vadd.f32 %v1723, %v2017
      %v2085 = vadd.f32 %v1724, %v2020
      %v2086 = vadd.f32 %v1725, %v2022
      %v2087 = vadd.f32 %v1726, %v2025
      %v2088 = vadd.f32 %v1727, %v2027
      %v2089 = vadd.f32 %v1728, %v2030
      %v2090 = vadd.f32 %v1729, %v2032
      %v2091 = vadd.f32 %v1730, %v2035
      %v2092 = vadd.f32 %v1731, %v2037
      %v2093 = vadd.f32 %v1732, %v2040
      %v2094 = vadd.f32 %v1733, %v2042
      %v2095 = vadd.f32 %v1734, %v2045
      %v2096 = vadd.f32 %v1735, %v2047
      %v2097 = vadd.f32 %v1736, %v2050
      %v2098 = vadd.f32 %v1737, %v2052
      %v2099 = vadd.f32 %v1738, %v2055
      %v2100 = vadd.f32 %v1739, %v2057
      %v2101 = vadd.f32 %v1740, %v2060
      %v2102 = vadd.f32 %v1741, %v2062
      %v2103 = vadd.f32 %v1742, %v2065
      %v2104 = vadd.f32 %v1743, %v2067
      %2105 = vst.msk [vmem:[#allocation4] sm:$0xff] %vm692, %v2069
      %2106 = vst.msk [vmem:[#allocation4 + $0x8] sm:$0xff] %vm692, %v2070
      %2107 = vst.msk [vmem:[#allocation4 + $0x10] sm:$0xff] %vm692, %v2071
      %2108 = vst.msk [vmem:[#allocation4 + $0x18] sm:$0xff] %vm692, %v2072
      %2109 = vst.msk [vmem:[#allocation4 + $0x20] sm:$0xff] %vm692, %v2073
      %2110 = vst.msk [vmem:[#allocation4 + $0x28] sm:$0xff] %vm692, %v2074
      %2111 = vst.msk [vmem:[#allocation4 + $0x30] sm:$0xff] %vm692, %v2075
      %2112 = vst.msk [vmem:[#allocation4 + $0x38] sm:$0xff] %vm692, %v2076
      %2113 = vst.msk [vmem:[#allocation4 + $0x40] sm:$0xff] %vm692, %v2077
      %2114 = vst.msk [vmem:[#allocation4 + $0x48] sm:$0xff] %vm692, %v2078
      %2115 = vst.msk [vmem:[#allocation4 + $0x50] sm:$0xff] %vm692, %v2079
      %2116 = vst.msk [vmem:[#allocation4 + $0x58] sm:$0xff] %vm692, %v2080
      %2117 = vst.msk [vmem:[#allocation4 + $0x60] sm:$0xff] %vm692, %v2081
      %2118 = vst.msk [vmem:[#allocation4 + $0x68] sm:$0xff] %vm692, %v2082
      %2119 = vst.msk [vmem:[#allocation4 + $0x70] sm:$0xff] %vm692, %v2083
      %2120 = vst.msk [vmem:[#allocation4 + $0x78] sm:$0xff] %vm692, %v2084
      %2121 = vst.msk [vmem:[#allocation4 + $0x80] sm:$0xff] %vm692, %v2085
      %2122 = vst.msk [vmem:[#allocation4 + $0x88] sm:$0xff] %vm692, %v2086
      %2123 = vst.msk [vmem:[#allocation4 + $0x90] sm:$0xff] %vm692, %v2087
      %2124 = vst.msk [vmem:[#allocation4 + $0x98] sm:$0xff] %vm692, %v2088
      %2125 = vst.msk [vmem:[#allocation4 + $0xa0] sm:$0xff] %vm692, %v2089
      %2126 = vst.msk [vmem:[#allocation4 + $0xa8] sm:$0xff] %vm692, %v2090
      %2127 = vst.msk [vmem:[#allocation4 + $0xb0] sm:$0xff] %vm692, %v2091
      %2128 = vst.msk [vmem:[#allocation4 + $0xb8] sm:$0xff] %vm692, %v2092
      %2129 = vst.msk [vmem:[#allocation4 + $0xc0] sm:$0xff] %vm692, %v2093
      %2130 = vst.msk [vmem:[#allocation4 + $0xc8] sm:$0xff] %vm692, %v2094
      %2131 = vst.msk [vmem:[#allocation4 + $0xd0] sm:$0xff] %vm692, %v2095
      %2132 = vst.msk [vmem:[#allocation4 + $0xd8] sm:$0xff] %vm692, %v2096
      %2133 = vst.msk [vmem:[#allocation4 + $0xe0] sm:$0xff] %vm692, %v2097
      %2134 = vst.msk [vmem:[#allocation4 + $0xe8] sm:$0xff] %vm692, %v2098
      %2135 = vst.msk [vmem:[#allocation4 + $0xf0] sm:$0xff] %vm692, %v2099
      %2136 = vst.msk [vmem:[#allocation4 + $0xf8] sm:$0xff] %vm692, %v2100
      %2137 = vst.msk [vmem:[#allocation4 + $0x100] sm:$0xff] %vm692, %v2101
      %2138 = vst.msk [vmem:[#allocation4 + $0x108] sm:$0xff] %vm692, %v2102
      %2139 = vst.msk [vmem:[#allocation4 + $0x110] sm:$0xff] %vm692, %v2103
      %2140 = vst.msk [vmem:[#allocation4 + $0x118] sm:$0xff] %vm692, %v2104
      %v2141 = vld [vmem:[#allocation4] sm:$0xff]
      %v2142 = vld [vmem:[#allocation4 + $0x8] sm:$0xff]
      %v2143 = vld [vmem:[#allocation4 + $0x10] sm:$0xff]
      %v2144 = vld [vmem:[#allocation4 + $0x18] sm:$0xff]
      %v2145 = vld [vmem:[#allocation4 + $0x20] sm:$0xff]
      %v2146 = vld [vmem:[#allocation4 + $0x28] sm:$0xff]
      %v2147 = vld [vmem:[#allocation4 + $0x30] sm:$0xff]
      %v2148 = vld [vmem:[#allocation4 + $0x38] sm:$0xff]
      %v2149 = vld [vmem:[#allocation4 + $0x40] sm:$0xff]
      %v2150 = vld [vmem:[#allocation4 + $0x48] sm:$0xff]
      %v2151 = vld [vmem:[#allocation4 + $0x50] sm:$0xff]
      %v2152 = vld [vmem:[#allocation4 + $0x58] sm:$0xff]
      %v2153 = vld [vmem:[#allocation4 + $0x60] sm:$0xff]
      %v2154 = vld [vmem:[#allocation4 + $0x68] sm:$0xff]
      %v2155 = vld [vmem:[#allocation4 + $0x70] sm:$0xff]
      %v2156 = vld [vmem:[#allocation4 + $0x78] sm:$0xff]
      %v2157 = vld [vmem:[#allocation4 + $0x80] sm:$0xff]
      %v2158 = vld [vmem:[#allocation4 + $0x88] sm:$0xff]
      %v2159 = vld [vmem:[#allocation4 + $0x90] sm:$0xff]
      %v2160 = vld [vmem:[#allocation4 + $0x98] sm:$0xff]
      %v2161 = vld [vmem:[#allocation4 + $0xa0] sm:$0xff]
      %v2162 = vld [vmem:[#allocation4 + $0xa8] sm:$0xff]
      %v2163 = vld [vmem:[#allocation4 + $0xb0] sm:$0xff]
      %v2164 = vld [vmem:[#allocation4 + $0xb8] sm:$0xff]
      %v2165 = vld [vmem:[#allocation4 + $0xc0] sm:$0xff]
      %v2166 = vld [vmem:[#allocation4 + $0xc8] sm:$0xff]
      %v2167 = vld [vmem:[#allocation4 + $0xd0] sm:$0xff]
      %v2168 = vld [vmem:[#allocation4 + $0xd8] sm:$0xff]
      %v2169 = vld [vmem:[#allocation4 + $0xe0] sm:$0xff]
      %v2170 = vld [vmem:[#allocation4 + $0xe8] sm:$0xff]
      %v2171 = vld [vmem:[#allocation4 + $0xf0] sm:$0xff]
      %v2172 = vld [vmem:[#allocation4 + $0xf8] sm:$0xff]
      %v2173 = vld [vmem:[#allocation4 + $0x100] sm:$0xff]
      %v2174 = vld [vmem:[#allocation4 + $0x108] sm:$0xff]
      %v2175 = vld [vmem:[#allocation4 + $0x110] sm:$0xff]
      %v2176 = vld [vmem:[#allocation4 + $0x118] sm:$0xff]
      %v2177 = vld [vmem:[#allocation2 + $0x8] sm:$0xe]
      %v2178 = vld [vmem:[#allocation2 + $0xc] sm:$0xf]
      %v2179 = vld [vmem:[#allocation2 + $0x10] sm:$0xf]
      %v2180 = vld [vmem:[#allocation2 + $0x14] sm:$0xf]
      %v2181 = vld [vmem:[#allocation2 + $0x18] sm:$0xf]
      %v2182 = vld [vmem:[#allocation2 + $0x1c] sm:$0xf]
      %v2183 = vld [vmem:[#allocation2 + $0x20] sm:$0xf]
      %v2184 = vld [vmem:[#allocation2 + $0x24] sm:$0xf]
      %v2185 = vld [vmem:[#allocation2 + $0x28] sm:$0xf]
      %v2186 = vld [vmem:[#allocation2 + $0x2c] sm:$0xf]
      %v2187 = vld [vmem:[#allocation2 + $0x30] sm:$0xf]
      %v2188 = vld [vmem:[#allocation2 + $0x34] sm:$0xf]
      %v2189 = vld [vmem:[#allocation2 + $0x38] sm:$0xf]
      %v2190 = vld [vmem:[#allocation2 + $0x3c] sm:$0xf]
      %v2191 = vld [vmem:[#allocation2 + $0x40] sm:$0xf]
      %v2192 = vld [vmem:[#allocation2 + $0x44] sm:$0xf]
      %v2193 = vld [vmem:[#allocation2 + $0x48] sm:$0xf]
      %v2194 = vld [vmem:[#allocation2 + $0x4c] sm:$0xf]
      %v2195 = vld [vmem:[#allocation2 + $0x50] sm:$0xf]
      %v2196 = vld [vmem:[#allocation2 + $0x54] sm:$0xf]
      %v2197 = vld [vmem:[#allocation2 + $0x58] sm:$0xf]
      %v2198 = vld [vmem:[#allocation2 + $0x5c] sm:$0xf]
      %v2199 = vld [vmem:[#allocation2 + $0x60] sm:$0xf]
      %v2200 = vld [vmem:[#allocation2 + $0x64] sm:$0xf]
      %v2201 = vld [vmem:[#allocation2 + $0x68] sm:$0xf]
      %v2202 = vld [vmem:[#allocation2 + $0x6c] sm:$0xf]
      %v2203 = vld [vmem:[#allocation2 + $0x70] sm:$0xf]
      %v2204 = vld [vmem:[#allocation2 + $0x74] sm:$0xf]
      %v2205 = vld [vmem:[#allocation2 + $0x78] sm:$0xf]
      %v2206 = vld [vmem:[#allocation2 + $0x7c] sm:$0xf]
      %v2207 = vld [vmem:[#allocation2 + $0x80] sm:$0xf]
      %v2208 = vld [vmem:[#allocation2 + $0x84] sm:$0xf]
      %v2209 = vld [vmem:[#allocation2 + $0x88] sm:$0xf]
      %v2210 = vld [vmem:[#allocation2 + $0x8c] sm:$0xf]
      %v2211 = vld [vmem:[#allocation2 + $0x90] sm:$0xf]
      %v2212 = vld [vmem:[#allocation2 + $0x94] sm:$0xf]
      %v2213 = vld [vmem:[#allocation2 + $0x98] sm:$0x3]
      %s2214 = scalar_lea.vmem %s2, 8
      %v2215 = vld [vmem:[%s2214] sm:$0x3]
      %v2253 = vunpack.c.l.b16 %v2177
      %v2254 = vunpack.c.l.b16 %v2178
      %v2255 = vunpack.c.l.b16 %v2179
      %v2256 = vunpack.c.l.b16 %v2180
      %v2257 = vunpack.c.l.b16 %v2181
      %v2258 = vunpack.c.l.b16 %v2182
      %v2259 = vunpack.c.l.b16 %v2183
      %v2260 = vunpack.c.l.b16 %v2184
      %v2261 = vunpack.c.l.b16 %v2185
      %v2262 = vunpack.c.l.b16 %v2186
      %v2263 = vunpack.c.l.b16 %v2187
      %v2264 = vunpack.c.l.b16 %v2188
      %v2265 = vunpack.c.l.b16 %v2189
      %v2266 = vunpack.c.l.b16 %v2190
      %v2267 = vunpack.c.l.b16 %v2191
      %v2268 = vunpack.c.l.b16 %v2192
      %v2269 = vunpack.c.l.b16 %v2193
      %v2270 = vunpack.c.l.b16 %v2194
      %v2271 = vunpack.c.l.b16 %v2195
      %v2272 = vunpack.c.l.b16 %v2196
      %v2273 = vunpack.c.l.b16 %v2197
      %v2274 = vunpack.c.l.b16 %v2198
      %v2275 = vunpack.c.l.b16 %v2199
      %v2276 = vunpack.c.l.b16 %v2200
      %v2277 = vunpack.c.l.b16 %v2201
      %v2278 = vunpack.c.l.b16 %v2202
      %v2279 = vunpack.c.l.b16 %v2203
      %v2280 = vunpack.c.l.b16 %v2204
      %v2281 = vunpack.c.l.b16 %v2205
      %v2282 = vunpack.c.l.b16 %v2206
      %v2283 = vunpack.c.l.b16 %v2207
      %v2284 = vunpack.c.l.b16 %v2208
      %v2285 = vunpack.c.l.b16 %v2209
      %v2286 = vunpack.c.l.b16 %v2210
      %v2287 = vunpack.c.l.b16 %v2211
      %v2288 = vunpack.c.l.b16 %v2212
      %v2289 = vunpack.c.l.b16 %v2213
      %v2290 = vpack.c.b16 %v2254, %v2253
      %v2291 = vpack.c.b16 %v2256, %v2255
      %v2292 = vpack.c.b16 %v2258, %v2257
      %v2293 = vpack.c.b16 %v2260, %v2259
      %v2294 = vpack.c.b16 %v2262, %v2261
      %v2295 = vpack.c.b16 %v2264, %v2263
      %v2296 = vpack.c.b16 %v2266, %v2265
      %v2297 = vpack.c.b16 %v2268, %v2267
      %v2298 = vpack.c.b16 %v2270, %v2269
      %v2299 = vpack.c.b16 %v2272, %v2271
      %v2300 = vpack.c.b16 %v2274, %v2273
      %v2301 = vpack.c.b16 %v2276, %v2275
      %v2302 = vpack.c.b16 %v2278, %v2277
      %v2303 = vpack.c.b16 %v2280, %v2279
      %v2304 = vpack.c.b16 %v2282, %v2281
      %v2305 = vpack.c.b16 %v2284, %v2283
      %v2306 = vpack.c.b16 %v2286, %v2285
      %v2307 = vpack.c.b16 %v2288, %v2287
      %v2308 = vpack.c.b16 %v2289, %v2289
      %vm2309 = vsmask.f32 6400
      %v2311 = vshrl.u32 %v2290, 16
      %v2313 = vrot.slane %v2311, 1
      %v2314 = vshll.u32 %v2290, 16
      %v2316 = vrot.slane %v2314, 2
      %v2317 = vor.u32 %v2313, %v2316
      %v2319 = vshrl.u32 %v2291, 16
      %v2321 = vrot.slane %v2319, 1
      %v2322 = vshll.u32 %v2291, 16
      %v2324 = vrot.slane %v2322, 2
      %v2325 = vor.u32 %v2321, %v2324
      %v2326 = vsel %vm2309, %v2317, %v2325
      %v2328 = vshrl.u32 %v2292, 16
      %v2330 = vrot.slane %v2328, 1
      %v2331 = vshll.u32 %v2292, 16
      %v2333 = vrot.slane %v2331, 2
      %v2334 = vor.u32 %v2330, %v2333
      %v2335 = vsel %vm2309, %v2325, %v2334
      %v2337 = vshrl.u32 %v2293, 16
      %v2339 = vrot.slane %v2337, 1
      %v2340 = vshll.u32 %v2293, 16
      %v2342 = vrot.slane %v2340, 2
      %v2343 = vor.u32 %v2339, %v2342
      %v2344 = vsel %vm2309, %v2334, %v2343
      %v2346 = vshrl.u32 %v2294, 16
      %v2348 = vrot.slane %v2346, 1
      %v2349 = vshll.u32 %v2294, 16
      %v2351 = vrot.slane %v2349, 2
      %v2352 = vor.u32 %v2348, %v2351
      %v2353 = vsel %vm2309, %v2343, %v2352
      %v2355 = vshrl.u32 %v2295, 16
      %v2357 = vrot.slane %v2355, 1
      %v2358 = vshll.u32 %v2295, 16
      %v2360 = vrot.slane %v2358, 2
      %v2361 = vor.u32 %v2357, %v2360
      %v2362 = vsel %vm2309, %v2352, %v2361
      %v2364 = vshrl.u32 %v2296, 16
      %v2366 = vrot.slane %v2364, 1
      %v2367 = vshll.u32 %v2296, 16
      %v2369 = vrot.slane %v2367, 2
      %v2370 = vor.u32 %v2366, %v2369
      %v2371 = vsel %vm2309, %v2361, %v2370
      %v2373 = vshrl.u32 %v2297, 16
      %v2375 = vrot.slane %v2373, 1
      %v2376 = vshll.u32 %v2297, 16
      %v2378 = vrot.slane %v2376, 2
      %v2379 = vor.u32 %v2375, %v2378
      %v2380 = vsel %vm2309, %v2370, %v2379
      %v2382 = vshrl.u32 %v2298, 16
      %v2384 = vrot.slane %v2382, 1
      %v2385 = vshll.u32 %v2298, 16
      %v2387 = vrot.slane %v2385, 2
      %v2388 = vor.u32 %v2384, %v2387
      %v2389 = vsel %vm2309, %v2379, %v2388
      %v2391 = vshrl.u32 %v2299, 16
      %v2393 = vrot.slane %v2391, 1
      %v2394 = vshll.u32 %v2299, 16
      %v2396 = vrot.slane %v2394, 2
      %v2397 = vor.u32 %v2393, %v2396
      %v2398 = vsel %vm2309, %v2388, %v2397
      %v2400 = vshrl.u32 %v2300, 16
      %v2402 = vrot.slane %v2400, 1
      %v2403 = vshll.u32 %v2300, 16
      %v2405 = vrot.slane %v2403, 2
      %v2406 = vor.u32 %v2402, %v2405
      %v2407 = vsel %vm2309, %v2397, %v2406
      %v2409 = vshrl.u32 %v2301, 16
      %v2411 = vrot.slane %v2409, 1
      %v2412 = vshll.u32 %v2301, 16
      %v2414 = vrot.slane %v2412, 2
      %v2415 = vor.u32 %v2411, %v2414
      %v2416 = vsel %vm2309, %v2406, %v2415
      %v2418 = vshrl.u32 %v2302, 16
      %v2420 = vrot.slane %v2418, 1
      %v2421 = vshll.u32 %v2302, 16
      %v2423 = vrot.slane %v2421, 2
      %v2424 = vor.u32 %v2420, %v2423
      %v2425 = vsel %vm2309, %v2415, %v2424
      %v2427 = vshrl.u32 %v2303, 16
      %v2429 = vrot.slane %v2427, 1
      %v2430 = vshll.u32 %v2303, 16
      %v2432 = vrot.slane %v2430, 2
      %v2433 = vor.u32 %v2429, %v2432
      %v2434 = vsel %vm2309, %v2424, %v2433
      %v2436 = vshrl.u32 %v2304, 16
      %v2438 = vrot.slane %v2436, 1
      %v2439 = vshll.u32 %v2304, 16
      %v2441 = vrot.slane %v2439, 2
      %v2442 = vor.u32 %v2438, %v2441
      %v2443 = vsel %vm2309, %v2433, %v2442
      %v2445 = vshrl.u32 %v2305, 16
      %v2447 = vrot.slane %v2445, 1
      %v2448 = vshll.u32 %v2305, 16
      %v2450 = vrot.slane %v2448, 2
      %v2451 = vor.u32 %v2447, %v2450
      %v2452 = vsel %vm2309, %v2442, %v2451
      %v2454 = vshrl.u32 %v2306, 16
      %v2456 = vrot.slane %v2454, 1
      %v2457 = vshll.u32 %v2306, 16
      %v2459 = vrot.slane %v2457, 2
      %v2460 = vor.u32 %v2456, %v2459
      %v2461 = vsel %vm2309, %v2451, %v2460
      %v2463 = vshrl.u32 %v2307, 16
      %v2465 = vrot.slane %v2463, 1
      %v2466 = vshll.u32 %v2307, 16
      %v2468 = vrot.slane %v2466, 2
      %v2469 = vor.u32 %v2465, %v2468
      %v2470 = vsel %vm2309, %v2460, %v2469
      %v2472 = vshrl.u32 %v2308, 16
      %v2474 = vrot.slane %v2472, 1
      %v2475 = vshll.u32 %v2308, 16
      %v2477 = vrot.slane %v2475, 2
      %v2478 = vor.u32 %v2474, %v2477
      %v2479 = vsel %vm2309, %v2469, %v2478
      %v2481 = vsel %vm534, %v2326, 0
      %v2484 = vsel %vm534, %v2335, 0
      %v2487 = vsel %vm534, %v2344, 0
      %v2490 = vsel %vm534, %v2353, 0
      %v2493 = vsel %vm534, %v2362, 0
      %v2496 = vsel %vm534, %v2371, 0
      %v2499 = vsel %vm534, %v2380, 0
      %v2502 = vsel %vm534, %v2389, 0
      %v2505 = vsel %vm534, %v2398, 0
      %v2508 = vsel %vm534, %v2407, 0
      %v2511 = vsel %vm534, %v2416, 0
      %v2514 = vsel %vm534, %v2425, 0
      %v2517 = vsel %vm534, %v2434, 0
      %v2520 = vsel %vm534, %v2443, 0
      %v2523 = vsel %vm534, %v2452, 0
      %v2526 = vsel %vm534, %v2461, 0
      %v2529 = vsel %vm534, %v2470, 0
      %v2532 = vsel %vm534, %v2479, 0
      %v2535 = vsel %vm589, %v2215, 0
      %2537 = vmatpush.bf16.msra.mxu0 0
      %2538 = vmatpush.bf16.msra.mxu0 0
      %2539 = vmatpush.bf16.msra.mxu0 0
      %2540 = vmatpush.bf16.msra.mxu0 0
      %2541 = vmatpush.bf16.msra.mxu0 0
      %2542 = vmatpush.bf16.msra.mxu0 0
      %2543 = vmatpush.bf16.msra.mxu0 0
      %2544 = vmatpush.bf16.msra.mxu0 %v2535
      %2545 = vmatmul.bf16.gmra.mxu0 %v2481
      %v2546 = vpop.f32.mrf.mxu0
      %v2547 = vadd.f32 0.0, %v2546
      %v2548 = vpop.f32.mrf.mxu0
      %v2549 = vadd.f32 0.0, %v2548
      %2550 = vmatmul.bf16.gmra.mxu0 %v2484
      %v2551 = vpop.f32.mrf.mxu0
      %v2552 = vadd.f32 0.0, %v2551
      %v2553 = vpop.f32.mrf.mxu0
      %v2554 = vadd.f32 0.0, %v2553
      %2555 = vmatmul.bf16.gmra.mxu0 %v2487
      %v2556 = vpop.f32.mrf.mxu0
      %v2557 = vadd.f32 0.0, %v2556
      %v2558 = vpop.f32.mrf.mxu0
      %v2559 = vadd.f32 0.0, %v2558
      %2560 = vmatmul.bf16.gmra.mxu0 %v2490
      %v2561 = vpop.f32.mrf.mxu0
      %v2562 = vadd.f32 0.0, %v2561
      %v2563 = vpop.f32.mrf.mxu0
      %v2564 = vadd.f32 0.0, %v2563
      %2565 = vmatmul.bf16.gmra.mxu0 %v2493
      %v2566 = vpop.f32.mrf.mxu0
      %v2567 = vadd.f32 0.0, %v2566
      %v2568 = vpop.f32.mrf.mxu0
      %v2569 = vadd.f32 0.0, %v2568
      %2570 = vmatmul.bf16.gmra.mxu0 %v2496
      %v2571 = vpop.f32.mrf.mxu0
      %v2572 = vadd.f32 0.0, %v2571
      %v2573 = vpop.f32.mrf.mxu0
      %v2574 = vadd.f32 0.0, %v2573
      %2575 = vmatmul.bf16.gmra.mxu0 %v2499
      %v2576 = vpop.f32.mrf.mxu0
      %v2577 = vadd.f32 0.0, %v2576
      %v2578 = vpop.f32.mrf.mxu0
      %v2579 = vadd.f32 0.0, %v2578
      %2580 = vmatmul.bf16.gmra.mxu0 %v2502
      %v2581 = vpop.f32.mrf.mxu0
      %v2582 = vadd.f32 0.0, %v2581
      %v2583 = vpop.f32.mrf.mxu0
      %v2584 = vadd.f32 0.0, %v2583
      %2585 = vmatmul.bf16.gmra.mxu0 %v2505
      %v2586 = vpop.f32.mrf.mxu0
      %v2587 = vadd.f32 0.0, %v2586
      %v2588 = vpop.f32.mrf.mxu0
      %v2589 = vadd.f32 0.0, %v2588
      %2590 = vmatmul.bf16.gmra.mxu0 %v2508
      %v2591 = vpop.f32.mrf.mxu0
      %v2592 = vadd.f32 0.0, %v2591
      %v2593 = vpop.f32.mrf.mxu0
      %v2594 = vadd.f32 0.0, %v2593
      %2595 = vmatmul.bf16.gmra.mxu0 %v2511
      %v2596 = vpop.f32.mrf.mxu0
      %v2597 = vadd.f32 0.0, %v2596
      %v2598 = vpop.f32.mrf.mxu0
      %v2599 = vadd.f32 0.0, %v2598
      %2600 = vmatmul.bf16.gmra.mxu0 %v2514
      %v2601 = vpop.f32.mrf.mxu0
      %v2602 = vadd.f32 0.0, %v2601
      %v2603 = vpop.f32.mrf.mxu0
      %v2604 = vadd.f32 0.0, %v2603
      %2605 = vmatmul.bf16.gmra.mxu0 %v2517
      %v2606 = vpop.f32.mrf.mxu0
      %v2607 = vadd.f32 0.0, %v2606
      %v2608 = vpop.f32.mrf.mxu0
      %v2609 = vadd.f32 0.0, %v2608
      %2610 = vmatmul.bf16.gmra.mxu0 %v2520
      %v2611 = vpop.f32.mrf.mxu0
      %v2612 = vadd.f32 0.0, %v2611
      %v2613 = vpop.f32.mrf.mxu0
      %v2614 = vadd.f32 0.0, %v2613
      %2615 = vmatmul.bf16.gmra.mxu0 %v2523
      %v2616 = vpop.f32.mrf.mxu0
      %v2617 = vadd.f32 0.0, %v2616
      %v2618 = vpop.f32.mrf.mxu0
      %v2619 = vadd.f32 0.0, %v2618
      %2620 = vmatmul.bf16.gmra.mxu0 %v2526
      %v2621 = vpop.f32.mrf.mxu0
      %v2622 = vadd.f32 0.0, %v2621
      %v2623 = vpop.f32.mrf.mxu0
      %v2624 = vadd.f32 0.0, %v2623
      %2625 = vmatmul.bf16.gmra.mxu0 %v2529
      %v2626 = vpop.f32.mrf.mxu0
      %v2627 = vadd.f32 0.0, %v2626
      %v2628 = vpop.f32.mrf.mxu0
      %v2629 = vadd.f32 0.0, %v2628
      %2630 = vmatmul.bf16.gmra.mxu0 %v2532
      %v2631 = vpop.f32.mrf.mxu0
      %v2632 = vadd.f32 0.0, %v2631
      %v2633 = vpop.f32.mrf.mxu0
      %v2634 = vadd.f32 0.0, %v2633
      %2635 = vdwg.mxu0
      %v2636 = vadd.f32 %v2141, %v2547
      %v2637 = vadd.f32 %v2142, %v2549
      %v2638 = vadd.f32 %v2143, %v2552
      %v2639 = vadd.f32 %v2144, %v2554
      %v2640 = vadd.f32 %v2145, %v2557
      %v2641 = vadd.f32 %v2146, %v2559
      %v2642 = vadd.f32 %v2147, %v2562
      %v2643 = vadd.f32 %v2148, %v2564
      %v2644 = vadd.f32 %v2149, %v2567
      %v2645 = vadd.f32 %v2150, %v2569
      %v2646 = vadd.f32 %v2151, %v2572
      %v2647 = vadd.f32 %v2152, %v2574
      %v2648 = vadd.f32 %v2153, %v2577
      %v2649 = vadd.f32 %v2154, %v2579
      %v2650 = vadd.f32 %v2155, %v2582
      %v2651 = vadd.f32 %v2156, %v2584
      %v2652 = vadd.f32 %v2157, %v2587
      %v2653 = vadd.f32 %v2158, %v2589
      %v2654 = vadd.f32 %v2159, %v2592
      %v2655 = vadd.f32 %v2160, %v2594
      %v2656 = vadd.f32 %v2161, %v2597
      %v2657 = vadd.f32 %v2162, %v2599
      %v2658 = vadd.f32 %v2163, %v2602
      %v2659 = vadd.f32 %v2164, %v2604
      %v2660 = vadd.f32 %v2165, %v2607
      %v2661 = vadd.f32 %v2166, %v2609
      %v2662 = vadd.f32 %v2167, %v2612
      %v2663 = vadd.f32 %v2168, %v2614
      %v2664 = vadd.f32 %v2169, %v2617
      %v2665 = vadd.f32 %v2170, %v2619
      %v2666 = vadd.f32 %v2171, %v2622
      %v2667 = vadd.f32 %v2172, %v2624
      %v2668 = vadd.f32 %v2173, %v2627
      %v2669 = vadd.f32 %v2174, %v2629
      %v2670 = vadd.f32 %v2175, %v2632
      %v2671 = vadd.f32 %v2176, %v2634
      %2672 = vst.msk [vmem:[#allocation4] sm:$0xff] %vm692, %v2636
      %2673 = vst.msk [vmem:[#allocation4 + $0x8] sm:$0xff] %vm692, %v2637
      %2674 = vst.msk [vmem:[#allocation4 + $0x10] sm:$0xff] %vm692, %v2638
      %2675 = vst.msk [vmem:[#allocation4 + $0x18] sm:$0xff] %vm692, %v2639
      %2676 = vst.msk [vmem:[#allocation4 + $0x20] sm:$0xff] %vm692, %v2640
      %2677 = vst.msk [vmem:[#allocation4 + $0x28] sm:$0xff] %vm692, %v2641
      %2678 = vst.msk [vmem:[#allocation4 + $0x30] sm:$0xff] %vm692, %v2642
      %2679 = vst.msk [vmem:[#allocation4 + $0x38] sm:$0xff] %vm692, %v2643
      %2680 = vst.msk [vmem:[#allocation4 + $0x40] sm:$0xff] %vm692, %v2644
      %2681 = vst.msk [vmem:[#allocation4 + $0x48] sm:$0xff] %vm692, %v2645
      %2682 = vst.msk [vmem:[#allocation4 + $0x50] sm:$0xff] %vm692, %v2646
      %2683 = vst.msk [vmem:[#allocation4 + $0x58] sm:$0xff] %vm692, %v2647
      %2684 = vst.msk [vmem:[#allocation4 + $0x60] sm:$0xff] %vm692, %v2648
      %2685 = vst.msk [vmem:[#allocation4 + $0x68] sm:$0xff] %vm692, %v2649
      %2686 = vst.msk [vmem:[#allocation4 + $0x70] sm:$0xff] %vm692, %v2650
      %2687 = vst.msk [vmem:[#allocation4 + $0x78] sm:$0xff] %vm692, %v2651
      %2688 = vst.msk [vmem:[#allocation4 + $0x80] sm:$0xff] %vm692, %v2652
      %2689 = vst.msk [vmem:[#allocation4 + $0x88] sm:$0xff] %vm692, %v2653
      %2690 = vst.msk [vmem:[#allocation4 + $0x90] sm:$0xff] %vm692, %v2654
      %2691 = vst.msk [vmem:[#allocation4 + $0x98] sm:$0xff] %vm692, %v2655
      %2692 = vst.msk [vmem:[#allocation4 + $0xa0] sm:$0xff] %vm692, %v2656
      %2693 = vst.msk [vmem:[#allocation4 + $0xa8] sm:$0xff] %vm692, %v2657
      %2694 = vst.msk [vmem:[#allocation4 + $0xb0] sm:$0xff] %vm692, %v2658
      %2695 = vst.msk [vmem:[#allocation4 + $0xb8] sm:$0xff] %vm692, %v2659
      %2696 = vst.msk [vmem:[#allocation4 + $0xc0] sm:$0xff] %vm692, %v2660
      %2697 = vst.msk [vmem:[#allocation4 + $0xc8] sm:$0xff] %vm692, %v2661
      %2698 = vst.msk [vmem:[#allocation4 + $0xd0] sm:$0xff] %vm692, %v2662
      %2699 = vst.msk [vmem:[#allocation4 + $0xd8] sm:$0xff] %vm692, %v2663
      %2700 = vst.msk [vmem:[#allocation4 + $0xe0] sm:$0xff] %vm692, %v2664
      %2701 = vst.msk [vmem:[#allocation4 + $0xe8] sm:$0xff] %vm692, %v2665
      %2702 = vst.msk [vmem:[#allocation4 + $0xf0] sm:$0xff] %vm692, %v2666
      %2703 = vst.msk [vmem:[#allocation4 + $0xf8] sm:$0xff] %vm692, %v2667
      %2704 = vst.msk [vmem:[#allocation4 + $0x100] sm:$0xff] %vm692, %v2668
      %2705 = vst.msk [vmem:[#allocation4 + $0x108] sm:$0xff] %vm692, %v2669
      %2706 = vst.msk [vmem:[#allocation4 + $0x110] sm:$0xff] %vm692, %v2670
      %2707 = vst.msk [vmem:[#allocation4 + $0x118] sm:$0xff] %vm692, %v2671
      %v2708 = vld [vmem:[#allocation4] sm:$0xff]
      %v2709 = vld [vmem:[#allocation4 + $0x8] sm:$0xff]
      %v2710 = vld [vmem:[#allocation4 + $0x10] sm:$0xff]
      %v2711 = vld [vmem:[#allocation4 + $0x18] sm:$0xff]
      %v2712 = vld [vmem:[#allocation4 + $0x20] sm:$0xff]
      %v2713 = vld [vmem:[#allocation4 + $0x28] sm:$0xff]
      %v2714 = vld [vmem:[#allocation4 + $0x30] sm:$0xff]
      %v2715 = vld [vmem:[#allocation4 + $0x38] sm:$0xff]
      %v2716 = vld [vmem:[#allocation4 + $0x40] sm:$0xff]
      %v2717 = vld [vmem:[#allocation4 + $0x48] sm:$0xff]
      %v2718 = vld [vmem:[#allocation4 + $0x50] sm:$0xff]
      %v2719 = vld [vmem:[#allocation4 + $0x58] sm:$0xff]
      %v2720 = vld [vmem:[#allocation4 + $0x60] sm:$0xff]
      %v2721 = vld [vmem:[#allocation4 + $0x68] sm:$0xff]
      %v2722 = vld [vmem:[#allocation4 + $0x70] sm:$0xff]
      %v2723 = vld [vmem:[#allocation4 + $0x78] sm:$0xff]
      %v2724 = vld [vmem:[#allocation4 + $0x80] sm:$0xff]
      %v2725 = vld [vmem:[#allocation4 + $0x88] sm:$0xff]
      %v2726 = vld [vmem:[#allocation4 + $0x90] sm:$0xff]
      %v2727 = vld [vmem:[#allocation4 + $0x98] sm:$0xff]
      %v2728 = vld [vmem:[#allocation4 + $0xa0] sm:$0xff]
      %v2729 = vld [vmem:[#allocation4 + $0xa8] sm:$0xff]
      %v2730 = vld [vmem:[#allocation4 + $0xb0] sm:$0xff]
      %v2731 = vld [vmem:[#allocation4 + $0xb8] sm:$0xff]
      %v2732 = vld [vmem:[#allocation4 + $0xc0] sm:$0xff]
      %v2733 = vld [vmem:[#allocation4 + $0xc8] sm:$0xff]
      %v2734 = vld [vmem:[#allocation4 + $0xd0] sm:$0xff]
      %v2735 = vld [vmem:[#allocation4 + $0xd8] sm:$0xff]
      %v2736 = vld [vmem:[#allocation4 + $0xe0] sm:$0xff]
      %v2737 = vld [vmem:[#allocation4 + $0xe8] sm:$0xff]
      %v2738 = vld [vmem:[#allocation4 + $0xf0] sm:$0xff]
      %v2739 = vld [vmem:[#allocation4 + $0xf8] sm:$0xff]
      %v2740 = vld [vmem:[#allocation4 + $0x100] sm:$0xff]
      %v2741 = vld [vmem:[#allocation4 + $0x108] sm:$0xff]
      %v2742 = vld [vmem:[#allocation4 + $0x110] sm:$0xff]
      %v2743 = vld [vmem:[#allocation4 + $0x118] sm:$0xff]
      %v2744 = vld [vmem:[#allocation2 + $0x8] sm:$0xc]
      %v2745 = vld [vmem:[#allocation2 + $0xc] sm:$0xf]
      %v2746 = vld [vmem:[#allocation2 + $0x10] sm:$0xf]
      %v2747 = vld [vmem:[#allocation2 + $0x14] sm:$0xf]
      %v2748 = vld [vmem:[#allocation2 + $0x18] sm:$0xf]
      %v2749 = vld [vmem:[#allocation2 + $0x1c] sm:$0xf]
      %v2750 = vld [vmem:[#allocation2 + $0x20] sm:$0xf]
      %v2751 = vld [vmem:[#allocation2 + $0x24] sm:$0xf]
      %v2752 = vld [vmem:[#allocation2 + $0x28] sm:$0xf]
      %v2753 = vld [vmem:[#allocation2 + $0x2c] sm:$0xf]
      %v2754 = vld [vmem:[#allocation2 + $0x30] sm:$0xf]
      %v2755 = vld [vmem:[#allocation2 + $0x34] sm:$0xf]
      %v2756 = vld [vmem:[#allocation2 + $0x38] sm:$0xf]
      %v2757 = vld [vmem:[#allocation2 + $0x3c] sm:$0xf]
      %v2758 = vld [vmem:[#allocation2 + $0x40] sm:$0xf]
      %v2759 = vld [vmem:[#allocation2 + $0x44] sm:$0xf]
      %v2760 = vld [vmem:[#allocation2 + $0x48] sm:$0xf]
      %v2761 = vld [vmem:[#allocation2 + $0x4c] sm:$0xf]
      %v2762 = vld [vmem:[#allocation2 + $0x50] sm:$0xf]
      %v2763 = vld [vmem:[#allocation2 + $0x54] sm:$0xf]
      %v2764 = vld [vmem:[#allocation2 + $0x58] sm:$0xf]
      %v2765 = vld [vmem:[#allocation2 + $0x5c] sm:$0xf]
      %v2766 = vld [vmem:[#allocation2 + $0x60] sm:$0xf]
      %v2767 = vld [vmem:[#allocation2 + $0x64] sm:$0xf]
      %v2768 = vld [vmem:[#allocation2 + $0x68] sm:$0xf]
      %v2769 = vld [vmem:[#allocation2 + $0x6c] sm:$0xf]
      %v2770 = vld [vmem:[#allocation2 + $0x70] sm:$0xf]
      %v2771 = vld [vmem:[#allocation2 + $0x74] sm:$0xf]
      %v2772 = vld [vmem:[#allocation2 + $0x78] sm:$0xf]
      %v2773 = vld [vmem:[#allocation2 + $0x7c] sm:$0xf]
      %v2774 = vld [vmem:[#allocation2 + $0x80] sm:$0xf]
      %v2775 = vld [vmem:[#allocation2 + $0x84] sm:$0xf]
      %v2776 = vld [vmem:[#allocation2 + $0x88] sm:$0xf]
      %v2777 = vld [vmem:[#allocation2 + $0x8c] sm:$0xf]
      %v2778 = vld [vmem:[#allocation2 + $0x90] sm:$0xf]
      %v2779 = vld [vmem:[#allocation2 + $0x94] sm:$0xf]
      %v2780 = vld [vmem:[#allocation2 + $0x98] sm:$0x3]
      %s2781 = scalar_lea.vmem %s2, 10
      %v2782 = vld [vmem:[%s2781] sm:$0x3]
      %v2820 = vunpack.c.l.b16 %v2744
      %v2821 = vunpack.c.l.b16 %v2745
      %v2822 = vunpack.c.l.b16 %v2746
      %v2823 = vunpack.c.l.b16 %v2747
      %v2824 = vunpack.c.l.b16 %v2748
      %v2825 = vunpack.c.l.b16 %v2749
      %v2826 = vunpack.c.l.b16 %v2750
      %v2827 = vunpack.c.l.b16 %v2751
      %v2828 = vunpack.c.l.b16 %v2752
      %v2829 = vunpack.c.l.b16 %v2753
      %v2830 = vunpack.c.l.b16 %v2754
      %v2831 = vunpack.c.l.b16 %v2755
      %v2832 = vunpack.c.l.b16 %v2756
      %v2833 = vunpack.c.l.b16 %v2757
      %v2834 = vunpack.c.l.b16 %v2758
      %v2835 = vunpack.c.l.b16 %v2759
      %v2836 = vunpack.c.l.b16 %v2760
      %v2837 = vunpack.c.l.b16 %v2761
      %v2838 = vunpack.c.l.b16 %v2762
      %v2839 = vunpack.c.l.b16 %v2763
      %v2840 = vunpack.c.l.b16 %v2764
      %v2841 = vunpack.c.l.b16 %v2765
      %v2842 = vunpack.c.l.b16 %v2766
      %v2843 = vunpack.c.l.b16 %v2767
      %v2844 = vunpack.c.l.b16 %v2768
      %v2845 = vunpack.c.l.b16 %v2769
      %v2846 = vunpack.c.l.b16 %v2770
      %v2847 = vunpack.c.l.b16 %v2771
      %v2848 = vunpack.c.l.b16 %v2772
      %v2849 = vunpack.c.l.b16 %v2773
      %v2850 = vunpack.c.l.b16 %v2774
      %v2851 = vunpack.c.l.b16 %v2775
      %v2852 = vunpack.c.l.b16 %v2776
      %v2853 = vunpack.c.l.b16 %v2777
      %v2854 = vunpack.c.l.b16 %v2778
      %v2855 = vunpack.c.l.b16 %v2779
      %v2856 = vunpack.c.l.b16 %v2780
      %v2857 = vpack.c.b16 %v2821, %v2820
      %v2858 = vpack.c.b16 %v2823, %v2822
      %v2859 = vpack.c.b16 %v2825, %v2824
      %v2860 = vpack.c.b16 %v2827, %v2826
      %v2861 = vpack.c.b16 %v2829, %v2828
      %v2862 = vpack.c.b16 %v2831, %v2830
      %v2863 = vpack.c.b16 %v2833, %v2832
      %v2864 = vpack.c.b16 %v2835, %v2834
      %v2865 = vpack.c.b16 %v2837, %v2836
      %v2866 = vpack.c.b16 %v2839, %v2838
      %v2867 = vpack.c.b16 %v2841, %v2840
      %v2868 = vpack.c.b16 %v2843, %v2842
      %v2869 = vpack.c.b16 %v2845, %v2844
      %v2870 = vpack.c.b16 %v2847, %v2846
      %v2871 = vpack.c.b16 %v2849, %v2848
      %v2872 = vpack.c.b16 %v2851, %v2850
      %v2873 = vpack.c.b16 %v2853, %v2852
      %v2874 = vpack.c.b16 %v2855, %v2854
      %v2875 = vpack.c.b16 %v2856, %v2856
      %vm2876 = vcmask 1045504
      %v2877 = vrot.slane %v2857, 2
      %v2878 = vrot.slane %v2858, 2
      %v2879 = vsel %vm2876, %v2877, %v2878
      %v2880 = vrot.slane %v2859, 2
      %v2881 = vsel %vm2876, %v2878, %v2880
      %v2882 = vrot.slane %v2860, 2
      %v2883 = vsel %vm2876, %v2880, %v2882
      %v2884 = vrot.slane %v2861, 2
      %v2885 = vsel %vm2876, %v2882, %v2884
      %v2886 = vrot.slane %v2862, 2
      %v2887 = vsel %vm2876, %v2884, %v2886
      %v2888 = vrot.slane %v2863, 2
      %v2889 = vsel %vm2876, %v2886, %v2888
      %v2890 = vrot.slane %v2864, 2
      %v2891 = vsel %vm2876, %v2888, %v2890
      %v2892 = vrot.slane %v2865, 2
      %v2893 = vsel %vm2876, %v2890, %v2892
      %v2894 = vrot.slane %v2866, 2
      %v2895 = vsel %vm2876, %v2892, %v2894
      %v2896 = vrot.slane %v2867, 2
      %v2897 = vsel %vm2876, %v2894, %v2896
      %v2898 = vrot.slane %v2868, 2
      %v2899 = vsel %vm2876, %v2896, %v2898
      %v2900 = vrot.slane %v2869, 2
      %v2901 = vsel %vm2876, %v2898, %v2900
      %v2902 = vrot.slane %v2870, 2
      %v2903 = vsel %vm2876, %v2900, %v2902
      %v2904 = vrot.slane %v2871, 2
      %v2905 = vsel %vm2876, %v2902, %v2904
      %v2906 = vrot.slane %v2872, 2
      %v2907 = vsel %vm2876, %v2904, %v2906
      %v2908 = vrot.slane %v2873, 2
      %v2909 = vsel %vm2876, %v2906, %v2908
      %v2910 = vrot.slane %v2874, 2
      %v2911 = vsel %vm2876, %v2908, %v2910
      %v2912 = vrot.slane %v2875, 2
      %v2913 = vsel %vm2876, %v2910, %v2912
      %v2915 = vsel %vm534, %v2879, 0
      %v2918 = vsel %vm534, %v2881, 0
      %v2921 = vsel %vm534, %v2883, 0
      %v2924 = vsel %vm534, %v2885, 0
      %v2927 = vsel %vm534, %v2887, 0
      %v2930 = vsel %vm534, %v2889, 0
      %v2933 = vsel %vm534, %v2891, 0
      %v2936 = vsel %vm534, %v2893, 0
      %v2939 = vsel %vm534, %v2895, 0
      %v2942 = vsel %vm534, %v2897, 0
      %v2945 = vsel %vm534, %v2899, 0
      %v2948 = vsel %vm534, %v2901, 0
      %v2951 = vsel %vm534, %v2903, 0
      %v2954 = vsel %vm534, %v2905, 0
      %v2957 = vsel %vm534, %v2907, 0
      %v2960 = vsel %vm534, %v2909, 0
      %v2963 = vsel %vm534, %v2911, 0
      %v2966 = vsel %vm534, %v2913, 0
      %v2969 = vsel %vm589, %v2782, 0
      %2971 = vmatpush.bf16.msra.mxu0 0
      %2972 = vmatpush.bf16.msra.mxu0 0
      %2973 = vmatpush.bf16.msra.mxu0 0
      %2974 = vmatpush.bf16.msra.mxu0 0
      %2975 = vmatpush.bf16.msra.mxu0 0
      %2976 = vmatpush.bf16.msra.mxu0 0
      %2977 = vmatpush.bf16.msra.mxu0 0
      %2978 = vmatpush.bf16.msra.mxu0 %v2969
      %2979 = vmatmul.bf16.gmra.mxu0 %v2915
      %v2980 = vpop.f32.mrf.mxu0
      %v2981 = vadd.f32 0.0, %v2980
      %v2982 = vpop.f32.mrf.mxu0
      %v2983 = vadd.f32 0.0, %v2982
      %2984 = vmatmul.bf16.gmra.mxu0 %v2918
      %v2985 = vpop.f32.mrf.mxu0
      %v2986 = vadd.f32 0.0, %v2985
      %v2987 = vpop.f32.mrf.mxu0
      %v2988 = vadd.f32 0.0, %v2987
      %2989 = vmatmul.bf16.gmra.mxu0 %v2921
      %v2990 = vpop.f32.mrf.mxu0
      %v2991 = vadd.f32 0.0, %v2990
      %v2992 = vpop.f32.mrf.mxu0
      %v2993 = vadd.f32 0.0, %v2992
      %2994 = vmatmul.bf16.gmra.mxu0 %v2924
      %v2995 = vpop.f32.mrf.mxu0
      %v2996 = vadd.f32 0.0, %v2995
      %v2997 = vpop.f32.mrf.mxu0
      %v2998 = vadd.f32 0.0, %v2997
      %2999 = vmatmul.bf16.gmra.mxu0 %v2927
      %v3000 = vpop.f32.mrf.mxu0
      %v3001 = vadd.f32 0.0, %v3000
      %v3002 = vpop.f32.mrf.mxu0
      %v3003 = vadd.f32 0.0, %v3002
      %3004 = vmatmul.bf16.gmra.mxu0 %v2930
      %v3005 = vpop.f32.mrf.mxu0
      %v3006 = vadd.f32 0.0, %v3005
      %v3007 = vpop.f32.mrf.mxu0
      %v3008 = vadd.f32 0.0, %v3007
      %3009 = vmatmul.bf16.gmra.mxu0 %v2933
      %v3010 = vpop.f32.mrf.mxu0
      %v3011 = vadd.f32 0.0, %v3010
      %v3012 = vpop.f32.mrf.mxu0
      %v3013 = vadd.f32 0.0, %v3012
      %3014 = vmatmul.bf16.gmra.mxu0 %v2936
      %v3015 = vpop.f32.mrf.mxu0
      %v3016 = vadd.f32 0.0, %v3015
      %v3017 = vpop.f32.mrf.mxu0
      %v3018 = vadd.f32 0.0, %v3017
      %3019 = vmatmul.bf16.gmra.mxu0 %v2939
      %v3020 = vpop.f32.mrf.mxu0
      %v3021 = vadd.f32 0.0, %v3020
      %v3022 = vpop.f32.mrf.mxu0
      %v3023 = vadd.f32 0.0, %v3022
      %3024 = vmatmul.bf16.gmra.mxu0 %v2942
      %v3025 = vpop.f32.mrf.mxu0
      %v3026 = vadd.f32 0.0, %v3025
      %v3027 = vpop.f32.mrf.mxu0
      %v3028 = vadd.f32 0.0, %v3027
      %3029 = vmatmul.bf16.gmra.mxu0 %v2945
      %v3030 = vpop.f32.mrf.mxu0
      %v3031 = vadd.f32 0.0, %v3030
      %v3032 = vpop.f32.mrf.mxu0
      %v3033 = vadd.f32 0.0, %v3032
      %3034 = vmatmul.bf16.gmra.mxu0 %v2948
      %v3035 = vpop.f32.mrf.mxu0
      %v3036 = vadd.f32 0.0, %v3035
      %v3037 = vpop.f32.mrf.mxu0
      %v3038 = vadd.f32 0.0, %v3037
      %3039 = vmatmul.bf16.gmra.mxu0 %v2951
      %v3040 = vpop.f32.mrf.mxu0
      %v3041 = vadd.f32 0.0, %v3040
      %v3042 = vpop.f32.mrf.mxu0
      %v3043 = vadd.f32 0.0, %v3042
      %3044 = vmatmul.bf16.gmra.mxu0 %v2954
      %v3045 = vpop.f32.mrf.mxu0
      %v3046 = vadd.f32 0.0, %v3045
      %v3047 = vpop.f32.mrf.mxu0
      %v3048 = vadd.f32 0.0, %v3047
      %3049 = vmatmul.bf16.gmra.mxu0 %v2957
      %v3050 = vpop.f32.mrf.mxu0
      %v3051 = vadd.f32 0.0, %v3050
      %v3052 = vpop.f32.mrf.mxu0
      %v3053 = vadd.f32 0.0, %v3052
      %3054 = vmatmul.bf16.gmra.mxu0 %v2960
      %v3055 = vpop.f32.mrf.mxu0
      %v3056 = vadd.f32 0.0, %v3055
      %v3057 = vpop.f32.mrf.mxu0
      %v3058 = vadd.f32 0.0, %v3057
      %3059 = vmatmul.bf16.gmra.mxu0 %v2963
      %v3060 = vpop.f32.mrf.mxu0
      %v3061 = vadd.f32 0.0, %v3060
      %v3062 = vpop.f32.mrf.mxu0
      %v3063 = vadd.f32 0.0, %v3062
      %3064 = vmatmul.bf16.gmra.mxu0 %v2966
      %v3065 = vpop.f32.mrf.mxu0
      %v3066 = vadd.f32 0.0, %v3065
      %v3067 = vpop.f32.mrf.mxu0
      %v3068 = vadd.f32 0.0, %v3067
      %3069 = vdwg.mxu0
      %v3070 = vadd.f32 %v2708, %v2981
      %v3071 = vadd.f32 %v2709, %v2983
      %v3072 = vadd.f32 %v2710, %v2986
      %v3073 = vadd.f32 %v2711, %v2988
      %v3074 = vadd.f32 %v2712, %v2991
      %v3075 = vadd.f32 %v2713, %v2993
      %v3076 = vadd.f32 %v2714, %v2996
      %v3077 = vadd.f32 %v2715, %v2998
      %v3078 = vadd.f32 %v2716, %v3001
      %v3079 = vadd.f32 %v2717, %v3003
      %v3080 = vadd.f32 %v2718, %v3006
      %v3081 = vadd.f32 %v2719, %v3008
      %v3082 = vadd.f32 %v2720, %v3011
      %v3083 = vadd.f32 %v2721, %v3013
      %v3084 = vadd.f32 %v2722, %v3016
      %v3085 = vadd.f32 %v2723, %v3018
      %v3086 = vadd.f32 %v2724, %v3021
      %v3087 = vadd.f32 %v2725, %v3023
      %v3088 = vadd.f32 %v2726, %v3026
      %v3089 = vadd.f32 %v2727, %v3028
      %v3090 = vadd.f32 %v2728, %v3031
      %v3091 = vadd.f32 %v2729, %v3033
      %v3092 = vadd.f32 %v2730, %v3036
      %v3093 = vadd.f32 %v2731, %v3038
      %v3094 = vadd.f32 %v2732, %v3041
      %v3095 = vadd.f32 %v2733, %v3043
      %v3096 = vadd.f32 %v2734, %v3046
      %v3097 = vadd.f32 %v2735, %v3048
      %v3098 = vadd.f32 %v2736, %v3051
      %v3099 = vadd.f32 %v2737, %v3053
      %v3100 = vadd.f32 %v2738, %v3056
      %v3101 = vadd.f32 %v2739, %v3058
      %v3102 = vadd.f32 %v2740, %v3061
      %v3103 = vadd.f32 %v2741, %v3063
      %v3104 = vadd.f32 %v2742, %v3066
      %v3105 = vadd.f32 %v2743, %v3068
      %3106 = vst.msk [vmem:[#allocation4] sm:$0xff] %vm692, %v3070
      %3107 = vst.msk [vmem:[#allocation4 + $0x8] sm:$0xff] %vm692, %v3071
      %3108 = vst.msk [vmem:[#allocation4 + $0x10] sm:$0xff] %vm692, %v3072
      %3109 = vst.msk [vmem:[#allocation4 + $0x18] sm:$0xff] %vm692, %v3073
      %3110 = vst.msk [vmem:[#allocation4 + $0x20] sm:$0xff] %vm692, %v3074
      %3111 = vst.msk [vmem:[#allocation4 + $0x28] sm:$0xff] %vm692, %v3075
      %3112 = vst.msk [vmem:[#allocation4 + $0x30] sm:$0xff] %vm692, %v3076
      %3113 = vst.msk [vmem:[#allocation4 + $0x38] sm:$0xff] %vm692, %v3077
      %3114 = vst.msk [vmem:[#allocation4 + $0x40] sm:$0xff] %vm692, %v3078
      %3115 = vst.msk [vmem:[#allocation4 + $0x48] sm:$0xff] %vm692, %v3079
      %3116 = vst.msk [vmem:[#allocation4 + $0x50] sm:$0xff] %vm692, %v3080
      %3117 = vst.msk [vmem:[#allocation4 + $0x58] sm:$0xff] %vm692, %v3081
      %3118 = vst.msk [vmem:[#allocation4 + $0x60] sm:$0xff] %vm692, %v3082
      %3119 = vst.msk [vmem:[#allocation4 + $0x68] sm:$0xff] %vm692, %v3083
      %3120 = vst.msk [vmem:[#allocation4 + $0x70] sm:$0xff] %vm692, %v3084
      %3121 = vst.msk [vmem:[#allocation4 + $0x78] sm:$0xff] %vm692, %v3085
      %3122 = vst.msk [vmem:[#allocation4 + $0x80] sm:$0xff] %vm692, %v3086
      %3123 = vst.msk [vmem:[#allocation4 + $0x88] sm:$0xff] %vm692, %v3087
      %3124 = vst.msk [vmem:[#allocation4 + $0x90] sm:$0xff] %vm692, %v3088
      %3125 = vst.msk [vmem:[#allocation4 + $0x98] sm:$0xff] %vm692, %v3089
      %3126 = vst.msk [vmem:[#allocation4 + $0xa0] sm:$0xff] %vm692, %v3090
      %3127 = vst.msk [vmem:[#allocation4 + $0xa8] sm:$0xff] %vm692, %v3091
      %3128 = vst.msk [vmem:[#allocation4 + $0xb0] sm:$0xff] %vm692, %v3092
      %3129 = vst.msk [vmem:[#allocation4 + $0xb8] sm:$0xff] %vm692, %v3093
      %3130 = vst.msk [vmem:[#allocation4 + $0xc0] sm:$0xff] %vm692, %v3094
      %3131 = vst.msk [vmem:[#allocation4 + $0xc8] sm:$0xff] %vm692, %v3095
      %3132 = vst.msk [vmem:[#allocation4 + $0xd0] sm:$0xff] %vm692, %v3096
      %3133 = vst.msk [vmem:[#allocation4 + $0xd8] sm:$0xff] %vm692, %v3097
      %3134 = vst.msk [vmem:[#allocation4 + $0xe0] sm:$0xff] %vm692, %v3098
      %3135 = vst.msk [vmem:[#allocation4 + $0xe8] sm:$0xff] %vm692, %v3099
      %3136 = vst.msk [vmem:[#allocation4 + $0xf0] sm:$0xff] %vm692, %v3100
      %3137 = vst.msk [vmem:[#allocation4 + $0xf8] sm:$0xff] %vm692, %v3101
      %3138 = vst.msk [vmem:[#allocation4 + $0x100] sm:$0xff] %vm692, %v3102
      %3139 = vst.msk [vmem:[#allocation4 + $0x108] sm:$0xff] %vm692, %v3103
      %3140 = vst.msk [vmem:[#allocation4 + $0x110] sm:$0xff] %vm692, %v3104
      %3141 = vst.msk [vmem:[#allocation4 + $0x118] sm:$0xff] %vm692, %v3105
      %v3142 = vld [vmem:[#allocation4] sm:$0xff]
      %v3143 = vld [vmem:[#allocation4 + $0x8] sm:$0xff]
      %v3144 = vld [vmem:[#allocation4 + $0x10] sm:$0xff]
      %v3145 = vld [vmem:[#allocation4 + $0x18] sm:$0xff]
      %v3146 = vld [vmem:[#allocation4 + $0x20] sm:$0xff]
      %v3147 = vld [vmem:[#allocation4 + $0x28] sm:$0xff]
      %v3148 = vld [vmem:[#allocation4 + $0x30] sm:$0xff]
      %v3149 = vld [vmem:[#allocation4 + $0x38] sm:$0xff]
      %v3150 = vld [vmem:[#allocation4 + $0x40] sm:$0xff]
      %v3151 = vld [vmem:[#allocation4 + $0x48] sm:$0xff]
      %v3152 = vld [vmem:[#allocation4 + $0x50] sm:$0xff]
      %v3153 = vld [vmem:[#allocation4 + $0x58] sm:$0xff]
      %v3154 = vld [vmem:[#allocation4 + $0x60] sm:$0xff]
      %v3155 = vld [vmem:[#allocation4 + $0x68] sm:$0xff]
      %v3156 = vld [vmem:[#allocation4 + $0x70] sm:$0xff]
      %v3157 = vld [vmem:[#allocation4 + $0x78] sm:$0xff]
      %v3158 = vld [vmem:[#allocation4 + $0x80] sm:$0xff]
      %v3159 = vld [vmem:[#allocation4 + $0x88] sm:$0xff]
      %v3160 = vld [vmem:[#allocation4 + $0x90] sm:$0xff]
      %v3161 = vld [vmem:[#allocation4 + $0x98] sm:$0xff]
      %v3162 = vld [vmem:[#allocation4 + $0xa0] sm:$0xff]
      %v3163 = vld [vmem:[#allocation4 + $0xa8] sm:$0xff]
      %v3164 = vld [vmem:[#allocation4 + $0xb0] sm:$0xff]
      %v3165 = vld [vmem:[#allocation4 + $0xb8] sm:$0xff]
      %v3166 = vld [vmem:[#allocation4 + $0xc0] sm:$0xff]
      %v3167 = vld [vmem:[#allocation4 + $0xc8] sm:$0xff]
      %v3168 = vld [vmem:[#allocation4 + $0xd0] sm:$0xff]
      %v3169 = vld [vmem:[#allocation4 + $0xd8] sm:$0xff]
      %v3170 = vld [vmem:[#allocation4 + $0xe0] sm:$0xff]
      %v3171 = vld [vmem:[#allocation4 + $0xe8] sm:$0xff]
      %v3172 = vld [vmem:[#allocation4 + $0xf0] sm:$0xff]
      %v3173 = vld [vmem:[#allocation4 + $0xf8] sm:$0xff]
      %v3174 = vld [vmem:[#allocation4 + $0x100] sm:$0xff]
      %v3175 = vld [vmem:[#allocation4 + $0x108] sm:$0xff]
      %v3176 = vld [vmem:[#allocation4 + $0x110] sm:$0xff]
      %v3177 = vld [vmem:[#allocation4 + $0x118] sm:$0xff]
      %v3178 = vld [vmem:[#allocation2 + $0x10] sm:$0xc]
      %v3179 = vld [vmem:[#allocation2 + $0x14] sm:$0xf]
      %v3180 = vld [vmem:[#allocation2 + $0x18] sm:$0xf]
      %v3181 = vld [vmem:[#allocation2 + $0x1c] sm:$0xf]
      %v3182 = vld [vmem:[#allocation2 + $0x20] sm:$0xf]
      %v3183 = vld [vmem:[#allocation2 + $0x24] sm:$0xf]
      %v3184 = vld [vmem:[#allocation2 + $0x28] sm:$0xf]
      %v3185 = vld [vmem:[#allocation2 + $0x2c] sm:$0xf]
      %v3186 = vld [vmem:[#allocation2 + $0x30] sm:$0xf]
      %v3187 = vld [vmem:[#allocation2 + $0x34] sm:$0xf]
      %v3188 = vld [vmem:[#allocation2 + $0x38] sm:$0xf]
      %v3189 = vld [vmem:[#allocation2 + $0x3c] sm:$0xf]
      %v3190 = vld [vmem:[#allocation2 + $0x40] sm:$0xf]
      %v3191 = vld [vmem:[#allocation2 + $0x44] sm:$0xf]
      %v3192 = vld [vmem:[#allocation2 + $0x48] sm:$0xf]
      %v3193 = vld [vmem:[#allocation2 + $0x4c] sm:$0xf]
      %v3194 = vld [vmem:[#allocation2 + $0x50] sm:$0xf]
      %v3195 = vld [vmem:[#allocation2 + $0x54] sm:$0xf]
      %v3196 = vld [vmem:[#allocation2 + $0x58] sm:$0xf]
      %v3197 = vld [vmem:[#allocation2 + $0x5c] sm:$0xf]
      %v3198 = vld [vmem:[#allocation2 + $0x60] sm:$0xf]
      %v3199 = vld [vmem:[#allocation2 + $0x64] sm:$0xf]
      %v3200 = vld [vmem:[#allocation2 + $0x68] sm:$0xf]
      %v3201 = vld [vmem:[#allocation2 + $0x6c] sm:$0xf]
      %v3202 = vld [vmem:[#allocation2 + $0x70] sm:$0xf]
      %v3203 = vld [vmem:[#allocation2 + $0x74] sm:$0xf]
      %v3204 = vld [vmem:[#allocation2 + $0x78] sm:$0xf]
      %v3205 = vld [vmem:[#allocation2 + $0x7c] sm:$0xf]
      %v3206 = vld [vmem:[#allocation2 + $0x80] sm:$0xf]
      %v3207 = vld [vmem:[#allocation2 + $0x84] sm:$0xf]
      %v3208 = vld [vmem:[#allocation2 + $0x88] sm:$0xf]
      %v3209 = vld [vmem:[#allocation2 + $0x8c] sm:$0xf]
      %v3210 = vld [vmem:[#allocation2 + $0x90] sm:$0xf]
      %v3211 = vld [vmem:[#allocation2 + $0x94] sm:$0xf]
      %v3212 = vld [vmem:[#allocation2 + $0x98] sm:$0xf]
      %v3213 = vld [vmem:[#allocation2 + $0x9c] sm:$0xf]
      %v3214 = vld [vmem:[#allocation2 + $0xa0] sm:$0x3]
      %s3215 = scalar_lea.vmem %s2, 12
      %v3216 = vld [vmem:[%s3215] sm:$0x3]
      %v3254 = vunpack.c.l.b16 %v3178
      %v3255 = vunpack.c.l.b16 %v3179
      %v3256 = vunpack.c.l.b16 %v3180
      %v3257 = vunpack.c.l.b16 %v3181
      %v3258 = vunpack.c.l.b16 %v3182
      %v3259 = vunpack.c.l.b16 %v3183
      %v3260 = vunpack.c.l.b16 %v3184
      %v3261 = vunpack.c.l.b16 %v3185
      %v3262 = vunpack.c.l.b16 %v3186
      %v3263 = vunpack.c.l.b16 %v3187
      %v3264 = vunpack.c.l.b16 %v3188
      %v3265 = vunpack.c.l.b16 %v3189
      %v3266 = vunpack.c.l.b16 %v3190
      %v3267 = vunpack.c.l.b16 %v3191
      %v3268 = vunpack.c.l.b16 %v3192
      %v3269 = vunpack.c.l.b16 %v3193
      %v3270 = vunpack.c.l.b16 %v3194
      %v3271 = vunpack.c.l.b16 %v3195
      %v3272 = vunpack.c.l.b16 %v3196
      %v3273 = vunpack.c.l.b16 %v3197
      %v3274 = vunpack.c.l.b16 %v3198
      %v3275 = vunpack.c.l.b16 %v3199
      %v3276 = vunpack.c.l.b16 %v3200
      %v3277 = vunpack.c.l.b16 %v3201
      %v3278 = vunpack.c.l.b16 %v3202
      %v3279 = vunpack.c.l.b16 %v3203
      %v3280 = vunpack.c.l.b16 %v3204
      %v3281 = vunpack.c.l.b16 %v3205
      %v3282 = vunpack.c.l.b16 %v3206
      %v3283 = vunpack.c.l.b16 %v3207
      %v3284 = vunpack.c.l.b16 %v3208
      %v3285 = vunpack.c.l.b16 %v3209
      %v3286 = vunpack.c.l.b16 %v3210
      %v3287 = vunpack.c.l.b16 %v3211
      %v3288 = vunpack.c.l.b16 %v3212
      %v3289 = vunpack.c.l.b16 %v3213
      %v3290 = vunpack.c.l.b16 %v3214
      %v3291 = vpack.c.b16 %v3255, %v3254
      %v3292 = vpack.c.b16 %v3257, %v3256
      %v3293 = vpack.c.b16 %v3259, %v3258
      %v3294 = vpack.c.b16 %v3261, %v3260
      %v3295 = vpack.c.b16 %v3263, %v3262
      %v3296 = vpack.c.b16 %v3265, %v3264
      %v3297 = vpack.c.b16 %v3267, %v3266
      %v3298 = vpack.c.b16 %v3269, %v3268
      %v3299 = vpack.c.b16 %v3271, %v3270
      %v3300 = vpack.c.b16 %v3273, %v3272
      %v3301 = vpack.c.b16 %v3275, %v3274
      %v3302 = vpack.c.b16 %v3277, %v3276
      %v3303 = vpack.c.b16 %v3279, %v3278
      %v3304 = vpack.c.b16 %v3281, %v3280
      %v3305 = vpack.c.b16 %v3283, %v3282
      %v3306 = vpack.c.b16 %v3285, %v3284
      %v3307 = vpack.c.b16 %v3287, %v3286
      %v3308 = vpack.c.b16 %v3289, %v3288
      %v3309 = vpack.c.b16 %v3290, %v3290
      %v3310 = vrot.slane %v3291, 2
      %v3311 = vrot.slane %v3292, 2
      %v3312 = vsel %vm2876, %v3310, %v3311
      %v3313 = vrot.slane %v3293, 2
      %v3314 = vsel %vm2876, %v3311, %v3313
      %v3315 = vrot.slane %v3294, 2
      %v3316 = vsel %vm2876, %v3313, %v3315
      %v3317 = vrot.slane %v3295, 2
      %v3318 = vsel %vm2876, %v3315, %v3317
      %v3319 = vrot.slane %v3296, 2
      %v3320 = vsel %vm2876, %v3317, %v3319
      %v3321 = vrot.slane %v3297, 2
      %v3322 = vsel %vm2876, %v3319, %v3321
      %v3323 = vrot.slane %v3298, 2
      %v3324 = vsel %vm2876, %v3321, %v3323
      %v3325 = vrot.slane %v3299, 2
      %v3326 = vsel %vm2876, %v3323, %v3325
      %v3327 = vrot.slane %v3300, 2
      %v3328 = vsel %vm2876, %v3325, %v3327
      %v3329 = vrot.slane %v3301, 2
      %v3330 = vsel %vm2876, %v3327, %v3329
      %v3331 = vrot.slane %v3302, 2
      %v3332 = vsel %vm2876, %v3329, %v3331
      %v3333 = vrot.slane %v3303, 2
      %v3334 = vsel %vm2876, %v3331, %v3333
      %v3335 = vrot.slane %v3304, 2
      %v3336 = vsel %vm2876, %v3333, %v3335
      %v3337 = vrot.slane %v3305, 2
      %v3338 = vsel %vm2876, %v3335, %v3337
      %v3339 = vrot.slane %v3306, 2
      %v3340 = vsel %vm2876, %v3337, %v3339
      %v3341 = vrot.slane %v3307, 2
      %v3342 = vsel %vm2876, %v3339, %v3341
      %v3343 = vrot.slane %v3308, 2
      %v3344 = vsel %vm2876, %v3341, %v3343
      %v3345 = vrot.slane %v3309, 2
      %v3346 = vsel %vm2876, %v3343, %v3345
      %v3348 = vsel %vm534, %v3312, 0
      %v3351 = vsel %vm534, %v3314, 0
      %v3354 = vsel %vm534, %v3316, 0
      %v3357 = vsel %vm534, %v3318, 0
      %v3360 = vsel %vm534, %v3320, 0
      %v3363 = vsel %vm534, %v3322, 0
      %v3366 = vsel %vm534, %v3324, 0
      %v3369 = vsel %vm534, %v3326, 0
      %v3372 = vsel %vm534, %v3328, 0
      %v3375 = vsel %vm534, %v3330, 0
      %v3378 = vsel %vm534, %v3332, 0
      %v3381 = vsel %vm534, %v3334, 0
      %v3384 = vsel %vm534, %v3336, 0
      %v3387 = vsel %vm534, %v3338, 0
      %v3390 = vsel %vm534, %v3340, 0
      %v3393 = vsel %vm534, %v3342, 0
      %v3396 = vsel %vm534, %v3344, 0
      %v3399 = vsel %vm534, %v3346, 0
      %v3402 = vsel %vm589, %v3216, 0
      %3404 = vmatpush.bf16.msra.mxu0 0
      %3405 = vmatpush.bf16.msra.mxu0 0
      %3406 = vmatpush.bf16.msra.mxu0 0
      %3407 = vmatpush.bf16.msra.mxu0 0
      %3408 = vmatpush.bf16.msra.mxu0 0
      %3409 = vmatpush.bf16.msra.mxu0 0
      %3410 = vmatpush.bf16.msra.mxu0 0
      %3411 = vmatpush.bf16.msra.mxu0 %v3402
      %3412 = vmatmul.bf16.gmra.mxu0 %v3348
      %v3413 = vpop.f32.mrf.mxu0
      %v3414 = vadd.f32 0.0, %v3413
      %v3415 = vpop.f32.mrf.mxu0
      %v3416 = vadd.f32 0.0, %v3415
      %3417 = vmatmul.bf16.gmra.mxu0 %v3351
      %v3418 = vpop.f32.mrf.mxu0
      %v3419 = vadd.f32 0.0, %v3418
      %v3420 = vpop.f32.mrf.mxu0
      %v3421 = vadd.f32 0.0, %v3420
      %3422 = vmatmul.bf16.gmra.mxu0 %v3354
      %v3423 = vpop.f32.mrf.mxu0
      %v3424 = vadd.f32 0.0, %v3423
      %v3425 = vpop.f32.mrf.mxu0
      %v3426 = vadd.f32 0.0, %v3425
      %3427 = vmatmul.bf16.gmra.mxu0 %v3357
      %v3428 = vpop.f32.mrf.mxu0
      %v3429 = vadd.f32 0.0, %v3428
      %v3430 = vpop.f32.mrf.mxu0
      %v3431 = vadd.f32 0.0, %v3430
      %3432 = vmatmul.bf16.gmra.mxu0 %v3360
      %v3433 = vpop.f32.mrf.mxu0
      %v3434 = vadd.f32 0.0, %v3433
      %v3435 = vpop.f32.mrf.mxu0
      %v3436 = vadd.f32 0.0, %v3435
      %3437 = vmatmul.bf16.gmra.mxu0 %v3363
      %v3438 = vpop.f32.mrf.mxu0
      %v3439 = vadd.f32 0.0, %v3438
      %v3440 = vpop.f32.mrf.mxu0
      %v3441 = vadd.f32 0.0, %v3440
      %3442 = vmatmul.bf16.gmra.mxu0 %v3366
      %v3443 = vpop.f32.mrf.mxu0
      %v3444 = vadd.f32 0.0, %v3443
      %v3445 = vpop.f32.mrf.mxu0
      %v3446 = vadd.f32 0.0, %v3445
      %3447 = vmatmul.bf16.gmra.mxu0 %v3369
      %v3448 = vpop.f32.mrf.mxu0
      %v3449 = vadd.f32 0.0, %v3448
      %v3450 = vpop.f32.mrf.mxu0
      %v3451 = vadd.f32 0.0, %v3450
      %3452 = vmatmul.bf16.gmra.mxu0 %v3372
      %v3453 = vpop.f32.mrf.mxu0
      %v3454 = vadd.f32 0.0, %v3453
      %v3455 = vpop.f32.mrf.mxu0
      %v3456 = vadd.f32 0.0, %v3455
      %3457 = vmatmul.bf16.gmra.mxu0 %v3375
      %v3458 = vpop.f32.mrf.mxu0
      %v3459 = vadd.f32 0.0, %v3458
      %v3460 = vpop.f32.mrf.mxu0
      %v3461 = vadd.f32 0.0, %v3460
      %3462 = vmatmul.bf16.gmra.mxu0 %v3378
      %v3463 = vpop.f32.mrf.mxu0
      %v3464 = vadd.f32 0.0, %v3463
      %v3465 = vpop.f32.mrf.mxu0
      %v3466 = vadd.f32 0.0, %v3465
      %3467 = vmatmul.bf16.gmra.mxu0 %v3381
      %v3468 = vpop.f32.mrf.mxu0
      %v3469 = vadd.f32 0.0, %v3468
      %v3470 = vpop.f32.mrf.mxu0
      %v3471 = vadd.f32 0.0, %v3470
      %3472 = vmatmul.bf16.gmra.mxu0 %v3384
      %v3473 = vpop.f32.mrf.mxu0
      %v3474 = vadd.f32 0.0, %v3473
      %v3475 = vpop.f32.mrf.mxu0
      %v3476 = vadd.f32 0.0, %v3475
      %3477 = vmatmul.bf16.gmra.mxu0 %v3387
      %v3478 = vpop.f32.mrf.mxu0
      %v3479 = vadd.f32 0.0, %v3478
      %v3480 = vpop.f32.mrf.mxu0
      %v3481 = vadd.f32 0.0, %v3480
      %3482 = vmatmul.bf16.gmra.mxu0 %v3390
      %v3483 = vpop.f32.mrf.mxu0
      %v3484 = vadd.f32 0.0, %v3483
      %v3485 = vpop.f32.mrf.mxu0
      %v3486 = vadd.f32 0.0, %v3485
      %3487 = vmatmul.bf16.gmra.mxu0 %v3393
      %v3488 = vpop.f32.mrf.mxu0
      %v3489 = vadd.f32 0.0, %v3488
      %v3490 = vpop.f32.mrf.mxu0
      %v3491 = vadd.f32 0.0, %v3490
      %3492 = vmatmul.bf16.gmra.mxu0 %v3396
      %v3493 = vpop.f32.mrf.mxu0
      %v3494 = vadd.f32 0.0, %v3493
      %v3495 = vpop.f32.mrf.mxu0
      %v3496 = vadd.f32 0.0, %v3495
      %3497 = vmatmul.bf16.gmra.mxu0 %v3399
      %v3498 = vpop.f32.mrf.mxu0
      %v3499 = vadd.f32 0.0, %v3498
      %v3500 = vpop.f32.mrf.mxu0
      %v3501 = vadd.f32 0.0, %v3500
      %3502 = vdwg.mxu0
      %v3503 = vadd.f32 %v3142, %v3414
      %v3504 = vadd.f32 %v3143, %v3416
      %v3505 = vadd.f32 %v3144, %v3419
      %v3506 = vadd.f32 %v3145, %v3421
      %v3507 = vadd.f32 %v3146, %v3424
      %v3508 = vadd.f32 %v3147, %v3426
      %v3509 = vadd.f32 %v3148, %v3429
      %v3510 = vadd.f32 %v3149, %v3431
      %v3511 = vadd.f32 %v3150, %v3434
      %v3512 = vadd.f32 %v3151, %v3436
      %v3513 = vadd.f32 %v3152, %v3439
      %v3514 = vadd.f32 %v3153, %v3441
      %v3515 = vadd.f32 %v3154, %v3444
      %v3516 = vadd.f32 %v3155, %v3446
      %v3517 = vadd.f32 %v3156, %v3449
      %v3518 = vadd.f32 %v3157, %v3451
      %v3519 = vadd.f32 %v3158, %v3454
      %v3520 = vadd.f32 %v3159, %v3456
      %v3521 = vadd.f32 %v3160, %v3459
      %v3522 = vadd.f32 %v3161, %v3461
      %v3523 = vadd.f32 %v3162, %v3464
      %v3524 = vadd.f32 %v3163, %v3466
      %v3525 = vadd.f32 %v3164, %v3469
      %v3526 = vadd.f32 %v3165, %v3471
      %v3527 = vadd.f32 %v3166, %v3474
      %v3528 = vadd.f32 %v3167, %v3476
      %v3529 = vadd.f32 %v3168, %v3479
      %v3530 = vadd.f32 %v3169, %v3481
      %v3531 = vadd.f32 %v3170, %v3484
      %v3532 = vadd.f32 %v3171, %v3486
      %v3533 = vadd.f32 %v3172, %v3489
      %v3534 = vadd.f32 %v3173, %v3491
      %v3535 = vadd.f32 %v3174, %v3494
      %v3536 = vadd.f32 %v3175, %v3496
      %v3537 = vadd.f32 %v3176, %v3499
      %v3538 = vadd.f32 %v3177, %v3501
      %3539 = vst.msk [vmem:[#allocation4] sm:$0xff] %vm692, %v3503
      %3540 = vst.msk [vmem:[#allocation4 + $0x8] sm:$0xff] %vm692, %v3504
      %3541 = vst.msk [vmem:[#allocation4 + $0x10] sm:$0xff] %vm692, %v3505
      %3542 = vst.msk [vmem:[#allocation4 + $0x18] sm:$0xff] %vm692, %v3506
      %3543 = vst.msk [vmem:[#allocation4 + $0x20] sm:$0xff] %vm692, %v3507
      %3544 = vst.msk [vmem:[#allocation4 + $0x28] sm:$0xff] %vm692, %v3508
      %3545 = vst.msk [vmem:[#allocation4 + $0x30] sm:$0xff] %vm692, %v3509
      %3546 = vst.msk [vmem:[#allocation4 + $0x38] sm:$0xff] %vm692, %v3510
      %3547 = vst.msk [vmem:[#allocation4 + $0x40] sm:$0xff] %vm692, %v3511
      %3548 = vst.msk [vmem:[#allocation4 + $0x48] sm:$0xff] %vm692, %v3512
      %3549 = vst.msk [vmem:[#allocation4 + $0x50] sm:$0xff] %vm692, %v3513
      %3550 = vst.msk [vmem:[#allocation4 + $0x58] sm:$0xff] %vm692, %v3514
      %3551 = vst.msk [vmem:[#allocation4 + $0x60] sm:$0xff] %vm692, %v3515
      %3552 = vst.msk [vmem:[#allocation4 + $0x68] sm:$0xff] %vm692, %v3516
      %3553 = vst.msk [vmem:[#allocation4 + $0x70] sm:$0xff] %vm692, %v3517
      %3554 = vst.msk [vmem:[#allocation4 + $0x78] sm:$0xff] %vm692, %v3518
      %3555 = vst.msk [vmem:[#allocation4 + $0x80] sm:$0xff] %vm692, %v3519
      %3556 = vst.msk [vmem:[#allocation4 + $0x88] sm:$0xff] %vm692, %v3520
      %3557 = vst.msk [vmem:[#allocation4 + $0x90] sm:$0xff] %vm692, %v3521
      %3558 = vst.msk [vmem:[#allocation4 + $0x98] sm:$0xff] %vm692, %v3522
      %3559 = vst.msk [vmem:[#allocation4 + $0xa0] sm:$0xff] %vm692, %v3523
      %3560 = vst.msk [vmem:[#allocation4 + $0xa8] sm:$0xff] %vm692, %v3524
      %3561 = vst.msk [vmem:[#allocation4 + $0xb0] sm:$0xff] %vm692, %v3525
      %3562 = vst.msk [vmem:[#allocation4 + $0xb8] sm:$0xff] %vm692, %v3526
      %3563 = vst.msk [vmem:[#allocation4 + $0xc0] sm:$0xff] %vm692, %v3527
      %3564 = vst.msk [vmem:[#allocation4 + $0xc8] sm:$0xff] %vm692, %v3528
      %3565 = vst.msk [vmem:[#allocation4 + $0xd0] sm:$0xff] %vm692, %v3529
      %3566 = vst.msk [vmem:[#allocation4 + $0xd8] sm:$0xff] %vm692, %v3530
      %3567 = vst.msk [vmem:[#allocation4 + $0xe0] sm:$0xff] %vm692, %v3531
      %3568 = vst.msk [vmem:[#allocation4 + $0xe8] sm:$0xff] %vm692, %v3532
      %3569 = vst.msk [vmem:[#allocation4 + $0xf0] sm:$0xff] %vm692, %v3533
      %3570 = vst.msk [vmem:[#allocation4 + $0xf8] sm:$0xff] %vm692, %v3534
      %3571 = vst.msk [vmem:[#allocation4 + $0x100] sm:$0xff] %vm692, %v3535
      %3572 = vst.msk [vmem:[#allocation4 + $0x108] sm:$0xff] %vm692, %v3536
      %3573 = vst.msk [vmem:[#allocation4 + $0x110] sm:$0xff] %vm692, %v3537
      %3574 = vst.msk [vmem:[#allocation4 + $0x118] sm:$0xff] %vm692, %v3538
      %v3575 = vld [vmem:[#allocation4] sm:$0xff]
      %v3576 = vld [vmem:[#allocation4 + $0x8] sm:$0xff]
      %v3577 = vld [vmem:[#allocation4 + $0x10] sm:$0xff]
      %v3578 = vld [vmem:[#allocation4 + $0x18] sm:$0xff]
      %v3579 = vld [vmem:[#allocation4 + $0x20] sm:$0xff]
      %v3580 = vld [vmem:[#allocation4 + $0x28] sm:$0xff]
      %v3581 = vld [vmem:[#allocation4 + $0x30] sm:$0xff]
      %v3582 = vld [vmem:[#allocation4 + $0x38] sm:$0xff]
      %v3583 = vld [vmem:[#allocation4 + $0x40] sm:$0xff]
      %v3584 = vld [vmem:[#allocation4 + $0x48] sm:$0xff]
      %v3585 = vld [vmem:[#allocation4 + $0x50] sm:$0xff]
      %v3586 = vld [vmem:[#allocation4 + $0x58] sm:$0xff]
      %v3587 = vld [vmem:[#allocation4 + $0x60] sm:$0xff]
      %v3588 = vld [vmem:[#allocation4 + $0x68] sm:$0xff]
      %v3589 = vld [vmem:[#allocation4 + $0x70] sm:$0xff]
      %v3590 = vld [vmem:[#allocation4 + $0x78] sm:$0xff]
      %v3591 = vld [vmem:[#allocation4 + $0x80] sm:$0xff]
      %v3592 = vld [vmem:[#allocation4 + $0x88] sm:$0xff]
      %v3593 = vld [vmem:[#allocation4 + $0x90] sm:$0xff]
      %v3594 = vld [vmem:[#allocation4 + $0x98] sm:$0xff]
      %v3595 = vld [vmem:[#allocation4 + $0xa0] sm:$0xff]
      %v3596 = vld [vmem:[#allocation4 + $0xa8] sm:$0xff]
      %v3597 = vld [vmem:[#allocation4 + $0xb0] sm:$0xff]
      %v3598 = vld [vmem:[#allocation4 + $0xb8] sm:$0xff]
      %v3599 = vld [vmem:[#allocation4 + $0xc0] sm:$0xff]
      %v3600 = vld [vmem:[#allocation4 + $0xc8] sm:$0xff]
      %v3601 = vld [vmem:[#allocation4 + $0xd0] sm:$0xff]
      %v3602 = vld [vmem:[#allocation4 + $0xd8] sm:$0xff]
      %v3603 = vld [vmem:[#allocation4 + $0xe0] sm:$0xff]
      %v3604 = vld [vmem:[#allocation4 + $0xe8] sm:$0xff]
      %v3605 = vld [vmem:[#allocation4 + $0xf0] sm:$0xff]
      %v3606 = vld [vmem:[#allocation4 + $0xf8] sm:$0xff]
      %v3607 = vld [vmem:[#allocation4 + $0x100] sm:$0xff]
      %v3608 = vld [vmem:[#allocation4 + $0x108] sm:$0xff]
      %v3609 = vld [vmem:[#allocation4 + $0x110] sm:$0xff]
      %v3610 = vld [vmem:[#allocation4 + $0x118] sm:$0xff]
      %v3611 = vld [vmem:[#allocation2 + $0x10] sm:$0xc]
      %v3612 = vld [vmem:[#allocation2 + $0x14] sm:$0xf]
      %v3613 = vld [vmem:[#allocation2 + $0x18] sm:$0xf]
      %v3614 = vld [vmem:[#allocation2 + $0x1c] sm:$0xf]
      %v3615 = vld [vmem:[#allocation2 + $0x20] sm:$0xf]
      %v3616 = vld [vmem:[#allocation2 + $0x24] sm:$0xf]
      %v3617 = vld [vmem:[#allocation2 + $0x28] sm:$0xf]
      %v3618 = vld [vmem:[#allocation2 + $0x2c] sm:$0xf]
      %v3619 = vld [vmem:[#allocation2 + $0x30] sm:$0xf]
      %v3620 = vld [vmem:[#allocation2 + $0x34] sm:$0xf]
      %v3621 = vld [vmem:[#allocation2 + $0x38] sm:$0xf]
      %v3622 = vld [vmem:[#allocation2 + $0x3c] sm:$0xf]
      %v3623 = vld [vmem:[#allocation2 + $0x40] sm:$0xf]
      %v3624 = vld [vmem:[#allocation2 + $0x44] sm:$0xf]
      %v3625 = vld [vmem:[#allocation2 + $0x48] sm:$0xf]
      %v3626 = vld [vmem:[#allocation2 + $0x4c] sm:$0xf]
      %v3627 = vld [vmem:[#allocation2 + $0x50] sm:$0xf]
      %v3628 = vld [vmem:[#allocation2 + $0x54] sm:$0xf]
      %v3629 = vld [vmem:[#allocation2 + $0x58] sm:$0xf]
      %v3630 = vld [vmem:[#allocation2 + $0x5c] sm:$0xf]
      %v3631 = vld [vmem:[#allocation2 + $0x60] sm:$0xf]
      %v3632 = vld [vmem:[#allocation2 + $0x64] sm:$0xf]
      %v3633 = vld [vmem:[#allocation2 + $0x68] sm:$0xf]
      %v3634 = vld [vmem:[#allocation2 + $0x6c] sm:$0xf]
      %v3635 = vld [vmem:[#allocation2 + $0x70] sm:$0xf]
      %v3636 = vld [vmem:[#allocation2 + $0x74] sm:$0xf]
      %v3637 = vld [vmem:[#allocation2 + $0x78] sm:$0xf]
      %v3638 = vld [vmem:[#allocation2 + $0x7c] sm:$0xf]
      %v3639 = vld [vmem:[#allocation2 + $0x80] sm:$0xf]
      %v3640 = vld [vmem:[#allocation2 + $0x84] sm:$0xf]
      %v3641 = vld [vmem:[#allocation2 + $0x88] sm:$0xf]
      %v3642 = vld [vmem:[#allocation2 + $0x8c] sm:$0xf]
      %v3643 = vld [vmem:[#allocation2 + $0x90] sm:$0xf]
      %v3644 = vld [vmem:[#allocation2 + $0x94] sm:$0xf]
      %v3645 = vld [vmem:[#allocation2 + $0x98] sm:$0xf]
      %v3646 = vld [vmem:[#allocation2 + $0x9c] sm:$0xf]
      %v3647 = vld [vmem:[#allocation2 + $0xa0] sm:$0x7]
      %s3648 = scalar_lea.vmem %s2, 14
      %v3649 = vld [vmem:[%s3648] sm:$0x3]
      %v3687 = vunpack.c.l.b16 %v3611
      %v3688 = vunpack.c.l.b16 %v3612
      %v3689 = vunpack.c.l.b16 %v3613
      %v3690 = vunpack.c.l.b16 %v3614
      %v3691 = vunpack.c.l.b16 %v3615
      %v3692 = vunpack.c.l.b16 %v3616
      %v3693 = vunpack.c.l.b16 %v3617
      %v3694 = vunpack.c.l.b16 %v3618
      %v3695 = vunpack.c.l.b16 %v3619
      %v3696 = vunpack.c.l.b16 %v3620
      %v3697 = vunpack.c.l.b16 %v3621
      %v3698 = vunpack.c.l.b16 %v3622
      %v3699 = vunpack.c.l.b16 %v3623
      %v3700 = vunpack.c.l.b16 %v3624
      %v3701 = vunpack.c.l.b16 %v3625
      %v3702 = vunpack.c.l.b16 %v3626
      %v3703 = vunpack.c.l.b16 %v3627
      %v3704 = vunpack.c.l.b16 %v3628
      %v3705 = vunpack.c.l.b16 %v3629
      %v3706 = vunpack.c.l.b16 %v3630
      %v3707 = vunpack.c.l.b16 %v3631
      %v3708 = vunpack.c.l.b16 %v3632
      %v3709 = vunpack.c.l.b16 %v3633
      %v3710 = vunpack.c.l.b16 %v3634
      %v3711 = vunpack.c.l.b16 %v3635
      %v3712 = vunpack.c.l.b16 %v3636
      %v3713 = vunpack.c.l.b16 %v3637
      %v3714 = vunpack.c.l.b16 %v3638
      %v3715 = vunpack.c.l.b16 %v3639
      %v3716 = vunpack.c.l.b16 %v3640
      %v3717 = vunpack.c.l.b16 %v3641
      %v3718 = vunpack.c.l.b16 %v3642
      %v3719 = vunpack.c.l.b16 %v3643
      %v3720 = vunpack.c.l.b16 %v3644
      %v3721 = vunpack.c.l.b16 %v3645
      %v3722 = vunpack.c.l.b16 %v3646
      %v3723 = vunpack.c.l.b16 %v3647
      %v3724 = vpack.c.b16 %v3688, %v3687
      %v3725 = vpack.c.b16 %v3690, %v3689
      %v3726 = vpack.c.b16 %v3692, %v3691
      %v3727 = vpack.c.b16 %v3694, %v3693
      %v3728 = vpack.c.b16 %v3696, %v3695
      %v3729 = vpack.c.b16 %v3698, %v3697
      %v3730 = vpack.c.b16 %v3700, %v3699
      %v3731 = vpack.c.b16 %v3702, %v3701
      %v3732 = vpack.c.b16 %v3704, %v3703
      %v3733 = vpack.c.b16 %v3706, %v3705
      %v3734 = vpack.c.b16 %v3708, %v3707
      %v3735 = vpack.c.b16 %v3710, %v3709
      %v3736 = vpack.c.b16 %v3712, %v3711
      %v3737 = vpack.c.b16 %v3714, %v3713
      %v3738 = vpack.c.b16 %v3716, %v3715
      %v3739 = vpack.c.b16 %v3718, %v3717
      %v3740 = vpack.c.b16 %v3720, %v3719
      %v3741 = vpack.c.b16 %v3722, %v3721
      %v3742 = vpack.c.b16 %v3723, %v3723
      %vm3743 = vsmask.f32 5376
      %v3745 = vshrl.u32 %v3724, 16
      %v3747 = vrot.slane %v3745, 2
      %v3748 = vshll.u32 %v3724, 16
      %v3750 = vrot.slane %v3748, 3
      %v3751 = vor.u32 %v3747, %v3750
      %v3753 = vshrl.u32 %v3725, 16
      %v3755 = vrot.slane %v3753, 2
      %v3756 = vshll.u32 %v3725, 16
      %v3758 = vrot.slane %v3756, 3
      %v3759 = vor.u32 %v3755, %v3758
      %v3760 = vsel %vm3743, %v3751, %v3759
      %v3762 = vshrl.u32 %v3726, 16
      %v3764 = vrot.slane %v3762, 2
      %v3765 = vshll.u32 %v3726, 16
      %v3767 = vrot.slane %v3765, 3
      %v3768 = vor.u32 %v3764, %v3767
      %v3769 = vsel %vm3743, %v3759, %v3768
      %v3771 = vshrl.u32 %v3727, 16
      %v3773 = vrot.slane %v3771, 2
      %v3774 = vshll.u32 %v3727, 16
      %v3776 = vrot.slane %v3774, 3
      %v3777 = vor.u32 %v3773, %v3776
      %v3778 = vsel %vm3743, %v3768, %v3777
      %v3780 = vshrl.u32 %v3728, 16
      %v3782 = vrot.slane %v3780, 2
      %v3783 = vshll.u32 %v3728, 16
      %v3785 = vrot.slane %v3783, 3
      %v3786 = vor.u32 %v3782, %v3785
      %v3787 = vsel %vm3743, %v3777, %v3786
      %v3789 = vshrl.u32 %v3729, 16
      %v3791 = vrot.slane %v3789, 2
      %v3792 = vshll.u32 %v3729, 16
      %v3794 = vrot.slane %v3792, 3
      %v3795 = vor.u32 %v3791, %v3794
      %v3796 = vsel %vm3743, %v3786, %v3795
      %v3798 = vshrl.u32 %v3730, 16
      %v3800 = vrot.slane %v3798, 2
      %v3801 = vshll.u32 %v3730, 16
      %v3803 = vrot.slane %v3801, 3
      %v3804 = vor.u32 %v3800, %v3803
      %v3805 = vsel %vm3743, %v3795, %v3804
      %v3807 = vshrl.u32 %v3731, 16
      %v3809 = vrot.slane %v3807, 2
      %v3810 = vshll.u32 %v3731, 16
      %v3812 = vrot.slane %v3810, 3
      %v3813 = vor.u32 %v3809, %v3812
      %v3814 = vsel %vm3743, %v3804, %v3813
      %v3816 = vshrl.u32 %v3732, 16
      %v3818 = vrot.slane %v3816, 2
      %v3819 = vshll.u32 %v3732, 16
      %v3821 = vrot.slane %v3819, 3
      %v3822 = vor.u32 %v3818, %v3821
      %v3823 = vsel %vm3743, %v3813, %v3822
      %v3825 = vshrl.u32 %v3733, 16
      %v3827 = vrot.slane %v3825, 2
      %v3828 = vshll.u32 %v3733, 16
      %v3830 = vrot.slane %v3828, 3
      %v3831 = vor.u32 %v3827, %v3830
      %v3832 = vsel %vm3743, %v3822, %v3831
      %v3834 = vshrl.u32 %v3734, 16
      %v3836 = vrot.slane %v3834, 2
      %v3837 = vshll.u32 %v3734, 16
      %v3839 = vrot.slane %v3837, 3
      %v3840 = vor.u32 %v3836, %v3839
      %v3841 = vsel %vm3743, %v3831, %v3840
      %v3843 = vshrl.u32 %v3735, 16
      %v3845 = vrot.slane %v3843, 2
      %v3846 = vshll.u32 %v3735, 16
      %v3848 = vrot.slane %v3846, 3
      %v3849 = vor.u32 %v3845, %v3848
      %v3850 = vsel %vm3743, %v3840, %v3849
      %v3852 = vshrl.u32 %v3736, 16
      %v3854 = vrot.slane %v3852, 2
      %v3855 = vshll.u32 %v3736, 16
      %v3857 = vrot.slane %v3855, 3
      %v3858 = vor.u32 %v3854, %v3857
      %v3859 = vsel %vm3743, %v3849, %v3858
      %v3861 = vshrl.u32 %v3737, 16
      %v3863 = vrot.slane %v3861, 2
      %v3864 = vshll.u32 %v3737, 16
      %v3866 = vrot.slane %v3864, 3
      %v3867 = vor.u32 %v3863, %v3866
      %v3868 = vsel %vm3743, %v3858, %v3867
      %v3870 = vshrl.u32 %v3738, 16
      %v3872 = vrot.slane %v3870, 2
      %v3873 = vshll.u32 %v3738, 16
      %v3875 = vrot.slane %v3873, 3
      %v3876 = vor.u32 %v3872, %v3875
      %v3877 = vsel %vm3743, %v3867, %v3876
      %v3879 = vshrl.u32 %v3739, 16
      %v3881 = vrot.slane %v3879, 2
      %v3882 = vshll.u32 %v3739, 16
      %v3884 = vrot.slane %v3882, 3
      %v3885 = vor.u32 %v3881, %v3884
      %v3886 = vsel %vm3743, %v3876, %v3885
      %v3888 = vshrl.u32 %v3740, 16
      %v3890 = vrot.slane %v3888, 2
      %v3891 = vshll.u32 %v3740, 16
      %v3893 = vrot.slane %v3891, 3
      %v3894 = vor.u32 %v3890, %v3893
      %v3895 = vsel %vm3743, %v3885, %v3894
      %v3897 = vshrl.u32 %v3741, 16
      %v3899 = vrot.slane %v3897, 2
      %v3900 = vshll.u32 %v3741, 16
      %v3902 = vrot.slane %v3900, 3
      %v3903 = vor.u32 %v3899, %v3902
      %v3904 = vsel %vm3743, %v3894, %v3903
      %v3906 = vshrl.u32 %v3742, 16
      %v3908 = vrot.slane %v3906, 2
      %v3909 = vshll.u32 %v3742, 16
      %v3911 = vrot.slane %v3909, 3
      %v3912 = vor.u32 %v3908, %v3911
      %v3913 = vsel %vm3743, %v3903, %v3912
      %v3915 = vsel %vm534, %v3760, 0
      %v3918 = vsel %vm534, %v3769, 0
      %v3921 = vsel %vm534, %v3778, 0
      %v3924 = vsel %vm534, %v3787, 0
      %v3927 = vsel %vm534, %v3796, 0
      %v3930 = vsel %vm534, %v3805, 0
      %v3933 = vsel %vm534, %v3814, 0
      %v3936 = vsel %vm534, %v3823, 0
      %v3939 = vsel %vm534, %v3832, 0
      %v3942 = vsel %vm534, %v3841, 0
      %v3945 = vsel %vm534, %v3850, 0
      %v3948 = vsel %vm534, %v3859, 0
      %v3951 = vsel %vm534, %v3868, 0
      %v3954 = vsel %vm534, %v3877, 0
      %v3957 = vsel %vm534, %v3886, 0
      %v3960 = vsel %vm534, %v3895, 0
      %v3963 = vsel %vm534, %v3904, 0
      %v3966 = vsel %vm534, %v3913, 0
      %v3969 = vsel %vm589, %v3649, 0
      %3971 = vmatpush.bf16.msra.mxu0 0
      %3972 = vmatpush.bf16.msra.mxu0 0
      %3973 = vmatpush.bf16.msra.mxu0 0
      %3974 = vmatpush.bf16.msra.mxu0 0
      %3975 = vmatpush.bf16.msra.mxu0 0
      %3976 = vmatpush.bf16.msra.mxu0 0
      %3977 = vmatpush.bf16.msra.mxu0 0
      %3978 = vmatpush.bf16.msra.mxu0 %v3969
      %3979 = vmatmul.bf16.gmra.mxu0 %v3915
      %v3980 = vpop.f32.mrf.mxu0
      %v3981 = vadd.f32 0.0, %v3980
      %v3982 = vpop.f32.mrf.mxu0
      %v3983 = vadd.f32 0.0, %v3982
      %3984 = vmatmul.bf16.gmra.mxu0 %v3918
      %v3985 = vpop.f32.mrf.mxu0
      %v3986 = vadd.f32 0.0, %v3985
      %v3987 = vpop.f32.mrf.mxu0
      %v3988 = vadd.f32 0.0, %v3987
      %3989 = vmatmul.bf16.gmra.mxu0 %v3921
      %v3990 = vpop.f32.mrf.mxu0
      %v3991 = vadd.f32 0.0, %v3990
      %v3992 = vpop.f32.mrf.mxu0
      %v3993 = vadd.f32 0.0, %v3992
      %3994 = vmatmul.bf16.gmra.mxu0 %v3924
      %v3995 = vpop.f32.mrf.mxu0
      %v3996 = vadd.f32 0.0, %v3995
      %v3997 = vpop.f32.mrf.mxu0
      %v3998 = vadd.f32 0.0, %v3997
      %3999 = vmatmul.bf16.gmra.mxu0 %v3927
      %v4000 = vpop.f32.mrf.mxu0
      %v4001 = vadd.f32 0.0, %v4000
      %v4002 = vpop.f32.mrf.mxu0
      %v4003 = vadd.f32 0.0, %v4002
      %4004 = vmatmul.bf16.gmra.mxu0 %v3930
      %v4005 = vpop.f32.mrf.mxu0
      %v4006 = vadd.f32 0.0, %v4005
      %v4007 = vpop.f32.mrf.mxu0
      %v4008 = vadd.f32 0.0, %v4007
      %4009 = vmatmul.bf16.gmra.mxu0 %v3933
      %v4010 = vpop.f32.mrf.mxu0
      %v4011 = vadd.f32 0.0, %v4010
      %v4012 = vpop.f32.mrf.mxu0
      %v4013 = vadd.f32 0.0, %v4012
      %4014 = vmatmul.bf16.gmra.mxu0 %v3936
      %v4015 = vpop.f32.mrf.mxu0
      %v4016 = vadd.f32 0.0, %v4015
      %v4017 = vpop.f32.mrf.mxu0
      %v4018 = vadd.f32 0.0, %v4017
      %4019 = vmatmul.bf16.gmra.mxu0 %v3939
      %v4020 = vpop.f32.mrf.mxu0
      %v4021 = vadd.f32 0.0, %v4020
      %v4022 = vpop.f32.mrf.mxu0
      %v4023 = vadd.f32 0.0, %v4022
      %4024 = vmatmul.bf16.gmra.mxu0 %v3942
      %v4025 = vpop.f32.mrf.mxu0
      %v4026 = vadd.f32 0.0, %v4025
      %v4027 = vpop.f32.mrf.mxu0
      %v4028 = vadd.f32 0.0, %v4027
      %4029 = vmatmul.bf16.gmra.mxu0 %v3945
      %v4030 = vpop.f32.mrf.mxu0
      %v4031 = vadd.f32 0.0, %v4030
      %v4032 = vpop.f32.mrf.mxu0
      %v4033 = vadd.f32 0.0, %v4032
      %4034 = vmatmul.bf16.gmra.mxu0 %v3948
      %v4035 = vpop.f32.mrf.mxu0
      %v4036 = vadd.f32 0.0, %v4035
      %v4037 = vpop.f32.mrf.mxu0
      %v4038 = vadd.f32 0.0, %v4037
      %4039 = vmatmul.bf16.gmra.mxu0 %v3951
      %v4040 = vpop.f32.mrf.mxu0
      %v4041 = vadd.f32 0.0, %v4040
      %v4042 = vpop.f32.mrf.mxu0
      %v4043 = vadd.f32 0.0, %v4042
      %4044 = vmatmul.bf16.gmra.mxu0 %v3954
      %v4045 = vpop.f32.mrf.mxu0
      %v4046 = vadd.f32 0.0, %v4045
      %v4047 = vpop.f32.mrf.mxu0
      %v4048 = vadd.f32 0.0, %v4047
      %4049 = vmatmul.bf16.gmra.mxu0 %v3957
      %v4050 = vpop.f32.mrf.mxu0
      %v4051 = vadd.f32 0.0, %v4050
      %v4052 = vpop.f32.mrf.mxu0
      %v4053 = vadd.f32 0.0, %v4052
      %4054 = vmatmul.bf16.gmra.mxu0 %v3960
      %v4055 = vpop.f32.mrf.mxu0
      %v4056 = vadd.f32 0.0, %v4055
      %v4057 = vpop.f32.mrf.mxu0
      %v4058 = vadd.f32 0.0, %v4057
      %4059 = vmatmul.bf16.gmra.mxu0 %v3963
      %v4060 = vpop.f32.mrf.mxu0
      %v4061 = vadd.f32 0.0, %v4060
      %v4062 = vpop.f32.mrf.mxu0
      %v4063 = vadd.f32 0.0, %v4062
      %4064 = vmatmul.bf16.gmra.mxu0 %v3966
      %v4065 = vpop.f32.mrf.mxu0
      %v4066 = vadd.f32 0.0, %v4065
      %v4067 = vpop.f32.mrf.mxu0
      %v4068 = vadd.f32 0.0, %v4067
      %4069 = vdwg.mxu0
      %v4070 = vadd.f32 %v3575, %v3981
      %v4071 = vadd.f32 %v3576, %v3983
      %v4072 = vadd.f32 %v3577, %v3986
      %v4073 = vadd.f32 %v3578, %v3988
      %v4074 = vadd.f32 %v3579, %v3991
      %v4075 = vadd.f32 %v3580, %v3993
      %v4076 = vadd.f32 %v3581, %v3996
      %v4077 = vadd.f32 %v3582, %v3998
      %v4078 = vadd.f32 %v3583, %v4001
      %v4079 = vadd.f32 %v3584, %v4003
      %v4080 = vadd.f32 %v3585, %v4006
      %v4081 = vadd.f32 %v3586, %v4008
      %v4082 = vadd.f32 %v3587, %v4011
      %v4083 = vadd.f32 %v3588, %v4013
      %v4084 = vadd.f32 %v3589, %v4016
      %v4085 = vadd.f32 %v3590, %v4018
      %v4086 = vadd.f32 %v3591, %v4021
      %v4087 = vadd.f32 %v3592, %v4023
      %v4088 = vadd.f32 %v3593, %v4026
      %v4089 = vadd.f32 %v3594, %v4028
      %v4090 = vadd.f32 %v3595, %v4031
      %v4091 = vadd.f32 %v3596, %v4033
      %v4092 = vadd.f32 %v3597, %v4036
      %v4093 = vadd.f32 %v3598, %v4038
      %v4094 = vadd.f32 %v3599, %v4041
      %v4095 = vadd.f32 %v3600, %v4043
      %v4096 = vadd.f32 %v3601, %v4046
      %v4097 = vadd.f32 %v3602, %v4048
      %v4098 = vadd.f32 %v3603, %v4051
      %v4099 = vadd.f32 %v3604, %v4053
      %v4100 = vadd.f32 %v3605, %v4056
      %v4101 = vadd.f32 %v3606, %v4058
      %v4102 = vadd.f32 %v3607, %v4061
      %v4103 = vadd.f32 %v3608, %v4063
      %v4104 = vadd.f32 %v3609, %v4066
      %v4105 = vadd.f32 %v3610, %v4068
      %4106 = vst.msk [vmem:[#allocation4] sm:$0xff] %vm692, %v4070
      %4107 = vst.msk [vmem:[#allocation4 + $0x8] sm:$0xff] %vm692, %v4071
      %4108 = vst.msk [vmem:[#allocation4 + $0x10] sm:$0xff] %vm692, %v4072
      %4109 = vst.msk [vmem:[#allocation4 + $0x18] sm:$0xff] %vm692, %v4073
      %4110 = vst.msk [vmem:[#allocation4 + $0x20] sm:$0xff] %vm692, %v4074
      %4111 = vst.msk [vmem:[#allocation4 + $0x28] sm:$0xff] %vm692, %v4075
      %4112 = vst.msk [vmem:[#allocation4 + $0x30] sm:$0xff] %vm692, %v4076
      %4113 = vst.msk [vmem:[#allocation4 + $0x38] sm:$0xff] %vm692, %v4077
      %4114 = vst.msk [vmem:[#allocation4 + $0x40] sm:$0xff] %vm692, %v4078
      %4115 = vst.msk [vmem:[#allocation4 + $0x48] sm:$0xff] %vm692, %v4079
      %4116 = vst.msk [vmem:[#allocation4 + $0x50] sm:$0xff] %vm692, %v4080
      %4117 = vst.msk [vmem:[#allocation4 + $0x58] sm:$0xff] %vm692, %v4081
      %4118 = vst.msk [vmem:[#allocation4 + $0x60] sm:$0xff] %vm692, %v4082
      %4119 = vst.msk [vmem:[#allocation4 + $0x68] sm:$0xff] %vm692, %v4083
      %4120 = vst.msk [vmem:[#allocation4 + $0x70] sm:$0xff] %vm692, %v4084
      %4121 = vst.msk [vmem:[#allocation4 + $0x78] sm:$0xff] %vm692, %v4085
      %4122 = vst.msk [vmem:[#allocation4 + $0x80] sm:$0xff] %vm692, %v4086
      %4123 = vst.msk [vmem:[#allocation4 + $0x88] sm:$0xff] %vm692, %v4087
      %4124 = vst.msk [vmem:[#allocation4 + $0x90] sm:$0xff] %vm692, %v4088
      %4125 = vst.msk [vmem:[#allocation4 + $0x98] sm:$0xff] %vm692, %v4089
      %4126 = vst.msk [vmem:[#allocation4 + $0xa0] sm:$0xff] %vm692, %v4090
      %4127 = vst.msk [vmem:[#allocation4 + $0xa8] sm:$0xff] %vm692, %v4091
      %4128 = vst.msk [vmem:[#allocation4 + $0xb0] sm:$0xff] %vm692, %v4092
      %4129 = vst.msk [vmem:[#allocation4 + $0xb8] sm:$0xff] %vm692, %v4093
      %4130 = vst.msk [vmem:[#allocation4 + $0xc0] sm:$0xff] %vm692, %v4094
      %4131 = vst.msk [vmem:[#allocation4 + $0xc8] sm:$0xff] %vm692, %v4095
      %4132 = vst.msk [vmem:[#allocation4 + $0xd0] sm:$0xff] %vm692, %v4096
      %4133 = vst.msk [vmem:[#allocation4 + $0xd8] sm:$0xff] %vm692, %v4097
      %4134 = vst.msk [vmem:[#allocation4 + $0xe0] sm:$0xff] %vm692, %v4098
      %4135 = vst.msk [vmem:[#allocation4 + $0xe8] sm:$0xff] %vm692, %v4099
      %4136 = vst.msk [vmem:[#allocation4 + $0xf0] sm:$0xff] %vm692, %v4100
      %4137 = vst.msk [vmem:[#allocation4 + $0xf8] sm:$0xff] %vm692, %v4101
      %4138 = vst.msk [vmem:[#allocation4 + $0x100] sm:$0xff] %vm692, %v4102
      %4139 = vst.msk [vmem:[#allocation4 + $0x108] sm:$0xff] %vm692, %v4103
      %4140 = vst.msk [vmem:[#allocation4 + $0x110] sm:$0xff] %vm692, %v4104
      %4141 = vst.msk [vmem:[#allocation4 + $0x118] sm:$0xff] %vm692, %v4105
      %v4142 = vld [vmem:[#allocation4] sm:$0xff]
      %v4143 = vld [vmem:[#allocation4 + $0x8] sm:$0xff]
      %v4144 = vld [vmem:[#allocation4 + $0x10] sm:$0xff]
      %v4145 = vld [vmem:[#allocation4 + $0x18] sm:$0xff]
      %v4146 = vld [vmem:[#allocation4 + $0x20] sm:$0xff]
      %v4147 = vld [vmem:[#allocation4 + $0x28] sm:$0xff]
      %v4148 = vld [vmem:[#allocation4 + $0x30] sm:$0xff]
      %v4149 = vld [vmem:[#allocation4 + $0x38] sm:$0xff]
      %v4150 = vld [vmem:[#allocation4 + $0x40] sm:$0xff]
      %v4151 = vld [vmem:[#allocation4 + $0x48] sm:$0xff]
      %v4152 = vld [vmem:[#allocation4 + $0x50] sm:$0xff]
      %v4153 = vld [vmem:[#allocation4 + $0x58] sm:$0xff]
      %v4154 = vld [vmem:[#allocation4 + $0x60] sm:$0xff]
      %v4155 = vld [vmem:[#allocation4 + $0x68] sm:$0xff]
      %v4156 = vld [vmem:[#allocation4 + $0x70] sm:$0xff]
      %v4157 = vld [vmem:[#allocation4 + $0x78] sm:$0xff]
      %v4158 = vld [vmem:[#allocation4 + $0x80] sm:$0xff]
      %v4159 = vld [vmem:[#allocation4 + $0x88] sm:$0xff]
      %v4160 = vld [vmem:[#allocation4 + $0x90] sm:$0xff]
      %v4161 = vld [vmem:[#allocation4 + $0x98] sm:$0xff]
      %v4162 = vld [vmem:[#allocation4 + $0xa0] sm:$0xff]
      %v4163 = vld [vmem:[#allocation4 + $0xa8] sm:$0xff]
      %v4164 = vld [vmem:[#allocation4 + $0xb0] sm:$0xff]
      %v4165 = vld [vmem:[#allocation4 + $0xb8] sm:$0xff]
      %v4166 = vld [vmem:[#allocation4 + $0xc0] sm:$0xff]
      %v4167 = vld [vmem:[#allocation4 + $0xc8] sm:$0xff]
      %v4168 = vld [vmem:[#allocation4 + $0xd0] sm:$0xff]
      %v4169 = vld [vmem:[#allocation4 + $0xd8] sm:$0xff]
      %v4170 = vld [vmem:[#allocation4 + $0xe0] sm:$0xff]
      %v4171 = vld [vmem:[#allocation4 + $0xe8] sm:$0xff]
      %v4172 = vld [vmem:[#allocation4 + $0xf0] sm:$0xff]
      %v4173 = vld [vmem:[#allocation4 + $0xf8] sm:$0xff]
      %v4174 = vld [vmem:[#allocation4 + $0x100] sm:$0xff]
      %v4175 = vld [vmem:[#allocation4 + $0x108] sm:$0xff]
      %v4176 = vld [vmem:[#allocation4 + $0x110] sm:$0xff]
      %v4177 = vld [vmem:[#allocation4 + $0x118] sm:$0xff]
      %v4178 = vld [vmem:[#allocation2 + $0x10] sm:$0x8]
      %v4179 = vld [vmem:[#allocation2 + $0x14] sm:$0xf]
      %v4180 = vld [vmem:[#allocation2 + $0x18] sm:$0xf]
      %v4181 = vld [vmem:[#allocation2 + $0x1c] sm:$0xf]
      %v4182 = vld [vmem:[#allocation2 + $0x20] sm:$0xf]
      %v4183 = vld [vmem:[#allocation2 + $0x24] sm:$0xf]
      %v4184 = vld [vmem:[#allocation2 + $0x28] sm:$0xf]
      %v4185 = vld [vmem:[#allocation2 + $0x2c] sm:$0xf]
      %v4186 = vld [vmem:[#allocation2 + $0x30] sm:$0xf]
      %v4187 = vld [vmem:[#allocation2 + $0x34] sm:$0xf]
      %v4188 = vld [vmem:[#allocation2 + $0x38] sm:$0xf]
      %v4189 = vld [vmem:[#allocation2 + $0x3c] sm:$0xf]
      %v4190 = vld [vmem:[#allocation2 + $0x40] sm:$0xf]
      %v4191 = vld [vmem:[#allocation2 + $0x44] sm:$0xf]
      %v4192 = vld [vmem:[#allocation2 + $0x48] sm:$0xf]
      %v4193 = vld [vmem:[#allocation2 + $0x4c] sm:$0xf]
      %v4194 = vld [vmem:[#allocation2 + $0x50] sm:$0xf]
      %v4195 = vld [vmem:[#allocation2 + $0x54] sm:$0xf]
      %v4196 = vld [vmem:[#allocation2 + $0x58] sm:$0xf]
      %v4197 = vld [vmem:[#allocation2 + $0x5c] sm:$0xf]
      %v4198 = vld [vmem:[#allocation2 + $0x60] sm:$0xf]
      %v4199 = vld [vmem:[#allocation2 + $0x64] sm:$0xf]
      %v4200 = vld [vmem:[#allocation2 + $0x68] sm:$0xf]
      %v4201 = vld [vmem:[#allocation2 + $0x6c] sm:$0xf]
      %v4202 = vld [vmem:[#allocation2 + $0x70] sm:$0xf]
      %v4203 = vld [vmem:[#allocation2 + $0x74] sm:$0xf]
      %v4204 = vld [vmem:[#allocation2 + $0x78] sm:$0xf]
      %v4205 = vld [vmem:[#allocation2 + $0x7c] sm:$0xf]
      %v4206 = vld [vmem:[#allocation2 + $0x80] sm:$0xf]
      %v4207 = vld [vmem:[#allocation2 + $0x84] sm:$0xf]
      %v4208 = vld [vmem:[#allocation2 + $0x88] sm:$0xf]
      %v4209 = vld [vmem:[#allocation2 + $0x8c] sm:$0xf]
      %v4210 = vld [vmem:[#allocation2 + $0x90] sm:$0xf]
      %v4211 = vld [vmem:[#allocation2 + $0x94] sm:$0xf]
      %v4212 = vld [vmem:[#allocation2 + $0x98] sm:$0xf]
      %v4213 = vld [vmem:[#allocation2 + $0x9c] sm:$0xf]
      %v4214 = vld [vmem:[#allocation2 + $0xa0] sm:$0x7]
      %s4215 = scalar_lea.vmem %s2, 16
      %v4216 = vld [vmem:[%s4215] sm:$0x3]
      %v4254 = vunpack.c.l.b16 %v4178
      %v4255 = vunpack.c.l.b16 %v4179
      %v4256 = vunpack.c.l.b16 %v4180
      %v4257 = vunpack.c.l.b16 %v4181
      %v4258 = vunpack.c.l.b16 %v4182
      %v4259 = vunpack.c.l.b16 %v4183
      %v4260 = vunpack.c.l.b16 %v4184
      %v4261 = vunpack.c.l.b16 %v4185
      %v4262 = vunpack.c.l.b16 %v4186
      %v4263 = vunpack.c.l.b16 %v4187
      %v4264 = vunpack.c.l.b16 %v4188
      %v4265 = vunpack.c.l.b16 %v4189
      %v4266 = vunpack.c.l.b16 %v4190
      %v4267 = vunpack.c.l.b16 %v4191
      %v4268 = vunpack.c.l.b16 %v4192
      %v4269 = vunpack.c.l.b16 %v4193
      %v4270 = vunpack.c.l.b16 %v4194
      %v4271 = vunpack.c.l.b16 %v4195
      %v4272 = vunpack.c.l.b16 %v4196
      %v4273 = vunpack.c.l.b16 %v4197
      %v4274 = vunpack.c.l.b16 %v4198
      %v4275 = vunpack.c.l.b16 %v4199
      %v4276 = vunpack.c.l.b16 %v4200
      %v4277 = vunpack.c.l.b16 %v4201
      %v4278 = vunpack.c.l.b16 %v4202
      %v4279 = vunpack.c.l.b16 %v4203
      %v4280 = vunpack.c.l.b16 %v4204
      %v4281 = vunpack.c.l.b16 %v4205
      %v4282 = vunpack.c.l.b16 %v4206
      %v4283 = vunpack.c.l.b16 %v4207
      %v4284 = vunpack.c.l.b16 %v4208
      %v4285 = vunpack.c.l.b16 %v4209
      %v4286 = vunpack.c.l.b16 %v4210
      %v4287 = vunpack.c.l.b16 %v4211
      %v4288 = vunpack.c.l.b16 %v4212
      %v4289 = vunpack.c.l.b16 %v4213
      %v4290 = vunpack.c.l.b16 %v4214
      %v4291 = vpack.c.b16 %v4255, %v4254
      %v4292 = vpack.c.b16 %v4257, %v4256
      %v4293 = vpack.c.b16 %v4259, %v4258
      %v4294 = vpack.c.b16 %v4261, %v4260
      %v4295 = vpack.c.b16 %v4263, %v4262
      %v4296 = vpack.c.b16 %v4265, %v4264
      %v4297 = vpack.c.b16 %v4267, %v4266
      %v4298 = vpack.c.b16 %v4269, %v4268
      %v4299 = vpack.c.b16 %v4271, %v4270
      %v4300 = vpack.c.b16 %v4273, %v4272
      %v4301 = vpack.c.b16 %v4275, %v4274
      %v4302 = vpack.c.b16 %v4277, %v4276
      %v4303 = vpack.c.b16 %v4279, %v4278
      %v4304 = vpack.c.b16 %v4281, %v4280
      %v4305 = vpack.c.b16 %v4283, %v4282
      %v4306 = vpack.c.b16 %v4285, %v4284
      %v4307 = vpack.c.b16 %v4287, %v4286
      %v4308 = vpack.c.b16 %v4289, %v4288
      %v4309 = vpack.c.b16 %v4290, %v4290
      %vm4310 = vcmask 1044480
      %v4311 = vrot.slane %v4291, 3
      %v4312 = vrot.slane %v4292, 3
      %v4313 = vsel %vm4310, %v4311, %v4312
      %v4314 = vrot.slane %v4293, 3
      %v4315 = vsel %vm4310, %v4312, %v4314
      %v4316 = vrot.slane %v4294, 3
      %v4317 = vsel %vm4310, %v4314, %v4316
      %v4318 = vrot.slane %v4295, 3
      %v4319 = vsel %vm4310, %v4316, %v4318
      %v4320 = vrot.slane %v4296, 3
      %v4321 = vsel %vm4310, %v4318, %v4320
      %v4322 = vrot.slane %v4297, 3
      %v4323 = vsel %vm4310, %v4320, %v4322
      %v4324 = vrot.slane %v4298, 3
      %v4325 = vsel %vm4310, %v4322, %v4324
      %v4326 = vrot.slane %v4299, 3
      %v4327 = vsel %vm4310, %v4324, %v4326
      %v4328 = vrot.slane %v4300, 3
      %v4329 = vsel %vm4310, %v4326, %v4328
      %v4330 = vrot.slane %v4301, 3
      %v4331 = vsel %vm4310, %v4328, %v4330
      %v4332 = vrot.slane %v4302, 3
      %v4333 = vsel %vm4310, %v4330, %v4332
      %v4334 = vrot.slane %v4303, 3
      %v4335 = vsel %vm4310, %v4332, %v4334
      %v4336 = vrot.slane %v4304, 3
      %v4337 = vsel %vm4310, %v4334, %v4336
      %v4338 = vrot.slane %v4305, 3
      %v4339 = vsel %vm4310, %v4336, %v4338
      %v4340 = vrot.slane %v4306, 3
      %v4341 = vsel %vm4310, %v4338, %v4340
      %v4342 = vrot.slane %v4307, 3
      %v4343 = vsel %vm4310, %v4340, %v4342
      %v4344 = vrot.slane %v4308, 3
      %v4345 = vsel %vm4310, %v4342, %v4344
      %v4346 = vrot.slane %v4309, 3
      %v4347 = vsel %vm4310, %v4344, %v4346
      %v4349 = vsel %vm534, %v4313, 0
      %v4352 = vsel %vm534, %v4315, 0
      %v4355 = vsel %vm534, %v4317, 0
      %v4358 = vsel %vm534, %v4319, 0
      %v4361 = vsel %vm534, %v4321, 0
      %v4364 = vsel %vm534, %v4323, 0
      %v4367 = vsel %vm534, %v4325, 0
      %v4370 = vsel %vm534, %v4327, 0
      %v4373 = vsel %vm534, %v4329, 0
      %v4376 = vsel %vm534, %v4331, 0
      %v4379 = vsel %vm534, %v4333, 0
      %v4382 = vsel %vm534, %v4335, 0
      %v4385 = vsel %vm534, %v4337, 0
      %v4388 = vsel %vm534, %v4339, 0
      %v4391 = vsel %vm534, %v4341, 0
      %v4394 = vsel %vm534, %v4343, 0
      %v4397 = vsel %vm534, %v4345, 0
      %v4400 = vsel %vm534, %v4347, 0
      %v4403 = vsel %vm589, %v4216, 0
      %4405 = vmatpush.bf16.msra.mxu0 0
      %4406 = vmatpush.bf16.msra.mxu0 0
      %4407 = vmatpush.bf16.msra.mxu0 0
      %4408 = vmatpush.bf16.msra.mxu0 0
      %4409 = vmatpush.bf16.msra.mxu0 0
      %4410 = vmatpush.bf16.msra.mxu0 0
      %4411 = vmatpush.bf16.msra.mxu0 0
      %4412 = vmatpush.bf16.msra.mxu0 %v4403
      %4413 = vmatmul.bf16.gmra.mxu0 %v4349
      %v4414 = vpop.f32.mrf.mxu0
      %v4415 = vadd.f32 0.0, %v4414
      %v4416 = vpop.f32.mrf.mxu0
      %v4417 = vadd.f32 0.0, %v4416
      %4418 = vmatmul.bf16.gmra.mxu0 %v4352
      %v4419 = vpop.f32.mrf.mxu0
      %v4420 = vadd.f32 0.0, %v4419
      %v4421 = vpop.f32.mrf.mxu0
      %v4422 = vadd.f32 0.0, %v4421
      %4423 = vmatmul.bf16.gmra.mxu0 %v4355
      %v4424 = vpop.f32.mrf.mxu0
      %v4425 = vadd.f32 0.0, %v4424
      %v4426 = vpop.f32.mrf.mxu0
      %v4427 = vadd.f32 0.0, %v4426
      %4428 = vmatmul.bf16.gmra.mxu0 %v4358
      %v4429 = vpop.f32.mrf.mxu0
      %v4430 = vadd.f32 0.0, %v4429
      %v4431 = vpop.f32.mrf.mxu0
      %v4432 = vadd.f32 0.0, %v4431
      %4433 = vmatmul.bf16.gmra.mxu0 %v4361
      %v4434 = vpop.f32.mrf.mxu0
      %v4435 = vadd.f32 0.0, %v4434
      %v4436 = vpop.f32.mrf.mxu0
      %v4437 = vadd.f32 0.0, %v4436
      %4438 = vmatmul.bf16.gmra.mxu0 %v4364
      %v4439 = vpop.f32.mrf.mxu0
      %v4440 = vadd.f32 0.0, %v4439
      %v4441 = vpop.f32.mrf.mxu0
      %v4442 = vadd.f32 0.0, %v4441
      %4443 = vmatmul.bf16.gmra.mxu0 %v4367
      %v4444 = vpop.f32.mrf.mxu0
      %v4445 = vadd.f32 0.0, %v4444
      %v4446 = vpop.f32.mrf.mxu0
      %v4447 = vadd.f32 0.0, %v4446
      %4448 = vmatmul.bf16.gmra.mxu0 %v4370
      %v4449 = vpop.f32.mrf.mxu0
      %v4450 = vadd.f32 0.0, %v4449
      %v4451 = vpop.f32.mrf.mxu0
      %v4452 = vadd.f32 0.0, %v4451
      %4453 = vmatmul.bf16.gmra.mxu0 %v4373
      %v4454 = vpop.f32.mrf.mxu0
      %v4455 = vadd.f32 0.0, %v4454
      %v4456 = vpop.f32.mrf.mxu0
      %v4457 = vadd.f32 0.0, %v4456
      %4458 = vmatmul.bf16.gmra.mxu0 %v4376
      %v4459 = vpop.f32.mrf.mxu0
      %v4460 = vadd.f32 0.0, %v4459
      %v4461 = vpop.f32.mrf.mxu0
      %v4462 = vadd.f32 0.0, %v4461
      %4463 = vmatmul.bf16.gmra.mxu0 %v4379
      %v4464 = vpop.f32.mrf.mxu0
      %v4465 = vadd.f32 0.0, %v4464
      %v4466 = vpop.f32.mrf.mxu0
      %v4467 = vadd.f32 0.0, %v4466
      %4468 = vmatmul.bf16.gmra.mxu0 %v4382
      %v4469 = vpop.f32.mrf.mxu0
      %v4470 = vadd.f32 0.0, %v4469
      %v4471 = vpop.f32.mrf.mxu0
      %v4472 = vadd.f32 0.0, %v4471
      %4473 = vmatmul.bf16.gmra.mxu0 %v4385
      %v4474 = vpop.f32.mrf.mxu0
      %v4475 = vadd.f32 0.0, %v4474
      %v4476 = vpop.f32.mrf.mxu0
      %v4477 = vadd.f32 0.0, %v4476
      %4478 = vmatmul.bf16.gmra.mxu0 %v4388
      %v4479 = vpop.f32.mrf.mxu0
      %v4480 = vadd.f32 0.0, %v4479
      %v4481 = vpop.f32.mrf.mxu0
      %v4482 = vadd.f32 0.0, %v4481
      %4483 = vmatmul.bf16.gmra.mxu0 %v4391
      %v4484 = vpop.f32.mrf.mxu0
      %v4485 = vadd.f32 0.0, %v4484
      %v4486 = vpop.f32.mrf.mxu0
      %v4487 = vadd.f32 0.0, %v4486
      %4488 = vmatmul.bf16.gmra.mxu0 %v4394
      %v4489 = vpop.f32.mrf.mxu0
      %v4490 = vadd.f32 0.0, %v4489
      %v4491 = vpop.f32.mrf.mxu0
      %v4492 = vadd.f32 0.0, %v4491
      %4493 = vmatmul.bf16.gmra.mxu0 %v4397
      %v4494 = vpop.f32.mrf.mxu0
      %v4495 = vadd.f32 0.0, %v4494
      %v4496 = vpop.f32.mrf.mxu0
      %v4497 = vadd.f32 0.0, %v4496
      %4498 = vmatmul.bf16.gmra.mxu0 %v4400
      %v4499 = vpop.f32.mrf.mxu0
      %v4500 = vadd.f32 0.0, %v4499
      %v4501 = vpop.f32.mrf.mxu0
      %v4502 = vadd.f32 0.0, %v4501
      %4503 = vdwg.mxu0
      %v4504 = vadd.f32 %v4142, %v4415
      %v4505 = vadd.f32 %v4143, %v4417
      %v4506 = vadd.f32 %v4144, %v4420
      %v4507 = vadd.f32 %v4145, %v4422
      %v4508 = vadd.f32 %v4146, %v4425
      %v4509 = vadd.f32 %v4147, %v4427
      %v4510 = vadd.f32 %v4148, %v4430
      %v4511 = vadd.f32 %v4149, %v4432
      %v4512 = vadd.f32 %v4150, %v4435
      %v4513 = vadd.f32 %v4151, %v4437
      %v4514 = vadd.f32 %v4152, %v4440
      %v4515 = vadd.f32 %v4153, %v4442
      %v4516 = vadd.f32 %v4154, %v4445
      %v4517 = vadd.f32 %v4155, %v4447
      %v4518 = vadd.f32 %v4156, %v4450
      %v4519 = vadd.f32 %v4157, %v4452
      %v4520 = vadd.f32 %v4158, %v4455
      %v4521 = vadd.f32 %v4159, %v4457
      %v4522 = vadd.f32 %v4160, %v4460
      %v4523 = vadd.f32 %v4161, %v4462
      %v4524 = vadd.f32 %v4162, %v4465
      %v4525 = vadd.f32 %v4163, %v4467
      %v4526 = vadd.f32 %v4164, %v4470
      %v4527 = vadd.f32 %v4165, %v4472
      %v4528 = vadd.f32 %v4166, %v4475
      %v4529 = vadd.f32 %v4167, %v4477
      %v4530 = vadd.f32 %v4168, %v4480
      %v4531 = vadd.f32 %v4169, %v4482
      %v4532 = vadd.f32 %v4170, %v4485
      %v4533 = vadd.f32 %v4171, %v4487
      %v4534 = vadd.f32 %v4172, %v4490
      %v4535 = vadd.f32 %v4173, %v4492
      %v4536 = vadd.f32 %v4174, %v4495
      %v4537 = vadd.f32 %v4175, %v4497
      %v4538 = vadd.f32 %v4176, %v4500
      %v4539 = vadd.f32 %v4177, %v4502
      %4540 = vst.msk [vmem:[#allocation4] sm:$0xff] %vm692, %v4504
      %4541 = vst.msk [vmem:[#allocation4 + $0x8] sm:$0xff] %vm692, %v4505
      %4542 = vst.msk [vmem:[#allocation4 + $0x10] sm:$0xff] %vm692, %v4506
      %4543 = vst.msk [vmem:[#allocation4 + $0x18] sm:$0xff] %vm692, %v4507
      %4544 = vst.msk [vmem:[#allocation4 + $0x20] sm:$0xff] %vm692, %v4508
      %4545 = vst.msk [vmem:[#allocation4 + $0x28] sm:$0xff] %vm692, %v4509
      %4546 = vst.msk [vmem:[#allocation4 + $0x30] sm:$0xff] %vm692, %v4510
      %4547 = vst.msk [vmem:[#allocation4 + $0x38] sm:$0xff] %vm692, %v4511
      %4548 = vst.msk [vmem:[#allocation4 + $0x40] sm:$0xff] %vm692, %v4512
      %4549 = vst.msk [vmem:[#allocation4 + $0x48] sm:$0xff] %vm692, %v4513
      %4550 = vst.msk [vmem:[#allocation4 + $0x50] sm:$0xff] %vm692, %v4514
      %4551 = vst.msk [vmem:[#allocation4 + $0x58] sm:$0xff] %vm692, %v4515
      %4552 = vst.msk [vmem:[#allocation4 + $0x60] sm:$0xff] %vm692, %v4516
      %4553 = vst.msk [vmem:[#allocation4 + $0x68] sm:$0xff] %vm692, %v4517
      %4554 = vst.msk [vmem:[#allocation4 + $0x70] sm:$0xff] %vm692, %v4518
      %4555 = vst.msk [vmem:[#allocation4 + $0x78] sm:$0xff] %vm692, %v4519
      %4556 = vst.msk [vmem:[#allocation4 + $0x80] sm:$0xff] %vm692, %v4520
      %4557 = vst.msk [vmem:[#allocation4 + $0x88] sm:$0xff] %vm692, %v4521
      %4558 = vst.msk [vmem:[#allocation4 + $0x90] sm:$0xff] %vm692, %v4522
      %4559 = vst.msk [vmem:[#allocation4 + $0x98] sm:$0xff] %vm692, %v4523
      %4560 = vst.msk [vmem:[#allocation4 + $0xa0] sm:$0xff] %vm692, %v4524
      %4561 = vst.msk [vmem:[#allocation4 + $0xa8] sm:$0xff] %vm692, %v4525
      %4562 = vst.msk [vmem:[#allocation4 + $0xb0] sm:$0xff] %vm692, %v4526
      %4563 = vst.msk [vmem:[#allocation4 + $0xb8] sm:$0xff] %vm692, %v4527
      %4564 = vst.msk [vmem:[#allocation4 + $0xc0] sm:$0xff] %vm692, %v4528
      %4565 = vst.msk [vmem:[#allocation4 + $0xc8] sm:$0xff] %vm692, %v4529
      %4566 = vst.msk [vmem:[#allocation4 + $0xd0] sm:$0xff] %vm692, %v4530
      %4567 = vst.msk [vmem:[#allocation4 + $0xd8] sm:$0xff] %vm692, %v4531
      %4568 = vst.msk [vmem:[#allocation4 + $0xe0] sm:$0xff] %vm692, %v4532
      %4569 = vst.msk [vmem:[#allocation4 + $0xe8] sm:$0xff] %vm692, %v4533
      %4570 = vst.msk [vmem:[#allocation4 + $0xf0] sm:$0xff] %vm692, %v4534
      %4571 = vst.msk [vmem:[#allocation4 + $0xf8] sm:$0xff] %vm692, %v4535
      %4572 = vst.msk [vmem:[#allocation4 + $0x100] sm:$0xff] %vm692, %v4536
      %4573 = vst.msk [vmem:[#allocation4 + $0x108] sm:$0xff] %vm692, %v4537
      %4574 = vst.msk [vmem:[#allocation4 + $0x110] sm:$0xff] %vm692, %v4538
      %4575 = vst.msk [vmem:[#allocation4 + $0x118] sm:$0xff] %vm692, %v4539
      %v4576 = vld [vmem:[#allocation4] sm:$0xff]
      %v4577 = vld [vmem:[#allocation4 + $0x8] sm:$0xff]
      %v4578 = vld [vmem:[#allocation4 + $0x10] sm:$0xff]
      %v4579 = vld [vmem:[#allocation4 + $0x18] sm:$0xff]
      %v4580 = vld [vmem:[#allocation4 + $0x20] sm:$0xff]
      %v4581 = vld [vmem:[#allocation4 + $0x28] sm:$0xff]
      %v4582 = vld [vmem:[#allocation4 + $0x30] sm:$0xff]
      %v4583 = vld [vmem:[#allocation4 + $0x38] sm:$0xff]
      %v4584 = vld [vmem:[#allocation4 + $0x40] sm:$0xff]
      %v4585 = vld [vmem:[#allocation4 + $0x48] sm:$0xff]
      %v4586 = vld [vmem:[#allocation4 + $0x50] sm:$0xff]
      %v4587 = vld [vmem:[#allocation4 + $0x58] sm:$0xff]
      %v4588 = vld [vmem:[#allocation4 + $0x60] sm:$0xff]
      %v4589 = vld [vmem:[#allocation4 + $0x68] sm:$0xff]
      %v4590 = vld [vmem:[#allocation4 + $0x70] sm:$0xff]
      %v4591 = vld [vmem:[#allocation4 + $0x78] sm:$0xff]
      %v4592 = vld [vmem:[#allocation4 + $0x80] sm:$0xff]
      %v4593 = vld [vmem:[#allocation4 + $0x88] sm:$0xff]
      %v4594 = vld [vmem:[#allocation4 + $0x90] sm:$0xff]
      %v4595 = vld [vmem:[#allocation4 + $0x98] sm:$0xff]
      %v4596 = vld [vmem:[#allocation4 + $0xa0] sm:$0xff]
      %v4597 = vld [vmem:[#allocation4 + $0xa8] sm:$0xff]
      %v4598 = vld [vmem:[#allocation4 + $0xb0] sm:$0xff]
      %v4599 = vld [vmem:[#allocation4 + $0xb8] sm:$0xff]
      %v4600 = vld [vmem:[#allocation4 + $0xc0] sm:$0xff]
      %v4601 = vld [vmem:[#allocation4 + $0xc8] sm:$0xff]
      %v4602 = vld [vmem:[#allocation4 + $0xd0] sm:$0xff]
      %v4603 = vld [vmem:[#allocation4 + $0xd8] sm:$0xff]
      %v4604 = vld [vmem:[#allocation4 + $0xe0] sm:$0xff]
      %v4605 = vld [vmem:[#allocation4 + $0xe8] sm:$0xff]
      %v4606 = vld [vmem:[#allocation4 + $0xf0] sm:$0xff]
      %v4607 = vld [vmem:[#allocation4 + $0xf8] sm:$0xff]
      %v4608 = vld [vmem:[#allocation4 + $0x100] sm:$0xff]
      %v4609 = vld [vmem:[#allocation4 + $0x108] sm:$0xff]
      %v4610 = vld [vmem:[#allocation4 + $0x110] sm:$0xff]
      %v4611 = vld [vmem:[#allocation4 + $0x118] sm:$0xff]
      %v4612 = vld [vmem:[%s3] sm:$0x1]
      %v4614 = vperm.slane %v4612, 0
      %v4616 = vadd.f32 %v4576, %v4614
      %v4617 = vadd.f32 %v4577, %v4614
      %v4618 = vadd.f32 %v4578, %v4614
      %v4619 = vadd.f32 %v4579, %v4614
      %v4620 = vadd.f32 %v4580, %v4614
      %v4621 = vadd.f32 %v4581, %v4614
      %v4622 = vadd.f32 %v4582, %v4614
      %v4623 = vadd.f32 %v4583, %v4614
      %v4624 = vadd.f32 %v4584, %v4614
      %v4625 = vadd.f32 %v4585, %v4614
      %v4626 = vadd.f32 %v4586, %v4614
      %v4627 = vadd.f32 %v4587, %v4614
      %v4628 = vadd.f32 %v4588, %v4614
      %v4629 = vadd.f32 %v4589, %v4614
      %v4630 = vadd.f32 %v4590, %v4614
      %v4631 = vadd.f32 %v4591, %v4614
      %v4632 = vadd.f32 %v4592, %v4614
      %v4633 = vadd.f32 %v4593, %v4614
      %v4634 = vadd.f32 %v4594, %v4614
      %v4635 = vadd.f32 %v4595, %v4614
      %v4636 = vadd.f32 %v4596, %v4614
      %v4637 = vadd.f32 %v4597, %v4614
      %v4638 = vadd.f32 %v4598, %v4614
      %v4639 = vadd.f32 %v4599, %v4614
      %v4640 = vadd.f32 %v4600, %v4614
      %v4641 = vadd.f32 %v4601, %v4614
      %v4642 = vadd.f32 %v4602, %v4614
      %v4643 = vadd.f32 %v4603, %v4614
      %v4644 = vadd.f32 %v4604, %v4614
      %v4645 = vadd.f32 %v4605, %v4614
      %v4646 = vadd.f32 %v4606, %v4614
      %v4647 = vadd.f32 %v4607, %v4614
      %v4648 = vadd.f32 %v4608, %v4614
      %v4649 = vadd.f32 %v4609, %v4614
      %v4650 = vadd.f32 %v4610, %v4614
      %v4651 = vadd.f32 %v4611, %v4614
      %v4652 = vmax.f32 %v4616, 0.0
      %v4653 = vmax.f32 %v4617, 0.0
      %v4654 = vmax.f32 %v4618, 0.0
      %v4655 = vmax.f32 %v4619, 0.0
      %v4656 = vmax.f32 %v4620, 0.0
      %v4657 = vmax.f32 %v4621, 0.0
      %v4658 = vmax.f32 %v4622, 0.0
      %v4659 = vmax.f32 %v4623, 0.0
      %v4660 = vmax.f32 %v4624, 0.0
      %v4661 = vmax.f32 %v4625, 0.0
      %v4662 = vmax.f32 %v4626, 0.0
      %v4663 = vmax.f32 %v4627, 0.0
      %v4664 = vmax.f32 %v4628, 0.0
      %v4665 = vmax.f32 %v4629, 0.0
      %v4666 = vmax.f32 %v4630, 0.0
      %v4667 = vmax.f32 %v4631, 0.0
      %v4668 = vmax.f32 %v4632, 0.0
      %v4669 = vmax.f32 %v4633, 0.0
      %v4670 = vmax.f32 %v4634, 0.0
      %v4671 = vmax.f32 %v4635, 0.0
      %v4672 = vmax.f32 %v4636, 0.0
      %v4673 = vmax.f32 %v4637, 0.0
      %v4674 = vmax.f32 %v4638, 0.0
      %v4675 = vmax.f32 %v4639, 0.0
      %v4676 = vmax.f32 %v4640, 0.0
      %v4677 = vmax.f32 %v4641, 0.0
      %v4678 = vmax.f32 %v4642, 0.0
      %v4679 = vmax.f32 %v4643, 0.0
      %v4680 = vmax.f32 %v4644, 0.0
      %v4681 = vmax.f32 %v4645, 0.0
      %v4682 = vmax.f32 %v4646, 0.0
      %v4683 = vmax.f32 %v4647, 0.0
      %v4684 = vmax.f32 %v4648, 0.0
      %v4685 = vmax.f32 %v4649, 0.0
      %v4686 = vmax.f32 %v4650, 0.0
      %v4687 = vmax.f32 %v4651, 0.0
      %vm4688 = vcmask 60416
      %4689 = vst.msk [vmem:[#allocation3] sm:$0xf] %vm4688, 0
      %4690 = vst.msk [vmem:[#allocation3 + $0x4] sm:$0xf] %vm4688, 0
      %4691 = vst.msk [vmem:[#allocation3 + $0x8] sm:$0xf] %vm4688, 0
      %4692 = vst.msk [vmem:[#allocation3 + $0xc] sm:$0xf] %vm4688, 0
      %4693 = vst.msk [vmem:[#allocation3 + $0x10] sm:$0xf] %vm4688, 0
      %4694 = vst.msk [vmem:[#allocation3 + $0x14] sm:$0xf] %vm4688, 0
      %4695 = vst.msk [vmem:[#allocation3 + $0x18] sm:$0xf] %vm4688, 0
      %4696 = vst.msk [vmem:[#allocation3 + $0x1c] sm:$0xf] %vm4688, 0
      %4697 = vst.msk [vmem:[#allocation3 + $0x20] sm:$0xf] %vm4688, 0
      %4698 = vst.msk [vmem:[#allocation3 + $0x24] sm:$0xf] %vm4688, 0
      %4699 = vst.msk [vmem:[#allocation3 + $0x28] sm:$0xf] %vm4688, 0
      %4700 = vst.msk [vmem:[#allocation3 + $0x2c] sm:$0xf] %vm4688, 0
      %4701 = vst.msk [vmem:[#allocation3 + $0x30] sm:$0xf] %vm4688, 0
      %4702 = vst.msk [vmem:[#allocation3 + $0x34] sm:$0xf] %vm4688, 0
      %4703 = vst.msk [vmem:[#allocation3 + $0x38] sm:$0xf] %vm4688, 0
      %4704 = vst.msk [vmem:[#allocation3 + $0x3c] sm:$0xf] %vm4688, 0
      %4705 = vst.msk [vmem:[#allocation3 + $0x40] sm:$0xf] %vm4688, 0
      %4706 = vst.msk [vmem:[#allocation3 + $0x44] sm:$0xf] %vm4688, 0
      %4707 = vst.msk [vmem:[#allocation3 + $0x48] sm:$0xf] %vm4688, 0
      %4708 = vst.msk [vmem:[#allocation3 + $0x4c] sm:$0xf] %vm4688, 0
      %4709 = vst.msk [vmem:[#allocation3 + $0x50] sm:$0xf] %vm4688, 0
      %4710 = vst.msk [vmem:[#allocation3 + $0x54] sm:$0xf] %vm4688, 0
      %4711 = vst.msk [vmem:[#allocation3 + $0x58] sm:$0xf] %vm4688, 0
      %4712 = vst.msk [vmem:[#allocation3 + $0x5c] sm:$0xf] %vm4688, 0
      %4713 = vst.msk [vmem:[#allocation3 + $0x60] sm:$0xf] %vm4688, 0
      %4714 = vst.msk [vmem:[#allocation3 + $0x64] sm:$0xf] %vm4688, 0
      %4715 = vst.msk [vmem:[#allocation3 + $0x68] sm:$0xf] %vm4688, 0
      %4716 = vst.msk [vmem:[#allocation3 + $0x6c] sm:$0xf] %vm4688, 0
      %4717 = vst.msk [vmem:[#allocation3 + $0x70] sm:$0xf] %vm4688, 0
      %4718 = vst.msk [vmem:[#allocation3 + $0x74] sm:$0xf] %vm4688, 0
      %4719 = vst.msk [vmem:[#allocation3 + $0x78] sm:$0xf] %vm4688, 0
      %4720 = vst.msk [vmem:[#allocation3 + $0x7c] sm:$0xf] %vm4688, 0
      %4721 = vst.msk [vmem:[#allocation3 + $0x80] sm:$0xf] %vm4688, 0
      %4722 = vst.msk [vmem:[#allocation3 + $0x84] sm:$0xf] %vm4688, 0
      %4723 = vst.msk [vmem:[#allocation3 + $0x88] sm:$0xf] %vm4688, 0
      %4724 = vst.msk [vmem:[#allocation3 + $0x8c] sm:$0xf] %vm4688, 0
      %4725 = vst.msk [vmem:[#allocation3 + $0x90] sm:$0xf] %vm4688, 0
      %4726 = vst.msk [vmem:[#allocation3 + $0x94] sm:$0xf] %vm4688, 0
      %4727 = vst.msk [vmem:[#allocation3 + $0x98] sm:$0xf] %vm4688, 0
      %4728 = vst.msk [vmem:[#allocation3 + $0x9c] sm:$0xf] %vm4688, 0
      %4729 = vst.msk [vmem:[#allocation3 + $0xa0] sm:$0xf] %vm4688, 0
      %4730 = vst.msk [vmem:[#allocation3 + $0xa4] sm:$0xf] %vm4688, 0
      %4731 = vst.msk [vmem:[#allocation3 + $0xa8] sm:$0xf] %vm4688, 0
      %4732 = vst.msk [vmem:[#allocation3 + $0xac] sm:$0xf] %vm4688, 0
      %v4733 = vld [vmem:[%s1] sm:$0xff]
      %v4734 = vld [vmem:[%s1 + $0x8] sm:$0xff]
      %v4735 = vld [vmem:[%s1 + $0x10] sm:$0xff]
      %v4736 = vld [vmem:[%s1 + $0x18] sm:$0xff]
      %v4737 = vld [vmem:[%s1 + $0x20] sm:$0xff]
      %v4738 = vld [vmem:[%s1 + $0x28] sm:$0xff]
      %v4739 = vld [vmem:[%s1 + $0x30] sm:$0xff]
      %v4740 = vld [vmem:[%s1 + $0x38] sm:$0xff]
      %v4741 = vld [vmem:[%s1 + $0x40] sm:$0xff]
      %v4742 = vld [vmem:[%s1 + $0x48] sm:$0xff]
      %v4743 = vld [vmem:[%s1 + $0x50] sm:$0xff]
      %v4744 = vld [vmem:[%s1 + $0x58] sm:$0xff]
      %v4745 = vld [vmem:[%s1 + $0x60] sm:$0xff]
      %v4746 = vld [vmem:[%s1 + $0x68] sm:$0xff]
      %v4747 = vld [vmem:[%s1 + $0x70] sm:$0xff]
      %v4748 = vld [vmem:[%s1 + $0x78] sm:$0xff]
      %v4749 = vld [vmem:[%s1 + $0x80] sm:$0xff]
      %v4750 = vld [vmem:[%s1 + $0x88] sm:$0xff]
      %v4751 = vld [vmem:[%s1 + $0x90] sm:$0xff]
      %v4752 = vld [vmem:[%s1 + $0x98] sm:$0xff]
      %v4753 = vld [vmem:[%s1 + $0xa0] sm:$0xff]
      %v4754 = vld [vmem:[%s1 + $0xa8] sm:$0xff]
      %v4755 = vld [vmem:[%s1 + $0xb0] sm:$0xff]
      %v4756 = vld [vmem:[%s1 + $0xb8] sm:$0xff]
      %v4757 = vld [vmem:[%s1 + $0xc0] sm:$0xff]
      %v4758 = vld [vmem:[%s1 + $0xc8] sm:$0xff]
      %v4759 = vld [vmem:[%s1 + $0xd0] sm:$0xff]
      %v4760 = vld [vmem:[%s1 + $0xd8] sm:$0xff]
      %v4761 = vld [vmem:[%s1 + $0xe0] sm:$0xff]
      %v4762 = vld [vmem:[%s1 + $0xe8] sm:$0xff]
      %v4763 = vld [vmem:[%s1 + $0xf0] sm:$0xff]
      %v4764 = vld [vmem:[%s1 + $0xf8] sm:$0xff]
      %v4765 = vld [vmem:[%s1 + $0x100] sm:$0xff]
      %v4766 = vld [vmem:[%s1 + $0x108] sm:$0xff]
      %v4767 = vld [vmem:[%s1 + $0x110] sm:$0xff]
      %v4768 = vld [vmem:[%s1 + $0x118] sm:$0xff]
      %4770 = vset.pattern.permute.xlu0 0
      %4771 = vperm.xlu0 %4770, %v4733
      %v4772 = vpop.permute.xlu0 %4771
      %4775 = vset.pattern.permute.xlu0 0
      %4776 = vperm.xlu0 %4775, %v4734
      %v4777 = vpop.permute.xlu0 %4776
      %4780 = vset.pattern.permute.xlu0 0
      %4781 = vperm.xlu0 %4780, %v4735
      %v4782 = vpop.permute.xlu0 %4781
      %4785 = vset.pattern.permute.xlu0 0
      %4786 = vperm.xlu0 %4785, %v4736
      %v4787 = vpop.permute.xlu0 %4786
      %4790 = vset.pattern.permute.xlu0 0
      %4791 = vperm.xlu0 %4790, %v4737
      %v4792 = vpop.permute.xlu0 %4791
      %4795 = vset.pattern.permute.xlu0 0
      %4796 = vperm.xlu0 %4795, %v4738
      %v4797 = vpop.permute.xlu0 %4796
      %4800 = vset.pattern.permute.xlu0 0
      %4801 = vperm.xlu0 %4800, %v4739
      %v4802 = vpop.permute.xlu0 %4801
      %4805 = vset.pattern.permute.xlu0 0
      %4806 = vperm.xlu0 %4805, %v4740
      %v4807 = vpop.permute.xlu0 %4806
      %4810 = vset.pattern.permute.xlu0 0
      %4811 = vperm.xlu0 %4810, %v4741
      %v4812 = vpop.permute.xlu0 %4811
      %4815 = vset.pattern.permute.xlu0 0
      %4816 = vperm.xlu0 %4815, %v4742
      %v4817 = vpop.permute.xlu0 %4816
      %4820 = vset.pattern.permute.xlu0 0
      %4821 = vperm.xlu0 %4820, %v4743
      %v4822 = vpop.permute.xlu0 %4821
      %4825 = vset.pattern.permute.xlu0 0
      %4826 = vperm.xlu0 %4825, %v4744
      %v4827 = vpop.permute.xlu0 %4826
      %4830 = vset.pattern.permute.xlu0 0
      %4831 = vperm.xlu0 %4830, %v4745
      %v4832 = vpop.permute.xlu0 %4831
      %4835 = vset.pattern.permute.xlu0 0
      %4836 = vperm.xlu0 %4835, %v4746
      %v4837 = vpop.permute.xlu0 %4836
      %4840 = vset.pattern.permute.xlu0 0
      %4841 = vperm.xlu0 %4840, %v4747
      %v4842 = vpop.permute.xlu0 %4841
      %4845 = vset.pattern.permute.xlu0 0
      %4846 = vperm.xlu0 %4845, %v4748
      %v4847 = vpop.permute.xlu0 %4846
      %4850 = vset.pattern.permute.xlu0 0
      %4851 = vperm.xlu0 %4850, %v4749
      %v4852 = vpop.permute.xlu0 %4851
      %4855 = vset.pattern.permute.xlu0 0
      %4856 = vperm.xlu0 %4855, %v4750
      %v4857 = vpop.permute.xlu0 %4856
      %4860 = vset.pattern.permute.xlu0 0
      %4861 = vperm.xlu0 %4860, %v4751
      %v4862 = vpop.permute.xlu0 %4861
      %4865 = vset.pattern.permute.xlu0 0
      %4866 = vperm.xlu0 %4865, %v4752
      %v4867 = vpop.permute.xlu0 %4866
      %4870 = vset.pattern.permute.xlu0 0
      %4871 = vperm.xlu0 %4870, %v4753
      %v4872 = vpop.permute.xlu0 %4871
      %4875 = vset.pattern.permute.xlu0 0
      %4876 = vperm.xlu0 %4875, %v4754
      %v4877 = vpop.permute.xlu0 %4876
      %4880 = vset.pattern.permute.xlu0 0
      %4881 = vperm.xlu0 %4880, %v4755
      %v4882 = vpop.permute.xlu0 %4881
      %4885 = vset.pattern.permute.xlu0 0
      %4886 = vperm.xlu0 %4885, %v4756
      %v4887 = vpop.permute.xlu0 %4886
      %4890 = vset.pattern.permute.xlu0 0
      %4891 = vperm.xlu0 %4890, %v4757
      %v4892 = vpop.permute.xlu0 %4891
      %4895 = vset.pattern.permute.xlu0 0
      %4896 = vperm.xlu0 %4895, %v4758
      %v4897 = vpop.permute.xlu0 %4896
      %4900 = vset.pattern.permute.xlu0 0
      %4901 = vperm.xlu0 %4900, %v4759
      %v4902 = vpop.permute.xlu0 %4901
      %4905 = vset.pattern.permute.xlu0 0
      %4906 = vperm.xlu0 %4905, %v4760
      %v4907 = vpop.permute.xlu0 %4906
      %4910 = vset.pattern.permute.xlu0 0
      %4911 = vperm.xlu0 %4910, %v4761
      %v4912 = vpop.permute.xlu0 %4911
      %4915 = vset.pattern.permute.xlu0 0
      %4916 = vperm.xlu0 %4915, %v4762
      %v4917 = vpop.permute.xlu0 %4916
      %4920 = vset.pattern.permute.xlu0 0
      %4921 = vperm.xlu0 %4920, %v4763
      %v4922 = vpop.permute.xlu0 %4921
      %4925 = vset.pattern.permute.xlu0 0
      %4926 = vperm.xlu0 %4925, %v4764
      %v4927 = vpop.permute.xlu0 %4926
      %4930 = vset.pattern.permute.xlu0 0
      %4931 = vperm.xlu0 %4930, %v4765
      %v4932 = vpop.permute.xlu0 %4931
      %4935 = vset.pattern.permute.xlu0 0
      %4936 = vperm.xlu0 %4935, %v4766
      %v4937 = vpop.permute.xlu0 %4936
      %4940 = vset.pattern.permute.xlu0 0
      %4941 = vperm.xlu0 %4940, %v4767
      %v4942 = vpop.permute.xlu0 %4941
      %4945 = vset.pattern.permute.xlu0 0
      %4946 = vperm.xlu0 %4945, %v4768
      %v4947 = vpop.permute.xlu0 %4946
      %v4949 = vmul.f32 %v4652, %v4772
      %v4950 = vmul.f32 %v4653, %v4777
      %v4951 = vmul.f32 %v4654, %v4782
      %v4952 = vmul.f32 %v4655, %v4787
      %v4953 = vmul.f32 %v4656, %v4792
      %v4954 = vmul.f32 %v4657, %v4797
      %v4955 = vmul.f32 %v4658, %v4802
      %v4956 = vmul.f32 %v4659, %v4807
      %v4957 = vmul.f32 %v4660, %v4812
      %v4958 = vmul.f32 %v4661, %v4817
      %v4959 = vmul.f32 %v4662, %v4822
      %v4960 = vmul.f32 %v4663, %v4827
      %v4961 = vmul.f32 %v4664, %v4832
      %v4962 = vmul.f32 %v4665, %v4837
      %v4963 = vmul.f32 %v4666, %v4842
      %v4964 = vmul.f32 %v4667, %v4847
      %v4965 = vmul.f32 %v4668, %v4852
      %v4966 = vmul.f32 %v4669, %v4857
      %v4967 = vmul.f32 %v4670, %v4862
      %v4968 = vmul.f32 %v4671, %v4867
      %v4969 = vmul.f32 %v4672, %v4872
      %v4970 = vmul.f32 %v4673, %v4877
      %v4971 = vmul.f32 %v4674, %v4882
      %v4972 = vmul.f32 %v4675, %v4887
      %v4973 = vmul.f32 %v4676, %v4892
      %v4974 = vmul.f32 %v4677, %v4897
      %v4975 = vmul.f32 %v4678, %v4902
      %v4976 = vmul.f32 %v4679, %v4907
      %v4977 = vmul.f32 %v4680, %v4912
      %v4978 = vmul.f32 %v4681, %v4917
      %v4979 = vmul.f32 %v4682, %v4922
      %v4980 = vmul.f32 %v4683, %v4927
      %v4981 = vmul.f32 %v4684, %v4932
      %v4982 = vmul.f32 %v4685, %v4937
      %v4983 = vmul.f32 %v4686, %v4942
      %v4984 = vmul.f32 %v4687, %v4947
      %v4985 = vpack.c.bf16 %v4949, %v4949
      %v4986 = vpack.c.bf16 %v4950, %v4950
      %v4987 = vpack.c.bf16 %v4951, %v4951
      %v4988 = vpack.c.bf16 %v4952, %v4952
      %v4989 = vpack.c.bf16 %v4953, %v4953
      %v4990 = vpack.c.bf16 %v4954, %v4954
      %v4991 = vpack.c.bf16 %v4955, %v4955
      %v4992 = vpack.c.bf16 %v4956, %v4956
      %v4993 = vpack.c.bf16 %v4957, %v4957
      %v4994 = vpack.c.bf16 %v4958, %v4958
      %v4995 = vpack.c.bf16 %v4959, %v4959
      %v4996 = vpack.c.bf16 %v4960, %v4960
      %v4997 = vpack.c.bf16 %v4961, %v4961
      %v4998 = vpack.c.bf16 %v4962, %v4962
      %v4999 = vpack.c.bf16 %v4963, %v4963
      %v5000 = vpack.c.bf16 %v4964, %v4964
      %v5001 = vpack.c.bf16 %v4965, %v4965
      %v5002 = vpack.c.bf16 %v4966, %v4966
      %v5003 = vpack.c.bf16 %v4967, %v4967
      %v5004 = vpack.c.bf16 %v4968, %v4968
      %v5005 = vpack.c.bf16 %v4969, %v4969
      %v5006 = vpack.c.bf16 %v4970, %v4970
      %v5007 = vpack.c.bf16 %v4971, %v4971
      %v5008 = vpack.c.bf16 %v4972, %v4972
      %v5009 = vpack.c.bf16 %v4973, %v4973
      %v5010 = vpack.c.bf16 %v4974, %v4974
      %v5011 = vpack.c.bf16 %v4975, %v4975
      %v5012 = vpack.c.bf16 %v4976, %v4976
      %v5013 = vpack.c.bf16 %v4977, %v4977
      %v5014 = vpack.c.bf16 %v4978, %v4978
      %v5015 = vpack.c.bf16 %v4979, %v4979
      %v5016 = vpack.c.bf16 %v4980, %v4980
      %v5017 = vpack.c.bf16 %v4981, %v4981
      %v5018 = vpack.c.bf16 %v4982, %v4982
      %v5019 = vpack.c.bf16 %v4983, %v4983
      %v5020 = vpack.c.bf16 %v4984, %v4984
      %5021 = vst.msk [vmem:[#allocation3 + $0x10] sm:$0xf] %vm4688, %v4985
      %5022 = vst.msk [vmem:[#allocation3 + $0x14] sm:$0xf] %vm4688, %v4986
      %5023 = vst.msk [vmem:[#allocation3 + $0x18] sm:$0xf] %vm4688, %v4987
      %5024 = vst.msk [vmem:[#allocation3 + $0x1c] sm:$0xf] %vm4688, %v4988
      %5025 = vst.msk [vmem:[#allocation3 + $0x20] sm:$0xf] %vm4688, %v4989
      %5026 = vst.msk [vmem:[#allocation3 + $0x24] sm:$0xf] %vm4688, %v4990
      %5027 = vst.msk [vmem:[#allocation3 + $0x28] sm:$0xf] %vm4688, %v4991
      %5028 = vst.msk [vmem:[#allocation3 + $0x2c] sm:$0xf] %vm4688, %v4992
      %5029 = vst.msk [vmem:[#allocation3 + $0x30] sm:$0xf] %vm4688, %v4993
      %5030 = vst.msk [vmem:[#allocation3 + $0x34] sm:$0xf] %vm4688, %v4994
      %5031 = vst.msk [vmem:[#allocation3 + $0x38] sm:$0xf] %vm4688, %v4995
      %5032 = vst.msk [vmem:[#allocation3 + $0x3c] sm:$0xf] %vm4688, %v4996
      %5033 = vst.msk [vmem:[#allocation3 + $0x40] sm:$0xf] %vm4688, %v4997
      %5034 = vst.msk [vmem:[#allocation3 + $0x44] sm:$0xf] %vm4688, %v4998
      %5035 = vst.msk [vmem:[#allocation3 + $0x48] sm:$0xf] %vm4688, %v4999
      %5036 = vst.msk [vmem:[#allocation3 + $0x4c] sm:$0xf] %vm4688, %v5000
      %5037 = vst.msk [vmem:[#allocation3 + $0x50] sm:$0xf] %vm4688, %v5001
      %5038 = vst.msk [vmem:[#allocation3 + $0x54] sm:$0xf] %vm4688, %v5002
      %5039 = vst.msk [vmem:[#allocation3 + $0x58] sm:$0xf] %vm4688, %v5003
      %5040 = vst.msk [vmem:[#allocation3 + $0x5c] sm:$0xf] %vm4688, %v5004
      %5041 = vst.msk [vmem:[#allocation3 + $0x60] sm:$0xf] %vm4688, %v5005
      %5042 = vst.msk [vmem:[#allocation3 + $0x64] sm:$0xf] %vm4688, %v5006
      %5043 = vst.msk [vmem:[#allocation3 + $0x68] sm:$0xf] %vm4688, %v5007
      %5044 = vst.msk [vmem:[#allocation3 + $0x6c] sm:$0xf] %vm4688, %v5008
      %5045 = vst.msk [vmem:[#allocation3 + $0x70] sm:$0xf] %vm4688, %v5009
      %5046 = vst.msk [vmem:[#allocation3 + $0x74] sm:$0xf] %vm4688, %v5010
      %5047 = vst.msk [vmem:[#allocation3 + $0x78] sm:$0xf] %vm4688, %v5011
      %5048 = vst.msk [vmem:[#allocation3 + $0x7c] sm:$0xf] %vm4688, %v5012
      %5049 = vst.msk [vmem:[#allocation3 + $0x80] sm:$0xf] %vm4688, %v5013
      %5050 = vst.msk [vmem:[#allocation3 + $0x84] sm:$0xf] %vm4688, %v5014
      %5051 = vst.msk [vmem:[#allocation3 + $0x88] sm:$0xf] %vm4688, %v5015
      %5052 = vst.msk [vmem:[#allocation3 + $0x8c] sm:$0xf] %vm4688, %v5016
      %5053 = vst.msk [vmem:[#allocation3 + $0x90] sm:$0xf] %vm4688, %v5017
      %5054 = vst.msk [vmem:[#allocation3 + $0x94] sm:$0xf] %vm4688, %v5018
      %5055 = vst.msk [vmem:[#allocation3 + $0x98] sm:$0xf] %vm4688, %v5019
      %5056 = vst.msk [vmem:[#allocation3 + $0x9c] sm:$0xf] %vm4688, %v5020
      %v5057 = vld [vmem:[#allocation3 + $0x4] sm:$0xc]
      %v5058 = vld [vmem:[#allocation3 + $0x8] sm:$0xf]
      %v5059 = vld [vmem:[#allocation3 + $0xc] sm:$0xf]
      %v5060 = vld [vmem:[#allocation3 + $0x10] sm:$0xf]
      %v5061 = vld [vmem:[#allocation3 + $0x14] sm:$0xf]
      %v5062 = vld [vmem:[#allocation3 + $0x18] sm:$0xf]
      %v5063 = vld [vmem:[#allocation3 + $0x1c] sm:$0xf]
      %v5064 = vld [vmem:[#allocation3 + $0x20] sm:$0xf]
      %v5065 = vld [vmem:[#allocation3 + $0x24] sm:$0xf]
      %v5066 = vld [vmem:[#allocation3 + $0x28] sm:$0xf]
      %v5067 = vld [vmem:[#allocation3 + $0x2c] sm:$0xf]
      %v5068 = vld [vmem:[#allocation3 + $0x30] sm:$0xf]
      %v5069 = vld [vmem:[#allocation3 + $0x34] sm:$0xf]
      %v5070 = vld [vmem:[#allocation3 + $0x38] sm:$0xf]
      %v5071 = vld [vmem:[#allocation3 + $0x3c] sm:$0xf]
      %v5072 = vld [vmem:[#allocation3 + $0x40] sm:$0xf]
      %v5073 = vld [vmem:[#allocation3 + $0x44] sm:$0xf]
      %v5074 = vld [vmem:[#allocation3 + $0x48] sm:$0xf]
      %v5075 = vld [vmem:[#allocation3 + $0x4c] sm:$0xf]
      %v5076 = vld [vmem:[#allocation3 + $0x50] sm:$0xf]
      %v5077 = vld [vmem:[#allocation3 + $0x54] sm:$0xf]
      %v5078 = vld [vmem:[#allocation3 + $0x58] sm:$0xf]
      %v5079 = vld [vmem:[#allocation3 + $0x5c] sm:$0xf]
      %v5080 = vld [vmem:[#allocation3 + $0x60] sm:$0xf]
      %v5081 = vld [vmem:[#allocation3 + $0x64] sm:$0xf]
      %v5082 = vld [vmem:[#allocation3 + $0x68] sm:$0xf]
      %v5083 = vld [vmem:[#allocation3 + $0x6c] sm:$0xf]
      %v5084 = vld [vmem:[#allocation3 + $0x70] sm:$0xf]
      %v5085 = vld [vmem:[#allocation3 + $0x74] sm:$0xf]
      %v5086 = vld [vmem:[#allocation3 + $0x78] sm:$0xf]
      %v5087 = vld [vmem:[#allocation3 + $0x7c] sm:$0xf]
      %v5088 = vld [vmem:[#allocation3 + $0x80] sm:$0xf]
      %v5089 = vld [vmem:[#allocation3 + $0x84] sm:$0xf]
      %v5090 = vld [vmem:[#allocation3 + $0x88] sm:$0xf]
      %v5091 = vld [vmem:[#allocation3 + $0x8c] sm:$0xf]
      %v5092 = vld [vmem:[#allocation3 + $0x90] sm:$0xf]
      %v5093 = vld [vmem:[#allocation3 + $0x94] sm:$0x7]
      %v5094 = vld [vmem:[%s4] sm:$0xf]
      %v5132 = vunpack.c.l.b16 %v5057
      %v5133 = vunpack.c.l.b16 %v5058
      %v5134 = vunpack.c.l.b16 %v5059
      %v5135 = vunpack.c.l.b16 %v5060
      %v5136 = vunpack.c.l.b16 %v5061
      %v5137 = vunpack.c.l.b16 %v5062
      %v5138 = vunpack.c.l.b16 %v5063
      %v5139 = vunpack.c.l.b16 %v5064
      %v5140 = vunpack.c.l.b16 %v5065
      %v5141 = vunpack.c.l.b16 %v5066
      %v5142 = vunpack.c.l.b16 %v5067
      %v5143 = vunpack.c.l.b16 %v5068
      %v5144 = vunpack.c.l.b16 %v5069
      %v5145 = vunpack.c.l.b16 %v5070
      %v5146 = vunpack.c.l.b16 %v5071
      %v5147 = vunpack.c.l.b16 %v5072
      %v5148 = vunpack.c.l.b16 %v5073
      %v5149 = vunpack.c.l.b16 %v5074
      %v5150 = vunpack.c.l.b16 %v5075
      %v5151 = vunpack.c.l.b16 %v5076
      %v5152 = vunpack.c.l.b16 %v5077
      %v5153 = vunpack.c.l.b16 %v5078
      %v5154 = vunpack.c.l.b16 %v5079
      %v5155 = vunpack.c.l.b16 %v5080
      %v5156 = vunpack.c.l.b16 %v5081
      %v5157 = vunpack.c.l.b16 %v5082
      %v5158 = vunpack.c.l.b16 %v5083
      %v5159 = vunpack.c.l.b16 %v5084
      %v5160 = vunpack.c.l.b16 %v5085
      %v5161 = vunpack.c.l.b16 %v5086
      %v5162 = vunpack.c.l.b16 %v5087
      %v5163 = vunpack.c.l.b16 %v5088
      %v5164 = vunpack.c.l.b16 %v5089
      %v5165 = vunpack.c.l.b16 %v5090
      %v5166 = vunpack.c.l.b16 %v5091
      %v5167 = vunpack.c.l.b16 %v5092
      %v5168 = vunpack.c.l.b16 %v5093
      %v5169 = vpack.c.b16 %v5133, %v5132
      %v5170 = vpack.c.b16 %v5135, %v5134
      %v5171 = vpack.c.b16 %v5137, %v5136
      %v5172 = vpack.c.b16 %v5139, %v5138
      %v5173 = vpack.c.b16 %v5141, %v5140
      %v5174 = vpack.c.b16 %v5143, %v5142
      %v5175 = vpack.c.b16 %v5145, %v5144
      %v5176 = vpack.c.b16 %v5147, %v5146
      %v5177 = vpack.c.b16 %v5149, %v5148
      %v5178 = vpack.c.b16 %v5151, %v5150
      %v5179 = vpack.c.b16 %v5153, %v5152
      %v5180 = vpack.c.b16 %v5155, %v5154
      %v5181 = vpack.c.b16 %v5157, %v5156
      %v5182 = vpack.c.b16 %v5159, %v5158
      %v5183 = vpack.c.b16 %v5161, %v5160
      %v5184 = vpack.c.b16 %v5163, %v5162
      %v5185 = vpack.c.b16 %v5165, %v5164
      %v5186 = vpack.c.b16 %v5167, %v5166
      %v5187 = vpack.c.b16 %v5168, %v5168
      %v5189 = vshrl.u32 %v5169, 16
      %v5191 = vrot.slane %v5189, 2
      %v5192 = vshll.u32 %v5169, 16
      %v5194 = vrot.slane %v5192, 3
      %v5195 = vor.u32 %v5191, %v5194
      %v5197 = vshrl.u32 %v5170, 16
      %v5199 = vrot.slane %v5197, 2
      %v5200 = vshll.u32 %v5170, 16
      %v5202 = vrot.slane %v5200, 3
      %v5203 = vor.u32 %v5199, %v5202
      %v5204 = vsel %vm3743, %v5195, %v5203
      %v5206 = vshrl.u32 %v5171, 16
      %v5208 = vrot.slane %v5206, 2
      %v5209 = vshll.u32 %v5171, 16
      %v5211 = vrot.slane %v5209, 3
      %v5212 = vor.u32 %v5208, %v5211
      %v5213 = vsel %vm3743, %v5203, %v5212
      %v5215 = vshrl.u32 %v5172, 16
      %v5217 = vrot.slane %v5215, 2
      %v5218 = vshll.u32 %v5172, 16
      %v5220 = vrot.slane %v5218, 3
      %v5221 = vor.u32 %v5217, %v5220
      %v5222 = vsel %vm3743, %v5212, %v5221
      %v5224 = vshrl.u32 %v5173, 16
      %v5226 = vrot.slane %v5224, 2
      %v5227 = vshll.u32 %v5173, 16
      %v5229 = vrot.slane %v5227, 3
      %v5230 = vor.u32 %v5226, %v5229
      %v5231 = vsel %vm3743, %v5221, %v5230
      %v5233 = vshrl.u32 %v5174, 16
      %v5235 = vrot.slane %v5233, 2
      %v5236 = vshll.u32 %v5174, 16
      %v5238 = vrot.slane %v5236, 3
      %v5239 = vor.u32 %v5235, %v5238
      %v5240 = vsel %vm3743, %v5230, %v5239
      %v5242 = vshrl.u32 %v5175, 16
      %v5244 = vrot.slane %v5242, 2
      %v5245 = vshll.u32 %v5175, 16
      %v5247 = vrot.slane %v5245, 3
      %v5248 = vor.u32 %v5244, %v5247
      %v5249 = vsel %vm3743, %v5239, %v5248
      %v5251 = vshrl.u32 %v5176, 16
      %v5253 = vrot.slane %v5251, 2
      %v5254 = vshll.u32 %v5176, 16
      %v5256 = vrot.slane %v5254, 3
      %v5257 = vor.u32 %v5253, %v5256
      %v5258 = vsel %vm3743, %v5248, %v5257
      %v5260 = vshrl.u32 %v5177, 16
      %v5262 = vrot.slane %v5260, 2
      %v5263 = vshll.u32 %v5177, 16
      %v5265 = vrot.slane %v5263, 3
      %v5266 = vor.u32 %v5262, %v5265
      %v5267 = vsel %vm3743, %v5257, %v5266
      %v5269 = vshrl.u32 %v5178, 16
      %v5271 = vrot.slane %v5269, 2
      %v5272 = vshll.u32 %v5178, 16
      %v5274 = vrot.slane %v5272, 3
      %v5275 = vor.u32 %v5271, %v5274
      %v5276 = vsel %vm3743, %v5266, %v5275
      %v5278 = vshrl.u32 %v5179, 16
      %v5280 = vrot.slane %v5278, 2
      %v5281 = vshll.u32 %v5179, 16
      %v5283 = vrot.slane %v5281, 3
      %v5284 = vor.u32 %v5280, %v5283
      %v5285 = vsel %vm3743, %v5275, %v5284
      %v5287 = vshrl.u32 %v5180, 16
      %v5289 = vrot.slane %v5287, 2
      %v5290 = vshll.u32 %v5180, 16
      %v5292 = vrot.slane %v5290, 3
      %v5293 = vor.u32 %v5289, %v5292
      %v5294 = vsel %vm3743, %v5284, %v5293
      %v5296 = vshrl.u32 %v5181, 16
      %v5298 = vrot.slane %v5296, 2
      %v5299 = vshll.u32 %v5181, 16
      %v5301 = vrot.slane %v5299, 3
      %v5302 = vor.u32 %v5298, %v5301
      %v5303 = vsel %vm3743, %v5293, %v5302
      %v5305 = vshrl.u32 %v5182, 16
      %v5307 = vrot.slane %v5305, 2
      %v5308 = vshll.u32 %v5182, 16
      %v5310 = vrot.slane %v5308, 3
      %v5311 = vor.u32 %v5307, %v5310
      %v5312 = vsel %vm3743, %v5302, %v5311
      %v5314 = vshrl.u32 %v5183, 16
      %v5316 = vrot.slane %v5314, 2
      %v5317 = vshll.u32 %v5183, 16
      %v5319 = vrot.slane %v5317, 3
      %v5320 = vor.u32 %v5316, %v5319
      %v5321 = vsel %vm3743, %v5311, %v5320
      %v5323 = vshrl.u32 %v5184, 16
      %v5325 = vrot.slane %v5323, 2
      %v5326 = vshll.u32 %v5184, 16
      %v5328 = vrot.slane %v5326, 3
      %v5329 = vor.u32 %v5325, %v5328
      %v5330 = vsel %vm3743, %v5320, %v5329
      %v5332 = vshrl.u32 %v5185, 16
      %v5334 = vrot.slane %v5332, 2
      %v5335 = vshll.u32 %v5185, 16
      %v5337 = vrot.slane %v5335, 3
      %v5338 = vor.u32 %v5334, %v5337
      %v5339 = vsel %vm3743, %v5329, %v5338
      %v5341 = vshrl.u32 %v5186, 16
      %v5343 = vrot.slane %v5341, 2
      %v5344 = vshll.u32 %v5186, 16
      %v5346 = vrot.slane %v5344, 3
      %v5347 = vor.u32 %v5343, %v5346
      %v5348 = vsel %vm3743, %v5338, %v5347
      %v5350 = vshrl.u32 %v5187, 16
      %v5352 = vrot.slane %v5350, 2
      %v5353 = vshll.u32 %v5187, 16
      %v5355 = vrot.slane %v5353, 3
      %v5356 = vor.u32 %v5352, %v5355
      %v5357 = vsel %vm3743, %v5347, %v5356
      %v5359 = vsel %vm692, %v5204, 0
      %v5362 = vsel %vm692, %v5213, 0
      %v5365 = vsel %vm692, %v5222, 0
      %v5368 = vsel %vm692, %v5231, 0
      %v5371 = vsel %vm692, %v5240, 0
      %v5374 = vsel %vm692, %v5249, 0
      %v5377 = vsel %vm692, %v5258, 0
      %v5380 = vsel %vm692, %v5267, 0
      %v5383 = vsel %vm692, %v5276, 0
      %v5386 = vsel %vm692, %v5285, 0
      %v5389 = vsel %vm692, %v5294, 0
      %v5392 = vsel %vm692, %v5303, 0
      %v5395 = vsel %vm692, %v5312, 0
      %v5398 = vsel %vm692, %v5321, 0
      %v5401 = vsel %vm692, %v5330, 0
      %v5404 = vsel %vm692, %v5339, 0
      %v5407 = vsel %vm692, %v5348, 0
      %v5410 = vsel %vm692, %v5357, 0
      %vm5412 = vcmask 1043456
      %v5414 = vsel %vm5412, %v5094, 0
      %5416 = vmatpush.bf16.msra.mxu0 0
      %5417 = vmatpush.bf16.msra.mxu0 0
      %5418 = vmatpush.bf16.msra.mxu0 0
      %5419 = vmatpush.bf16.msra.mxu0 0
      %5420 = vmatpush.bf16.msra.mxu0 0
      %5421 = vmatpush.bf16.msra.mxu0 0
      %5422 = vmatpush.bf16.msra.mxu0 0
      %5423 = vmatpush.bf16.msra.mxu0 %v5414
      %5424 = vmatmul.bf16.gmra.mxu0 %v5359
      %v5425 = vpop.f32.mrf.mxu0
      %v5426 = vadd.f32 0.0, %v5425
      %v5427 = vpop.f32.mrf.mxu0
      %v5428 = vadd.f32 0.0, %v5427
      %5429 = vmatmul.bf16.gmra.mxu0 %v5362
      %v5430 = vpop.f32.mrf.mxu0
      %v5431 = vadd.f32 0.0, %v5430
      %v5432 = vpop.f32.mrf.mxu0
      %v5433 = vadd.f32 0.0, %v5432
      %5434 = vmatmul.bf16.gmra.mxu0 %v5365
      %v5435 = vpop.f32.mrf.mxu0
      %v5436 = vadd.f32 0.0, %v5435
      %v5437 = vpop.f32.mrf.mxu0
      %v5438 = vadd.f32 0.0, %v5437
      %5439 = vmatmul.bf16.gmra.mxu0 %v5368
      %v5440 = vpop.f32.mrf.mxu0
      %v5441 = vadd.f32 0.0, %v5440
      %v5442 = vpop.f32.mrf.mxu0
      %v5443 = vadd.f32 0.0, %v5442
      %5444 = vmatmul.bf16.gmra.mxu0 %v5371
      %v5445 = vpop.f32.mrf.mxu0
      %v5446 = vadd.f32 0.0, %v5445
      %v5447 = vpop.f32.mrf.mxu0
      %v5448 = vadd.f32 0.0, %v5447
      %5449 = vmatmul.bf16.gmra.mxu0 %v5374
      %v5450 = vpop.f32.mrf.mxu0
      %v5451 = vadd.f32 0.0, %v5450
      %v5452 = vpop.f32.mrf.mxu0
      %v5453 = vadd.f32 0.0, %v5452
      %5454 = vmatmul.bf16.gmra.mxu0 %v5377
      %v5455 = vpop.f32.mrf.mxu0
      %v5456 = vadd.f32 0.0, %v5455
      %v5457 = vpop.f32.mrf.mxu0
      %v5458 = vadd.f32 0.0, %v5457
      %5459 = vmatmul.bf16.gmra.mxu0 %v5380
      %v5460 = vpop.f32.mrf.mxu0
      %v5461 = vadd.f32 0.0, %v5460
      %v5462 = vpop.f32.mrf.mxu0
      %v5463 = vadd.f32 0.0, %v5462
      %5464 = vmatmul.bf16.gmra.mxu0 %v5383
      %v5465 = vpop.f32.mrf.mxu0
      %v5466 = vadd.f32 0.0, %v5465
      %v5467 = vpop.f32.mrf.mxu0
      %v5468 = vadd.f32 0.0, %v5467
      %5469 = vmatmul.bf16.gmra.mxu0 %v5386
      %v5470 = vpop.f32.mrf.mxu0
      %v5471 = vadd.f32 0.0, %v5470
      %v5472 = vpop.f32.mrf.mxu0
      %v5473 = vadd.f32 0.0, %v5472
      %5474 = vmatmul.bf16.gmra.mxu0 %v5389
      %v5475 = vpop.f32.mrf.mxu0
      %v5476 = vadd.f32 0.0, %v5475
      %v5477 = vpop.f32.mrf.mxu0
      %v5478 = vadd.f32 0.0, %v5477
      %5479 = vmatmul.bf16.gmra.mxu0 %v5392
      %v5480 = vpop.f32.mrf.mxu0
      %v5481 = vadd.f32 0.0, %v5480
      %v5482 = vpop.f32.mrf.mxu0
      %v5483 = vadd.f32 0.0, %v5482
      %5484 = vmatmul.bf16.gmra.mxu0 %v5395
      %v5485 = vpop.f32.mrf.mxu0
      %v5486 = vadd.f32 0.0, %v5485
      %v5487 = vpop.f32.mrf.mxu0
      %v5488 = vadd.f32 0.0, %v5487
      %5489 = vmatmul.bf16.gmra.mxu0 %v5398
      %v5490 = vpop.f32.mrf.mxu0
      %v5491 = vadd.f32 0.0, %v5490
      %v5492 = vpop.f32.mrf.mxu0
      %v5493 = vadd.f32 0.0, %v5492
      %5494 = vmatmul.bf16.gmra.mxu0 %v5401
      %v5495 = vpop.f32.mrf.mxu0
      %v5496 = vadd.f32 0.0, %v5495
      %v5497 = vpop.f32.mrf.mxu0
      %v5498 = vadd.f32 0.0, %v5497
      %5499 = vmatmul.bf16.gmra.mxu0 %v5404
      %v5500 = vpop.f32.mrf.mxu0
      %v5501 = vadd.f32 0.0, %v5500
      %v5502 = vpop.f32.mrf.mxu0
      %v5503 = vadd.f32 0.0, %v5502
      %5504 = vmatmul.bf16.gmra.mxu0 %v5407
      %v5505 = vpop.f32.mrf.mxu0
      %v5506 = vadd.f32 0.0, %v5505
      %v5507 = vpop.f32.mrf.mxu0
      %v5508 = vadd.f32 0.0, %v5507
      %5509 = vmatmul.bf16.gmra.mxu0 %v5410
      %v5510 = vpop.f32.mrf.mxu0
      %v5511 = vadd.f32 0.0, %v5510
      %v5512 = vpop.f32.mrf.mxu0
      %v5513 = vadd.f32 0.0, %v5512
      %5514 = vdwg.mxu0
      %5515 = vst.msk [vmem:[#allocation4] sm:$0xff] %vm692, %v5426
      %5516 = vst.msk [vmem:[#allocation4 + $0x8] sm:$0xff] %vm692, %v5428
      %5517 = vst.msk [vmem:[#allocation4 + $0x10] sm:$0xff] %vm692, %v5431
      %5518 = vst.msk [vmem:[#allocation4 + $0x18] sm:$0xff] %vm692, %v5433
      %5519 = vst.msk [vmem:[#allocation4 + $0x20] sm:$0xff] %vm692, %v5436
      %5520 = vst.msk [vmem:[#allocation4 + $0x28] sm:$0xff] %vm692, %v5438
      %5521 = vst.msk [vmem:[#allocation4 + $0x30] sm:$0xff] %vm692, %v5441
      %5522 = vst.msk [vmem:[#allocation4 + $0x38] sm:$0xff] %vm692, %v5443
      %5523 = vst.msk [vmem:[#allocation4 + $0x40] sm:$0xff] %vm692, %v5446
      %5524 = vst.msk [vmem:[#allocation4 + $0x48] sm:$0xff] %vm692, %v5448
      %5525 = vst.msk [vmem:[#allocation4 + $0x50] sm:$0xff] %vm692, %v5451
      %5526 = vst.msk [vmem:[#allocation4 + $0x58] sm:$0xff] %vm692, %v5453
      %5527 = vst.msk [vmem:[#allocation4 + $0x60] sm:$0xff] %vm692, %v5456
      %5528 = vst.msk [vmem:[#allocation4 + $0x68] sm:$0xff] %vm692, %v5458
      %5529 = vst.msk [vmem:[#allocation4 + $0x70] sm:$0xff] %vm692, %v5461
      %5530 = vst.msk [vmem:[#allocation4 + $0x78] sm:$0xff] %vm692, %v5463
      %5531 = vst.msk [vmem:[#allocation4 + $0x80] sm:$0xff] %vm692, %v5466
      %5532 = vst.msk [vmem:[#allocation4 + $0x88] sm:$0xff] %vm692, %v5468
      %5533 = vst.msk [vmem:[#allocation4 + $0x90] sm:$0xff] %vm692, %v5471
      %5534 = vst.msk [vmem:[#allocation4 + $0x98] sm:$0xff] %vm692, %v5473
      %5535 = vst.msk [vmem:[#allocation4 + $0xa0] sm:$0xff] %vm692, %v5476
      %5536 = vst.msk [vmem:[#allocation4 + $0xa8] sm:$0xff] %vm692, %v5478
      %5537 = vst.msk [vmem:[#allocation4 + $0xb0] sm:$0xff] %vm692, %v5481
      %5538 = vst.msk [vmem:[#allocation4 + $0xb8] sm:$0xff] %vm692, %v5483
      %5539 = vst.msk [vmem:[#allocation4 + $0xc0] sm:$0xff] %vm692, %v5486
      %5540 = vst.msk [vmem:[#allocation4 + $0xc8] sm:$0xff] %vm692, %v5488
      %5541 = vst.msk [vmem:[#allocation4 + $0xd0] sm:$0xff] %vm692, %v5491
      %5542 = vst.msk [vmem:[#allocation4 + $0xd8] sm:$0xff] %vm692, %v5493
      %5543 = vst.msk [vmem:[#allocation4 + $0xe0] sm:$0xff] %vm692, %v5496
      %5544 = vst.msk [vmem:[#allocation4 + $0xe8] sm:$0xff] %vm692, %v5498
      %5545 = vst.msk [vmem:[#allocation4 + $0xf0] sm:$0xff] %vm692, %v5501
      %5546 = vst.msk [vmem:[#allocation4 + $0xf8] sm:$0xff] %vm692, %v5503
      %5547 = vst.msk [vmem:[#allocation4 + $0x100] sm:$0xff] %vm692, %v5506
      %5548 = vst.msk [vmem:[#allocation4 + $0x108] sm:$0xff] %vm692, %v5508
      %5549 = vst.msk [vmem:[#allocation4 + $0x110] sm:$0xff] %vm692, %v5511
      %5550 = vst.msk [vmem:[#allocation4 + $0x118] sm:$0xff] %vm692, %v5513
      %v5551 = vld [vmem:[#allocation4] sm:$0xff]
      %v5552 = vld [vmem:[#allocation4 + $0x8] sm:$0xff]
      %v5553 = vld [vmem:[#allocation4 + $0x10] sm:$0xff]
      %v5554 = vld [vmem:[#allocation4 + $0x18] sm:$0xff]
      %v5555 = vld [vmem:[#allocation4 + $0x20] sm:$0xff]
      %v5556 = vld [vmem:[#allocation4 + $0x28] sm:$0xff]
      %v5557 = vld [vmem:[#allocation4 + $0x30] sm:$0xff]
      %v5558 = vld [vmem:[#allocation4 + $0x38] sm:$0xff]
      %v5559 = vld [vmem:[#allocation4 + $0x40] sm:$0xff]
      %v5560 = vld [vmem:[#allocation4 + $0x48] sm:$0xff]
      %v5561 = vld [vmem:[#allocation4 + $0x50] sm:$0xff]
      %v5562 = vld [vmem:[#allocation4 + $0x58] sm:$0xff]
      %v5563 = vld [vmem:[#allocation4 + $0x60] sm:$0xff]
      %v5564 = vld [vmem:[#allocation4 + $0x68] sm:$0xff]
      %v5565 = vld [vmem:[#allocation4 + $0x70] sm:$0xff]
      %v5566 = vld [vmem:[#allocation4 + $0x78] sm:$0xff]
      %v5567 = vld [vmem:[#allocation4 + $0x80] sm:$0xff]
      %v5568 = vld [vmem:[#allocation4 + $0x88] sm:$0xff]
      %v5569 = vld [vmem:[#allocation4 + $0x90] sm:$0xff]
      %v5570 = vld [vmem:[#allocation4 + $0x98] sm:$0xff]
      %v5571 = vld [vmem:[#allocation4 + $0xa0] sm:$0xff]
      %v5572 = vld [vmem:[#allocation4 + $0xa8] sm:$0xff]
      %v5573 = vld [vmem:[#allocation4 + $0xb0] sm:$0xff]
      %v5574 = vld [vmem:[#allocation4 + $0xb8] sm:$0xff]
      %v5575 = vld [vmem:[#allocation4 + $0xc0] sm:$0xff]
      %v5576 = vld [vmem:[#allocation4 + $0xc8] sm:$0xff]
      %v5577 = vld [vmem:[#allocation4 + $0xd0] sm:$0xff]
      %v5578 = vld [vmem:[#allocation4 + $0xd8] sm:$0xff]
      %v5579 = vld [vmem:[#allocation4 + $0xe0] sm:$0xff]
      %v5580 = vld [vmem:[#allocation4 + $0xe8] sm:$0xff]
      %v5581 = vld [vmem:[#allocation4 + $0xf0] sm:$0xff]
      %v5582 = vld [vmem:[#allocation4 + $0xf8] sm:$0xff]
      %v5583 = vld [vmem:[#allocation4 + $0x100] sm:$0xff]
      %v5584 = vld [vmem:[#allocation4 + $0x108] sm:$0xff]
      %v5585 = vld [vmem:[#allocation4 + $0x110] sm:$0xff]
      %v5586 = vld [vmem:[#allocation4 + $0x118] sm:$0xff]
      %v5587 = vld [vmem:[#allocation3 + $0x4] sm:$0x8]
      %v5588 = vld [vmem:[#allocation3 + $0x8] sm:$0xf]
      %v5589 = vld [vmem:[#allocation3 + $0xc] sm:$0xf]
      %v5590 = vld [vmem:[#allocation3 + $0x10] sm:$0xf]
      %v5591 = vld [vmem:[#allocation3 + $0x14] sm:$0xf]
      %v5592 = vld [vmem:[#allocation3 + $0x18] sm:$0xf]
      %v5593 = vld [vmem:[#allocation3 + $0x1c] sm:$0xf]
      %v5594 = vld [vmem:[#allocation3 + $0x20] sm:$0xf]
      %v5595 = vld [vmem:[#allocation3 + $0x24] sm:$0xf]
      %v5596 = vld [vmem:[#allocation3 + $0x28] sm:$0xf]
      %v5597 = vld [vmem:[#allocation3 + $0x2c] sm:$0xf]
      %v5598 = vld [vmem:[#allocation3 + $0x30] sm:$0xf]
      %v5599 = vld [vmem:[#allocation3 + $0x34] sm:$0xf]
      %v5600 = vld [vmem:[#allocation3 + $0x38] sm:$0xf]
      %v5601 = vld [vmem:[#allocation3 + $0x3c] sm:$0xf]
      %v5602 = vld [vmem:[#allocation3 + $0x40] sm:$0xf]
      %v5603 = vld [vmem:[#allocation3 + $0x44] sm:$0xf]
      %v5604 = vld [vmem:[#allocation3 + $0x48] sm:$0xf]
      %v5605 = vld [vmem:[#allocation3 + $0x4c] sm:$0xf]
      %v5606 = vld [vmem:[#allocation3 + $0x50] sm:$0xf]
      %v5607 = vld [vmem:[#allocation3 + $0x54] sm:$0xf]
      %v5608 = vld [vmem:[#allocation3 + $0x58] sm:$0xf]
      %v5609 = vld [vmem:[#allocation3 + $0x5c] sm:$0xf]
      %v5610 = vld [vmem:[#allocation3 + $0x60] sm:$0xf]
      %v5611 = vld [vmem:[#allocation3 + $0x64] sm:$0xf]
      %v5612 = vld [vmem:[#allocation3 + $0x68] sm:$0xf]
      %v5613 = vld [vmem:[#allocation3 + $0x6c] sm:$0xf]
      %v5614 = vld [vmem:[#allocation3 + $0x70] sm:$0xf]
      %v5615 = vld [vmem:[#allocation3 + $0x74] sm:$0xf]
      %v5616 = vld [vmem:[#allocation3 + $0x78] sm:$0xf]
      %v5617 = vld [vmem:[#allocation3 + $0x7c] sm:$0xf]
      %v5618 = vld [vmem:[#allocation3 + $0x80] sm:$0xf]
      %v5619 = vld [vmem:[#allocation3 + $0x84] sm:$0xf]
      %v5620 = vld [vmem:[#allocation3 + $0x88] sm:$0xf]
      %v5621 = vld [vmem:[#allocation3 + $0x8c] sm:$0xf]
      %v5622 = vld [vmem:[#allocation3 + $0x90] sm:$0xf]
      %v5623 = vld [vmem:[#allocation3 + $0x94] sm:$0x7]
      %s5624 = scalar_lea.vmem %s4, 4
      %v5625 = vld [vmem:[%s5624] sm:$0xf]
      %v5663 = vunpack.c.l.b16 %v5587
      %v5664 = vunpack.c.l.b16 %v5588
      %v5665 = vunpack.c.l.b16 %v5589
      %v5666 = vunpack.c.l.b16 %v5590
      %v5667 = vunpack.c.l.b16 %v5591
      %v5668 = vunpack.c.l.b16 %v5592
      %v5669 = vunpack.c.l.b16 %v5593
      %v5670 = vunpack.c.l.b16 %v5594
      %v5671 = vunpack.c.l.b16 %v5595
      %v5672 = vunpack.c.l.b16 %v5596
      %v5673 = vunpack.c.l.b16 %v5597
      %v5674 = vunpack.c.l.b16 %v5598
      %v5675 = vunpack.c.l.b16 %v5599
      %v5676 = vunpack.c.l.b16 %v5600
      %v5677 = vunpack.c.l.b16 %v5601
      %v5678 = vunpack.c.l.b16 %v5602
      %v5679 = vunpack.c.l.b16 %v5603
      %v5680 = vunpack.c.l.b16 %v5604
      %v5681 = vunpack.c.l.b16 %v5605
      %v5682 = vunpack.c.l.b16 %v5606
      %v5683 = vunpack.c.l.b16 %v5607
      %v5684 = vunpack.c.l.b16 %v5608
      %v5685 = vunpack.c.l.b16 %v5609
      %v5686 = vunpack.c.l.b16 %v5610
      %v5687 = vunpack.c.l.b16 %v5611
      %v5688 = vunpack.c.l.b16 %v5612
      %v5689 = vunpack.c.l.b16 %v5613
      %v5690 = vunpack.c.l.b16 %v5614
      %v5691 = vunpack.c.l.b16 %v5615
      %v5692 = vunpack.c.l.b16 %v5616
      %v5693 = vunpack.c.l.b16 %v5617
      %v5694 = vunpack.c.l.b16 %v5618
      %v5695 = vunpack.c.l.b16 %v5619
      %v5696 = vunpack.c.l.b16 %v5620
      %v5697 = vunpack.c.l.b16 %v5621
      %v5698 = vunpack.c.l.b16 %v5622
      %v5699 = vunpack.c.l.b16 %v5623
      %v5700 = vpack.c.b16 %v5664, %v5663
      %v5701 = vpack.c.b16 %v5666, %v5665
      %v5702 = vpack.c.b16 %v5668, %v5667
      %v5703 = vpack.c.b16 %v5670, %v5669
      %v5704 = vpack.c.b16 %v5672, %v5671
      %v5705 = vpack.c.b16 %v5674, %v5673
      %v5706 = vpack.c.b16 %v5676, %v5675
      %v5707 = vpack.c.b16 %v5678, %v5677
      %v5708 = vpack.c.b16 %v5680, %v5679
      %v5709 = vpack.c.b16 %v5682, %v5681
      %v5710 = vpack.c.b16 %v5684, %v5683
      %v5711 = vpack.c.b16 %v5686, %v5685
      %v5712 = vpack.c.b16 %v5688, %v5687
      %v5713 = vpack.c.b16 %v5690, %v5689
      %v5714 = vpack.c.b16 %v5692, %v5691
      %v5715 = vpack.c.b16 %v5694, %v5693
      %v5716 = vpack.c.b16 %v5696, %v5695
      %v5717 = vpack.c.b16 %v5698, %v5697
      %v5718 = vpack.c.b16 %v5699, %v5699
      %v5719 = vrot.slane %v5700, 3
      %v5720 = vrot.slane %v5701, 3
      %v5721 = vsel %vm4310, %v5719, %v5720
      %v5722 = vrot.slane %v5702, 3
      %v5723 = vsel %vm4310, %v5720, %v5722
      %v5724 = vrot.slane %v5703, 3
      %v5725 = vsel %vm4310, %v5722, %v5724
      %v5726 = vrot.slane %v5704, 3
      %v5727 = vsel %vm4310, %v5724, %v5726
      %v5728 = vrot.slane %v5705, 3
      %v5729 = vsel %vm4310, %v5726, %v5728
      %v5730 = vrot.slane %v5706, 3
      %v5731 = vsel %vm4310, %v5728, %v5730
      %v5732 = vrot.slane %v5707, 3
      %v5733 = vsel %vm4310, %v5730, %v5732
      %v5734 = vrot.slane %v5708, 3
      %v5735 = vsel %vm4310, %v5732, %v5734
      %v5736 = vrot.slane %v5709, 3
      %v5737 = vsel %vm4310, %v5734, %v5736
      %v5738 = vrot.slane %v5710, 3
      %v5739 = vsel %vm4310, %v5736, %v5738
      %v5740 = vrot.slane %v5711, 3
      %v5741 = vsel %vm4310, %v5738, %v5740
      %v5742 = vrot.slane %v5712, 3
      %v5743 = vsel %vm4310, %v5740, %v5742
      %v5744 = vrot.slane %v5713, 3
      %v5745 = vsel %vm4310, %v5742, %v5744
      %v5746 = vrot.slane %v5714, 3
      %v5747 = vsel %vm4310, %v5744, %v5746
      %v5748 = vrot.slane %v5715, 3
      %v5749 = vsel %vm4310, %v5746, %v5748
      %v5750 = vrot.slane %v5716, 3
      %v5751 = vsel %vm4310, %v5748, %v5750
      %v5752 = vrot.slane %v5717, 3
      %v5753 = vsel %vm4310, %v5750, %v5752
      %v5754 = vrot.slane %v5718, 3
      %v5755 = vsel %vm4310, %v5752, %v5754
      %v5757 = vsel %vm692, %v5721, 0
      %v5760 = vsel %vm692, %v5723, 0
      %v5763 = vsel %vm692, %v5725, 0
      %v5766 = vsel %vm692, %v5727, 0
      %v5769 = vsel %vm692, %v5729, 0
      %v5772 = vsel %vm692, %v5731, 0
      %v5775 = vsel %vm692, %v5733, 0
      %v5778 = vsel %vm692, %v5735, 0
      %v5781 = vsel %vm692, %v5737, 0
      %v5784 = vsel %vm692, %v5739, 0
      %v5787 = vsel %vm692, %v5741, 0
      %v5790 = vsel %vm692, %v5743, 0
      %v5793 = vsel %vm692, %v5745, 0
      %v5796 = vsel %vm692, %v5747, 0
      %v5799 = vsel %vm692, %v5749, 0
      %v5802 = vsel %vm692, %v5751, 0
      %v5805 = vsel %vm692, %v5753, 0
      %v5808 = vsel %vm692, %v5755, 0
      %v5811 = vsel %vm5412, %v5625, 0
      %5813 = vmatpush.bf16.msra.mxu0 0
      %5814 = vmatpush.bf16.msra.mxu0 0
      %5815 = vmatpush.bf16.msra.mxu0 0
      %5816 = vmatpush.bf16.msra.mxu0 0
      %5817 = vmatpush.bf16.msra.mxu0 0
      %5818 = vmatpush.bf16.msra.mxu0 0
      %5819 = vmatpush.bf16.msra.mxu0 0
      %5820 = vmatpush.bf16.msra.mxu0 %v5811
      %5821 = vmatmul.bf16.gmra.mxu0 %v5757
      %v5822 = vpop.f32.mrf.mxu0
      %v5823 = vadd.f32 0.0, %v5822
      %v5824 = vpop.f32.mrf.mxu0
      %v5825 = vadd.f32 0.0, %v5824
      %5826 = vmatmul.bf16.gmra.mxu0 %v5760
      %v5827 = vpop.f32.mrf.mxu0
      %v5828 = vadd.f32 0.0, %v5827
      %v5829 = vpop.f32.mrf.mxu0
      %v5830 = vadd.f32 0.0, %v5829
      %5831 = vmatmul.bf16.gmra.mxu0 %v5763
      %v5832 = vpop.f32.mrf.mxu0
      %v5833 = vadd.f32 0.0, %v5832
      %v5834 = vpop.f32.mrf.mxu0
      %v5835 = vadd.f32 0.0, %v5834
      %5836 = vmatmul.bf16.gmra.mxu0 %v5766
      %v5837 = vpop.f32.mrf.mxu0
      %v5838 = vadd.f32 0.0, %v5837
      %v5839 = vpop.f32.mrf.mxu0
      %v5840 = vadd.f32 0.0, %v5839
      %5841 = vmatmul.bf16.gmra.mxu0 %v5769
      %v5842 = vpop.f32.mrf.mxu0
      %v5843 = vadd.f32 0.0, %v5842
      %v5844 = vpop.f32.mrf.mxu0
      %v5845 = vadd.f32 0.0, %v5844
      %5846 = vmatmul.bf16.gmra.mxu0 %v5772
      %v5847 = vpop.f32.mrf.mxu0
      %v5848 = vadd.f32 0.0, %v5847
      %v5849 = vpop.f32.mrf.mxu0
      %v5850 = vadd.f32 0.0, %v5849
      %5851 = vmatmul.bf16.gmra.mxu0 %v5775
      %v5852 = vpop.f32.mrf.mxu0
      %v5853 = vadd.f32 0.0, %v5852
      %v5854 = vpop.f32.mrf.mxu0
      %v5855 = vadd.f32 0.0, %v5854
      %5856 = vmatmul.bf16.gmra.mxu0 %v5778
      %v5857 = vpop.f32.mrf.mxu0
      %v5858 = vadd.f32 0.0, %v5857
      %v5859 = vpop.f32.mrf.mxu0
      %v5860 = vadd.f32 0.0, %v5859
      %5861 = vmatmul.bf16.gmra.mxu0 %v5781
      %v5862 = vpop.f32.mrf.mxu0
      %v5863 = vadd.f32 0.0, %v5862
      %v5864 = vpop.f32.mrf.mxu0
      %v5865 = vadd.f32 0.0, %v5864
      %5866 = vmatmul.bf16.gmra.mxu0 %v5784
      %v5867 = vpop.f32.mrf.mxu0
      %v5868 = vadd.f32 0.0, %v5867
      %v5869 = vpop.f32.mrf.mxu0
      %v5870 = vadd.f32 0.0, %v5869
      %5871 = vmatmul.bf16.gmra.mxu0 %v5787
      %v5872 = vpop.f32.mrf.mxu0
      %v5873 = vadd.f32 0.0, %v5872
      %v5874 = vpop.f32.mrf.mxu0
      %v5875 = vadd.f32 0.0, %v5874
      %5876 = vmatmul.bf16.gmra.mxu0 %v5790
      %v5877 = vpop.f32.mrf.mxu0
      %v5878 = vadd.f32 0.0, %v5877
      %v5879 = vpop.f32.mrf.mxu0
      %v5880 = vadd.f32 0.0, %v5879
      %5881 = vmatmul.bf16.gmra.mxu0 %v5793
      %v5882 = vpop.f32.mrf.mxu0
      %v5883 = vadd.f32 0.0, %v5882
      %v5884 = vpop.f32.mrf.mxu0
      %v5885 = vadd.f32 0.0, %v5884
      %5886 = vmatmul.bf16.gmra.mxu0 %v5796
      %v5887 = vpop.f32.mrf.mxu0
      %v5888 = vadd.f32 0.0, %v5887
      %v5889 = vpop.f32.mrf.mxu0
      %v5890 = vadd.f32 0.0, %v5889
      %5891 = vmatmul.bf16.gmra.mxu0 %v5799
      %v5892 = vpop.f32.mrf.mxu0
      %v5893 = vadd.f32 0.0, %v5892
      %v5894 = vpop.f32.mrf.mxu0
      %v5895 = vadd.f32 0.0, %v5894
      %5896 = vmatmul.bf16.gmra.mxu0 %v5802
      %v5897 = vpop.f32.mrf.mxu0
      %v5898 = vadd.f32 0.0, %v5897
      %v5899 = vpop.f32.mrf.mxu0
      %v5900 = vadd.f32 0.0, %v5899
      %5901 = vmatmul.bf16.gmra.mxu0 %v5805
      %v5902 = vpop.f32.mrf.mxu0
      %v5903 = vadd.f32 0.0, %v5902
      %v5904 = vpop.f32.mrf.mxu0
      %v5905 = vadd.f32 0.0, %v5904
      %5906 = vmatmul.bf16.gmra.mxu0 %v5808
      %v5907 = vpop.f32.mrf.mxu0
      %v5908 = vadd.f32 0.0, %v5907
      %v5909 = vpop.f32.mrf.mxu0
      %v5910 = vadd.f32 0.0, %v5909
      %5911 = vdwg.mxu0
      %v5912 = vadd.f32 %v5551, %v5823
      %v5913 = vadd.f32 %v5552, %v5825
      %v5914 = vadd.f32 %v5553, %v5828
      %v5915 = vadd.f32 %v5554, %v5830
      %v5916 = vadd.f32 %v5555, %v5833
      %v5917 = vadd.f32 %v5556, %v5835
      %v5918 = vadd.f32 %v5557, %v5838
      %v5919 = vadd.f32 %v5558, %v5840
      %v5920 = vadd.f32 %v5559, %v5843
      %v5921 = vadd.f32 %v5560, %v5845
      %v5922 = vadd.f32 %v5561, %v5848
      %v5923 = vadd.f32 %v5562, %v5850
      %v5924 = vadd.f32 %v5563, %v5853
      %v5925 = vadd.f32 %v5564, %v5855
      %v5926 = vadd.f32 %v5565, %v5858
      %v5927 = vadd.f32 %v5566, %v5860
      %v5928 = vadd.f32 %v5567, %v5863
      %v5929 = vadd.f32 %v5568, %v5865
      %v5930 = vadd.f32 %v5569, %v5868
      %v5931 = vadd.f32 %v5570, %v5870
      %v5932 = vadd.f32 %v5571, %v5873
      %v5933 = vadd.f32 %v5572, %v5875
      %v5934 = vadd.f32 %v5573, %v5878
      %v5935 = vadd.f32 %v5574, %v5880
      %v5936 = vadd.f32 %v5575, %v5883
      %v5937 = vadd.f32 %v5576, %v5885
      %v5938 = vadd.f32 %v5577, %v5888
      %v5939 = vadd.f32 %v5578, %v5890
      %v5940 = vadd.f32 %v5579, %v5893
      %v5941 = vadd.f32 %v5580, %v5895
      %v5942 = vadd.f32 %v5581, %v5898
      %v5943 = vadd.f32 %v5582, %v5900
      %v5944 = vadd.f32 %v5583, %v5903
      %v5945 = vadd.f32 %v5584, %v5905
      %v5946 = vadd.f32 %v5585, %v5908
      %v5947 = vadd.f32 %v5586, %v5910
      %5948 = vst.msk [vmem:[#allocation4] sm:$0xff] %vm692, %v5912
      %5949 = vst.msk [vmem:[#allocation4 + $0x8] sm:$0xff] %vm692, %v5913
      %5950 = vst.msk [vmem:[#allocation4 + $0x10] sm:$0xff] %vm692, %v5914
      %5951 = vst.msk [vmem:[#allocation4 + $0x18] sm:$0xff] %vm692, %v5915
      %5952 = vst.msk [vmem:[#allocation4 + $0x20] sm:$0xff] %vm692, %v5916
      %5953 = vst.msk [vmem:[#allocation4 + $0x28] sm:$0xff] %vm692, %v5917
      %5954 = vst.msk [vmem:[#allocation4 + $0x30] sm:$0xff] %vm692, %v5918
      %5955 = vst.msk [vmem:[#allocation4 + $0x38] sm:$0xff] %vm692, %v5919
      %5956 = vst.msk [vmem:[#allocation4 + $0x40] sm:$0xff] %vm692, %v5920
      %5957 = vst.msk [vmem:[#allocation4 + $0x48] sm:$0xff] %vm692, %v5921
      %5958 = vst.msk [vmem:[#allocation4 + $0x50] sm:$0xff] %vm692, %v5922
      %5959 = vst.msk [vmem:[#allocation4 + $0x58] sm:$0xff] %vm692, %v5923
      %5960 = vst.msk [vmem:[#allocation4 + $0x60] sm:$0xff] %vm692, %v5924
      %5961 = vst.msk [vmem:[#allocation4 + $0x68] sm:$0xff] %vm692, %v5925
      %5962 = vst.msk [vmem:[#allocation4 + $0x70] sm:$0xff] %vm692, %v5926
      %5963 = vst.msk [vmem:[#allocation4 + $0x78] sm:$0xff] %vm692, %v5927
      %5964 = vst.msk [vmem:[#allocation4 + $0x80] sm:$0xff] %vm692, %v5928
      %5965 = vst.msk [vmem:[#allocation4 + $0x88] sm:$0xff] %vm692, %v5929
      %5966 = vst.msk [vmem:[#allocation4 + $0x90] sm:$0xff] %vm692, %v5930
      %5967 = vst.msk [vmem:[#allocation4 + $0x98] sm:$0xff] %vm692, %v5931
      %5968 = vst.msk [vmem:[#allocation4 + $0xa0] sm:$0xff] %vm692, %v5932
      %5969 = vst.msk [vmem:[#allocation4 + $0xa8] sm:$0xff] %vm692, %v5933
      %5970 = vst.msk [vmem:[#allocation4 + $0xb0] sm:$0xff] %vm692, %v5934
      %5971 = vst.msk [vmem:[#allocation4 + $0xb8] sm:$0xff] %vm692, %v5935
      %5972 = vst.msk [vmem:[#allocation4 + $0xc0] sm:$0xff] %vm692, %v5936
      %5973 = vst.msk [vmem:[#allocation4 + $0xc8] sm:$0xff] %vm692, %v5937
      %5974 = vst.msk [vmem:[#allocation4 + $0xd0] sm:$0xff] %vm692, %v5938
      %5975 = vst.msk [vmem:[#allocation4 + $0xd8] sm:$0xff] %vm692, %v5939
      %5976 = vst.msk [vmem:[#allocation4 + $0xe0] sm:$0xff] %vm692, %v5940
      %5977 = vst.msk [vmem:[#allocation4 + $0xe8] sm:$0xff] %vm692, %v5941
      %5978 = vst.msk [vmem:[#allocation4 + $0xf0] sm:$0xff] %vm692, %v5942
      %5979 = vst.msk [vmem:[#allocation4 + $0xf8] sm:$0xff] %vm692, %v5943
      %5980 = vst.msk [vmem:[#allocation4 + $0x100] sm:$0xff] %vm692, %v5944
      %5981 = vst.msk [vmem:[#allocation4 + $0x108] sm:$0xff] %vm692, %v5945
      %5982 = vst.msk [vmem:[#allocation4 + $0x110] sm:$0xff] %vm692, %v5946
      %5983 = vst.msk [vmem:[#allocation4 + $0x118] sm:$0xff] %vm692, %v5947
      %v5984 = vld [vmem:[#allocation4] sm:$0xff]
      %v5985 = vld [vmem:[#allocation4 + $0x8] sm:$0xff]
      %v5986 = vld [vmem:[#allocation4 + $0x10] sm:$0xff]
      %v5987 = vld [vmem:[#allocation4 + $0x18] sm:$0xff]
      %v5988 = vld [vmem:[#allocation4 + $0x20] sm:$0xff]
      %v5989 = vld [vmem:[#allocation4 + $0x28] sm:$0xff]
      %v5990 = vld [vmem:[#allocation4 + $0x30] sm:$0xff]
      %v5991 = vld [vmem:[#allocation4 + $0x38] sm:$0xff]
      %v5992 = vld [vmem:[#allocation4 + $0x40] sm:$0xff]
      %v5993 = vld [vmem:[#allocation4 + $0x48] sm:$0xff]
      %v5994 = vld [vmem:[#allocation4 + $0x50] sm:$0xff]
      %v5995 = vld [vmem:[#allocation4 + $0x58] sm:$0xff]
      %v5996 = vld [vmem:[#allocation4 + $0x60] sm:$0xff]
      %v5997 = vld [vmem:[#allocation4 + $0x68] sm:$0xff]
      %v5998 = vld [vmem:[#allocation4 + $0x70] sm:$0xff]
      %v5999 = vld [vmem:[#allocation4 + $0x78] sm:$0xff]
      %v6000 = vld [vmem:[#allocation4 + $0x80] sm:$0xff]
      %v6001 = vld [vmem:[#allocation4 + $0x88] sm:$0xff]
      %v6002 = vld [vmem:[#allocation4 + $0x90] sm:$0xff]
      %v6003 = vld [vmem:[#allocation4 + $0x98] sm:$0xff]
      %v6004 = vld [vmem:[#allocation4 + $0xa0] sm:$0xff]
      %v6005 = vld [vmem:[#allocation4 + $0xa8] sm:$0xff]
      %v6006 = vld [vmem:[#allocation4 + $0xb0] sm:$0xff]
      %v6007 = vld [vmem:[#allocation4 + $0xb8] sm:$0xff]
      %v6008 = vld [vmem:[#allocation4 + $0xc0] sm:$0xff]
      %v6009 = vld [vmem:[#allocation4 + $0xc8] sm:$0xff]
      %v6010 = vld [vmem:[#allocation4 + $0xd0] sm:$0xff]
      %v6011 = vld [vmem:[#allocation4 + $0xd8] sm:$0xff]
      %v6012 = vld [vmem:[#allocation4 + $0xe0] sm:$0xff]
      %v6013 = vld [vmem:[#allocation4 + $0xe8] sm:$0xff]
      %v6014 = vld [vmem:[#allocation4 + $0xf0] sm:$0xff]
      %v6015 = vld [vmem:[#allocation4 + $0xf8] sm:$0xff]
      %v6016 = vld [vmem:[#allocation4 + $0x100] sm:$0xff]
      %v6017 = vld [vmem:[#allocation4 + $0x108] sm:$0xff]
      %v6018 = vld [vmem:[#allocation4 + $0x110] sm:$0xff]
      %v6019 = vld [vmem:[#allocation4 + $0x118] sm:$0xff]
      %v6020 = vld [vmem:[#allocation3 + $0x4] sm:$0x8]
      %v6021 = vld [vmem:[#allocation3 + $0x8] sm:$0xf]
      %v6022 = vld [vmem:[#allocation3 + $0xc] sm:$0xf]
      %v6023 = vld [vmem:[#allocation3 + $0x10] sm:$0xf]
      %v6024 = vld [vmem:[#allocation3 + $0x14] sm:$0xf]
      %v6025 = vld [vmem:[#allocation3 + $0x18] sm:$0xf]
      %v6026 = vld [vmem:[#allocation3 + $0x1c] sm:$0xf]
      %v6027 = vld [vmem:[#allocation3 + $0x20] sm:$0xf]
      %v6028 = vld [vmem:[#allocation3 + $0x24] sm:$0xf]
      %v6029 = vld [vmem:[#allocation3 + $0x28] sm:$0xf]
      %v6030 = vld [vmem:[#allocation3 + $0x2c] sm:$0xf]
      %v6031 = vld [vmem:[#allocation3 + $0x30] sm:$0xf]
      %v6032 = vld [vmem:[#allocation3 + $0x34] sm:$0xf]
      %v6033 = vld [vmem:[#allocation3 + $0x38] sm:$0xf]
      %v6034 = vld [vmem:[#allocation3 + $0x3c] sm:$0xf]
      %v6035 = vld [vmem:[#allocation3 + $0x40] sm:$0xf]
      %v6036 = vld [vmem:[#allocation3 + $0x44] sm:$0xf]
      %v6037 = vld [vmem:[#allocation3 + $0x48] sm:$0xf]
      %v6038 = vld [vmem:[#allocation3 + $0x4c] sm:$0xf]
      %v6039 = vld [vmem:[#allocation3 + $0x50] sm:$0xf]
      %v6040 = vld [vmem:[#allocation3 + $0x54] sm:$0xf]
      %v6041 = vld [vmem:[#allocation3 + $0x58] sm:$0xf]
      %v6042 = vld [vmem:[#allocation3 + $0x5c] sm:$0xf]
      %v6043 = vld [vmem:[#allocation3 + $0x60] sm:$0xf]
      %v6044 = vld [vmem:[#allocation3 + $0x64] sm:$0xf]
      %v6045 = vld [vmem:[#allocation3 + $0x68] sm:$0xf]
      %v6046 = vld [vmem:[#allocation3 + $0x6c] sm:$0xf]
      %v6047 = vld [vmem:[#allocation3 + $0x70] sm:$0xf]
      %v6048 = vld [vmem:[#allocation3 + $0x74] sm:$0xf]
      %v6049 = vld [vmem:[#allocation3 + $0x78] sm:$0xf]
      %v6050 = vld [vmem:[#allocation3 + $0x7c] sm:$0xf]
      %v6051 = vld [vmem:[#allocation3 + $0x80] sm:$0xf]
      %v6052 = vld [vmem:[#allocation3 + $0x84] sm:$0xf]
      %v6053 = vld [vmem:[#allocation3 + $0x88] sm:$0xf]
      %v6054 = vld [vmem:[#allocation3 + $0x8c] sm:$0xf]
      %v6055 = vld [vmem:[#allocation3 + $0x90] sm:$0xf]
      %v6056 = vld [vmem:[#allocation3 + $0x94] sm:$0xf]
      %s6057 = scalar_lea.vmem %s4, 8
      %v6058 = vld [vmem:[%s6057] sm:$0xf]
      %v6096 = vunpack.c.l.b16 %v6020
      %v6097 = vunpack.c.l.b16 %v6021
      %v6098 = vunpack.c.l.b16 %v6022
      %v6099 = vunpack.c.l.b16 %v6023
      %v6100 = vunpack.c.l.b16 %v6024
      %v6101 = vunpack.c.l.b16 %v6025
      %v6102 = vunpack.c.l.b16 %v6026
      %v6103 = vunpack.c.l.b16 %v6027
      %v6104 = vunpack.c.l.b16 %v6028
      %v6105 = vunpack.c.l.b16 %v6029
      %v6106 = vunpack.c.l.b16 %v6030
      %v6107 = vunpack.c.l.b16 %v6031
      %v6108 = vunpack.c.l.b16 %v6032
      %v6109 = vunpack.c.l.b16 %v6033
      %v6110 = vunpack.c.l.b16 %v6034
      %v6111 = vunpack.c.l.b16 %v6035
      %v6112 = vunpack.c.l.b16 %v6036
      %v6113 = vunpack.c.l.b16 %v6037
      %v6114 = vunpack.c.l.b16 %v6038
      %v6115 = vunpack.c.l.b16 %v6039
      %v6116 = vunpack.c.l.b16 %v6040
      %v6117 = vunpack.c.l.b16 %v6041
      %v6118 = vunpack.c.l.b16 %v6042
      %v6119 = vunpack.c.l.b16 %v6043
      %v6120 = vunpack.c.l.b16 %v6044
      %v6121 = vunpack.c.l.b16 %v6045
      %v6122 = vunpack.c.l.b16 %v6046
      %v6123 = vunpack.c.l.b16 %v6047
      %v6124 = vunpack.c.l.b16 %v6048
      %v6125 = vunpack.c.l.b16 %v6049
      %v6126 = vunpack.c.l.b16 %v6050
      %v6127 = vunpack.c.l.b16 %v6051
      %v6128 = vunpack.c.l.b16 %v6052
      %v6129 = vunpack.c.l.b16 %v6053
      %v6130 = vunpack.c.l.b16 %v6054
      %v6131 = vunpack.c.l.b16 %v6055
      %v6132 = vunpack.c.l.b16 %v6056
      %v6133 = vpack.c.b16 %v6097, %v6096
      %v6134 = vpack.c.b16 %v6099, %v6098
      %v6135 = vpack.c.b16 %v6101, %v6100
      %v6136 = vpack.c.b16 %v6103, %v6102
      %v6137 = vpack.c.b16 %v6105, %v6104
      %v6138 = vpack.c.b16 %v6107, %v6106
      %v6139 = vpack.c.b16 %v6109, %v6108
      %v6140 = vpack.c.b16 %v6111, %v6110
      %v6141 = vpack.c.b16 %v6113, %v6112
      %v6142 = vpack.c.b16 %v6115, %v6114
      %v6143 = vpack.c.b16 %v6117, %v6116
      %v6144 = vpack.c.b16 %v6119, %v6118
      %v6145 = vpack.c.b16 %v6121, %v6120
      %v6146 = vpack.c.b16 %v6123, %v6122
      %v6147 = vpack.c.b16 %v6125, %v6124
      %v6148 = vpack.c.b16 %v6127, %v6126
      %v6149 = vpack.c.b16 %v6129, %v6128
      %v6150 = vpack.c.b16 %v6131, %v6130
      %v6151 = vpack.c.b16 %v6132, %v6132
      %vm6152 = vsmask.f32 4352
      %v6154 = vshrl.u32 %v6133, 16
      %v6156 = vrot.slane %v6154, 3
      %v6157 = vshll.u32 %v6133, 16
      %v6159 = vrot.slane %v6157, 4
      %v6160 = vor.u32 %v6156, %v6159
      %v6162 = vshrl.u32 %v6134, 16
      %v6164 = vrot.slane %v6162, 3
      %v6165 = vshll.u32 %v6134, 16
      %v6167 = vrot.slane %v6165, 4
      %v6168 = vor.u32 %v6164, %v6167
      %v6169 = vsel %vm6152, %v6160, %v6168
      %v6171 = vshrl.u32 %v6135, 16
      %v6173 = vrot.slane %v6171, 3
      %v6174 = vshll.u32 %v6135, 16
      %v6176 = vrot.slane %v6174, 4
      %v6177 = vor.u32 %v6173, %v6176
      %v6178 = vsel %vm6152, %v6168, %v6177
      %v6180 = vshrl.u32 %v6136, 16
      %v6182 = vrot.slane %v6180, 3
      %v6183 = vshll.u32 %v6136, 16
      %v6185 = vrot.slane %v6183, 4
      %v6186 = vor.u32 %v6182, %v6185
      %v6187 = vsel %vm6152, %v6177, %v6186
      %v6189 = vshrl.u32 %v6137, 16
      %v6191 = vrot.slane %v6189, 3
      %v6192 = vshll.u32 %v6137, 16
      %v6194 = vrot.slane %v6192, 4
      %v6195 = vor.u32 %v6191, %v6194
      %v6196 = vsel %vm6152, %v6186, %v6195
      %v6198 = vshrl.u32 %v6138, 16
      %v6200 = vrot.slane %v6198, 3
      %v6201 = vshll.u32 %v6138, 16
      %v6203 = vrot.slane %v6201, 4
      %v6204 = vor.u32 %v6200, %v6203
      %v6205 = vsel %vm6152, %v6195, %v6204
      %v6207 = vshrl.u32 %v6139, 16
      %v6209 = vrot.slane %v6207, 3
      %v6210 = vshll.u32 %v6139, 16
      %v6212 = vrot.slane %v6210, 4
      %v6213 = vor.u32 %v6209, %v6212
      %v6214 = vsel %vm6152, %v6204, %v6213
      %v6216 = vshrl.u32 %v6140, 16
      %v6218 = vrot.slane %v6216, 3
      %v6219 = vshll.u32 %v6140, 16
      %v6221 = vrot.slane %v6219, 4
      %v6222 = vor.u32 %v6218, %v6221
      %v6223 = vsel %vm6152, %v6213, %v6222
      %v6225 = vshrl.u32 %v6141, 16
      %v6227 = vrot.slane %v6225, 3
      %v6228 = vshll.u32 %v6141, 16
      %v6230 = vrot.slane %v6228, 4
      %v6231 = vor.u32 %v6227, %v6230
      %v6232 = vsel %vm6152, %v6222, %v6231
      %v6234 = vshrl.u32 %v6142, 16
      %v6236 = vrot.slane %v6234, 3
      %v6237 = vshll.u32 %v6142, 16
      %v6239 = vrot.slane %v6237, 4
      %v6240 = vor.u32 %v6236, %v6239
      %v6241 = vsel %vm6152, %v6231, %v6240
      %v6243 = vshrl.u32 %v6143, 16
      %v6245 = vrot.slane %v6243, 3
      %v6246 = vshll.u32 %v6143, 16
      %v6248 = vrot.slane %v6246, 4
      %v6249 = vor.u32 %v6245, %v6248
      %v6250 = vsel %vm6152, %v6240, %v6249
      %v6252 = vshrl.u32 %v6144, 16
      %v6254 = vrot.slane %v6252, 3
      %v6255 = vshll.u32 %v6144, 16
      %v6257 = vrot.slane %v6255, 4
      %v6258 = vor.u32 %v6254, %v6257
      %v6259 = vsel %vm6152, %v6249, %v6258
      %v6261 = vshrl.u32 %v6145, 16
      %v6263 = vrot.slane %v6261, 3
      %v6264 = vshll.u32 %v6145, 16
      %v6266 = vrot.slane %v6264, 4
      %v6267 = vor.u32 %v6263, %v6266
      %v6268 = vsel %vm6152, %v6258, %v6267
      %v6270 = vshrl.u32 %v6146, 16
      %v6272 = vrot.slane %v6270, 3
      %v6273 = vshll.u32 %v6146, 16
      %v6275 = vrot.slane %v6273, 4
      %v6276 = vor.u32 %v6272, %v6275
      %v6277 = vsel %vm6152, %v6267, %v6276
      %v6279 = vshrl.u32 %v6147, 16
      %v6281 = vrot.slane %v6279, 3
      %v6282 = vshll.u32 %v6147, 16
      %v6284 = vrot.slane %v6282, 4
      %v6285 = vor.u32 %v6281, %v6284
      %v6286 = vsel %vm6152, %v6276, %v6285
      %v6288 = vshrl.u32 %v6148, 16
      %v6290 = vrot.slane %v6288, 3
      %v6291 = vshll.u32 %v6148, 16
      %v6293 = vrot.slane %v6291, 4
      %v6294 = vor.u32 %v6290, %v6293
      %v6295 = vsel %vm6152, %v6285, %v6294
      %v6297 = vshrl.u32 %v6149, 16
      %v6299 = vrot.slane %v6297, 3
      %v6300 = vshll.u32 %v6149, 16
      %v6302 = vrot.slane %v6300, 4
      %v6303 = vor.u32 %v6299, %v6302
      %v6304 = vsel %vm6152, %v6294, %v6303
      %v6306 = vshrl.u32 %v6150, 16
      %v6308 = vrot.slane %v6306, 3
      %v6309 = vshll.u32 %v6150, 16
      %v6311 = vrot.slane %v6309, 4
      %v6312 = vor.u32 %v6308, %v6311
      %v6313 = vsel %vm6152, %v6303, %v6312
      %v6315 = vshrl.u32 %v6151, 16
      %v6317 = vrot.slane %v6315, 3
      %v6318 = vshll.u32 %v6151, 16
      %v6320 = vrot.slane %v6318, 4
      %v6321 = vor.u32 %v6317, %v6320
      %v6322 = vsel %vm6152, %v6312, %v6321
      %v6324 = vsel %vm692, %v6169, 0
      %v6327 = vsel %vm692, %v6178, 0
      %v6330 = vsel %vm692, %v6187, 0
      %v6333 = vsel %vm692, %v6196, 0
      %v6336 = vsel %vm692, %v6205, 0
      %v6339 = vsel %vm692, %v6214, 0
      %v6342 = vsel %vm692, %v6223, 0
      %v6345 = vsel %vm692, %v6232, 0
      %v6348 = vsel %vm692, %v6241, 0
      %v6351 = vsel %vm692, %v6250, 0
      %v6354 = vsel %vm692, %v6259, 0
      %v6357 = vsel %vm692, %v6268, 0
      %v6360 = vsel %vm692, %v6277, 0
      %v6363 = vsel %vm692, %v6286, 0
      %v6366 = vsel %vm692, %v6295, 0
      %v6369 = vsel %vm692, %v6304, 0
      %v6372 = vsel %vm692, %v6313, 0
      %v6375 = vsel %vm692, %v6322, 0
      %v6378 = vsel %vm5412, %v6058, 0
      %6380 = vmatpush.bf16.msra.mxu0 0
      %6381 = vmatpush.bf16.msra.mxu0 0
      %6382 = vmatpush.bf16.msra.mxu0 0
      %6383 = vmatpush.bf16.msra.mxu0 0
      %6384 = vmatpush.bf16.msra.mxu0 0
      %6385 = vmatpush.bf16.msra.mxu0 0
      %6386 = vmatpush.bf16.msra.mxu0 0
      %6387 = vmatpush.bf16.msra.mxu0 %v6378
      %6388 = vmatmul.bf16.gmra.mxu0 %v6324
      %v6389 = vpop.f32.mrf.mxu0
      %v6390 = vadd.f32 0.0, %v6389
      %v6391 = vpop.f32.mrf.mxu0
      %v6392 = vadd.f32 0.0, %v6391
      %6393 = vmatmul.bf16.gmra.mxu0 %v6327
      %v6394 = vpop.f32.mrf.mxu0
      %v6395 = vadd.f32 0.0, %v6394
      %v6396 = vpop.f32.mrf.mxu0
      %v6397 = vadd.f32 0.0, %v6396
      %6398 = vmatmul.bf16.gmra.mxu0 %v6330
      %v6399 = vpop.f32.mrf.mxu0
      %v6400 = vadd.f32 0.0, %v6399
      %v6401 = vpop.f32.mrf.mxu0
      %v6402 = vadd.f32 0.0, %v6401
      %6403 = vmatmul.bf16.gmra.mxu0 %v6333
      %v6404 = vpop.f32.mrf.mxu0
      %v6405 = vadd.f32 0.0, %v6404
      %v6406 = vpop.f32.mrf.mxu0
      %v6407 = vadd.f32 0.0, %v6406
      %6408 = vmatmul.bf16.gmra.mxu0 %v6336
      %v6409 = vpop.f32.mrf.mxu0
      %v6410 = vadd.f32 0.0, %v6409
      %v6411 = vpop.f32.mrf.mxu0
      %v6412 = vadd.f32 0.0, %v6411
      %6413 = vmatmul.bf16.gmra.mxu0 %v6339
      %v6414 = vpop.f32.mrf.mxu0
      %v6415 = vadd.f32 0.0, %v6414
      %v6416 = vpop.f32.mrf.mxu0
      %v6417 = vadd.f32 0.0, %v6416
      %6418 = vmatmul.bf16.gmra.mxu0 %v6342
      %v6419 = vpop.f32.mrf.mxu0
      %v6420 = vadd.f32 0.0, %v6419
      %v6421 = vpop.f32.mrf.mxu0
      %v6422 = vadd.f32 0.0, %v6421
      %6423 = vmatmul.bf16.gmra.mxu0 %v6345
      %v6424 = vpop.f32.mrf.mxu0
      %v6425 = vadd.f32 0.0, %v6424
      %v6426 = vpop.f32.mrf.mxu0
      %v6427 = vadd.f32 0.0, %v6426
      %6428 = vmatmul.bf16.gmra.mxu0 %v6348
      %v6429 = vpop.f32.mrf.mxu0
      %v6430 = vadd.f32 0.0, %v6429
      %v6431 = vpop.f32.mrf.mxu0
      %v6432 = vadd.f32 0.0, %v6431
      %6433 = vmatmul.bf16.gmra.mxu0 %v6351
      %v6434 = vpop.f32.mrf.mxu0
      %v6435 = vadd.f32 0.0, %v6434
      %v6436 = vpop.f32.mrf.mxu0
      %v6437 = vadd.f32 0.0, %v6436
      %6438 = vmatmul.bf16.gmra.mxu0 %v6354
      %v6439 = vpop.f32.mrf.mxu0
      %v6440 = vadd.f32 0.0, %v6439
      %v6441 = vpop.f32.mrf.mxu0
      %v6442 = vadd.f32 0.0, %v6441
      %6443 = vmatmul.bf16.gmra.mxu0 %v6357
      %v6444 = vpop.f32.mrf.mxu0
      %v6445 = vadd.f32 0.0, %v6444
      %v6446 = vpop.f32.mrf.mxu0
      %v6447 = vadd.f32 0.0, %v6446
      %6448 = vmatmul.bf16.gmra.mxu0 %v6360
      %v6449 = vpop.f32.mrf.mxu0
      %v6450 = vadd.f32 0.0, %v6449
      %v6451 = vpop.f32.mrf.mxu0
      %v6452 = vadd.f32 0.0, %v6451
      %6453 = vmatmul.bf16.gmra.mxu0 %v6363
      %v6454 = vpop.f32.mrf.mxu0
      %v6455 = vadd.f32 0.0, %v6454
      %v6456 = vpop.f32.mrf.mxu0
      %v6457 = vadd.f32 0.0, %v6456
      %6458 = vmatmul.bf16.gmra.mxu0 %v6366
      %v6459 = vpop.f32.mrf.mxu0
      %v6460 = vadd.f32 0.0, %v6459
      %v6461 = vpop.f32.mrf.mxu0
      %v6462 = vadd.f32 0.0, %v6461
      %6463 = vmatmul.bf16.gmra.mxu0 %v6369
      %v6464 = vpop.f32.mrf.mxu0
      %v6465 = vadd.f32 0.0, %v6464
      %v6466 = vpop.f32.mrf.mxu0
      %v6467 = vadd.f32 0.0, %v6466
      %6468 = vmatmul.bf16.gmra.mxu0 %v6372
      %v6469 = vpop.f32.mrf.mxu0
      %v6470 = vadd.f32 0.0, %v6469
      %v6471 = vpop.f32.mrf.mxu0
      %v6472 = vadd.f32 0.0, %v6471
      %6473 = vmatmul.bf16.gmra.mxu0 %v6375
      %v6474 = vpop.f32.mrf.mxu0
      %v6475 = vadd.f32 0.0, %v6474
      %v6476 = vpop.f32.mrf.mxu0
      %v6477 = vadd.f32 0.0, %v6476
      %6478 = vdwg.mxu0
      %v6479 = vadd.f32 %v5984, %v6390
      %v6480 = vadd.f32 %v5985, %v6392
      %v6481 = vadd.f32 %v5986, %v6395
      %v6482 = vadd.f32 %v5987, %v6397
      %v6483 = vadd.f32 %v5988, %v6400
      %v6484 = vadd.f32 %v5989, %v6402
      %v6485 = vadd.f32 %v5990, %v6405
      %v6486 = vadd.f32 %v5991, %v6407
      %v6487 = vadd.f32 %v5992, %v6410
      %v6488 = vadd.f32 %v5993, %v6412
      %v6489 = vadd.f32 %v5994, %v6415
      %v6490 = vadd.f32 %v5995, %v6417
      %v6491 = vadd.f32 %v5996, %v6420
      %v6492 = vadd.f32 %v5997, %v6422
      %v6493 = vadd.f32 %v5998, %v6425
      %v6494 = vadd.f32 %v5999, %v6427
      %v6495 = vadd.f32 %v6000, %v6430
      %v6496 = vadd.f32 %v6001, %v6432
      %v6497 = vadd.f32 %v6002, %v6435
      %v6498 = vadd.f32 %v6003, %v6437
      %v6499 = vadd.f32 %v6004, %v6440
      %v6500 = vadd.f32 %v6005, %v6442
      %v6501 = vadd.f32 %v6006, %v6445
      %v6502 = vadd.f32 %v6007, %v6447
      %v6503 = vadd.f32 %v6008, %v6450
      %v6504 = vadd.f32 %v6009, %v6452
      %v6505 = vadd.f32 %v6010, %v6455
      %v6506 = vadd.f32 %v6011, %v6457
      %v6507 = vadd.f32 %v6012, %v6460
      %v6508 = vadd.f32 %v6013, %v6462
      %v6509 = vadd.f32 %v6014, %v6465
      %v6510 = vadd.f32 %v6015, %v6467
      %v6511 = vadd.f32 %v6016, %v6470
      %v6512 = vadd.f32 %v6017, %v6472
      %v6513 = vadd.f32 %v6018, %v6475
      %v6514 = vadd.f32 %v6019, %v6477
      %6515 = vst.msk [vmem:[#allocation4] sm:$0xff] %vm692, %v6479
      %6516 = vst.msk [vmem:[#allocation4 + $0x8] sm:$0xff] %vm692, %v6480
      %6517 = vst.msk [vmem:[#allocation4 + $0x10] sm:$0xff] %vm692, %v6481
      %6518 = vst.msk [vmem:[#allocation4 + $0x18] sm:$0xff] %vm692, %v6482
      %6519 = vst.msk [vmem:[#allocation4 + $0x20] sm:$0xff] %vm692, %v6483
      %6520 = vst.msk [vmem:[#allocation4 + $0x28] sm:$0xff] %vm692, %v6484
      %6521 = vst.msk [vmem:[#allocation4 + $0x30] sm:$0xff] %vm692, %v6485
      %6522 = vst.msk [vmem:[#allocation4 + $0x38] sm:$0xff] %vm692, %v6486
      %6523 = vst.msk [vmem:[#allocation4 + $0x40] sm:$0xff] %vm692, %v6487
      %6524 = vst.msk [vmem:[#allocation4 + $0x48] sm:$0xff] %vm692, %v6488
      %6525 = vst.msk [vmem:[#allocation4 + $0x50] sm:$0xff] %vm692, %v6489
      %6526 = vst.msk [vmem:[#allocation4 + $0x58] sm:$0xff] %vm692, %v6490
      %6527 = vst.msk [vmem:[#allocation4 + $0x60] sm:$0xff] %vm692, %v6491
      %6528 = vst.msk [vmem:[#allocation4 + $0x68] sm:$0xff] %vm692, %v6492
      %6529 = vst.msk [vmem:[#allocation4 + $0x70] sm:$0xff] %vm692, %v6493
      %6530 = vst.msk [vmem:[#allocation4 + $0x78] sm:$0xff] %vm692, %v6494
      %6531 = vst.msk [vmem:[#allocation4 + $0x80] sm:$0xff] %vm692, %v6495
      %6532 = vst.msk [vmem:[#allocation4 + $0x88] sm:$0xff] %vm692, %v6496
      %6533 = vst.msk [vmem:[#allocation4 + $0x90] sm:$0xff] %vm692, %v6497
      %6534 = vst.msk [vmem:[#allocation4 + $0x98] sm:$0xff] %vm692, %v6498
      %6535 = vst.msk [vmem:[#allocation4 + $0xa0] sm:$0xff] %vm692, %v6499
      %6536 = vst.msk [vmem:[#allocation4 + $0xa8] sm:$0xff] %vm692, %v6500
      %6537 = vst.msk [vmem:[#allocation4 + $0xb0] sm:$0xff] %vm692, %v6501
      %6538 = vst.msk [vmem:[#allocation4 + $0xb8] sm:$0xff] %vm692, %v6502
      %6539 = vst.msk [vmem:[#allocation4 + $0xc0] sm:$0xff] %vm692, %v6503
      %6540 = vst.msk [vmem:[#allocation4 + $0xc8] sm:$0xff] %vm692, %v6504
      %6541 = vst.msk [vmem:[#allocation4 + $0xd0] sm:$0xff] %vm692, %v6505
      %6542 = vst.msk [vmem:[#allocation4 + $0xd8] sm:$0xff] %vm692, %v6506
      %6543 = vst.msk [vmem:[#allocation4 + $0xe0] sm:$0xff] %vm692, %v6507
      %6544 = vst.msk [vmem:[#allocation4 + $0xe8] sm:$0xff] %vm692, %v6508
      %6545 = vst.msk [vmem:[#allocation4 + $0xf0] sm:$0xff] %vm692, %v6509
      %6546 = vst.msk [vmem:[#allocation4 + $0xf8] sm:$0xff] %vm692, %v6510
      %6547 = vst.msk [vmem:[#allocation4 + $0x100] sm:$0xff] %vm692, %v6511
      %6548 = vst.msk [vmem:[#allocation4 + $0x108] sm:$0xff] %vm692, %v6512
      %6549 = vst.msk [vmem:[#allocation4 + $0x110] sm:$0xff] %vm692, %v6513
      %6550 = vst.msk [vmem:[#allocation4 + $0x118] sm:$0xff] %vm692, %v6514
      %v6551 = vld [vmem:[#allocation4] sm:$0xff]
      %v6552 = vld [vmem:[#allocation4 + $0x8] sm:$0xff]
      %v6553 = vld [vmem:[#allocation4 + $0x10] sm:$0xff]
      %v6554 = vld [vmem:[#allocation4 + $0x18] sm:$0xff]
      %v6555 = vld [vmem:[#allocation4 + $0x20] sm:$0xff]
      %v6556 = vld [vmem:[#allocation4 + $0x28] sm:$0xff]
      %v6557 = vld [vmem:[#allocation4 + $0x30] sm:$0xff]
      %v6558 = vld [vmem:[#allocation4 + $0x38] sm:$0xff]
      %v6559 = vld [vmem:[#allocation4 + $0x40] sm:$0xff]
      %v6560 = vld [vmem:[#allocation4 + $0x48] sm:$0xff]
      %v6561 = vld [vmem:[#allocation4 + $0x50] sm:$0xff]
      %v6562 = vld [vmem:[#allocation4 + $0x58] sm:$0xff]
      %v6563 = vld [vmem:[#allocation4 + $0x60] sm:$0xff]
      %v6564 = vld [vmem:[#allocation4 + $0x68] sm:$0xff]
      %v6565 = vld [vmem:[#allocation4 + $0x70] sm:$0xff]
      %v6566 = vld [vmem:[#allocation4 + $0x78] sm:$0xff]
      %v6567 = vld [vmem:[#allocation4 + $0x80] sm:$0xff]
      %v6568 = vld [vmem:[#allocation4 + $0x88] sm:$0xff]
      %v6569 = vld [vmem:[#allocation4 + $0x90] sm:$0xff]
      %v6570 = vld [vmem:[#allocation4 + $0x98] sm:$0xff]
      %v6571 = vld [vmem:[#allocation4 + $0xa0] sm:$0xff]
      %v6572 = vld [vmem:[#allocation4 + $0xa8] sm:$0xff]
      %v6573 = vld [vmem:[#allocation4 + $0xb0] sm:$0xff]
      %v6574 = vld [vmem:[#allocation4 + $0xb8] sm:$0xff]
      %v6575 = vld [vmem:[#allocation4 + $0xc0] sm:$0xff]
      %v6576 = vld [vmem:[#allocation4 + $0xc8] sm:$0xff]
      %v6577 = vld [vmem:[#allocation4 + $0xd0] sm:$0xff]
      %v6578 = vld [vmem:[#allocation4 + $0xd8] sm:$0xff]
      %v6579 = vld [vmem:[#allocation4 + $0xe0] sm:$0xff]
      %v6580 = vld [vmem:[#allocation4 + $0xe8] sm:$0xff]
      %v6581 = vld [vmem:[#allocation4 + $0xf0] sm:$0xff]
      %v6582 = vld [vmem:[#allocation4 + $0xf8] sm:$0xff]
      %v6583 = vld [vmem:[#allocation4 + $0x100] sm:$0xff]
      %v6584 = vld [vmem:[#allocation4 + $0x108] sm:$0xff]
      %v6585 = vld [vmem:[#allocation4 + $0x110] sm:$0xff]
      %v6586 = vld [vmem:[#allocation4 + $0x118] sm:$0xff]
      %v6587 = vld [vmem:[#allocation3 + $0xc] sm:$0x8]
      %v6588 = vld [vmem:[#allocation3 + $0x10] sm:$0xf]
      %v6589 = vld [vmem:[#allocation3 + $0x14] sm:$0xf]
      %v6590 = vld [vmem:[#allocation3 + $0x18] sm:$0xf]
      %v6591 = vld [vmem:[#allocation3 + $0x1c] sm:$0xf]
      %v6592 = vld [vmem:[#allocation3 + $0x20] sm:$0xf]
      %v6593 = vld [vmem:[#allocation3 + $0x24] sm:$0xf]
      %v6594 = vld [vmem:[#allocation3 + $0x28] sm:$0xf]
      %v6595 = vld [vmem:[#allocation3 + $0x2c] sm:$0xf]
      %v6596 = vld [vmem:[#allocation3 + $0x30] sm:$0xf]
      %v6597 = vld [vmem:[#allocation3 + $0x34] sm:$0xf]
      %v6598 = vld [vmem:[#allocation3 + $0x38] sm:$0xf]
      %v6599 = vld [vmem:[#allocation3 + $0x3c] sm:$0xf]
      %v6600 = vld [vmem:[#allocation3 + $0x40] sm:$0xf]
      %v6601 = vld [vmem:[#allocation3 + $0x44] sm:$0xf]
      %v6602 = vld [vmem:[#allocation3 + $0x48] sm:$0xf]
      %v6603 = vld [vmem:[#allocation3 + $0x4c] sm:$0xf]
      %v6604 = vld [vmem:[#allocation3 + $0x50] sm:$0xf]
      %v6605 = vld [vmem:[#allocation3 + $0x54] sm:$0xf]
      %v6606 = vld [vmem:[#allocation3 + $0x58] sm:$0xf]
      %v6607 = vld [vmem:[#allocation3 + $0x5c] sm:$0xf]
      %v6608 = vld [vmem:[#allocation3 + $0x60] sm:$0xf]
      %v6609 = vld [vmem:[#allocation3 + $0x64] sm:$0xf]
      %v6610 = vld [vmem:[#allocation3 + $0x68] sm:$0xf]
      %v6611 = vld [vmem:[#allocation3 + $0x6c] sm:$0xf]
      %v6612 = vld [vmem:[#allocation3 + $0x70] sm:$0xf]
      %v6613 = vld [vmem:[#allocation3 + $0x74] sm:$0xf]
      %v6614 = vld [vmem:[#allocation3 + $0x78] sm:$0xf]
      %v6615 = vld [vmem:[#allocation3 + $0x7c] sm:$0xf]
      %v6616 = vld [vmem:[#allocation3 + $0x80] sm:$0xf]
      %v6617 = vld [vmem:[#allocation3 + $0x84] sm:$0xf]
      %v6618 = vld [vmem:[#allocation3 + $0x88] sm:$0xf]
      %v6619 = vld [vmem:[#allocation3 + $0x8c] sm:$0xf]
      %v6620 = vld [vmem:[#allocation3 + $0x90] sm:$0xf]
      %v6621 = vld [vmem:[#allocation3 + $0x94] sm:$0xf]
      %v6622 = vld [vmem:[#allocation3 + $0x98] sm:$0xf]
      %v6623 = vld [vmem:[#allocation3 + $0x9c] sm:$0xf]
      %s6624 = scalar_lea.vmem %s4, 12
      %v6625 = vld [vmem:[%s6624] sm:$0xf]
      %v6663 = vunpack.c.l.b16 %v6587
      %v6664 = vunpack.c.l.b16 %v6588
      %v6665 = vunpack.c.l.b16 %v6589
      %v6666 = vunpack.c.l.b16 %v6590
      %v6667 = vunpack.c.l.b16 %v6591
      %v6668 = vunpack.c.l.b16 %v6592
      %v6669 = vunpack.c.l.b16 %v6593
      %v6670 = vunpack.c.l.b16 %v6594
      %v6671 = vunpack.c.l.b16 %v6595
      %v6672 = vunpack.c.l.b16 %v6596
      %v6673 = vunpack.c.l.b16 %v6597
      %v6674 = vunpack.c.l.b16 %v6598
      %v6675 = vunpack.c.l.b16 %v6599
      %v6676 = vunpack.c.l.b16 %v6600
      %v6677 = vunpack.c.l.b16 %v6601
      %v6678 = vunpack.c.l.b16 %v6602
      %v6679 = vunpack.c.l.b16 %v6603
      %v6680 = vunpack.c.l.b16 %v6604
      %v6681 = vunpack.c.l.b16 %v6605
      %v6682 = vunpack.c.l.b16 %v6606
      %v6683 = vunpack.c.l.b16 %v6607
      %v6684 = vunpack.c.l.b16 %v6608
      %v6685 = vunpack.c.l.b16 %v6609
      %v6686 = vunpack.c.l.b16 %v6610
      %v6687 = vunpack.c.l.b16 %v6611
      %v6688 = vunpack.c.l.b16 %v6612
      %v6689 = vunpack.c.l.b16 %v6613
      %v6690 = vunpack.c.l.b16 %v6614
      %v6691 = vunpack.c.l.b16 %v6615
      %v6692 = vunpack.c.l.b16 %v6616
      %v6693 = vunpack.c.l.b16 %v6617
      %v6694 = vunpack.c.l.b16 %v6618
      %v6695 = vunpack.c.l.b16 %v6619
      %v6696 = vunpack.c.l.b16 %v6620
      %v6697 = vunpack.c.l.b16 %v6621
      %v6698 = vunpack.c.l.b16 %v6622
      %v6699 = vunpack.c.l.b16 %v6623
      %v6700 = vpack.c.b16 %v6664, %v6663
      %v6701 = vpack.c.b16 %v6666, %v6665
      %v6702 = vpack.c.b16 %v6668, %v6667
      %v6703 = vpack.c.b16 %v6670, %v6669
      %v6704 = vpack.c.b16 %v6672, %v6671
      %v6705 = vpack.c.b16 %v6674, %v6673
      %v6706 = vpack.c.b16 %v6676, %v6675
      %v6707 = vpack.c.b16 %v6678, %v6677
      %v6708 = vpack.c.b16 %v6680, %v6679
      %v6709 = vpack.c.b16 %v6682, %v6681
      %v6710 = vpack.c.b16 %v6684, %v6683
      %v6711 = vpack.c.b16 %v6686, %v6685
      %v6712 = vpack.c.b16 %v6688, %v6687
      %v6713 = vpack.c.b16 %v6690, %v6689
      %v6714 = vpack.c.b16 %v6692, %v6691
      %v6715 = vpack.c.b16 %v6694, %v6693
      %v6716 = vpack.c.b16 %v6696, %v6695
      %v6717 = vpack.c.b16 %v6698, %v6697
      %v6718 = vpack.c.b16 %v6699, %v6699
      %v6720 = vshrl.u32 %v6700, 16
      %v6722 = vrot.slane %v6720, 3
      %v6723 = vshll.u32 %v6700, 16
      %v6725 = vrot.slane %v6723, 4
      %v6726 = vor.u32 %v6722, %v6725
      %v6728 = vshrl.u32 %v6701, 16
      %v6730 = vrot.slane %v6728, 3
      %v6731 = vshll.u32 %v6701, 16
      %v6733 = vrot.slane %v6731, 4
      %v6734 = vor.u32 %v6730, %v6733
      %v6735 = vsel %vm6152, %v6726, %v6734
      %v6737 = vshrl.u32 %v6702, 16
      %v6739 = vrot.slane %v6737, 3
      %v6740 = vshll.u32 %v6702, 16
      %v6742 = vrot.slane %v6740, 4
      %v6743 = vor.u32 %v6739, %v6742
      %v6744 = vsel %vm6152, %v6734, %v6743
      %v6746 = vshrl.u32 %v6703, 16
      %v6748 = vrot.slane %v6746, 3
      %v6749 = vshll.u32 %v6703, 16
      %v6751 = vrot.slane %v6749, 4
      %v6752 = vor.u32 %v6748, %v6751
      %v6753 = vsel %vm6152, %v6743, %v6752
      %v6755 = vshrl.u32 %v6704, 16
      %v6757 = vrot.slane %v6755, 3
      %v6758 = vshll.u32 %v6704, 16
      %v6760 = vrot.slane %v6758, 4
      %v6761 = vor.u32 %v6757, %v6760
      %v6762 = vsel %vm6152, %v6752, %v6761
      %v6764 = vshrl.u32 %v6705, 16
      %v6766 = vrot.slane %v6764, 3
      %v6767 = vshll.u32 %v6705, 16
      %v6769 = vrot.slane %v6767, 4
      %v6770 = vor.u32 %v6766, %v6769
      %v6771 = vsel %vm6152, %v6761, %v6770
      %v6773 = vshrl.u32 %v6706, 16
      %v6775 = vrot.slane %v6773, 3
      %v6776 = vshll.u32 %v6706, 16
      %v6778 = vrot.slane %v6776, 4
      %v6779 = vor.u32 %v6775, %v6778
      %v6780 = vsel %vm6152, %v6770, %v6779
      %v6782 = vshrl.u32 %v6707, 16
      %v6784 = vrot.slane %v6782, 3
      %v6785 = vshll.u32 %v6707, 16
      %v6787 = vrot.slane %v6785, 4
      %v6788 = vor.u32 %v6784, %v6787
      %v6789 = vsel %vm6152, %v6779, %v6788
      %v6791 = vshrl.u32 %v6708, 16
      %v6793 = vrot.slane %v6791, 3
      %v6794 = vshll.u32 %v6708, 16
      %v6796 = vrot.slane %v6794, 4
      %v6797 = vor.u32 %v6793, %v6796
      %v6798 = vsel %vm6152, %v6788, %v6797
      %v6800 = vshrl.u32 %v6709, 16
      %v6802 = vrot.slane %v6800, 3
      %v6803 = vshll.u32 %v6709, 16
      %v6805 = vrot.slane %v6803, 4
      %v6806 = vor.u32 %v6802, %v6805
      %v6807 = vsel %vm6152, %v6797, %v6806
      %v6809 = vshrl.u32 %v6710, 16
      %v6811 = vrot.slane %v6809, 3
      %v6812 = vshll.u32 %v6710, 16
      %v6814 = vrot.slane %v6812, 4
      %v6815 = vor.u32 %v6811, %v6814
      %v6816 = vsel %vm6152, %v6806, %v6815
      %v6818 = vshrl.u32 %v6711, 16
      %v6820 = vrot.slane %v6818, 3
      %v6821 = vshll.u32 %v6711, 16
      %v6823 = vrot.slane %v6821, 4
      %v6824 = vor.u32 %v6820, %v6823
      %v6825 = vsel %vm6152, %v6815, %v6824
      %v6827 = vshrl.u32 %v6712, 16
      %v6829 = vrot.slane %v6827, 3
      %v6830 = vshll.u32 %v6712, 16
      %v6832 = vrot.slane %v6830, 4
      %v6833 = vor.u32 %v6829, %v6832
      %v6834 = vsel %vm6152, %v6824, %v6833
      %v6836 = vshrl.u32 %v6713, 16
      %v6838 = vrot.slane %v6836, 3
      %v6839 = vshll.u32 %v6713, 16
      %v6841 = vrot.slane %v6839, 4
      %v6842 = vor.u32 %v6838, %v6841
      %v6843 = vsel %vm6152, %v6833, %v6842
      %v6845 = vshrl.u32 %v6714, 16
      %v6847 = vrot.slane %v6845, 3
      %v6848 = vshll.u32 %v6714, 16
      %v6850 = vrot.slane %v6848, 4
      %v6851 = vor.u32 %v6847, %v6850
      %v6852 = vsel %vm6152, %v6842, %v6851
      %v6854 = vshrl.u32 %v6715, 16
      %v6856 = vrot.slane %v6854, 3
      %v6857 = vshll.u32 %v6715, 16
      %v6859 = vrot.slane %v6857, 4
      %v6860 = vor.u32 %v6856, %v6859
      %v6861 = vsel %vm6152, %v6851, %v6860
      %v6863 = vshrl.u32 %v6716, 16
      %v6865 = vrot.slane %v6863, 3
      %v6866 = vshll.u32 %v6716, 16
      %v6868 = vrot.slane %v6866, 4
      %v6869 = vor.u32 %v6865, %v6868
      %v6870 = vsel %vm6152, %v6860, %v6869
      %v6872 = vshrl.u32 %v6717, 16
      %v6874 = vrot.slane %v6872, 3
      %v6875 = vshll.u32 %v6717, 16
      %v6877 = vrot.slane %v6875, 4
      %v6878 = vor.u32 %v6874, %v6877
      %v6879 = vsel %vm6152, %v6869, %v6878
      %v6881 = vshrl.u32 %v6718, 16
      %v6883 = vrot.slane %v6881, 3
      %v6884 = vshll.u32 %v6718, 16
      %v6886 = vrot.slane %v6884, 4
      %v6887 = vor.u32 %v6883, %v6886
      %v6888 = vsel %vm6152, %v6878, %v6887
      %v6890 = vsel %vm692, %v6735, 0
      %v6893 = vsel %vm692, %v6744, 0
      %v6896 = vsel %vm692, %v6753, 0
      %v6899 = vsel %vm692, %v6762, 0
      %v6902 = vsel %vm692, %v6771, 0
      %v6905 = vsel %vm692, %v6780, 0
      %v6908 = vsel %vm692, %v6789, 0
      %v6911 = vsel %vm692, %v6798, 0
      %v6914 = vsel %vm692, %v6807, 0
      %v6917 = vsel %vm692, %v6816, 0
      %v6920 = vsel %vm692, %v6825, 0
      %v6923 = vsel %vm692, %v6834, 0
      %v6926 = vsel %vm692, %v6843, 0
      %v6929 = vsel %vm692, %v6852, 0
      %v6932 = vsel %vm692, %v6861, 0
      %v6935 = vsel %vm692, %v6870, 0
      %v6938 = vsel %vm692, %v6879, 0
      %v6941 = vsel %vm692, %v6888, 0
      %v6944 = vsel %vm5412, %v6625, 0
      %6946 = vmatpush.bf16.msra.mxu0 0
      %6947 = vmatpush.bf16.msra.mxu0 0
      %6948 = vmatpush.bf16.msra.mxu0 0
      %6949 = vmatpush.bf16.msra.mxu0 0
      %6950 = vmatpush.bf16.msra.mxu0 0
      %6951 = vmatpush.bf16.msra.mxu0 0
      %6952 = vmatpush.bf16.msra.mxu0 0
      %6953 = vmatpush.bf16.msra.mxu0 %v6944
      %6954 = vmatmul.bf16.gmra.mxu0 %v6890
      %v6955 = vpop.f32.mrf.mxu0
      %v6956 = vadd.f32 0.0, %v6955
      %v6957 = vpop.f32.mrf.mxu0
      %v6958 = vadd.f32 0.0, %v6957
      %6959 = vmatmul.bf16.gmra.mxu0 %v6893
      %v6960 = vpop.f32.mrf.mxu0
      %v6961 = vadd.f32 0.0, %v6960
      %v6962 = vpop.f32.mrf.mxu0
      %v6963 = vadd.f32 0.0, %v6962
      %6964 = vmatmul.bf16.gmra.mxu0 %v6896
      %v6965 = vpop.f32.mrf.mxu0
      %v6966 = vadd.f32 0.0, %v6965
      %v6967 = vpop.f32.mrf.mxu0
      %v6968 = vadd.f32 0.0, %v6967
      %6969 = vmatmul.bf16.gmra.mxu0 %v6899
      %v6970 = vpop.f32.mrf.mxu0
      %v6971 = vadd.f32 0.0, %v6970
      %v6972 = vpop.f32.mrf.mxu0
      %v6973 = vadd.f32 0.0, %v6972
      %6974 = vmatmul.bf16.gmra.mxu0 %v6902
      %v6975 = vpop.f32.mrf.mxu0
      %v6976 = vadd.f32 0.0, %v6975
      %v6977 = vpop.f32.mrf.mxu0
      %v6978 = vadd.f32 0.0, %v6977
      %6979 = vmatmul.bf16.gmra.mxu0 %v6905
      %v6980 = vpop.f32.mrf.mxu0
      %v6981 = vadd.f32 0.0, %v6980
      %v6982 = vpop.f32.mrf.mxu0
      %v6983 = vadd.f32 0.0, %v6982
      %6984 = vmatmul.bf16.gmra.mxu0 %v6908
      %v6985 = vpop.f32.mrf.mxu0
      %v6986 = vadd.f32 0.0, %v6985
      %v6987 = vpop.f32.mrf.mxu0
      %v6988 = vadd.f32 0.0, %v6987
      %6989 = vmatmul.bf16.gmra.mxu0 %v6911
      %v6990 = vpop.f32.mrf.mxu0
      %v6991 = vadd.f32 0.0, %v6990
      %v6992 = vpop.f32.mrf.mxu0
      %v6993 = vadd.f32 0.0, %v6992
      %6994 = vmatmul.bf16.gmra.mxu0 %v6914
      %v6995 = vpop.f32.mrf.mxu0
      %v6996 = vadd.f32 0.0, %v6995
      %v6997 = vpop.f32.mrf.mxu0
      %v6998 = vadd.f32 0.0, %v6997
      %6999 = vmatmul.bf16.gmra.mxu0 %v6917
      %v7000 = vpop.f32.mrf.mxu0
      %v7001 = vadd.f32 0.0, %v7000
      %v7002 = vpop.f32.mrf.mxu0
      %v7003 = vadd.f32 0.0, %v7002
      %7004 = vmatmul.bf16.gmra.mxu0 %v6920
      %v7005 = vpop.f32.mrf.mxu0
      %v7006 = vadd.f32 0.0, %v7005
      %v7007 = vpop.f32.mrf.mxu0
      %v7008 = vadd.f32 0.0, %v7007
      %7009 = vmatmul.bf16.gmra.mxu0 %v6923
      %v7010 = vpop.f32.mrf.mxu0
      %v7011 = vadd.f32 0.0, %v7010
      %v7012 = vpop.f32.mrf.mxu0
      %v7013 = vadd.f32 0.0, %v7012
      %7014 = vmatmul.bf16.gmra.mxu0 %v6926
      %v7015 = vpop.f32.mrf.mxu0
      %v7016 = vadd.f32 0.0, %v7015
      %v7017 = vpop.f32.mrf.mxu0
      %v7018 = vadd.f32 0.0, %v7017
      %7019 = vmatmul.bf16.gmra.mxu0 %v6929
      %v7020 = vpop.f32.mrf.mxu0
      %v7021 = vadd.f32 0.0, %v7020
      %v7022 = vpop.f32.mrf.mxu0
      %v7023 = vadd.f32 0.0, %v7022
      %7024 = vmatmul.bf16.gmra.mxu0 %v6932
      %v7025 = vpop.f32.mrf.mxu0
      %v7026 = vadd.f32 0.0, %v7025
      %v7027 = vpop.f32.mrf.mxu0
      %v7028 = vadd.f32 0.0, %v7027
      %7029 = vmatmul.bf16.gmra.mxu0 %v6935
      %v7030 = vpop.f32.mrf.mxu0
      %v7031 = vadd.f32 0.0, %v7030
      %v7032 = vpop.f32.mrf.mxu0
      %v7033 = vadd.f32 0.0, %v7032
      %7034 = vmatmul.bf16.gmra.mxu0 %v6938
      %v7035 = vpop.f32.mrf.mxu0
      %v7036 = vadd.f32 0.0, %v7035
      %v7037 = vpop.f32.mrf.mxu0
      %v7038 = vadd.f32 0.0, %v7037
      %7039 = vmatmul.bf16.gmra.mxu0 %v6941
      %v7040 = vpop.f32.mrf.mxu0
      %v7041 = vadd.f32 0.0, %v7040
      %v7042 = vpop.f32.mrf.mxu0
      %v7043 = vadd.f32 0.0, %v7042
      %7044 = vdwg.mxu0
      %v7045 = vadd.f32 %v6551, %v6956
      %v7046 = vadd.f32 %v6552, %v6958
      %v7047 = vadd.f32 %v6553, %v6961
      %v7048 = vadd.f32 %v6554, %v6963
      %v7049 = vadd.f32 %v6555, %v6966
      %v7050 = vadd.f32 %v6556, %v6968
      %v7051 = vadd.f32 %v6557, %v6971
      %v7052 = vadd.f32 %v6558, %v6973
      %v7053 = vadd.f32 %v6559, %v6976
      %v7054 = vadd.f32 %v6560, %v6978
      %v7055 = vadd.f32 %v6561, %v6981
      %v7056 = vadd.f32 %v6562, %v6983
      %v7057 = vadd.f32 %v6563, %v6986
      %v7058 = vadd.f32 %v6564, %v6988
      %v7059 = vadd.f32 %v6565, %v6991
      %v7060 = vadd.f32 %v6566, %v6993
      %v7061 = vadd.f32 %v6567, %v6996
      %v7062 = vadd.f32 %v6568, %v6998
      %v7063 = vadd.f32 %v6569, %v7001
      %v7064 = vadd.f32 %v6570, %v7003
      %v7065 = vadd.f32 %v6571, %v7006
      %v7066 = vadd.f32 %v6572, %v7008
      %v7067 = vadd.f32 %v6573, %v7011
      %v7068 = vadd.f32 %v6574, %v7013
      %v7069 = vadd.f32 %v6575, %v7016
      %v7070 = vadd.f32 %v6576, %v7018
      %v7071 = vadd.f32 %v6577, %v7021
      %v7072 = vadd.f32 %v6578, %v7023
      %v7073 = vadd.f32 %v6579, %v7026
      %v7074 = vadd.f32 %v6580, %v7028
      %v7075 = vadd.f32 %v6581, %v7031
      %v7076 = vadd.f32 %v6582, %v7033
      %v7077 = vadd.f32 %v6583, %v7036
      %v7078 = vadd.f32 %v6584, %v7038
      %v7079 = vadd.f32 %v6585, %v7041
      %v7080 = vadd.f32 %v6586, %v7043
      %7081 = vst.msk [vmem:[#allocation4] sm:$0xff] %vm692, %v7045
      %7082 = vst.msk [vmem:[#allocation4 + $0x8] sm:$0xff] %vm692, %v7046
      %7083 = vst.msk [vmem:[#allocation4 + $0x10] sm:$0xff] %vm692, %v7047
      %7084 = vst.msk [vmem:[#allocation4 + $0x18] sm:$0xff] %vm692, %v7048
      %7085 = vst.msk [vmem:[#allocation4 + $0x20] sm:$0xff] %vm692, %v7049
      %7086 = vst.msk [vmem:[#allocation4 + $0x28] sm:$0xff] %vm692, %v7050
      %7087 = vst.msk [vmem:[#allocation4 + $0x30] sm:$0xff] %vm692, %v7051
      %7088 = vst.msk [vmem:[#allocation4 + $0x38] sm:$0xff] %vm692, %v7052
      %7089 = vst.msk [vmem:[#allocation4 + $0x40] sm:$0xff] %vm692, %v7053
      %7090 = vst.msk [vmem:[#allocation4 + $0x48] sm:$0xff] %vm692, %v7054
      %7091 = vst.msk [vmem:[#allocation4 + $0x50] sm:$0xff] %vm692, %v7055
      %7092 = vst.msk [vmem:[#allocation4 + $0x58] sm:$0xff] %vm692, %v7056
      %7093 = vst.msk [vmem:[#allocation4 + $0x60] sm:$0xff] %vm692, %v7057
      %7094 = vst.msk [vmem:[#allocation4 + $0x68] sm:$0xff] %vm692, %v7058
      %7095 = vst.msk [vmem:[#allocation4 + $0x70] sm:$0xff] %vm692, %v7059
      %7096 = vst.msk [vmem:[#allocation4 + $0x78] sm:$0xff] %vm692, %v7060
      %7097 = vst.msk [vmem:[#allocation4 + $0x80] sm:$0xff] %vm692, %v7061
      %7098 = vst.msk [vmem:[#allocation4 + $0x88] sm:$0xff] %vm692, %v7062
      %7099 = vst.msk [vmem:[#allocation4 + $0x90] sm:$0xff] %vm692, %v7063
      %7100 = vst.msk [vmem:[#allocation4 + $0x98] sm:$0xff] %vm692, %v7064
      %7101 = vst.msk [vmem:[#allocation4 + $0xa0] sm:$0xff] %vm692, %v7065
      %7102 = vst.msk [vmem:[#allocation4 + $0xa8] sm:$0xff] %vm692, %v7066
      %7103 = vst.msk [vmem:[#allocation4 + $0xb0] sm:$0xff] %vm692, %v7067
      %7104 = vst.msk [vmem:[#allocation4 + $0xb8] sm:$0xff] %vm692, %v7068
      %7105 = vst.msk [vmem:[#allocation4 + $0xc0] sm:$0xff] %vm692, %v7069
      %7106 = vst.msk [vmem:[#allocation4 + $0xc8] sm:$0xff] %vm692, %v7070
      %7107 = vst.msk [vmem:[#allocation4 + $0xd0] sm:$0xff] %vm692, %v7071
      %7108 = vst.msk [vmem:[#allocation4 + $0xd8] sm:$0xff] %vm692, %v7072
      %7109 = vst.msk [vmem:[#allocation4 + $0xe0] sm:$0xff] %vm692, %v7073
      %7110 = vst.msk [vmem:[#allocation4 + $0xe8] sm:$0xff] %vm692, %v7074
      %7111 = vst.msk [vmem:[#allocation4 + $0xf0] sm:$0xff] %vm692, %v7075
      %7112 = vst.msk [vmem:[#allocation4 + $0xf8] sm:$0xff] %vm692, %v7076
      %7113 = vst.msk [vmem:[#allocation4 + $0x100] sm:$0xff] %vm692, %v7077
      %7114 = vst.msk [vmem:[#allocation4 + $0x108] sm:$0xff] %vm692, %v7078
      %7115 = vst.msk [vmem:[#allocation4 + $0x110] sm:$0xff] %vm692, %v7079
      %7116 = vst.msk [vmem:[#allocation4 + $0x118] sm:$0xff] %vm692, %v7080
      %v7117 = vld [vmem:[#allocation4] sm:$0xff]
      %v7118 = vld [vmem:[#allocation4 + $0x8] sm:$0xff]
      %v7119 = vld [vmem:[#allocation4 + $0x10] sm:$0xff]
      %v7120 = vld [vmem:[#allocation4 + $0x18] sm:$0xff]
      %v7121 = vld [vmem:[#allocation4 + $0x20] sm:$0xff]
      %v7122 = vld [vmem:[#allocation4 + $0x28] sm:$0xff]
      %v7123 = vld [vmem:[#allocation4 + $0x30] sm:$0xff]
      %v7124 = vld [vmem:[#allocation4 + $0x38] sm:$0xff]
      %v7125 = vld [vmem:[#allocation4 + $0x40] sm:$0xff]
      %v7126 = vld [vmem:[#allocation4 + $0x48] sm:$0xff]
      %v7127 = vld [vmem:[#allocation4 + $0x50] sm:$0xff]
      %v7128 = vld [vmem:[#allocation4 + $0x58] sm:$0xff]
      %v7129 = vld [vmem:[#allocation4 + $0x60] sm:$0xff]
      %v7130 = vld [vmem:[#allocation4 + $0x68] sm:$0xff]
      %v7131 = vld [vmem:[#allocation4 + $0x70] sm:$0xff]
      %v7132 = vld [vmem:[#allocation4 + $0x78] sm:$0xff]
      %v7133 = vld [vmem:[#allocation4 + $0x80] sm:$0xff]
      %v7134 = vld [vmem:[#allocation4 + $0x88] sm:$0xff]
      %v7135 = vld [vmem:[#allocation4 + $0x90] sm:$0xff]
      %v7136 = vld [vmem:[#allocation4 + $0x98] sm:$0xff]
      %v7137 = vld [vmem:[#allocation4 + $0xa0] sm:$0xff]
      %v7138 = vld [vmem:[#allocation4 + $0xa8] sm:$0xff]
      %v7139 = vld [vmem:[#allocation4 + $0xb0] sm:$0xff]
      %v7140 = vld [vmem:[#allocation4 + $0xb8] sm:$0xff]
      %v7141 = vld [vmem:[#allocation4 + $0xc0] sm:$0xff]
      %v7142 = vld [vmem:[#allocation4 + $0xc8] sm:$0xff]
      %v7143 = vld [vmem:[#allocation4 + $0xd0] sm:$0xff]
      %v7144 = vld [vmem:[#allocation4 + $0xd8] sm:$0xff]
      %v7145 = vld [vmem:[#allocation4 + $0xe0] sm:$0xff]
      %v7146 = vld [vmem:[#allocation4 + $0xe8] sm:$0xff]
      %v7147 = vld [vmem:[#allocation4 + $0xf0] sm:$0xff]
      %v7148 = vld [vmem:[#allocation4 + $0xf8] sm:$0xff]
      %v7149 = vld [vmem:[#allocation4 + $0x100] sm:$0xff]
      %v7150 = vld [vmem:[#allocation4 + $0x108] sm:$0xff]
      %v7151 = vld [vmem:[#allocation4 + $0x110] sm:$0xff]
      %v7152 = vld [vmem:[#allocation4 + $0x118] sm:$0xff]
      %v7153 = vld [vmem:[#allocation3 + $0x10] sm:$0xf]
      %v7154 = vld [vmem:[#allocation3 + $0x14] sm:$0xf]
      %v7155 = vld [vmem:[#allocation3 + $0x18] sm:$0xf]
      %v7156 = vld [vmem:[#allocation3 + $0x1c] sm:$0xf]
      %v7157 = vld [vmem:[#allocation3 + $0x20] sm:$0xf]
      %v7158 = vld [vmem:[#allocation3 + $0x24] sm:$0xf]
      %v7159 = vld [vmem:[#allocation3 + $0x28] sm:$0xf]
      %v7160 = vld [vmem:[#allocation3 + $0x2c] sm:$0xf]
      %v7161 = vld [vmem:[#allocation3 + $0x30] sm:$0xf]
      %v7162 = vld [vmem:[#allocation3 + $0x34] sm:$0xf]
      %v7163 = vld [vmem:[#allocation3 + $0x38] sm:$0xf]
      %v7164 = vld [vmem:[#allocation3 + $0x3c] sm:$0xf]
      %v7165 = vld [vmem:[#allocation3 + $0x40] sm:$0xf]
      %v7166 = vld [vmem:[#allocation3 + $0x44] sm:$0xf]
      %v7167 = vld [vmem:[#allocation3 + $0x48] sm:$0xf]
      %v7168 = vld [vmem:[#allocation3 + $0x4c] sm:$0xf]
      %v7169 = vld [vmem:[#allocation3 + $0x50] sm:$0xf]
      %v7170 = vld [vmem:[#allocation3 + $0x54] sm:$0xf]
      %v7171 = vld [vmem:[#allocation3 + $0x58] sm:$0xf]
      %v7172 = vld [vmem:[#allocation3 + $0x5c] sm:$0xf]
      %v7173 = vld [vmem:[#allocation3 + $0x60] sm:$0xf]
      %v7174 = vld [vmem:[#allocation3 + $0x64] sm:$0xf]
      %v7175 = vld [vmem:[#allocation3 + $0x68] sm:$0xf]
      %v7176 = vld [vmem:[#allocation3 + $0x6c] sm:$0xf]
      %v7177 = vld [vmem:[#allocation3 + $0x70] sm:$0xf]
      %v7178 = vld [vmem:[#allocation3 + $0x74] sm:$0xf]
      %v7179 = vld [vmem:[#allocation3 + $0x78] sm:$0xf]
      %v7180 = vld [vmem:[#allocation3 + $0x7c] sm:$0xf]
      %v7181 = vld [vmem:[#allocation3 + $0x80] sm:$0xf]
      %v7182 = vld [vmem:[#allocation3 + $0x84] sm:$0xf]
      %v7183 = vld [vmem:[#allocation3 + $0x88] sm:$0xf]
      %v7184 = vld [vmem:[#allocation3 + $0x8c] sm:$0xf]
      %v7185 = vld [vmem:[#allocation3 + $0x90] sm:$0xf]
      %v7186 = vld [vmem:[#allocation3 + $0x94] sm:$0xf]
      %v7187 = vld [vmem:[#allocation3 + $0x98] sm:$0xf]
      %v7188 = vld [vmem:[#allocation3 + $0x9c] sm:$0xf]
      %s7189 = scalar_lea.vmem %s4, 16
      %v7190 = vld [vmem:[%s7189] sm:$0xf]
      %v7227 = vunpack.c.l.b16 %v7153
      %v7228 = vunpack.c.l.b16 %v7154
      %v7229 = vunpack.c.l.b16 %v7155
      %v7230 = vunpack.c.l.b16 %v7156
      %v7231 = vunpack.c.l.b16 %v7157
      %v7232 = vunpack.c.l.b16 %v7158
      %v7233 = vunpack.c.l.b16 %v7159
      %v7234 = vunpack.c.l.b16 %v7160
      %v7235 = vunpack.c.l.b16 %v7161
      %v7236 = vunpack.c.l.b16 %v7162
      %v7237 = vunpack.c.l.b16 %v7163
      %v7238 = vunpack.c.l.b16 %v7164
      %v7239 = vunpack.c.l.b16 %v7165
      %v7240 = vunpack.c.l.b16 %v7166
      %v7241 = vunpack.c.l.b16 %v7167
      %v7242 = vunpack.c.l.b16 %v7168
      %v7243 = vunpack.c.l.b16 %v7169
      %v7244 = vunpack.c.l.b16 %v7170
      %v7245 = vunpack.c.l.b16 %v7171
      %v7246 = vunpack.c.l.b16 %v7172
      %v7247 = vunpack.c.l.b16 %v7173
      %v7248 = vunpack.c.l.b16 %v7174
      %v7249 = vunpack.c.l.b16 %v7175
      %v7250 = vunpack.c.l.b16 %v7176
      %v7251 = vunpack.c.l.b16 %v7177
      %v7252 = vunpack.c.l.b16 %v7178
      %v7253 = vunpack.c.l.b16 %v7179
      %v7254 = vunpack.c.l.b16 %v7180
      %v7255 = vunpack.c.l.b16 %v7181
      %v7256 = vunpack.c.l.b16 %v7182
      %v7257 = vunpack.c.l.b16 %v7183
      %v7258 = vunpack.c.l.b16 %v7184
      %v7259 = vunpack.c.l.b16 %v7185
      %v7260 = vunpack.c.l.b16 %v7186
      %v7261 = vunpack.c.l.b16 %v7187
      %v7262 = vunpack.c.l.b16 %v7188
      %v7263 = vpack.c.b16 %v7228, %v7227
      %v7264 = vpack.c.b16 %v7230, %v7229
      %v7265 = vpack.c.b16 %v7232, %v7231
      %v7266 = vpack.c.b16 %v7234, %v7233
      %v7267 = vpack.c.b16 %v7236, %v7235
      %v7268 = vpack.c.b16 %v7238, %v7237
      %v7269 = vpack.c.b16 %v7240, %v7239
      %v7270 = vpack.c.b16 %v7242, %v7241
      %v7271 = vpack.c.b16 %v7244, %v7243
      %v7272 = vpack.c.b16 %v7246, %v7245
      %v7273 = vpack.c.b16 %v7248, %v7247
      %v7274 = vpack.c.b16 %v7250, %v7249
      %v7275 = vpack.c.b16 %v7252, %v7251
      %v7276 = vpack.c.b16 %v7254, %v7253
      %v7277 = vpack.c.b16 %v7256, %v7255
      %v7278 = vpack.c.b16 %v7258, %v7257
      %v7279 = vpack.c.b16 %v7260, %v7259
      %v7280 = vpack.c.b16 %v7262, %v7261
      %v7282 = vsel %vm692, %v7263, 0
      %v7285 = vsel %vm692, %v7264, 0
      %v7288 = vsel %vm692, %v7265, 0
      %v7291 = vsel %vm692, %v7266, 0
      %v7294 = vsel %vm692, %v7267, 0
      %v7297 = vsel %vm692, %v7268, 0
      %v7300 = vsel %vm692, %v7269, 0
      %v7303 = vsel %vm692, %v7270, 0
      %v7306 = vsel %vm692, %v7271, 0
      %v7309 = vsel %vm692, %v7272, 0
      %v7312 = vsel %vm692, %v7273, 0
      %v7315 = vsel %vm692, %v7274, 0
      %v7318 = vsel %vm692, %v7275, 0
      %v7321 = vsel %vm692, %v7276, 0
      %v7324 = vsel %vm692, %v7277, 0
      %v7327 = vsel %vm692, %v7278, 0
      %v7330 = vsel %vm692, %v7279, 0
      %v7333 = vsel %vm692, %v7280, 0
      %v7336 = vsel %vm5412, %v7190, 0
      %7338 = vmatpush.bf16.msra.mxu0 0
      %7339 = vmatpush.bf16.msra.mxu0 0
      %7340 = vmatpush.bf16.msra.mxu0 0
      %7341 = vmatpush.bf16.msra.mxu0 0
      %7342 = vmatpush.bf16.msra.mxu0 0
      %7343 = vmatpush.bf16.msra.mxu0 0
      %7344 = vmatpush.bf16.msra.mxu0 0
      %7345 = vmatpush.bf16.msra.mxu0 %v7336
      %7346 = vmatmul.bf16.gmra.mxu0 %v7282
      %v7347 = vpop.f32.mrf.mxu0
      %v7348 = vadd.f32 0.0, %v7347
      %v7349 = vpop.f32.mrf.mxu0
      %v7350 = vadd.f32 0.0, %v7349
      %7351 = vmatmul.bf16.gmra.mxu0 %v7285
      %v7352 = vpop.f32.mrf.mxu0
      %v7353 = vadd.f32 0.0, %v7352
      %v7354 = vpop.f32.mrf.mxu0
      %v7355 = vadd.f32 0.0, %v7354
      %7356 = vmatmul.bf16.gmra.mxu0 %v7288
      %v7357 = vpop.f32.mrf.mxu0
      %v7358 = vadd.f32 0.0, %v7357
      %v7359 = vpop.f32.mrf.mxu0
      %v7360 = vadd.f32 0.0, %v7359
      %7361 = vmatmul.bf16.gmra.mxu0 %v7291
      %v7362 = vpop.f32.mrf.mxu0
      %v7363 = vadd.f32 0.0, %v7362
      %v7364 = vpop.f32.mrf.mxu0
      %v7365 = vadd.f32 0.0, %v7364
      %7366 = vmatmul.bf16.gmra.mxu0 %v7294
      %v7367 = vpop.f32.mrf.mxu0
      %v7368 = vadd.f32 0.0, %v7367
      %v7369 = vpop.f32.mrf.mxu0
      %v7370 = vadd.f32 0.0, %v7369
      %7371 = vmatmul.bf16.gmra.mxu0 %v7297
      %v7372 = vpop.f32.mrf.mxu0
      %v7373 = vadd.f32 0.0, %v7372
      %v7374 = vpop.f32.mrf.mxu0
      %v7375 = vadd.f32 0.0, %v7374
      %7376 = vmatmul.bf16.gmra.mxu0 %v7300
      %v7377 = vpop.f32.mrf.mxu0
      %v7378 = vadd.f32 0.0, %v7377
      %v7379 = vpop.f32.mrf.mxu0
      %v7380 = vadd.f32 0.0, %v7379
      %7381 = vmatmul.bf16.gmra.mxu0 %v7303
      %v7382 = vpop.f32.mrf.mxu0
      %v7383 = vadd.f32 0.0, %v7382
      %v7384 = vpop.f32.mrf.mxu0
      %v7385 = vadd.f32 0.0, %v7384
      %7386 = vmatmul.bf16.gmra.mxu0 %v7306
      %v7387 = vpop.f32.mrf.mxu0
      %v7388 = vadd.f32 0.0, %v7387
      %v7389 = vpop.f32.mrf.mxu0
      %v7390 = vadd.f32 0.0, %v7389
      %7391 = vmatmul.bf16.gmra.mxu0 %v7309
      %v7392 = vpop.f32.mrf.mxu0
      %v7393 = vadd.f32 0.0, %v7392
      %v7394 = vpop.f32.mrf.mxu0
      %v7395 = vadd.f32 0.0, %v7394
      %7396 = vmatmul.bf16.gmra.mxu0 %v7312
      %v7397 = vpop.f32.mrf.mxu0
      %v7398 = vadd.f32 0.0, %v7397
      %v7399 = vpop.f32.mrf.mxu0
      %v7400 = vadd.f32 0.0, %v7399
      %7401 = vmatmul.bf16.gmra.mxu0 %v7315
      %v7402 = vpop.f32.mrf.mxu0
      %v7403 = vadd.f32 0.0, %v7402
      %v7404 = vpop.f32.mrf.mxu0
      %v7405 = vadd.f32 0.0, %v7404
      %7406 = vmatmul.bf16.gmra.mxu0 %v7318
      %v7407 = vpop.f32.mrf.mxu0
      %v7408 = vadd.f32 0.0, %v7407
      %v7409 = vpop.f32.mrf.mxu0
      %v7410 = vadd.f32 0.0, %v7409
      %7411 = vmatmul.bf16.gmra.mxu0 %v7321
      %v7412 = vpop.f32.mrf.mxu0
      %v7413 = vadd.f32 0.0, %v7412
      %v7414 = vpop.f32.mrf.mxu0
      %v7415 = vadd.f32 0.0, %v7414
      %7416 = vmatmul.bf16.gmra.mxu0 %v7324
      %v7417 = vpop.f32.mrf.mxu0
      %v7418 = vadd.f32 0.0, %v7417
      %v7419 = vpop.f32.mrf.mxu0
      %v7420 = vadd.f32 0.0, %v7419
      %7421 = vmatmul.bf16.gmra.mxu0 %v7327
      %v7422 = vpop.f32.mrf.mxu0
      %v7423 = vadd.f32 0.0, %v7422
      %v7424 = vpop.f32.mrf.mxu0
      %v7425 = vadd.f32 0.0, %v7424
      %7426 = vmatmul.bf16.gmra.mxu0 %v7330
      %v7427 = vpop.f32.mrf.mxu0
      %v7428 = vadd.f32 0.0, %v7427
      %v7429 = vpop.f32.mrf.mxu0
      %v7430 = vadd.f32 0.0, %v7429
      %7431 = vmatmul.bf16.gmra.mxu0 %v7333
      %v7432 = vpop.f32.mrf.mxu0
      %v7433 = vadd.f32 0.0, %v7432
      %v7434 = vpop.f32.mrf.mxu0
      %v7435 = vadd.f32 0.0, %v7434
      %7436 = vdwg.mxu0
      %v7437 = vadd.f32 %v7117, %v7348
      %v7438 = vadd.f32 %v7118, %v7350
      %v7439 = vadd.f32 %v7119, %v7353
      %v7440 = vadd.f32 %v7120, %v7355
      %v7441 = vadd.f32 %v7121, %v7358
      %v7442 = vadd.f32 %v7122, %v7360
      %v7443 = vadd.f32 %v7123, %v7363
      %v7444 = vadd.f32 %v7124, %v7365
      %v7445 = vadd.f32 %v7125, %v7368
      %v7446 = vadd.f32 %v7126, %v7370
      %v7447 = vadd.f32 %v7127, %v7373
      %v7448 = vadd.f32 %v7128, %v7375
      %v7449 = vadd.f32 %v7129, %v7378
      %v7450 = vadd.f32 %v7130, %v7380
      %v7451 = vadd.f32 %v7131, %v7383
      %v7452 = vadd.f32 %v7132, %v7385
      %v7453 = vadd.f32 %v7133, %v7388
      %v7454 = vadd.f32 %v7134, %v7390
      %v7455 = vadd.f32 %v7135, %v7393
      %v7456 = vadd.f32 %v7136, %v7395
      %v7457 = vadd.f32 %v7137, %v7398
      %v7458 = vadd.f32 %v7138, %v7400
      %v7459 = vadd.f32 %v7139, %v7403
      %v7460 = vadd.f32 %v7140, %v7405
      %v7461 = vadd.f32 %v7141, %v7408
      %v7462 = vadd.f32 %v7142, %v7410
      %v7463 = vadd.f32 %v7143, %v7413
      %v7464 = vadd.f32 %v7144, %v7415
      %v7465 = vadd.f32 %v7145, %v7418
      %v7466 = vadd.f32 %v7146, %v7420
      %v7467 = vadd.f32 %v7147, %v7423
      %v7468 = vadd.f32 %v7148, %v7425
      %v7469 = vadd.f32 %v7149, %v7428
      %v7470 = vadd.f32 %v7150, %v7430
      %v7471 = vadd.f32 %v7151, %v7433
      %v7472 = vadd.f32 %v7152, %v7435
      %7473 = vst.msk [vmem:[#allocation4] sm:$0xff] %vm692, %v7437
      %7474 = vst.msk [vmem:[#allocation4 + $0x8] sm:$0xff] %vm692, %v7438
      %7475 = vst.msk [vmem:[#allocation4 + $0x10] sm:$0xff] %vm692, %v7439
      %7476 = vst.msk [vmem:[#allocation4 + $0x18] sm:$0xff] %vm692, %v7440
      %7477 = vst.msk [vmem:[#allocation4 + $0x20] sm:$0xff] %vm692, %v7441
      %7478 = vst.msk [vmem:[#allocation4 + $0x28] sm:$0xff] %vm692, %v7442
      %7479 = vst.msk [vmem:[#allocation4 + $0x30] sm:$0xff] %vm692, %v7443
      %7480 = vst.msk [vmem:[#allocation4 + $0x38] sm:$0xff] %vm692, %v7444
      %7481 = vst.msk [vmem:[#allocation4 + $0x40] sm:$0xff] %vm692, %v7445
      %7482 = vst.msk [vmem:[#allocation4 + $0x48] sm:$0xff] %vm692, %v7446
      %7483 = vst.msk [vmem:[#allocation4 + $0x50] sm:$0xff] %vm692, %v7447
      %7484 = vst.msk [vmem:[#allocation4 + $0x58] sm:$0xff] %vm692, %v7448
      %7485 = vst.msk [vmem:[#allocation4 + $0x60] sm:$0xff] %vm692, %v7449
      %7486 = vst.msk [vmem:[#allocation4 + $0x68] sm:$0xff] %vm692, %v7450
      %7487 = vst.msk [vmem:[#allocation4 + $0x70] sm:$0xff] %vm692, %v7451
      %7488 = vst.msk [vmem:[#allocation4 + $0x78] sm:$0xff] %vm692, %v7452
      %7489 = vst.msk [vmem:[#allocation4 + $0x80] sm:$0xff] %vm692, %v7453
      %7490 = vst.msk [vmem:[#allocation4 + $0x88] sm:$0xff] %vm692, %v7454
      %7491 = vst.msk [vmem:[#allocation4 + $0x90] sm:$0xff] %vm692, %v7455
      %7492 = vst.msk [vmem:[#allocation4 + $0x98] sm:$0xff] %vm692, %v7456
      %7493 = vst.msk [vmem:[#allocation4 + $0xa0] sm:$0xff] %vm692, %v7457
      %7494 = vst.msk [vmem:[#allocation4 + $0xa8] sm:$0xff] %vm692, %v7458
      %7495 = vst.msk [vmem:[#allocation4 + $0xb0] sm:$0xff] %vm692, %v7459
      %7496 = vst.msk [vmem:[#allocation4 + $0xb8] sm:$0xff] %vm692, %v7460
      %7497 = vst.msk [vmem:[#allocation4 + $0xc0] sm:$0xff] %vm692, %v7461
      %7498 = vst.msk [vmem:[#allocation4 + $0xc8] sm:$0xff] %vm692, %v7462
      %7499 = vst.msk [vmem:[#allocation4 + $0xd0] sm:$0xff] %vm692, %v7463
      %7500 = vst.msk [vmem:[#allocation4 + $0xd8] sm:$0xff] %vm692, %v7464
      %7501 = vst.msk [vmem:[#allocation4 + $0xe0] sm:$0xff] %vm692, %v7465
      %7502 = vst.msk [vmem:[#allocation4 + $0xe8] sm:$0xff] %vm692, %v7466
      %7503 = vst.msk [vmem:[#allocation4 + $0xf0] sm:$0xff] %vm692, %v7467
      %7504 = vst.msk [vmem:[#allocation4 + $0xf8] sm:$0xff] %vm692, %v7468
      %7505 = vst.msk [vmem:[#allocation4 + $0x100] sm:$0xff] %vm692, %v7469
      %7506 = vst.msk [vmem:[#allocation4 + $0x108] sm:$0xff] %vm692, %v7470
      %7507 = vst.msk [vmem:[#allocation4 + $0x110] sm:$0xff] %vm692, %v7471
      %7508 = vst.msk [vmem:[#allocation4 + $0x118] sm:$0xff] %vm692, %v7472
      %v7509 = vld [vmem:[#allocation4] sm:$0xff]
      %v7510 = vld [vmem:[#allocation4 + $0x8] sm:$0xff]
      %v7511 = vld [vmem:[#allocation4 + $0x10] sm:$0xff]
      %v7512 = vld [vmem:[#allocation4 + $0x18] sm:$0xff]
      %v7513 = vld [vmem:[#allocation4 + $0x20] sm:$0xff]
      %v7514 = vld [vmem:[#allocation4 + $0x28] sm:$0xff]
      %v7515 = vld [vmem:[#allocation4 + $0x30] sm:$0xff]
      %v7516 = vld [vmem:[#allocation4 + $0x38] sm:$0xff]
      %v7517 = vld [vmem:[#allocation4 + $0x40] sm:$0xff]
      %v7518 = vld [vmem:[#allocation4 + $0x48] sm:$0xff]
      %v7519 = vld [vmem:[#allocation4 + $0x50] sm:$0xff]
      %v7520 = vld [vmem:[#allocation4 + $0x58] sm:$0xff]
      %v7521 = vld [vmem:[#allocation4 + $0x60] sm:$0xff]
      %v7522 = vld [vmem:[#allocation4 + $0x68] sm:$0xff]
      %v7523 = vld [vmem:[#allocation4 + $0x70] sm:$0xff]
      %v7524 = vld [vmem:[#allocation4 + $0x78] sm:$0xff]
      %v7525 = vld [vmem:[#allocation4 + $0x80] sm:$0xff]
      %v7526 = vld [vmem:[#allocation4 + $0x88] sm:$0xff]
      %v7527 = vld [vmem:[#allocation4 + $0x90] sm:$0xff]
      %v7528 = vld [vmem:[#allocation4 + $0x98] sm:$0xff]
      %v7529 = vld [vmem:[#allocation4 + $0xa0] sm:$0xff]
      %v7530 = vld [vmem:[#allocation4 + $0xa8] sm:$0xff]
      %v7531 = vld [vmem:[#allocation4 + $0xb0] sm:$0xff]
      %v7532 = vld [vmem:[#allocation4 + $0xb8] sm:$0xff]
      %v7533 = vld [vmem:[#allocation4 + $0xc0] sm:$0xff]
      %v7534 = vld [vmem:[#allocation4 + $0xc8] sm:$0xff]
      %v7535 = vld [vmem:[#allocation4 + $0xd0] sm:$0xff]
      %v7536 = vld [vmem:[#allocation4 + $0xd8] sm:$0xff]
      %v7537 = vld [vmem:[#allocation4 + $0xe0] sm:$0xff]
      %v7538 = vld [vmem:[#allocation4 + $0xe8] sm:$0xff]
      %v7539 = vld [vmem:[#allocation4 + $0xf0] sm:$0xff]
      %v7540 = vld [vmem:[#allocation4 + $0xf8] sm:$0xff]
      %v7541 = vld [vmem:[#allocation4 + $0x100] sm:$0xff]
      %v7542 = vld [vmem:[#allocation4 + $0x108] sm:$0xff]
      %v7543 = vld [vmem:[#allocation4 + $0x110] sm:$0xff]
      %v7544 = vld [vmem:[#allocation4 + $0x118] sm:$0xff]
      %v7545 = vld [vmem:[#allocation3 + $0x10] sm:$0xf]
      %v7546 = vld [vmem:[#allocation3 + $0x14] sm:$0xf]
      %v7547 = vld [vmem:[#allocation3 + $0x18] sm:$0xf]
      %v7548 = vld [vmem:[#allocation3 + $0x1c] sm:$0xf]
      %v7549 = vld [vmem:[#allocation3 + $0x20] sm:$0xf]
      %v7550 = vld [vmem:[#allocation3 + $0x24] sm:$0xf]
      %v7551 = vld [vmem:[#allocation3 + $0x28] sm:$0xf]
      %v7552 = vld [vmem:[#allocation3 + $0x2c] sm:$0xf]
      %v7553 = vld [vmem:[#allocation3 + $0x30] sm:$0xf]
      %v7554 = vld [vmem:[#allocation3 + $0x34] sm:$0xf]
      %v7555 = vld [vmem:[#allocation3 + $0x38] sm:$0xf]
      %v7556 = vld [vmem:[#allocation3 + $0x3c] sm:$0xf]
      %v7557 = vld [vmem:[#allocation3 + $0x40] sm:$0xf]
      %v7558 = vld [vmem:[#allocation3 + $0x44] sm:$0xf]
      %v7559 = vld [vmem:[#allocation3 + $0x48] sm:$0xf]
      %v7560 = vld [vmem:[#allocation3 + $0x4c] sm:$0xf]
      %v7561 = vld [vmem:[#allocation3 + $0x50] sm:$0xf]
      %v7562 = vld [vmem:[#allocation3 + $0x54] sm:$0xf]
      %v7563 = vld [vmem:[#allocation3 + $0x58] sm:$0xf]
      %v7564 = vld [vmem:[#allocation3 + $0x5c] sm:$0xf]
      %v7565 = vld [vmem:[#allocation3 + $0x60] sm:$0xf]
      %v7566 = vld [vmem:[#allocation3 + $0x64] sm:$0xf]
      %v7567 = vld [vmem:[#allocation3 + $0x68] sm:$0xf]
      %v7568 = vld [vmem:[#allocation3 + $0x6c] sm:$0xf]
      %v7569 = vld [vmem:[#allocation3 + $0x70] sm:$0xf]
      %v7570 = vld [vmem:[#allocation3 + $0x74] sm:$0xf]
      %v7571 = vld [vmem:[#allocation3 + $0x78] sm:$0xf]
      %v7572 = vld [vmem:[#allocation3 + $0x7c] sm:$0xf]
      %v7573 = vld [vmem:[#allocation3 + $0x80] sm:$0xf]
      %v7574 = vld [vmem:[#allocation3 + $0x84] sm:$0xf]
      %v7575 = vld [vmem:[#allocation3 + $0x88] sm:$0xf]
      %v7576 = vld [vmem:[#allocation3 + $0x8c] sm:$0xf]
      %v7577 = vld [vmem:[#allocation3 + $0x90] sm:$0xf]
      %v7578 = vld [vmem:[#allocation3 + $0x94] sm:$0xf]
      %v7579 = vld [vmem:[#allocation3 + $0x98] sm:$0xf]
      %v7580 = vld [vmem:[#allocation3 + $0x9c] sm:$0xf]
      %v7581 = vld [vmem:[#allocation3 + $0xa0] sm:$0x1]
      %s7582 = scalar_lea.vmem %s4, 20
      %v7583 = vld [vmem:[%s7582] sm:$0xf]
      %v7621 = vunpack.c.l.b16 %v7545
      %v7622 = vunpack.c.l.b16 %v7546
      %v7623 = vunpack.c.l.b16 %v7547
      %v7624 = vunpack.c.l.b16 %v7548
      %v7625 = vunpack.c.l.b16 %v7549
      %v7626 = vunpack.c.l.b16 %v7550
      %v7627 = vunpack.c.l.b16 %v7551
      %v7628 = vunpack.c.l.b16 %v7552
      %v7629 = vunpack.c.l.b16 %v7553
      %v7630 = vunpack.c.l.b16 %v7554
      %v7631 = vunpack.c.l.b16 %v7555
      %v7632 = vunpack.c.l.b16 %v7556
      %v7633 = vunpack.c.l.b16 %v7557
      %v7634 = vunpack.c.l.b16 %v7558
      %v7635 = vunpack.c.l.b16 %v7559
      %v7636 = vunpack.c.l.b16 %v7560
      %v7637 = vunpack.c.l.b16 %v7561
      %v7638 = vunpack.c.l.b16 %v7562
      %v7639 = vunpack.c.l.b16 %v7563
      %v7640 = vunpack.c.l.b16 %v7564
      %v7641 = vunpack.c.l.b16 %v7565
      %v7642 = vunpack.c.l.b16 %v7566
      %v7643 = vunpack.c.l.b16 %v7567
      %v7644 = vunpack.c.l.b16 %v7568
      %v7645 = vunpack.c.l.b16 %v7569
      %v7646 = vunpack.c.l.b16 %v7570
      %v7647 = vunpack.c.l.b16 %v7571
      %v7648 = vunpack.c.l.b16 %v7572
      %v7649 = vunpack.c.l.b16 %v7573
      %v7650 = vunpack.c.l.b16 %v7574
      %v7651 = vunpack.c.l.b16 %v7575
      %v7652 = vunpack.c.l.b16 %v7576
      %v7653 = vunpack.c.l.b16 %v7577
      %v7654 = vunpack.c.l.b16 %v7578
      %v7655 = vunpack.c.l.b16 %v7579
      %v7656 = vunpack.c.l.b16 %v7580
      %v7657 = vunpack.c.l.b16 %v7581
      %v7658 = vpack.c.b16 %v7622, %v7621
      %v7659 = vpack.c.b16 %v7624, %v7623
      %v7660 = vpack.c.b16 %v7626, %v7625
      %v7661 = vpack.c.b16 %v7628, %v7627
      %v7662 = vpack.c.b16 %v7630, %v7629
      %v7663 = vpack.c.b16 %v7632, %v7631
      %v7664 = vpack.c.b16 %v7634, %v7633
      %v7665 = vpack.c.b16 %v7636, %v7635
      %v7666 = vpack.c.b16 %v7638, %v7637
      %v7667 = vpack.c.b16 %v7640, %v7639
      %v7668 = vpack.c.b16 %v7642, %v7641
      %v7669 = vpack.c.b16 %v7644, %v7643
      %v7670 = vpack.c.b16 %v7646, %v7645
      %v7671 = vpack.c.b16 %v7648, %v7647
      %v7672 = vpack.c.b16 %v7650, %v7649
      %v7673 = vpack.c.b16 %v7652, %v7651
      %v7674 = vpack.c.b16 %v7654, %v7653
      %v7675 = vpack.c.b16 %v7656, %v7655
      %v7676 = vpack.c.b16 %v7657, %v7657
      %v7678 = vshrl.u32 %v7658, 16
      %v7680 = vshll.u32 %v7658, 16
      %v7682 = vrot.slane %v7680, 1
      %v7683 = vor.u32 %v7678, %v7682
      %v7685 = vshll.u32 %v7659, 16
      %v7687 = vrot.slane %v7685, 1
      %v7688 = vsel %vm897, %v7683, %v7687
      %v7689 = vshrl.u32 %v7659, 16
      %v7691 = vor.u32 %v7689, %v7687
      %v7693 = vshll.u32 %v7660, 16
      %v7695 = vrot.slane %v7693, 1
      %v7696 = vsel %vm897, %v7691, %v7695
      %v7697 = vshrl.u32 %v7660, 16
      %v7699 = vor.u32 %v7697, %v7695
      %v7701 = vshll.u32 %v7661, 16
      %v7703 = vrot.slane %v7701, 1
      %v7704 = vsel %vm897, %v7699, %v7703
      %v7705 = vshrl.u32 %v7661, 16
      %v7707 = vor.u32 %v7705, %v7703
      %v7709 = vshll.u32 %v7662, 16
      %v7711 = vrot.slane %v7709, 1
      %v7712 = vsel %vm897, %v7707, %v7711
      %v7713 = vshrl.u32 %v7662, 16
      %v7715 = vor.u32 %v7713, %v7711
      %v7717 = vshll.u32 %v7663, 16
      %v7719 = vrot.slane %v7717, 1
      %v7720 = vsel %vm897, %v7715, %v7719
      %v7721 = vshrl.u32 %v7663, 16
      %v7723 = vor.u32 %v7721, %v7719
      %v7725 = vshll.u32 %v7664, 16
      %v7727 = vrot.slane %v7725, 1
      %v7728 = vsel %vm897, %v7723, %v7727
      %v7729 = vshrl.u32 %v7664, 16
      %v7731 = vor.u32 %v7729, %v7727
      %v7733 = vshll.u32 %v7665, 16
      %v7735 = vrot.slane %v7733, 1
      %v7736 = vsel %vm897, %v7731, %v7735
      %v7737 = vshrl.u32 %v7665, 16
      %v7739 = vor.u32 %v7737, %v7735
      %v7741 = vshll.u32 %v7666, 16
      %v7743 = vrot.slane %v7741, 1
      %v7744 = vsel %vm897, %v7739, %v7743
      %v7745 = vshrl.u32 %v7666, 16
      %v7747 = vor.u32 %v7745, %v7743
      %v7749 = vshll.u32 %v7667, 16
      %v7751 = vrot.slane %v7749, 1
      %v7752 = vsel %vm897, %v7747, %v7751
      %v7753 = vshrl.u32 %v7667, 16
      %v7755 = vor.u32 %v7753, %v7751
      %v7757 = vshll.u32 %v7668, 16
      %v7759 = vrot.slane %v7757, 1
      %v7760 = vsel %vm897, %v7755, %v7759
      %v7761 = vshrl.u32 %v7668, 16
      %v7763 = vor.u32 %v7761, %v7759
      %v7765 = vshll.u32 %v7669, 16
      %v7767 = vrot.slane %v7765, 1
      %v7768 = vsel %vm897, %v7763, %v7767
      %v7769 = vshrl.u32 %v7669, 16
      %v7771 = vor.u32 %v7769, %v7767
      %v7773 = vshll.u32 %v7670, 16
      %v7775 = vrot.slane %v7773, 1
      %v7776 = vsel %vm897, %v7771, %v7775
      %v7777 = vshrl.u32 %v7670, 16
      %v7779 = vor.u32 %v7777, %v7775
      %v7781 = vshll.u32 %v7671, 16
      %v7783 = vrot.slane %v7781, 1
      %v7784 = vsel %vm897, %v7779, %v7783
      %v7785 = vshrl.u32 %v7671, 16
      %v7787 = vor.u32 %v7785, %v7783
      %v7789 = vshll.u32 %v7672, 16
      %v7791 = vrot.slane %v7789, 1
      %v7792 = vsel %vm897, %v7787, %v7791
      %v7793 = vshrl.u32 %v7672, 16
      %v7795 = vor.u32 %v7793, %v7791
      %v7797 = vshll.u32 %v7673, 16
      %v7799 = vrot.slane %v7797, 1
      %v7800 = vsel %vm897, %v7795, %v7799
      %v7801 = vshrl.u32 %v7673, 16
      %v7803 = vor.u32 %v7801, %v7799
      %v7805 = vshll.u32 %v7674, 16
      %v7807 = vrot.slane %v7805, 1
      %v7808 = vsel %vm897, %v7803, %v7807
      %v7809 = vshrl.u32 %v7674, 16
      %v7811 = vor.u32 %v7809, %v7807
      %v7813 = vshll.u32 %v7675, 16
      %v7815 = vrot.slane %v7813, 1
      %v7816 = vsel %vm897, %v7811, %v7815
      %v7817 = vshrl.u32 %v7675, 16
      %v7819 = vor.u32 %v7817, %v7815
      %v7821 = vshll.u32 %v7676, 16
      %v7823 = vrot.slane %v7821, 1
      %v7824 = vsel %vm897, %v7819, %v7823
      %v7826 = vsel %vm692, %v7688, 0
      %v7829 = vsel %vm692, %v7696, 0
      %v7832 = vsel %vm692, %v7704, 0
      %v7835 = vsel %vm692, %v7712, 0
      %v7838 = vsel %vm692, %v7720, 0
      %v7841 = vsel %vm692, %v7728, 0
      %v7844 = vsel %vm692, %v7736, 0
      %v7847 = vsel %vm692, %v7744, 0
      %v7850 = vsel %vm692, %v7752, 0
      %v7853 = vsel %vm692, %v7760, 0
      %v7856 = vsel %vm692, %v7768, 0
      %v7859 = vsel %vm692, %v7776, 0
      %v7862 = vsel %vm692, %v7784, 0
      %v7865 = vsel %vm692, %v7792, 0
      %v7868 = vsel %vm692, %v7800, 0
      %v7871 = vsel %vm692, %v7808, 0
      %v7874 = vsel %vm692, %v7816, 0
      %v7877 = vsel %vm692, %v7824, 0
      %v7880 = vsel %vm5412, %v7583, 0
      %7882 = vmatpush.bf16.msra.mxu0 0
      %7883 = vmatpush.bf16.msra.mxu0 0
      %7884 = vmatpush.bf16.msra.mxu0 0
      %7885 = vmatpush.bf16.msra.mxu0 0
      %7886 = vmatpush.bf16.msra.mxu0 0
      %7887 = vmatpush.bf16.msra.mxu0 0
      %7888 = vmatpush.bf16.msra.mxu0 0
      %7889 = vmatpush.bf16.msra.mxu0 %v7880
      %7890 = vmatmul.bf16.gmra.mxu0 %v7826
      %v7891 = vpop.f32.mrf.mxu0
      %v7892 = vadd.f32 0.0, %v7891
      %v7893 = vpop.f32.mrf.mxu0
      %v7894 = vadd.f32 0.0, %v7893
      %7895 = vmatmul.bf16.gmra.mxu0 %v7829
      %v7896 = vpop.f32.mrf.mxu0
      %v7897 = vadd.f32 0.0, %v7896
      %v7898 = vpop.f32.mrf.mxu0
      %v7899 = vadd.f32 0.0, %v7898
      %7900 = vmatmul.bf16.gmra.mxu0 %v7832
      %v7901 = vpop.f32.mrf.mxu0
      %v7902 = vadd.f32 0.0, %v7901
      %v7903 = vpop.f32.mrf.mxu0
      %v7904 = vadd.f32 0.0, %v7903
      %7905 = vmatmul.bf16.gmra.mxu0 %v7835
      %v7906 = vpop.f32.mrf.mxu0
      %v7907 = vadd.f32 0.0, %v7906
      %v7908 = vpop.f32.mrf.mxu0
      %v7909 = vadd.f32 0.0, %v7908
      %7910 = vmatmul.bf16.gmra.mxu0 %v7838
      %v7911 = vpop.f32.mrf.mxu0
      %v7912 = vadd.f32 0.0, %v7911
      %v7913 = vpop.f32.mrf.mxu0
      %v7914 = vadd.f32 0.0, %v7913
      %7915 = vmatmul.bf16.gmra.mxu0 %v7841
      %v7916 = vpop.f32.mrf.mxu0
      %v7917 = vadd.f32 0.0, %v7916
      %v7918 = vpop.f32.mrf.mxu0
      %v7919 = vadd.f32 0.0, %v7918
      %7920 = vmatmul.bf16.gmra.mxu0 %v7844
      %v7921 = vpop.f32.mrf.mxu0
      %v7922 = vadd.f32 0.0, %v7921
      %v7923 = vpop.f32.mrf.mxu0
      %v7924 = vadd.f32 0.0, %v7923
      %7925 = vmatmul.bf16.gmra.mxu0 %v7847
      %v7926 = vpop.f32.mrf.mxu0
      %v7927 = vadd.f32 0.0, %v7926
      %v7928 = vpop.f32.mrf.mxu0
      %v7929 = vadd.f32 0.0, %v7928
      %7930 = vmatmul.bf16.gmra.mxu0 %v7850
      %v7931 = vpop.f32.mrf.mxu0
      %v7932 = vadd.f32 0.0, %v7931
      %v7933 = vpop.f32.mrf.mxu0
      %v7934 = vadd.f32 0.0, %v7933
      %7935 = vmatmul.bf16.gmra.mxu0 %v7853
      %v7936 = vpop.f32.mrf.mxu0
      %v7937 = vadd.f32 0.0, %v7936
      %v7938 = vpop.f32.mrf.mxu0
      %v7939 = vadd.f32 0.0, %v7938
      %7940 = vmatmul.bf16.gmra.mxu0 %v7856
      %v7941 = vpop.f32.mrf.mxu0
      %v7942 = vadd.f32 0.0, %v7941
      %v7943 = vpop.f32.mrf.mxu0
      %v7944 = vadd.f32 0.0, %v7943
      %7945 = vmatmul.bf16.gmra.mxu0 %v7859
      %v7946 = vpop.f32.mrf.mxu0
      %v7947 = vadd.f32 0.0, %v7946
      %v7948 = vpop.f32.mrf.mxu0
      %v7949 = vadd.f32 0.0, %v7948
      %7950 = vmatmul.bf16.gmra.mxu0 %v7862
      %v7951 = vpop.f32.mrf.mxu0
      %v7952 = vadd.f32 0.0, %v7951
      %v7953 = vpop.f32.mrf.mxu0
      %v7954 = vadd.f32 0.0, %v7953
      %7955 = vmatmul.bf16.gmra.mxu0 %v7865
      %v7956 = vpop.f32.mrf.mxu0
      %v7957 = vadd.f32 0.0, %v7956
      %v7958 = vpop.f32.mrf.mxu0
      %v7959 = vadd.f32 0.0, %v7958
      %7960 = vmatmul.bf16.gmra.mxu0 %v7868
      %v7961 = vpop.f32.mrf.mxu0
      %v7962 = vadd.f32 0.0, %v7961
      %v7963 = vpop.f32.mrf.mxu0
      %v7964 = vadd.f32 0.0, %v7963
      %7965 = vmatmul.bf16.gmra.mxu0 %v7871
      %v7966 = vpop.f32.mrf.mxu0
      %v7967 = vadd.f32 0.0, %v7966
      %v7968 = vpop.f32.mrf.mxu0
      %v7969 = vadd.f32 0.0, %v7968
      %7970 = vmatmul.bf16.gmra.mxu0 %v7874
      %v7971 = vpop.f32.mrf.mxu0
      %v7972 = vadd.f32 0.0, %v7971
      %v7973 = vpop.f32.mrf.mxu0
      %v7974 = vadd.f32 0.0, %v7973
      %7975 = vmatmul.bf16.gmra.mxu0 %v7877
      %v7976 = vpop.f32.mrf.mxu0
      %v7977 = vadd.f32 0.0, %v7976
      %v7978 = vpop.f32.mrf.mxu0
      %v7979 = vadd.f32 0.0, %v7978
      %7980 = vdwg.mxu0
      %v7981 = vadd.f32 %v7509, %v7892
      %v7982 = vadd.f32 %v7510, %v7894
      %v7983 = vadd.f32 %v7511, %v7897
      %v7984 = vadd.f32 %v7512, %v7899
      %v7985 = vadd.f32 %v7513, %v7902
      %v7986 = vadd.f32 %v7514, %v7904
      %v7987 = vadd.f32 %v7515, %v7907
      %v7988 = vadd.f32 %v7516, %v7909
      %v7989 = vadd.f32 %v7517, %v7912
      %v7990 = vadd.f32 %v7518, %v7914
      %v7991 = vadd.f32 %v7519, %v7917
      %v7992 = vadd.f32 %v7520, %v7919
      %v7993 = vadd.f32 %v7521, %v7922
      %v7994 = vadd.f32 %v7522, %v7924
      %v7995 = vadd.f32 %v7523, %v7927
      %v7996 = vadd.f32 %v7524, %v7929
      %v7997 = vadd.f32 %v7525, %v7932
      %v7998 = vadd.f32 %v7526, %v7934
      %v7999 = vadd.f32 %v7527, %v7937
      %v8000 = vadd.f32 %v7528, %v7939
      %v8001 = vadd.f32 %v7529, %v7942
      %v8002 = vadd.f32 %v7530, %v7944
      %v8003 = vadd.f32 %v7531, %v7947
      %v8004 = vadd.f32 %v7532, %v7949
      %v8005 = vadd.f32 %v7533, %v7952
      %v8006 = vadd.f32 %v7534, %v7954
      %v8007 = vadd.f32 %v7535, %v7957
      %v8008 = vadd.f32 %v7536, %v7959
      %v8009 = vadd.f32 %v7537, %v7962
      %v8010 = vadd.f32 %v7538, %v7964
      %v8011 = vadd.f32 %v7539, %v7967
      %v8012 = vadd.f32 %v7540, %v7969
      %v8013 = vadd.f32 %v7541, %v7972
      %v8014 = vadd.f32 %v7542, %v7974
      %v8015 = vadd.f32 %v7543, %v7977
      %v8016 = vadd.f32 %v7544, %v7979
      %8017 = vst.msk [vmem:[#allocation4] sm:$0xff] %vm692, %v7981
      %8018 = vst.msk [vmem:[#allocation4 + $0x8] sm:$0xff] %vm692, %v7982
      %8019 = vst.msk [vmem:[#allocation4 + $0x10] sm:$0xff] %vm692, %v7983
      %8020 = vst.msk [vmem:[#allocation4 + $0x18] sm:$0xff] %vm692, %v7984
      %8021 = vst.msk [vmem:[#allocation4 + $0x20] sm:$0xff] %vm692, %v7985
      %8022 = vst.msk [vmem:[#allocation4 + $0x28] sm:$0xff] %vm692, %v7986
      %8023 = vst.msk [vmem:[#allocation4 + $0x30] sm:$0xff] %vm692, %v7987
      %8024 = vst.msk [vmem:[#allocation4 + $0x38] sm:$0xff] %vm692, %v7988
      %8025 = vst.msk [vmem:[#allocation4 + $0x40] sm:$0xff] %vm692, %v7989
      %8026 = vst.msk [vmem:[#allocation4 + $0x48] sm:$0xff] %vm692, %v7990
      %8027 = vst.msk [vmem:[#allocation4 + $0x50] sm:$0xff] %vm692, %v7991
      %8028 = vst.msk [vmem:[#allocation4 + $0x58] sm:$0xff] %vm692, %v7992
      %8029 = vst.msk [vmem:[#allocation4 + $0x60] sm:$0xff] %vm692, %v7993
      %8030 = vst.msk [vmem:[#allocation4 + $0x68] sm:$0xff] %vm692, %v7994
      %8031 = vst.msk [vmem:[#allocation4 + $0x70] sm:$0xff] %vm692, %v7995
      %8032 = vst.msk [vmem:[#allocation4 + $0x78] sm:$0xff] %vm692, %v7996
      %8033 = vst.msk [vmem:[#allocation4 + $0x80] sm:$0xff] %vm692, %v7997
      %8034 = vst.msk [vmem:[#allocation4 + $0x88] sm:$0xff] %vm692, %v7998
      %8035 = vst.msk [vmem:[#allocation4 + $0x90] sm:$0xff] %vm692, %v7999
      %8036 = vst.msk [vmem:[#allocation4 + $0x98] sm:$0xff] %vm692, %v8000
      %8037 = vst.msk [vmem:[#allocation4 + $0xa0] sm:$0xff] %vm692, %v8001
      %8038 = vst.msk [vmem:[#allocation4 + $0xa8] sm:$0xff] %vm692, %v8002
      %8039 = vst.msk [vmem:[#allocation4 + $0xb0] sm:$0xff] %vm692, %v8003
      %8040 = vst.msk [vmem:[#allocation4 + $0xb8] sm:$0xff] %vm692, %v8004
      %8041 = vst.msk [vmem:[#allocation4 + $0xc0] sm:$0xff] %vm692, %v8005
      %8042 = vst.msk [vmem:[#allocation4 + $0xc8] sm:$0xff] %vm692, %v8006
      %8043 = vst.msk [vmem:[#allocation4 + $0xd0] sm:$0xff] %vm692, %v8007
      %8044 = vst.msk [vmem:[#allocation4 + $0xd8] sm:$0xff] %vm692, %v8008
      %8045 = vst.msk [vmem:[#allocation4 + $0xe0] sm:$0xff] %vm692, %v8009
      %8046 = vst.msk [vmem:[#allocation4 + $0xe8] sm:$0xff] %vm692, %v8010
      %8047 = vst.msk [vmem:[#allocation4 + $0xf0] sm:$0xff] %vm692, %v8011
      %8048 = vst.msk [vmem:[#allocation4 + $0xf8] sm:$0xff] %vm692, %v8012
      %8049 = vst.msk [vmem:[#allocation4 + $0x100] sm:$0xff] %vm692, %v8013
      %8050 = vst.msk [vmem:[#allocation4 + $0x108] sm:$0xff] %vm692, %v8014
      %8051 = vst.msk [vmem:[#allocation4 + $0x110] sm:$0xff] %vm692, %v8015
      %8052 = vst.msk [vmem:[#allocation4 + $0x118] sm:$0xff] %vm692, %v8016
      %v8053 = vld [vmem:[#allocation4] sm:$0xff]
      %v8054 = vld [vmem:[#allocation4 + $0x8] sm:$0xff]
      %v8055 = vld [vmem:[#allocation4 + $0x10] sm:$0xff]
      %v8056 = vld [vmem:[#allocation4 + $0x18] sm:$0xff]
      %v8057 = vld [vmem:[#allocation4 + $0x20] sm:$0xff]
      %v8058 = vld [vmem:[#allocation4 + $0x28] sm:$0xff]
      %v8059 = vld [vmem:[#allocation4 + $0x30] sm:$0xff]
      %v8060 = vld [vmem:[#allocation4 + $0x38] sm:$0xff]
      %v8061 = vld [vmem:[#allocation4 + $0x40] sm:$0xff]
      %v8062 = vld [vmem:[#allocation4 + $0x48] sm:$0xff]
      %v8063 = vld [vmem:[#allocation4 + $0x50] sm:$0xff]
      %v8064 = vld [vmem:[#allocation4 + $0x58] sm:$0xff]
      %v8065 = vld [vmem:[#allocation4 + $0x60] sm:$0xff]
      %v8066 = vld [vmem:[#allocation4 + $0x68] sm:$0xff]
      %v8067 = vld [vmem:[#allocation4 + $0x70] sm:$0xff]
      %v8068 = vld [vmem:[#allocation4 + $0x78] sm:$0xff]
      %v8069 = vld [vmem:[#allocation4 + $0x80] sm:$0xff]
      %v8070 = vld [vmem:[#allocation4 + $0x88] sm:$0xff]
      %v8071 = vld [vmem:[#allocation4 + $0x90] sm:$0xff]
      %v8072 = vld [vmem:[#allocation4 + $0x98] sm:$0xff]
      %v8073 = vld [vmem:[#allocation4 + $0xa0] sm:$0xff]
      %v8074 = vld [vmem:[#allocation4 + $0xa8] sm:$0xff]
      %v8075 = vld [vmem:[#allocation4 + $0xb0] sm:$0xff]
      %v8076 = vld [vmem:[#allocation4 + $0xb8] sm:$0xff]
      %v8077 = vld [vmem:[#allocation4 + $0xc0] sm:$0xff]
      %v8078 = vld [vmem:[#allocation4 + $0xc8] sm:$0xff]
      %v8079 = vld [vmem:[#allocation4 + $0xd0] sm:$0xff]
      %v8080 = vld [vmem:[#allocation4 + $0xd8] sm:$0xff]
      %v8081 = vld [vmem:[#allocation4 + $0xe0] sm:$0xff]
      %v8082 = vld [vmem:[#allocation4 + $0xe8] sm:$0xff]
      %v8083 = vld [vmem:[#allocation4 + $0xf0] sm:$0xff]
      %v8084 = vld [vmem:[#allocation4 + $0xf8] sm:$0xff]
      %v8085 = vld [vmem:[#allocation4 + $0x100] sm:$0xff]
      %v8086 = vld [vmem:[#allocation4 + $0x108] sm:$0xff]
      %v8087 = vld [vmem:[#allocation4 + $0x110] sm:$0xff]
      %v8088 = vld [vmem:[#allocation4 + $0x118] sm:$0xff]
      %v8089 = vld [vmem:[#allocation3 + $0x18] sm:$0xf]
      %v8090 = vld [vmem:[#allocation3 + $0x1c] sm:$0xf]
      %v8091 = vld [vmem:[#allocation3 + $0x20] sm:$0xf]
      %v8092 = vld [vmem:[#allocation3 + $0x24] sm:$0xf]
      %v8093 = vld [vmem:[#allocation3 + $0x28] sm:$0xf]
      %v8094 = vld [vmem:[#allocation3 + $0x2c] sm:$0xf]
      %v8095 = vld [vmem:[#allocation3 + $0x30] sm:$0xf]
      %v8096 = vld [vmem:[#allocation3 + $0x34] sm:$0xf]
      %v8097 = vld [vmem:[#allocation3 + $0x38] sm:$0xf]
      %v8098 = vld [vmem:[#allocation3 + $0x3c] sm:$0xf]
      %v8099 = vld [vmem:[#allocation3 + $0x40] sm:$0xf]
      %v8100 = vld [vmem:[#allocation3 + $0x44] sm:$0xf]
      %v8101 = vld [vmem:[#allocation3 + $0x48] sm:$0xf]
      %v8102 = vld [vmem:[#allocation3 + $0x4c] sm:$0xf]
      %v8103 = vld [vmem:[#allocation3 + $0x50] sm:$0xf]
      %v8104 = vld [vmem:[#allocation3 + $0x54] sm:$0xf]
      %v8105 = vld [vmem:[#allocation3 + $0x58] sm:$0xf]
      %v8106 = vld [vmem:[#allocation3 + $0x5c] sm:$0xf]
      %v8107 = vld [vmem:[#allocation3 + $0x60] sm:$0xf]
      %v8108 = vld [vmem:[#allocation3 + $0x64] sm:$0xf]
      %v8109 = vld [vmem:[#allocation3 + $0x68] sm:$0xf]
      %v8110 = vld [vmem:[#allocation3 + $0x6c] sm:$0xf]
      %v8111 = vld [vmem:[#allocation3 + $0x70] sm:$0xf]
      %v8112 = vld [vmem:[#allocation3 + $0x74] sm:$0xf]
      %v8113 = vld [vmem:[#allocation3 + $0x78] sm:$0xf]
      %v8114 = vld [vmem:[#allocation3 + $0x7c] sm:$0xf]
      %v8115 = vld [vmem:[#allocation3 + $0x80] sm:$0xf]
      %v8116 = vld [vmem:[#allocation3 + $0x84] sm:$0xf]
      %v8117 = vld [vmem:[#allocation3 + $0x88] sm:$0xf]
      %v8118 = vld [vmem:[#allocation3 + $0x8c] sm:$0xf]
      %v8119 = vld [vmem:[#allocation3 + $0x90] sm:$0xf]
      %v8120 = vld [vmem:[#allocation3 + $0x94] sm:$0xf]
      %v8121 = vld [vmem:[#allocation3 + $0x98] sm:$0xf]
      %v8122 = vld [vmem:[#allocation3 + $0x9c] sm:$0xf]
      %v8123 = vld [vmem:[#allocation3 + $0xa0] sm:$0xf]
      %v8124 = vld [vmem:[#allocation3 + $0xa4] sm:$0xf]
      %v8125 = vld [vmem:[#allocation3 + $0xa8] sm:$0x1]
      %s8126 = scalar_lea.vmem %s4, 24
      %v8127 = vld [vmem:[%s8126] sm:$0xf]
      %v8165 = vunpack.c.l.b16 %v8089
      %v8166 = vunpack.c.l.b16 %v8090
      %v8167 = vunpack.c.l.b16 %v8091
      %v8168 = vunpack.c.l.b16 %v8092
      %v8169 = vunpack.c.l.b16 %v8093
      %v8170 = vunpack.c.l.b16 %v8094
      %v8171 = vunpack.c.l.b16 %v8095
      %v8172 = vunpack.c.l.b16 %v8096
      %v8173 = vunpack.c.l.b16 %v8097
      %v8174 = vunpack.c.l.b16 %v8098
      %v8175 = vunpack.c.l.b16 %v8099
      %v8176 = vunpack.c.l.b16 %v8100
      %v8177 = vunpack.c.l.b16 %v8101
      %v8178 = vunpack.c.l.b16 %v8102
      %v8179 = vunpack.c.l.b16 %v8103
      %v8180 = vunpack.c.l.b16 %v8104
      %v8181 = vunpack.c.l.b16 %v8105
      %v8182 = vunpack.c.l.b16 %v8106
      %v8183 = vunpack.c.l.b16 %v8107
      %v8184 = vunpack.c.l.b16 %v8108
      %v8185 = vunpack.c.l.b16 %v8109
      %v8186 = vunpack.c.l.b16 %v8110
      %v8187 = vunpack.c.l.b16 %v8111
      %v8188 = vunpack.c.l.b16 %v8112
      %v8189 = vunpack.c.l.b16 %v8113
      %v8190 = vunpack.c.l.b16 %v8114
      %v8191 = vunpack.c.l.b16 %v8115
      %v8192 = vunpack.c.l.b16 %v8116
      %v8193 = vunpack.c.l.b16 %v8117
      %v8194 = vunpack.c.l.b16 %v8118
      %v8195 = vunpack.c.l.b16 %v8119
      %v8196 = vunpack.c.l.b16 %v8120
      %v8197 = vunpack.c.l.b16 %v8121
      %v8198 = vunpack.c.l.b16 %v8122
      %v8199 = vunpack.c.l.b16 %v8123
      %v8200 = vunpack.c.l.b16 %v8124
      %v8201 = vunpack.c.l.b16 %v8125
      %v8202 = vpack.c.b16 %v8166, %v8165
      %v8203 = vpack.c.b16 %v8168, %v8167
      %v8204 = vpack.c.b16 %v8170, %v8169
      %v8205 = vpack.c.b16 %v8172, %v8171
      %v8206 = vpack.c.b16 %v8174, %v8173
      %v8207 = vpack.c.b16 %v8176, %v8175
      %v8208 = vpack.c.b16 %v8178, %v8177
      %v8209 = vpack.c.b16 %v8180, %v8179
      %v8210 = vpack.c.b16 %v8182, %v8181
      %v8211 = vpack.c.b16 %v8184, %v8183
      %v8212 = vpack.c.b16 %v8186, %v8185
      %v8213 = vpack.c.b16 %v8188, %v8187
      %v8214 = vpack.c.b16 %v8190, %v8189
      %v8215 = vpack.c.b16 %v8192, %v8191
      %v8216 = vpack.c.b16 %v8194, %v8193
      %v8217 = vpack.c.b16 %v8196, %v8195
      %v8218 = vpack.c.b16 %v8198, %v8197
      %v8219 = vpack.c.b16 %v8200, %v8199
      %v8220 = vpack.c.b16 %v8201, %v8201
      %v8222 = vshrl.u32 %v8202, 16
      %v8224 = vshll.u32 %v8202, 16
      %v8226 = vrot.slane %v8224, 1
      %v8227 = vor.u32 %v8222, %v8226
      %v8229 = vshll.u32 %v8203, 16
      %v8231 = vrot.slane %v8229, 1
      %v8232 = vsel %vm897, %v8227, %v8231
      %v8233 = vshrl.u32 %v8203, 16
      %v8235 = vor.u32 %v8233, %v8231
      %v8237 = vshll.u32 %v8204, 16
      %v8239 = vrot.slane %v8237, 1
      %v8240 = vsel %vm897, %v8235, %v8239
      %v8241 = vshrl.u32 %v8204, 16
      %v8243 = vor.u32 %v8241, %v8239
      %v8245 = vshll.u32 %v8205, 16
      %v8247 = vrot.slane %v8245, 1
      %v8248 = vsel %vm897, %v8243, %v8247
      %v8249 = vshrl.u32 %v8205, 16
      %v8251 = vor.u32 %v8249, %v8247
      %v8253 = vshll.u32 %v8206, 16
      %v8255 = vrot.slane %v8253, 1
      %v8256 = vsel %vm897, %v8251, %v8255
      %v8257 = vshrl.u32 %v8206, 16
      %v8259 = vor.u32 %v8257, %v8255
      %v8261 = vshll.u32 %v8207, 16
      %v8263 = vrot.slane %v8261, 1
      %v8264 = vsel %vm897, %v8259, %v8263
      %v8265 = vshrl.u32 %v8207, 16
      %v8267 = vor.u32 %v8265, %v8263
      %v8269 = vshll.u32 %v8208, 16
      %v8271 = vrot.slane %v8269, 1
      %v8272 = vsel %vm897, %v8267, %v8271
      %v8273 = vshrl.u32 %v8208, 16
      %v8275 = vor.u32 %v8273, %v8271
      %v8277 = vshll.u32 %v8209, 16
      %v8279 = vrot.slane %v8277, 1
      %v8280 = vsel %vm897, %v8275, %v8279
      %v8281 = vshrl.u32 %v8209, 16
      %v8283 = vor.u32 %v8281, %v8279
      %v8285 = vshll.u32 %v8210, 16
      %v8287 = vrot.slane %v8285, 1
      %v8288 = vsel %vm897, %v8283, %v8287
      %v8289 = vshrl.u32 %v8210, 16
      %v8291 = vor.u32 %v8289, %v8287
      %v8293 = vshll.u32 %v8211, 16
      %v8295 = vrot.slane %v8293, 1
      %v8296 = vsel %vm897, %v8291, %v8295
      %v8297 = vshrl.u32 %v8211, 16
      %v8299 = vor.u32 %v8297, %v8295
      %v8301 = vshll.u32 %v8212, 16
      %v8303 = vrot.slane %v8301, 1
      %v8304 = vsel %vm897, %v8299, %v8303
      %v8305 = vshrl.u32 %v8212, 16
      %v8307 = vor.u32 %v8305, %v8303
      %v8309 = vshll.u32 %v8213, 16
      %v8311 = vrot.slane %v8309, 1
      %v8312 = vsel %vm897, %v8307, %v8311
      %v8313 = vshrl.u32 %v8213, 16
      %v8315 = vor.u32 %v8313, %v8311
      %v8317 = vshll.u32 %v8214, 16
      %v8319 = vrot.slane %v8317, 1
      %v8320 = vsel %vm897, %v8315, %v8319
      %v8321 = vshrl.u32 %v8214, 16
      %v8323 = vor.u32 %v8321, %v8319
      %v8325 = vshll.u32 %v8215, 16
      %v8327 = vrot.slane %v8325, 1
      %v8328 = vsel %vm897, %v8323, %v8327
      %v8329 = vshrl.u32 %v8215, 16
      %v8331 = vor.u32 %v8329, %v8327
      %v8333 = vshll.u32 %v8216, 16
      %v8335 = vrot.slane %v8333, 1
      %v8336 = vsel %vm897, %v8331, %v8335
      %v8337 = vshrl.u32 %v8216, 16
      %v8339 = vor.u32 %v8337, %v8335
      %v8341 = vshll.u32 %v8217, 16
      %v8343 = vrot.slane %v8341, 1
      %v8344 = vsel %vm897, %v8339, %v8343
      %v8345 = vshrl.u32 %v8217, 16
      %v8347 = vor.u32 %v8345, %v8343
      %v8349 = vshll.u32 %v8218, 16
      %v8351 = vrot.slane %v8349, 1
      %v8352 = vsel %vm897, %v8347, %v8351
      %v8353 = vshrl.u32 %v8218, 16
      %v8355 = vor.u32 %v8353, %v8351
      %v8357 = vshll.u32 %v8219, 16
      %v8359 = vrot.slane %v8357, 1
      %v8360 = vsel %vm897, %v8355, %v8359
      %v8361 = vshrl.u32 %v8219, 16
      %v8363 = vor.u32 %v8361, %v8359
      %v8365 = vshll.u32 %v8220, 16
      %v8367 = vrot.slane %v8365, 1
      %v8368 = vsel %vm897, %v8363, %v8367
      %v8370 = vsel %vm692, %v8232, 0
      %v8373 = vsel %vm692, %v8240, 0
      %v8376 = vsel %vm692, %v8248, 0
      %v8379 = vsel %vm692, %v8256, 0
      %v8382 = vsel %vm692, %v8264, 0
      %v8385 = vsel %vm692, %v8272, 0
      %v8388 = vsel %vm692, %v8280, 0
      %v8391 = vsel %vm692, %v8288, 0
      %v8394 = vsel %vm692, %v8296, 0
      %v8397 = vsel %vm692, %v8304, 0
      %v8400 = vsel %vm692, %v8312, 0
      %v8403 = vsel %vm692, %v8320, 0
      %v8406 = vsel %vm692, %v8328, 0
      %v8409 = vsel %vm692, %v8336, 0
      %v8412 = vsel %vm692, %v8344, 0
      %v8415 = vsel %vm692, %v8352, 0
      %v8418 = vsel %vm692, %v8360, 0
      %v8421 = vsel %vm692, %v8368, 0
      %v8424 = vsel %vm5412, %v8127, 0
      %8426 = vmatpush.bf16.msra.mxu0 0
      %8427 = vmatpush.bf16.msra.mxu0 0
      %8428 = vmatpush.bf16.msra.mxu0 0
      %8429 = vmatpush.bf16.msra.mxu0 0
      %8430 = vmatpush.bf16.msra.mxu0 0
      %8431 = vmatpush.bf16.msra.mxu0 0
      %8432 = vmatpush.bf16.msra.mxu0 0
      %8433 = vmatpush.bf16.msra.mxu0 %v8424
      %8434 = vmatmul.bf16.gmra.mxu0 %v8370
      %v8435 = vpop.f32.mrf.mxu0
      %v8436 = vadd.f32 0.0, %v8435
      %v8437 = vpop.f32.mrf.mxu0
      %v8438 = vadd.f32 0.0, %v8437
      %8439 = vmatmul.bf16.gmra.mxu0 %v8373
      %v8440 = vpop.f32.mrf.mxu0
      %v8441 = vadd.f32 0.0, %v8440
      %v8442 = vpop.f32.mrf.mxu0
      %v8443 = vadd.f32 0.0, %v8442
      %8444 = vmatmul.bf16.gmra.mxu0 %v8376
      %v8445 = vpop.f32.mrf.mxu0
      %v8446 = vadd.f32 0.0, %v8445
      %v8447 = vpop.f32.mrf.mxu0
      %v8448 = vadd.f32 0.0, %v8447
      %8449 = vmatmul.bf16.gmra.mxu0 %v8379
      %v8450 = vpop.f32.mrf.mxu0
      %v8451 = vadd.f32 0.0, %v8450
      %v8452 = vpop.f32.mrf.mxu0
      %v8453 = vadd.f32 0.0, %v8452
      %8454 = vmatmul.bf16.gmra.mxu0 %v8382
      %v8455 = vpop.f32.mrf.mxu0
      %v8456 = vadd.f32 0.0, %v8455
      %v8457 = vpop.f32.mrf.mxu0
      %v8458 = vadd.f32 0.0, %v8457
      %8459 = vmatmul.bf16.gmra.mxu0 %v8385
      %v8460 = vpop.f32.mrf.mxu0
      %v8461 = vadd.f32 0.0, %v8460
      %v8462 = vpop.f32.mrf.mxu0
      %v8463 = vadd.f32 0.0, %v8462
      %8464 = vmatmul.bf16.gmra.mxu0 %v8388
      %v8465 = vpop.f32.mrf.mxu0
      %v8466 = vadd.f32 0.0, %v8465
      %v8467 = vpop.f32.mrf.mxu0
      %v8468 = vadd.f32 0.0, %v8467
      %8469 = vmatmul.bf16.gmra.mxu0 %v8391
      %v8470 = vpop.f32.mrf.mxu0
      %v8471 = vadd.f32 0.0, %v8470
      %v8472 = vpop.f32.mrf.mxu0
      %v8473 = vadd.f32 0.0, %v8472
      %8474 = vmatmul.bf16.gmra.mxu0 %v8394
      %v8475 = vpop.f32.mrf.mxu0
      %v8476 = vadd.f32 0.0, %v8475
      %v8477 = vpop.f32.mrf.mxu0
      %v8478 = vadd.f32 0.0, %v8477
      %8479 = vmatmul.bf16.gmra.mxu0 %v8397
      %v8480 = vpop.f32.mrf.mxu0
      %v8481 = vadd.f32 0.0, %v8480
      %v8482 = vpop.f32.mrf.mxu0
      %v8483 = vadd.f32 0.0, %v8482
      %8484 = vmatmul.bf16.gmra.mxu0 %v8400
      %v8485 = vpop.f32.mrf.mxu0
      %v8486 = vadd.f32 0.0, %v8485
      %v8487 = vpop.f32.mrf.mxu0
      %v8488 = vadd.f32 0.0, %v8487
      %8489 = vmatmul.bf16.gmra.mxu0 %v8403
      %v8490 = vpop.f32.mrf.mxu0
      %v8491 = vadd.f32 0.0, %v8490
      %v8492 = vpop.f32.mrf.mxu0
      %v8493 = vadd.f32 0.0, %v8492
      %8494 = vmatmul.bf16.gmra.mxu0 %v8406
      %v8495 = vpop.f32.mrf.mxu0
      %v8496 = vadd.f32 0.0, %v8495
      %v8497 = vpop.f32.mrf.mxu0
      %v8498 = vadd.f32 0.0, %v8497
      %8499 = vmatmul.bf16.gmra.mxu0 %v8409
      %v8500 = vpop.f32.mrf.mxu0
      %v8501 = vadd.f32 0.0, %v8500
      %v8502 = vpop.f32.mrf.mxu0
      %v8503 = vadd.f32 0.0, %v8502
      %8504 = vmatmul.bf16.gmra.mxu0 %v8412
      %v8505 = vpop.f32.mrf.mxu0
      %v8506 = vadd.f32 0.0, %v8505
      %v8507 = vpop.f32.mrf.mxu0
      %v8508 = vadd.f32 0.0, %v8507
      %8509 = vmatmul.bf16.gmra.mxu0 %v8415
      %v8510 = vpop.f32.mrf.mxu0
      %v8511 = vadd.f32 0.0, %v8510
      %v8512 = vpop.f32.mrf.mxu0
      %v8513 = vadd.f32 0.0, %v8512
      %8514 = vmatmul.bf16.gmra.mxu0 %v8418
      %v8515 = vpop.f32.mrf.mxu0
      %v8516 = vadd.f32 0.0, %v8515
      %v8517 = vpop.f32.mrf.mxu0
      %v8518 = vadd.f32 0.0, %v8517
      %8519 = vmatmul.bf16.gmra.mxu0 %v8421
      %v8520 = vpop.f32.mrf.mxu0
      %v8521 = vadd.f32 0.0, %v8520
      %v8522 = vpop.f32.mrf.mxu0
      %v8523 = vadd.f32 0.0, %v8522
      %8524 = vdwg.mxu0
      %v8525 = vadd.f32 %v8053, %v8436
      %v8526 = vadd.f32 %v8054, %v8438
      %v8527 = vadd.f32 %v8055, %v8441
      %v8528 = vadd.f32 %v8056, %v8443
      %v8529 = vadd.f32 %v8057, %v8446
      %v8530 = vadd.f32 %v8058, %v8448
      %v8531 = vadd.f32 %v8059, %v8451
      %v8532 = vadd.f32 %v8060, %v8453
      %v8533 = vadd.f32 %v8061, %v8456
      %v8534 = vadd.f32 %v8062, %v8458
      %v8535 = vadd.f32 %v8063, %v8461
      %v8536 = vadd.f32 %v8064, %v8463
      %v8537 = vadd.f32 %v8065, %v8466
      %v8538 = vadd.f32 %v8066, %v8468
      %v8539 = vadd.f32 %v8067, %v8471
      %v8540 = vadd.f32 %v8068, %v8473
      %v8541 = vadd.f32 %v8069, %v8476
      %v8542 = vadd.f32 %v8070, %v8478
      %v8543 = vadd.f32 %v8071, %v8481
      %v8544 = vadd.f32 %v8072, %v8483
      %v8545 = vadd.f32 %v8073, %v8486
      %v8546 = vadd.f32 %v8074, %v8488
      %v8547 = vadd.f32 %v8075, %v8491
      %v8548 = vadd.f32 %v8076, %v8493
      %v8549 = vadd.f32 %v8077, %v8496
      %v8550 = vadd.f32 %v8078, %v8498
      %v8551 = vadd.f32 %v8079, %v8501
      %v8552 = vadd.f32 %v8080, %v8503
      %v8553 = vadd.f32 %v8081, %v8506
      %v8554 = vadd.f32 %v8082, %v8508
      %v8555 = vadd.f32 %v8083, %v8511
      %v8556 = vadd.f32 %v8084, %v8513
      %v8557 = vadd.f32 %v8085, %v8516
      %v8558 = vadd.f32 %v8086, %v8518
      %v8559 = vadd.f32 %v8087, %v8521
      %v8560 = vadd.f32 %v8088, %v8523
      %8561 = vst.msk [vmem:[#allocation4] sm:$0xff] %vm692, %v8525
      %8562 = vst.msk [vmem:[#allocation4 + $0x8] sm:$0xff] %vm692, %v8526
      %8563 = vst.msk [vmem:[#allocation4 + $0x10] sm:$0xff] %vm692, %v8527
      %8564 = vst.msk [vmem:[#allocation4 + $0x18] sm:$0xff] %vm692, %v8528
      %8565 = vst.msk [vmem:[#allocation4 + $0x20] sm:$0xff] %vm692, %v8529
      %8566 = vst.msk [vmem:[#allocation4 + $0x28] sm:$0xff] %vm692, %v8530
      %8567 = vst.msk [vmem:[#allocation4 + $0x30] sm:$0xff] %vm692, %v8531
      %8568 = vst.msk [vmem:[#allocation4 + $0x38] sm:$0xff] %vm692, %v8532
      %8569 = vst.msk [vmem:[#allocation4 + $0x40] sm:$0xff] %vm692, %v8533
      %8570 = vst.msk [vmem:[#allocation4 + $0x48] sm:$0xff] %vm692, %v8534
      %8571 = vst.msk [vmem:[#allocation4 + $0x50] sm:$0xff] %vm692, %v8535
      %8572 = vst.msk [vmem:[#allocation4 + $0x58] sm:$0xff] %vm692, %v8536
      %8573 = vst.msk [vmem:[#allocation4 + $0x60] sm:$0xff] %vm692, %v8537
      %8574 = vst.msk [vmem:[#allocation4 + $0x68] sm:$0xff] %vm692, %v8538
      %8575 = vst.msk [vmem:[#allocation4 + $0x70] sm:$0xff] %vm692, %v8539
      %8576 = vst.msk [vmem:[#allocation4 + $0x78] sm:$0xff] %vm692, %v8540
      %8577 = vst.msk [vmem:[#allocation4 + $0x80] sm:$0xff] %vm692, %v8541
      %8578 = vst.msk [vmem:[#allocation4 + $0x88] sm:$0xff] %vm692, %v8542
      %8579 = vst.msk [vmem:[#allocation4 + $0x90] sm:$0xff] %vm692, %v8543
      %8580 = vst.msk [vmem:[#allocation4 + $0x98] sm:$0xff] %vm692, %v8544
      %8581 = vst.msk [vmem:[#allocation4 + $0xa0] sm:$0xff] %vm692, %v8545
      %8582 = vst.msk [vmem:[#allocation4 + $0xa8] sm:$0xff] %vm692, %v8546
      %8583 = vst.msk [vmem:[#allocation4 + $0xb0] sm:$0xff] %vm692, %v8547
      %8584 = vst.msk [vmem:[#allocation4 + $0xb8] sm:$0xff] %vm692, %v8548
      %8585 = vst.msk [vmem:[#allocation4 + $0xc0] sm:$0xff] %vm692, %v8549
      %8586 = vst.msk [vmem:[#allocation4 + $0xc8] sm:$0xff] %vm692, %v8550
      %8587 = vst.msk [vmem:[#allocation4 + $0xd0] sm:$0xff] %vm692, %v8551
      %8588 = vst.msk [vmem:[#allocation4 + $0xd8] sm:$0xff] %vm692, %v8552
      %8589 = vst.msk [vmem:[#allocation4 + $0xe0] sm:$0xff] %vm692, %v8553
      %8590 = vst.msk [vmem:[#allocation4 + $0xe8] sm:$0xff] %vm692, %v8554
      %8591 = vst.msk [vmem:[#allocation4 + $0xf0] sm:$0xff] %vm692, %v8555
      %8592 = vst.msk [vmem:[#allocation4 + $0xf8] sm:$0xff] %vm692, %v8556
      %8593 = vst.msk [vmem:[#allocation4 + $0x100] sm:$0xff] %vm692, %v8557
      %8594 = vst.msk [vmem:[#allocation4 + $0x108] sm:$0xff] %vm692, %v8558
      %8595 = vst.msk [vmem:[#allocation4 + $0x110] sm:$0xff] %vm692, %v8559
      %8596 = vst.msk [vmem:[#allocation4 + $0x118] sm:$0xff] %vm692, %v8560
      %v8597 = vld [vmem:[#allocation4] sm:$0xff]
      %v8598 = vld [vmem:[#allocation4 + $0x8] sm:$0xff]
      %v8599 = vld [vmem:[#allocation4 + $0x10] sm:$0xff]
      %v8600 = vld [vmem:[#allocation4 + $0x18] sm:$0xff]
      %v8601 = vld [vmem:[#allocation4 + $0x20] sm:$0xff]
      %v8602 = vld [vmem:[#allocation4 + $0x28] sm:$0xff]
      %v8603 = vld [vmem:[#allocation4 + $0x30] sm:$0xff]
      %v8604 = vld [vmem:[#allocation4 + $0x38] sm:$0xff]
      %v8605 = vld [vmem:[#allocation4 + $0x40] sm:$0xff]
      %v8606 = vld [vmem:[#allocation4 + $0x48] sm:$0xff]
      %v8607 = vld [vmem:[#allocation4 + $0x50] sm:$0xff]
      %v8608 = vld [vmem:[#allocation4 + $0x58] sm:$0xff]
      %v8609 = vld [vmem:[#allocation4 + $0x60] sm:$0xff]
      %v8610 = vld [vmem:[#allocation4 + $0x68] sm:$0xff]
      %v8611 = vld [vmem:[#allocation4 + $0x70] sm:$0xff]
      %v8612 = vld [vmem:[#allocation4 + $0x78] sm:$0xff]
      %v8613 = vld [vmem:[#allocation4 + $0x80] sm:$0xff]
      %v8614 = vld [vmem:[#allocation4 + $0x88] sm:$0xff]
      %v8615 = vld [vmem:[#allocation4 + $0x90] sm:$0xff]
      %v8616 = vld [vmem:[#allocation4 + $0x98] sm:$0xff]
      %v8617 = vld [vmem:[#allocation4 + $0xa0] sm:$0xff]
      %v8618 = vld [vmem:[#allocation4 + $0xa8] sm:$0xff]
      %v8619 = vld [vmem:[#allocation4 + $0xb0] sm:$0xff]
      %v8620 = vld [vmem:[#allocation4 + $0xb8] sm:$0xff]
      %v8621 = vld [vmem:[#allocation4 + $0xc0] sm:$0xff]
      %v8622 = vld [vmem:[#allocation4 + $0xc8] sm:$0xff]
      %v8623 = vld [vmem:[#allocation4 + $0xd0] sm:$0xff]
      %v8624 = vld [vmem:[#allocation4 + $0xd8] sm:$0xff]
      %v8625 = vld [vmem:[#allocation4 + $0xe0] sm:$0xff]
      %v8626 = vld [vmem:[#allocation4 + $0xe8] sm:$0xff]
      %v8627 = vld [vmem:[#allocation4 + $0xf0] sm:$0xff]
      %v8628 = vld [vmem:[#allocation4 + $0xf8] sm:$0xff]
      %v8629 = vld [vmem:[#allocation4 + $0x100] sm:$0xff]
      %v8630 = vld [vmem:[#allocation4 + $0x108] sm:$0xff]
      %v8631 = vld [vmem:[#allocation4 + $0x110] sm:$0xff]
      %v8632 = vld [vmem:[#allocation4 + $0x118] sm:$0xff]
      %v8633 = vld [vmem:[#allocation3 + $0x18] sm:$0xe]
      %v8634 = vld [vmem:[#allocation3 + $0x1c] sm:$0xf]
      %v8635 = vld [vmem:[#allocation3 + $0x20] sm:$0xf]
      %v8636 = vld [vmem:[#allocation3 + $0x24] sm:$0xf]
      %v8637 = vld [vmem:[#allocation3 + $0x28] sm:$0xf]
      %v8638 = vld [vmem:[#allocation3 + $0x2c] sm:$0xf]
      %v8639 = vld [vmem:[#allocation3 + $0x30] sm:$0xf]
      %v8640 = vld [vmem:[#allocation3 + $0x34] sm:$0xf]
      %v8641 = vld [vmem:[#allocation3 + $0x38] sm:$0xf]
      %v8642 = vld [vmem:[#allocation3 + $0x3c] sm:$0xf]
      %v8643 = vld [vmem:[#allocation3 + $0x40] sm:$0xf]
      %v8644 = vld [vmem:[#allocation3 + $0x44] sm:$0xf]
      %v8645 = vld [vmem:[#allocation3 + $0x48] sm:$0xf]
      %v8646 = vld [vmem:[#allocation3 + $0x4c] sm:$0xf]
      %v8647 = vld [vmem:[#allocation3 + $0x50] sm:$0xf]
      %v8648 = vld [vmem:[#allocation3 + $0x54] sm:$0xf]
      %v8649 = vld [vmem:[#allocation3 + $0x58] sm:$0xf]
      %v8650 = vld [vmem:[#allocation3 + $0x5c] sm:$0xf]
      %v8651 = vld [vmem:[#allocation3 + $0x60] sm:$0xf]
      %v8652 = vld [vmem:[#allocation3 + $0x64] sm:$0xf]
      %v8653 = vld [vmem:[#allocation3 + $0x68] sm:$0xf]
      %v8654 = vld [vmem:[#allocation3 + $0x6c] sm:$0xf]
      %v8655 = vld [vmem:[#allocation3 + $0x70] sm:$0xf]
      %v8656 = vld [vmem:[#allocation3 + $0x74] sm:$0xf]
      %v8657 = vld [vmem:[#allocation3 + $0x78] sm:$0xf]
      %v8658 = vld [vmem:[#allocation3 + $0x7c] sm:$0xf]
      %v8659 = vld [vmem:[#allocation3 + $0x80] sm:$0xf]
      %v8660 = vld [vmem:[#allocation3 + $0x84] sm:$0xf]
      %v8661 = vld [vmem:[#allocation3 + $0x88] sm:$0xf]
      %v8662 = vld [vmem:[#allocation3 + $0x8c] sm:$0xf]
      %v8663 = vld [vmem:[#allocation3 + $0x90] sm:$0xf]
      %v8664 = vld [vmem:[#allocation3 + $0x94] sm:$0xf]
      %v8665 = vld [vmem:[#allocation3 + $0x98] sm:$0xf]
      %v8666 = vld [vmem:[#allocation3 + $0x9c] sm:$0xf]
      %v8667 = vld [vmem:[#allocation3 + $0xa0] sm:$0xf]
      %v8668 = vld [vmem:[#allocation3 + $0xa4] sm:$0xf]
      %v8669 = vld [vmem:[#allocation3 + $0xa8] sm:$0x1]
      %s8670 = scalar_lea.vmem %s4, 28
      %v8671 = vld [vmem:[%s8670] sm:$0xf]
      %v8709 = vunpack.c.l.b16 %v8633
      %v8710 = vunpack.c.l.b16 %v8634
      %v8711 = vunpack.c.l.b16 %v8635
      %v8712 = vunpack.c.l.b16 %v8636
      %v8713 = vunpack.c.l.b16 %v8637
      %v8714 = vunpack.c.l.b16 %v8638
      %v8715 = vunpack.c.l.b16 %v8639
      %v8716 = vunpack.c.l.b16 %v8640
      %v8717 = vunpack.c.l.b16 %v8641
      %v8718 = vunpack.c.l.b16 %v8642
      %v8719 = vunpack.c.l.b16 %v8643
      %v8720 = vunpack.c.l.b16 %v8644
      %v8721 = vunpack.c.l.b16 %v8645
      %v8722 = vunpack.c.l.b16 %v8646
      %v8723 = vunpack.c.l.b16 %v8647
      %v8724 = vunpack.c.l.b16 %v8648
      %v8725 = vunpack.c.l.b16 %v8649
      %v8726 = vunpack.c.l.b16 %v8650
      %v8727 = vunpack.c.l.b16 %v8651
      %v8728 = vunpack.c.l.b16 %v8652
      %v8729 = vunpack.c.l.b16 %v8653
      %v8730 = vunpack.c.l.b16 %v8654
      %v8731 = vunpack.c.l.b16 %v8655
      %v8732 = vunpack.c.l.b16 %v8656
      %v8733 = vunpack.c.l.b16 %v8657
      %v8734 = vunpack.c.l.b16 %v8658
      %v8735 = vunpack.c.l.b16 %v8659
      %v8736 = vunpack.c.l.b16 %v8660
      %v8737 = vunpack.c.l.b16 %v8661
      %v8738 = vunpack.c.l.b16 %v8662
      %v8739 = vunpack.c.l.b16 %v8663
      %v8740 = vunpack.c.l.b16 %v8664
      %v8741 = vunpack.c.l.b16 %v8665
      %v8742 = vunpack.c.l.b16 %v8666
      %v8743 = vunpack.c.l.b16 %v8667
      %v8744 = vunpack.c.l.b16 %v8668
      %v8745 = vunpack.c.l.b16 %v8669
      %v8746 = vpack.c.b16 %v8710, %v8709
      %v8747 = vpack.c.b16 %v8712, %v8711
      %v8748 = vpack.c.b16 %v8714, %v8713
      %v8749 = vpack.c.b16 %v8716, %v8715
      %v8750 = vpack.c.b16 %v8718, %v8717
      %v8751 = vpack.c.b16 %v8720, %v8719
      %v8752 = vpack.c.b16 %v8722, %v8721
      %v8753 = vpack.c.b16 %v8724, %v8723
      %v8754 = vpack.c.b16 %v8726, %v8725
      %v8755 = vpack.c.b16 %v8728, %v8727
      %v8756 = vpack.c.b16 %v8730, %v8729
      %v8757 = vpack.c.b16 %v8732, %v8731
      %v8758 = vpack.c.b16 %v8734, %v8733
      %v8759 = vpack.c.b16 %v8736, %v8735
      %v8760 = vpack.c.b16 %v8738, %v8737
      %v8761 = vpack.c.b16 %v8740, %v8739
      %v8762 = vpack.c.b16 %v8742, %v8741
      %v8763 = vpack.c.b16 %v8744, %v8743
      %v8764 = vpack.c.b16 %v8745, %v8745
      %v8765 = vrot.slane %v8746, 1
      %v8766 = vrot.slane %v8747, 1
      %v8767 = vsel %vm1442, %v8765, %v8766
      %v8768 = vrot.slane %v8748, 1
      %v8769 = vsel %vm1442, %v8766, %v8768
      %v8770 = vrot.slane %v8749, 1
      %v8771 = vsel %vm1442, %v8768, %v8770
      %v8772 = vrot.slane %v8750, 1
      %v8773 = vsel %vm1442, %v8770, %v8772
      %v8774 = vrot.slane %v8751, 1
      %v8775 = vsel %vm1442, %v8772, %v8774
      %v8776 = vrot.slane %v8752, 1
      %v8777 = vsel %vm1442, %v8774, %v8776
      %v8778 = vrot.slane %v8753, 1
      %v8779 = vsel %vm1442, %v8776, %v8778
      %v8780 = vrot.slane %v8754, 1
      %v8781 = vsel %vm1442, %v8778, %v8780
      %v8782 = vrot.slane %v8755, 1
      %v8783 = vsel %vm1442, %v8780, %v8782
      %v8784 = vrot.slane %v8756, 1
      %v8785 = vsel %vm1442, %v8782, %v8784
      %v8786 = vrot.slane %v8757, 1
      %v8787 = vsel %vm1442, %v8784, %v8786
      %v8788 = vrot.slane %v8758, 1
      %v8789 = vsel %vm1442, %v8786, %v8788
      %v8790 = vrot.slane %v8759, 1
      %v8791 = vsel %vm1442, %v8788, %v8790
      %v8792 = vrot.slane %v8760, 1
      %v8793 = vsel %vm1442, %v8790, %v8792
      %v8794 = vrot.slane %v8761, 1
      %v8795 = vsel %vm1442, %v8792, %v8794
      %v8796 = vrot.slane %v8762, 1
      %v8797 = vsel %vm1442, %v8794, %v8796
      %v8798 = vrot.slane %v8763, 1
      %v8799 = vsel %vm1442, %v8796, %v8798
      %v8800 = vrot.slane %v8764, 1
      %v8801 = vsel %vm1442, %v8798, %v8800
      %v8803 = vsel %vm692, %v8767, 0
      %v8806 = vsel %vm692, %v8769, 0
      %v8809 = vsel %vm692, %v8771, 0
      %v8812 = vsel %vm692, %v8773, 0
      %v8815 = vsel %vm692, %v8775, 0
      %v8818 = vsel %vm692, %v8777, 0
      %v8821 = vsel %vm692, %v8779, 0
      %v8824 = vsel %vm692, %v8781, 0
      %v8827 = vsel %vm692, %v8783, 0
      %v8830 = vsel %vm692, %v8785, 0
      %v8833 = vsel %vm692, %v8787, 0
      %v8836 = vsel %vm692, %v8789, 0
      %v8839 = vsel %vm692, %v8791, 0
      %v8842 = vsel %vm692, %v8793, 0
      %v8845 = vsel %vm692, %v8795, 0
      %v8848 = vsel %vm692, %v8797, 0
      %v8851 = vsel %vm692, %v8799, 0
      %v8854 = vsel %vm692, %v8801, 0
      %v8857 = vsel %vm5412, %v8671, 0
      %8859 = vmatpush.bf16.msra.mxu0 0
      %8860 = vmatpush.bf16.msra.mxu0 0
      %8861 = vmatpush.bf16.msra.mxu0 0
      %8862 = vmatpush.bf16.msra.mxu0 0
      %8863 = vmatpush.bf16.msra.mxu0 0
      %8864 = vmatpush.bf16.msra.mxu0 0
      %8865 = vmatpush.bf16.msra.mxu0 0
      %8866 = vmatpush.bf16.msra.mxu0 %v8857
      %8867 = vmatmul.bf16.gmra.mxu0 %v8803
      %v8868 = vpop.f32.mrf.mxu0
      %v8869 = vadd.f32 0.0, %v8868
      %v8870 = vpop.f32.mrf.mxu0
      %v8871 = vadd.f32 0.0, %v8870
      %8872 = vmatmul.bf16.gmra.mxu0 %v8806
      %v8873 = vpop.f32.mrf.mxu0
      %v8874 = vadd.f32 0.0, %v8873
      %v8875 = vpop.f32.mrf.mxu0
      %v8876 = vadd.f32 0.0, %v8875
      %8877 = vmatmul.bf16.gmra.mxu0 %v8809
      %v8878 = vpop.f32.mrf.mxu0
      %v8879 = vadd.f32 0.0, %v8878
      %v8880 = vpop.f32.mrf.mxu0
      %v8881 = vadd.f32 0.0, %v8880
      %8882 = vmatmul.bf16.gmra.mxu0 %v8812
      %v8883 = vpop.f32.mrf.mxu0
      %v8884 = vadd.f32 0.0, %v8883
      %v8885 = vpop.f32.mrf.mxu0
      %v8886 = vadd.f32 0.0, %v8885
      %8887 = vmatmul.bf16.gmra.mxu0 %v8815
      %v8888 = vpop.f32.mrf.mxu0
      %v8889 = vadd.f32 0.0, %v8888
      %v8890 = vpop.f32.mrf.mxu0
      %v8891 = vadd.f32 0.0, %v8890
      %8892 = vmatmul.bf16.gmra.mxu0 %v8818
      %v8893 = vpop.f32.mrf.mxu0
      %v8894 = vadd.f32 0.0, %v8893
      %v8895 = vpop.f32.mrf.mxu0
      %v8896 = vadd.f32 0.0, %v8895
      %8897 = vmatmul.bf16.gmra.mxu0 %v8821
      %v8898 = vpop.f32.mrf.mxu0
      %v8899 = vadd.f32 0.0, %v8898
      %v8900 = vpop.f32.mrf.mxu0
      %v8901 = vadd.f32 0.0, %v8900
      %8902 = vmatmul.bf16.gmra.mxu0 %v8824
      %v8903 = vpop.f32.mrf.mxu0
      %v8904 = vadd.f32 0.0, %v8903
      %v8905 = vpop.f32.mrf.mxu0
      %v8906 = vadd.f32 0.0, %v8905
      %8907 = vmatmul.bf16.gmra.mxu0 %v8827
      %v8908 = vpop.f32.mrf.mxu0
      %v8909 = vadd.f32 0.0, %v8908
      %v8910 = vpop.f32.mrf.mxu0
      %v8911 = vadd.f32 0.0, %v8910
      %8912 = vmatmul.bf16.gmra.mxu0 %v8830
      %v8913 = vpop.f32.mrf.mxu0
      %v8914 = vadd.f32 0.0, %v8913
      %v8915 = vpop.f32.mrf.mxu0
      %v8916 = vadd.f32 0.0, %v8915
      %8917 = vmatmul.bf16.gmra.mxu0 %v8833
      %v8918 = vpop.f32.mrf.mxu0
      %v8919 = vadd.f32 0.0, %v8918
      %v8920 = vpop.f32.mrf.mxu0
      %v8921 = vadd.f32 0.0, %v8920
      %8922 = vmatmul.bf16.gmra.mxu0 %v8836
      %v8923 = vpop.f32.mrf.mxu0
      %v8924 = vadd.f32 0.0, %v8923
      %v8925 = vpop.f32.mrf.mxu0
      %v8926 = vadd.f32 0.0, %v8925
      %8927 = vmatmul.bf16.gmra.mxu0 %v8839
      %v8928 = vpop.f32.mrf.mxu0
      %v8929 = vadd.f32 0.0, %v8928
      %v8930 = vpop.f32.mrf.mxu0
      %v8931 = vadd.f32 0.0, %v8930
      %8932 = vmatmul.bf16.gmra.mxu0 %v8842
      %v8933 = vpop.f32.mrf.mxu0
      %v8934 = vadd.f32 0.0, %v8933
      %v8935 = vpop.f32.mrf.mxu0
      %v8936 = vadd.f32 0.0, %v8935
      %8937 = vmatmul.bf16.gmra.mxu0 %v8845
      %v8938 = vpop.f32.mrf.mxu0
      %v8939 = vadd.f32 0.0, %v8938
      %v8940 = vpop.f32.mrf.mxu0
      %v8941 = vadd.f32 0.0, %v8940
      %8942 = vmatmul.bf16.gmra.mxu0 %v8848
      %v8943 = vpop.f32.mrf.mxu0
      %v8944 = vadd.f32 0.0, %v8943
      %v8945 = vpop.f32.mrf.mxu0
      %v8946 = vadd.f32 0.0, %v8945
      %8947 = vmatmul.bf16.gmra.mxu0 %v8851
      %v8948 = vpop.f32.mrf.mxu0
      %v8949 = vadd.f32 0.0, %v8948
      %v8950 = vpop.f32.mrf.mxu0
      %v8951 = vadd.f32 0.0, %v8950
      %8952 = vmatmul.bf16.gmra.mxu0 %v8854
      %v8953 = vpop.f32.mrf.mxu0
      %v8954 = vadd.f32 0.0, %v8953
      %v8955 = vpop.f32.mrf.mxu0
      %v8956 = vadd.f32 0.0, %v8955
      %8957 = vdwg.mxu0
      %v8958 = vadd.f32 %v8597, %v8869
      %v8959 = vadd.f32 %v8598, %v8871
      %v8960 = vadd.f32 %v8599, %v8874
      %v8961 = vadd.f32 %v8600, %v8876
      %v8962 = vadd.f32 %v8601, %v8879
      %v8963 = vadd.f32 %v8602, %v8881
      %v8964 = vadd.f32 %v8603, %v8884
      %v8965 = vadd.f32 %v8604, %v8886
      %v8966 = vadd.f32 %v8605, %v8889
      %v8967 = vadd.f32 %v8606, %v8891
      %v8968 = vadd.f32 %v8607, %v8894
      %v8969 = vadd.f32 %v8608, %v8896
      %v8970 = vadd.f32 %v8609, %v8899
      %v8971 = vadd.f32 %v8610, %v8901
      %v8972 = vadd.f32 %v8611, %v8904
      %v8973 = vadd.f32 %v8612, %v8906
      %v8974 = vadd.f32 %v8613, %v8909
      %v8975 = vadd.f32 %v8614, %v8911
      %v8976 = vadd.f32 %v8615, %v8914
      %v8977 = vadd.f32 %v8616, %v8916
      %v8978 = vadd.f32 %v8617, %v8919
      %v8979 = vadd.f32 %v8618, %v8921
      %v8980 = vadd.f32 %v8619, %v8924
      %v8981 = vadd.f32 %v8620, %v8926
      %v8982 = vadd.f32 %v8621, %v8929
      %v8983 = vadd.f32 %v8622, %v8931
      %v8984 = vadd.f32 %v8623, %v8934
      %v8985 = vadd.f32 %v8624, %v8936
      %v8986 = vadd.f32 %v8625, %v8939
      %v8987 = vadd.f32 %v8626, %v8941
      %v8988 = vadd.f32 %v8627, %v8944
      %v8989 = vadd.f32 %v8628, %v8946
      %v8990 = vadd.f32 %v8629, %v8949
      %v8991 = vadd.f32 %v8630, %v8951
      %v8992 = vadd.f32 %v8631, %v8954
      %v8993 = vadd.f32 %v8632, %v8956
      %8994 = vst.msk [vmem:[#allocation4] sm:$0xff] %vm692, %v8958
      %8995 = vst.msk [vmem:[#allocation4 + $0x8] sm:$0xff] %vm692, %v8959
      %8996 = vst.msk [vmem:[#allocation4 + $0x10] sm:$0xff] %vm692, %v8960
      %8997 = vst.msk [vmem:[#allocation4 + $0x18] sm:$0xff] %vm692, %v8961
      %8998 = vst.msk [vmem:[#allocation4 + $0x20] sm:$0xff] %vm692, %v8962
      %8999 = vst.msk [vmem:[#allocation4 + $0x28] sm:$0xff] %vm692, %v8963
      %9000 = vst.msk [vmem:[#allocation4 + $0x30] sm:$0xff] %vm692, %v8964
      %9001 = vst.msk [vmem:[#allocation4 + $0x38] sm:$0xff] %vm692, %v8965
      %9002 = vst.msk [vmem:[#allocation4 + $0x40] sm:$0xff] %vm692, %v8966
      %9003 = vst.msk [vmem:[#allocation4 + $0x48] sm:$0xff] %vm692, %v8967
      %9004 = vst.msk [vmem:[#allocation4 + $0x50] sm:$0xff] %vm692, %v8968
      %9005 = vst.msk [vmem:[#allocation4 + $0x58] sm:$0xff] %vm692, %v8969
      %9006 = vst.msk [vmem:[#allocation4 + $0x60] sm:$0xff] %vm692, %v8970
      %9007 = vst.msk [vmem:[#allocation4 + $0x68] sm:$0xff] %vm692, %v8971
      %9008 = vst.msk [vmem:[#allocation4 + $0x70] sm:$0xff] %vm692, %v8972
      %9009 = vst.msk [vmem:[#allocation4 + $0x78] sm:$0xff] %vm692, %v8973
      %9010 = vst.msk [vmem:[#allocation4 + $0x80] sm:$0xff] %vm692, %v8974
      %9011 = vst.msk [vmem:[#allocation4 + $0x88] sm:$0xff] %vm692, %v8975
      %9012 = vst.msk [vmem:[#allocation4 + $0x90] sm:$0xff] %vm692, %v8976
      %9013 = vst.msk [vmem:[#allocation4 + $0x98] sm:$0xff] %vm692, %v8977
      %9014 = vst.msk [vmem:[#allocation4 + $0xa0] sm:$0xff] %vm692, %v8978
      %9015 = vst.msk [vmem:[#allocation4 + $0xa8] sm:$0xff] %vm692, %v8979
      %9016 = vst.msk [vmem:[#allocation4 + $0xb0] sm:$0xff] %vm692, %v8980
      %9017 = vst.msk [vmem:[#allocation4 + $0xb8] sm:$0xff] %vm692, %v8981
      %9018 = vst.msk [vmem:[#allocation4 + $0xc0] sm:$0xff] %vm692, %v8982
      %9019 = vst.msk [vmem:[#allocation4 + $0xc8] sm:$0xff] %vm692, %v8983
      %9020 = vst.msk [vmem:[#allocation4 + $0xd0] sm:$0xff] %vm692, %v8984
      %9021 = vst.msk [vmem:[#allocation4 + $0xd8] sm:$0xff] %vm692, %v8985
      %9022 = vst.msk [vmem:[#allocation4 + $0xe0] sm:$0xff] %vm692, %v8986
      %9023 = vst.msk [vmem:[#allocation4 + $0xe8] sm:$0xff] %vm692, %v8987
      %9024 = vst.msk [vmem:[#allocation4 + $0xf0] sm:$0xff] %vm692, %v8988
      %9025 = vst.msk [vmem:[#allocation4 + $0xf8] sm:$0xff] %vm692, %v8989
      %9026 = vst.msk [vmem:[#allocation4 + $0x100] sm:$0xff] %vm692, %v8990
      %9027 = vst.msk [vmem:[#allocation4 + $0x108] sm:$0xff] %vm692, %v8991
      %9028 = vst.msk [vmem:[#allocation4 + $0x110] sm:$0xff] %vm692, %v8992
      %9029 = vst.msk [vmem:[#allocation4 + $0x118] sm:$0xff] %vm692, %v8993
      %v9030 = vld [vmem:[#allocation4] sm:$0xff]
      %v9031 = vld [vmem:[#allocation4 + $0x8] sm:$0xff]
      %v9032 = vld [vmem:[#allocation4 + $0x10] sm:$0xff]
      %v9033 = vld [vmem:[#allocation4 + $0x18] sm:$0xff]
      %v9034 = vld [vmem:[#allocation4 + $0x20] sm:$0xff]
      %v9035 = vld [vmem:[#allocation4 + $0x28] sm:$0xff]
      %v9036 = vld [vmem:[#allocation4 + $0x30] sm:$0xff]
      %v9037 = vld [vmem:[#allocation4 + $0x38] sm:$0xff]
      %v9038 = vld [vmem:[#allocation4 + $0x40] sm:$0xff]
      %v9039 = vld [vmem:[#allocation4 + $0x48] sm:$0xff]
      %v9040 = vld [vmem:[#allocation4 + $0x50] sm:$0xff]
      %v9041 = vld [vmem:[#allocation4 + $0x58] sm:$0xff]
      %v9042 = vld [vmem:[#allocation4 + $0x60] sm:$0xff]
      %v9043 = vld [vmem:[#allocation4 + $0x68] sm:$0xff]
      %v9044 = vld [vmem:[#allocation4 + $0x70] sm:$0xff]
      %v9045 = vld [vmem:[#allocation4 + $0x78] sm:$0xff]
      %v9046 = vld [vmem:[#allocation4 + $0x80] sm:$0xff]
      %v9047 = vld [vmem:[#allocation4 + $0x88] sm:$0xff]
      %v9048 = vld [vmem:[#allocation4 + $0x90] sm:$0xff]
      %v9049 = vld [vmem:[#allocation4 + $0x98] sm:$0xff]
      %v9050 = vld [vmem:[#allocation4 + $0xa0] sm:$0xff]
      %v9051 = vld [vmem:[#allocation4 + $0xa8] sm:$0xff]
      %v9052 = vld [vmem:[#allocation4 + $0xb0] sm:$0xff]
      %v9053 = vld [vmem:[#allocation4 + $0xb8] sm:$0xff]
      %v9054 = vld [vmem:[#allocation4 + $0xc0] sm:$0xff]
      %v9055 = vld [vmem:[#allocation4 + $0xc8] sm:$0xff]
      %v9056 = vld [vmem:[#allocation4 + $0xd0] sm:$0xff]
      %v9057 = vld [vmem:[#allocation4 + $0xd8] sm:$0xff]
      %v9058 = vld [vmem:[#allocation4 + $0xe0] sm:$0xff]
      %v9059 = vld [vmem:[#allocation4 + $0xe8] sm:$0xff]
      %v9060 = vld [vmem:[#allocation4 + $0xf0] sm:$0xff]
      %v9061 = vld [vmem:[#allocation4 + $0xf8] sm:$0xff]
      %v9062 = vld [vmem:[#allocation4 + $0x100] sm:$0xff]
      %v9063 = vld [vmem:[#allocation4 + $0x108] sm:$0xff]
      %v9064 = vld [vmem:[#allocation4 + $0x110] sm:$0xff]
      %v9065 = vld [vmem:[#allocation4 + $0x118] sm:$0xff]
      %v9066 = vld [vmem:[#allocation3 + $0x18] sm:$0xe]
      %v9067 = vld [vmem:[#allocation3 + $0x1c] sm:$0xf]
      %v9068 = vld [vmem:[#allocation3 + $0x20] sm:$0xf]
      %v9069 = vld [vmem:[#allocation3 + $0x24] sm:$0xf]
      %v9070 = vld [vmem:[#allocation3 + $0x28] sm:$0xf]
      %v9071 = vld [vmem:[#allocation3 + $0x2c] sm:$0xf]
      %v9072 = vld [vmem:[#allocation3 + $0x30] sm:$0xf]
      %v9073 = vld [vmem:[#allocation3 + $0x34] sm:$0xf]
      %v9074 = vld [vmem:[#allocation3 + $0x38] sm:$0xf]
      %v9075 = vld [vmem:[#allocation3 + $0x3c] sm:$0xf]
      %v9076 = vld [vmem:[#allocation3 + $0x40] sm:$0xf]
      %v9077 = vld [vmem:[#allocation3 + $0x44] sm:$0xf]
      %v9078 = vld [vmem:[#allocation3 + $0x48] sm:$0xf]
      %v9079 = vld [vmem:[#allocation3 + $0x4c] sm:$0xf]
      %v9080 = vld [vmem:[#allocation3 + $0x50] sm:$0xf]
      %v9081 = vld [vmem:[#allocation3 + $0x54] sm:$0xf]
      %v9082 = vld [vmem:[#allocation3 + $0x58] sm:$0xf]
      %v9083 = vld [vmem:[#allocation3 + $0x5c] sm:$0xf]
      %v9084 = vld [vmem:[#allocation3 + $0x60] sm:$0xf]
      %v9085 = vld [vmem:[#allocation3 + $0x64] sm:$0xf]
      %v9086 = vld [vmem:[#allocation3 + $0x68] sm:$0xf]
      %v9087 = vld [vmem:[#allocation3 + $0x6c] sm:$0xf]
      %v9088 = vld [vmem:[#allocation3 + $0x70] sm:$0xf]
      %v9089 = vld [vmem:[#allocation3 + $0x74] sm:$0xf]
      %v9090 = vld [vmem:[#allocation3 + $0x78] sm:$0xf]
      %v9091 = vld [vmem:[#allocation3 + $0x7c] sm:$0xf]
      %v9092 = vld [vmem:[#allocation3 + $0x80] sm:$0xf]
      %v9093 = vld [vmem:[#allocation3 + $0x84] sm:$0xf]
      %v9094 = vld [vmem:[#allocation3 + $0x88] sm:$0xf]
      %v9095 = vld [vmem:[#allocation3 + $0x8c] sm:$0xf]
      %v9096 = vld [vmem:[#allocation3 + $0x90] sm:$0xf]
      %v9097 = vld [vmem:[#allocation3 + $0x94] sm:$0xf]
      %v9098 = vld [vmem:[#allocation3 + $0x98] sm:$0xf]
      %v9099 = vld [vmem:[#allocation3 + $0x9c] sm:$0xf]
      %v9100 = vld [vmem:[#allocation3 + $0xa0] sm:$0xf]
      %v9101 = vld [vmem:[#allocation3 + $0xa4] sm:$0xf]
      %v9102 = vld [vmem:[#allocation3 + $0xa8] sm:$0x3]
      %s9103 = scalar_lea.vmem %s4, 32
      %v9104 = vld [vmem:[%s9103] sm:$0xf]
      %v9142 = vunpack.c.l.b16 %v9066
      %v9143 = vunpack.c.l.b16 %v9067
      %v9144 = vunpack.c.l.b16 %v9068
      %v9145 = vunpack.c.l.b16 %v9069
      %v9146 = vunpack.c.l.b16 %v9070
      %v9147 = vunpack.c.l.b16 %v9071
      %v9148 = vunpack.c.l.b16 %v9072
      %v9149 = vunpack.c.l.b16 %v9073
      %v9150 = vunpack.c.l.b16 %v9074
      %v9151 = vunpack.c.l.b16 %v9075
      %v9152 = vunpack.c.l.b16 %v9076
      %v9153 = vunpack.c.l.b16 %v9077
      %v9154 = vunpack.c.l.b16 %v9078
      %v9155 = vunpack.c.l.b16 %v9079
      %v9156 = vunpack.c.l.b16 %v9080
      %v9157 = vunpack.c.l.b16 %v9081
      %v9158 = vunpack.c.l.b16 %v9082
      %v9159 = vunpack.c.l.b16 %v9083
      %v9160 = vunpack.c.l.b16 %v9084
      %v9161 = vunpack.c.l.b16 %v9085
      %v9162 = vunpack.c.l.b16 %v9086
      %v9163 = vunpack.c.l.b16 %v9087
      %v9164 = vunpack.c.l.b16 %v9088
      %v9165 = vunpack.c.l.b16 %v9089
      %v9166 = vunpack.c.l.b16 %v9090
      %v9167 = vunpack.c.l.b16 %v9091
      %v9168 = vunpack.c.l.b16 %v9092
      %v9169 = vunpack.c.l.b16 %v9093
      %v9170 = vunpack.c.l.b16 %v9094
      %v9171 = vunpack.c.l.b16 %v9095
      %v9172 = vunpack.c.l.b16 %v9096
      %v9173 = vunpack.c.l.b16 %v9097
      %v9174 = vunpack.c.l.b16 %v9098
      %v9175 = vunpack.c.l.b16 %v9099
      %v9176 = vunpack.c.l.b16 %v9100
      %v9177 = vunpack.c.l.b16 %v9101
      %v9178 = vunpack.c.l.b16 %v9102
      %v9179 = vpack.c.b16 %v9143, %v9142
      %v9180 = vpack.c.b16 %v9145, %v9144
      %v9181 = vpack.c.b16 %v9147, %v9146
      %v9182 = vpack.c.b16 %v9149, %v9148
      %v9183 = vpack.c.b16 %v9151, %v9150
      %v9184 = vpack.c.b16 %v9153, %v9152
      %v9185 = vpack.c.b16 %v9155, %v9154
      %v9186 = vpack.c.b16 %v9157, %v9156
      %v9187 = vpack.c.b16 %v9159, %v9158
      %v9188 = vpack.c.b16 %v9161, %v9160
      %v9189 = vpack.c.b16 %v9163, %v9162
      %v9190 = vpack.c.b16 %v9165, %v9164
      %v9191 = vpack.c.b16 %v9167, %v9166
      %v9192 = vpack.c.b16 %v9169, %v9168
      %v9193 = vpack.c.b16 %v9171, %v9170
      %v9194 = vpack.c.b16 %v9173, %v9172
      %v9195 = vpack.c.b16 %v9175, %v9174
      %v9196 = vpack.c.b16 %v9177, %v9176
      %v9197 = vpack.c.b16 %v9178, %v9178
      %v9199 = vshrl.u32 %v9179, 16
      %v9201 = vrot.slane %v9199, 1
      %v9202 = vshll.u32 %v9179, 16
      %v9204 = vrot.slane %v9202, 2
      %v9205 = vor.u32 %v9201, %v9204
      %v9207 = vshrl.u32 %v9180, 16
      %v9209 = vrot.slane %v9207, 1
      %v9210 = vshll.u32 %v9180, 16
      %v9212 = vrot.slane %v9210, 2
      %v9213 = vor.u32 %v9209, %v9212
      %v9214 = vsel %vm2309, %v9205, %v9213
      %v9216 = vshrl.u32 %v9181, 16
      %v9218 = vrot.slane %v9216, 1
      %v9219 = vshll.u32 %v9181, 16
      %v9221 = vrot.slane %v9219, 2
      %v9222 = vor.u32 %v9218, %v9221
      %v9223 = vsel %vm2309, %v9213, %v9222
      %v9225 = vshrl.u32 %v9182, 16
      %v9227 = vrot.slane %v9225, 1
      %v9228 = vshll.u32 %v9182, 16
      %v9230 = vrot.slane %v9228, 2
      %v9231 = vor.u32 %v9227, %v9230
      %v9232 = vsel %vm2309, %v9222, %v9231
      %v9234 = vshrl.u32 %v9183, 16
      %v9236 = vrot.slane %v9234, 1
      %v9237 = vshll.u32 %v9183, 16
      %v9239 = vrot.slane %v9237, 2
      %v9240 = vor.u32 %v9236, %v9239
      %v9241 = vsel %vm2309, %v9231, %v9240
      %v9243 = vshrl.u32 %v9184, 16
      %v9245 = vrot.slane %v9243, 1
      %v9246 = vshll.u32 %v9184, 16
      %v9248 = vrot.slane %v9246, 2
      %v9249 = vor.u32 %v9245, %v9248
      %v9250 = vsel %vm2309, %v9240, %v9249
      %v9252 = vshrl.u32 %v9185, 16
      %v9254 = vrot.slane %v9252, 1
      %v9255 = vshll.u32 %v9185, 16
      %v9257 = vrot.slane %v9255, 2
      %v9258 = vor.u32 %v9254, %v9257
      %v9259 = vsel %vm2309, %v9249, %v9258
      %v9261 = vshrl.u32 %v9186, 16
      %v9263 = vrot.slane %v9261, 1
      %v9264 = vshll.u32 %v9186, 16
      %v9266 = vrot.slane %v9264, 2
      %v9267 = vor.u32 %v9263, %v9266
      %v9268 = vsel %vm2309, %v9258, %v9267
      %v9270 = vshrl.u32 %v9187, 16
      %v9272 = vrot.slane %v9270, 1
      %v9273 = vshll.u32 %v9187, 16
      %v9275 = vrot.slane %v9273, 2
      %v9276 = vor.u32 %v9272, %v9275
      %v9277 = vsel %vm2309, %v9267, %v9276
      %v9279 = vshrl.u32 %v9188, 16
      %v9281 = vrot.slane %v9279, 1
      %v9282 = vshll.u32 %v9188, 16
      %v9284 = vrot.slane %v9282, 2
      %v9285 = vor.u32 %v9281, %v9284
      %v9286 = vsel %vm2309, %v9276, %v9285
      %v9288 = vshrl.u32 %v9189, 16
      %v9290 = vrot.slane %v9288, 1
      %v9291 = vshll.u32 %v9189, 16
      %v9293 = vrot.slane %v9291, 2
      %v9294 = vor.u32 %v9290, %v9293
      %v9295 = vsel %vm2309, %v9285, %v9294
      %v9297 = vshrl.u32 %v9190, 16
      %v9299 = vrot.slane %v9297, 1
      %v9300 = vshll.u32 %v9190, 16
      %v9302 = vrot.slane %v9300, 2
      %v9303 = vor.u32 %v9299, %v9302
      %v9304 = vsel %vm2309, %v9294, %v9303
      %v9306 = vshrl.u32 %v9191, 16
      %v9308 = vrot.slane %v9306, 1
      %v9309 = vshll.u32 %v9191, 16
      %v9311 = vrot.slane %v9309, 2
      %v9312 = vor.u32 %v9308, %v9311
      %v9313 = vsel %vm2309, %v9303, %v9312
      %v9315 = vshrl.u32 %v9192, 16
      %v9317 = vrot.slane %v9315, 1
      %v9318 = vshll.u32 %v9192, 16
      %v9320 = vrot.slane %v9318, 2
      %v9321 = vor.u32 %v9317, %v9320
      %v9322 = vsel %vm2309, %v9312, %v9321
      %v9324 = vshrl.u32 %v9193, 16
      %v9326 = vrot.slane %v9324, 1
      %v9327 = vshll.u32 %v9193, 16
      %v9329 = vrot.slane %v9327, 2
      %v9330 = vor.u32 %v9326, %v9329
      %v9331 = vsel %vm2309, %v9321, %v9330
      %v9333 = vshrl.u32 %v9194, 16
      %v9335 = vrot.slane %v9333, 1
      %v9336 = vshll.u32 %v9194, 16
      %v9338 = vrot.slane %v9336, 2
      %v9339 = vor.u32 %v9335, %v9338
      %v9340 = vsel %vm2309, %v9330, %v9339
      %v9342 = vshrl.u32 %v9195, 16
      %v9344 = vrot.slane %v9342, 1
      %v9345 = vshll.u32 %v9195, 16
      %v9347 = vrot.slane %v9345, 2
      %v9348 = vor.u32 %v9344, %v9347
      %v9349 = vsel %vm2309, %v9339, %v9348
      %v9351 = vshrl.u32 %v9196, 16
      %v9353 = vrot.slane %v9351, 1
      %v9354 = vshll.u32 %v9196, 16
      %v9356 = vrot.slane %v9354, 2
      %v9357 = vor.u32 %v9353, %v9356
      %v9358 = vsel %vm2309, %v9348, %v9357
      %v9360 = vshrl.u32 %v9197, 16
      %v9362 = vrot.slane %v9360, 1
      %v9363 = vshll.u32 %v9197, 16
      %v9365 = vrot.slane %v9363, 2
      %v9366 = vor.u32 %v9362, %v9365
      %v9367 = vsel %vm2309, %v9357, %v9366
      %v9369 = vsel %vm692, %v9214, 0
      %v9372 = vsel %vm692, %v9223, 0
      %v9375 = vsel %vm692, %v9232, 0
      %v9378 = vsel %vm692, %v9241, 0
      %v9381 = vsel %vm692, %v9250, 0
      %v9384 = vsel %vm692, %v9259, 0
      %v9387 = vsel %vm692, %v9268, 0
      %v9390 = vsel %vm692, %v9277, 0
      %v9393 = vsel %vm692, %v9286, 0
      %v9396 = vsel %vm692, %v9295, 0
      %v9399 = vsel %vm692, %v9304, 0
      %v9402 = vsel %vm692, %v9313, 0
      %v9405 = vsel %vm692, %v9322, 0
      %v9408 = vsel %vm692, %v9331, 0
      %v9411 = vsel %vm692, %v9340, 0
      %v9414 = vsel %vm692, %v9349, 0
      %v9417 = vsel %vm692, %v9358, 0
      %v9420 = vsel %vm692, %v9367, 0
      %v9423 = vsel %vm5412, %v9104, 0
      %9425 = vmatpush.bf16.msra.mxu0 0
      %9426 = vmatpush.bf16.msra.mxu0 0
      %9427 = vmatpush.bf16.msra.mxu0 0
      %9428 = vmatpush.bf16.msra.mxu0 0
      %9429 = vmatpush.bf16.msra.mxu0 0
      %9430 = vmatpush.bf16.msra.mxu0 0
      %9431 = vmatpush.bf16.msra.mxu0 0
      %9432 = vmatpush.bf16.msra.mxu0 %v9423
      %9433 = vmatmul.bf16.gmra.mxu0 %v9369
      %v9434 = vpop.f32.mrf.mxu0
      %v9435 = vadd.f32 0.0, %v9434
      %v9436 = vpop.f32.mrf.mxu0
      %v9437 = vadd.f32 0.0, %v9436
      %9438 = vmatmul.bf16.gmra.mxu0 %v9372
      %v9439 = vpop.f32.mrf.mxu0
      %v9440 = vadd.f32 0.0, %v9439
      %v9441 = vpop.f32.mrf.mxu0
      %v9442 = vadd.f32 0.0, %v9441
      %9443 = vmatmul.bf16.gmra.mxu0 %v9375
      %v9444 = vpop.f32.mrf.mxu0
      %v9445 = vadd.f32 0.0, %v9444
      %v9446 = vpop.f32.mrf.mxu0
      %v9447 = vadd.f32 0.0, %v9446
      %9448 = vmatmul.bf16.gmra.mxu0 %v9378
      %v9449 = vpop.f32.mrf.mxu0
      %v9450 = vadd.f32 0.0, %v9449
      %v9451 = vpop.f32.mrf.mxu0
      %v9452 = vadd.f32 0.0, %v9451
      %9453 = vmatmul.bf16.gmra.mxu0 %v9381
      %v9454 = vpop.f32.mrf.mxu0
      %v9455 = vadd.f32 0.0, %v9454
      %v9456 = vpop.f32.mrf.mxu0
      %v9457 = vadd.f32 0.0, %v9456
      %9458 = vmatmul.bf16.gmra.mxu0 %v9384
      %v9459 = vpop.f32.mrf.mxu0
      %v9460 = vadd.f32 0.0, %v9459
      %v9461 = vpop.f32.mrf.mxu0
      %v9462 = vadd.f32 0.0, %v9461
      %9463 = vmatmul.bf16.gmra.mxu0 %v9387
      %v9464 = vpop.f32.mrf.mxu0
      %v9465 = vadd.f32 0.0, %v9464
      %v9466 = vpop.f32.mrf.mxu0
      %v9467 = vadd.f32 0.0, %v9466
      %9468 = vmatmul.bf16.gmra.mxu0 %v9390
      %v9469 = vpop.f32.mrf.mxu0
      %v9470 = vadd.f32 0.0, %v9469
      %v9471 = vpop.f32.mrf.mxu0
      %v9472 = vadd.f32 0.0, %v9471
      %9473 = vmatmul.bf16.gmra.mxu0 %v9393
      %v9474 = vpop.f32.mrf.mxu0
      %v9475 = vadd.f32 0.0, %v9474
      %v9476 = vpop.f32.mrf.mxu0
      %v9477 = vadd.f32 0.0, %v9476
      %9478 = vmatmul.bf16.gmra.mxu0 %v9396
      %v9479 = vpop.f32.mrf.mxu0
      %v9480 = vadd.f32 0.0, %v9479
      %v9481 = vpop.f32.mrf.mxu0
      %v9482 = vadd.f32 0.0, %v9481
      %9483 = vmatmul.bf16.gmra.mxu0 %v9399
      %v9484 = vpop.f32.mrf.mxu0
      %v9485 = vadd.f32 0.0, %v9484
      %v9486 = vpop.f32.mrf.mxu0
      %v9487 = vadd.f32 0.0, %v9486
      %9488 = vmatmul.bf16.gmra.mxu0 %v9402
      %v9489 = vpop.f32.mrf.mxu0
      %v9490 = vadd.f32 0.0, %v9489
      %v9491 = vpop.f32.mrf.mxu0
      %v9492 = vadd.f32 0.0, %v9491
      %9493 = vmatmul.bf16.gmra.mxu0 %v9405
      %v9494 = vpop.f32.mrf.mxu0
      %v9495 = vadd.f32 0.0, %v9494
      %v9496 = vpop.f32.mrf.mxu0
      %v9497 = vadd.f32 0.0, %v9496
      %9498 = vmatmul.bf16.gmra.mxu0 %v9408
      %v9499 = vpop.f32.mrf.mxu0
      %v9500 = vadd.f32 0.0, %v9499
      %v9501 = vpop.f32.mrf.mxu0
      %v9502 = vadd.f32 0.0, %v9501
      %9503 = vmatmul.bf16.gmra.mxu0 %v9411
      %v9504 = vpop.f32.mrf.mxu0
      %v9505 = vadd.f32 0.0, %v9504
      %v9506 = vpop.f32.mrf.mxu0
      %v9507 = vadd.f32 0.0, %v9506
      %9508 = vmatmul.bf16.gmra.mxu0 %v9414
      %v9509 = vpop.f32.mrf.mxu0
      %v9510 = vadd.f32 0.0, %v9509
      %v9511 = vpop.f32.mrf.mxu0
      %v9512 = vadd.f32 0.0, %v9511
      %9513 = vmatmul.bf16.gmra.mxu0 %v9417
      %v9514 = vpop.f32.mrf.mxu0
      %v9515 = vadd.f32 0.0, %v9514
      %v9516 = vpop.f32.mrf.mxu0
      %v9517 = vadd.f32 0.0, %v9516
      %9518 = vmatmul.bf16.gmra.mxu0 %v9420
      %v9519 = vpop.f32.mrf.mxu0
      %v9520 = vadd.f32 0.0, %v9519
      %v9521 = vpop.f32.mrf.mxu0
      %v9522 = vadd.f32 0.0, %v9521
      %9523 = vdwg.mxu0
      %v9524 = vadd.f32 %v9030, %v9435
      %v9525 = vadd.f32 %v9031, %v9437
      %v9526 = vadd.f32 %v9032, %v9440
      %v9527 = vadd.f32 %v9033, %v9442
      %v9528 = vadd.f32 %v9034, %v9445
      %v9529 = vadd.f32 %v9035, %v9447
      %v9530 = vadd.f32 %v9036, %v9450
      %v9531 = vadd.f32 %v9037, %v9452
      %v9532 = vadd.f32 %v9038, %v9455
      %v9533 = vadd.f32 %v9039, %v9457
      %v9534 = vadd.f32 %v9040, %v9460
      %v9535 = vadd.f32 %v9041, %v9462
      %v9536 = vadd.f32 %v9042, %v9465
      %v9537 = vadd.f32 %v9043, %v9467
      %v9538 = vadd.f32 %v9044, %v9470
      %v9539 = vadd.f32 %v9045, %v9472
      %v9540 = vadd.f32 %v9046, %v9475
      %v9541 = vadd.f32 %v9047, %v9477
      %v9542 = vadd.f32 %v9048, %v9480
      %v9543 = vadd.f32 %v9049, %v9482
      %v9544 = vadd.f32 %v9050, %v9485
      %v9545 = vadd.f32 %v9051, %v9487
      %v9546 = vadd.f32 %v9052, %v9490
      %v9547 = vadd.f32 %v9053, %v9492
      %v9548 = vadd.f32 %v9054, %v9495
      %v9549 = vadd.f32 %v9055, %v9497
      %v9550 = vadd.f32 %v9056, %v9500
      %v9551 = vadd.f32 %v9057, %v9502
      %v9552 = vadd.f32 %v9058, %v9505
      %v9553 = vadd.f32 %v9059, %v9507
      %v9554 = vadd.f32 %v9060, %v9510
      %v9555 = vadd.f32 %v9061, %v9512
      %v9556 = vadd.f32 %v9062, %v9515
      %v9557 = vadd.f32 %v9063, %v9517
      %v9558 = vadd.f32 %v9064, %v9520
      %v9559 = vadd.f32 %v9065, %v9522
      %9560 = vst.msk [vmem:[#allocation4] sm:$0xff] %vm692, %v9524
      %9561 = vst.msk [vmem:[#allocation4 + $0x8] sm:$0xff] %vm692, %v9525
      %9562 = vst.msk [vmem:[#allocation4 + $0x10] sm:$0xff] %vm692, %v9526
      %9563 = vst.msk [vmem:[#allocation4 + $0x18] sm:$0xff] %vm692, %v9527
      %9564 = vst.msk [vmem:[#allocation4 + $0x20] sm:$0xff] %vm692, %v9528
      %9565 = vst.msk [vmem:[#allocation4 + $0x28] sm:$0xff] %vm692, %v9529
      %9566 = vst.msk [vmem:[#allocation4 + $0x30] sm:$0xff] %vm692, %v9530
      %9567 = vst.msk [vmem:[#allocation4 + $0x38] sm:$0xff] %vm692, %v9531
      %9568 = vst.msk [vmem:[#allocation4 + $0x40] sm:$0xff] %vm692, %v9532
      %9569 = vst.msk [vmem:[#allocation4 + $0x48] sm:$0xff] %vm692, %v9533
      %9570 = vst.msk [vmem:[#allocation4 + $0x50] sm:$0xff] %vm692, %v9534
      %9571 = vst.msk [vmem:[#allocation4 + $0x58] sm:$0xff] %vm692, %v9535
      %9572 = vst.msk [vmem:[#allocation4 + $0x60] sm:$0xff] %vm692, %v9536
      %9573 = vst.msk [vmem:[#allocation4 + $0x68] sm:$0xff] %vm692, %v9537
      %9574 = vst.msk [vmem:[#allocation4 + $0x70] sm:$0xff] %vm692, %v9538
      %9575 = vst.msk [vmem:[#allocation4 + $0x78] sm:$0xff] %vm692, %v9539
      %9576 = vst.msk [vmem:[#allocation4 + $0x80] sm:$0xff] %vm692, %v9540
      %9577 = vst.msk [vmem:[#allocation4 + $0x88] sm:$0xff] %vm692, %v9541
      %9578 = vst.msk [vmem:[#allocation4 + $0x90] sm:$0xff] %vm692, %v9542
      %9579 = vst.msk [vmem:[#allocation4 + $0x98] sm:$0xff] %vm692, %v9543
      %9580 = vst.msk [vmem:[#allocation4 + $0xa0] sm:$0xff] %vm692, %v9544
      %9581 = vst.msk [vmem:[#allocation4 + $0xa8] sm:$0xff] %vm692, %v9545
      %9582 = vst.msk [vmem:[#allocation4 + $0xb0] sm:$0xff] %vm692, %v9546
      %9583 = vst.msk [vmem:[#allocation4 + $0xb8] sm:$0xff] %vm692, %v9547
      %9584 = vst.msk [vmem:[#allocation4 + $0xc0] sm:$0xff] %vm692, %v9548
      %9585 = vst.msk [vmem:[#allocation4 + $0xc8] sm:$0xff] %vm692, %v9549
      %9586 = vst.msk [vmem:[#allocation4 + $0xd0] sm:$0xff] %vm692, %v9550
      %9587 = vst.msk [vmem:[#allocation4 + $0xd8] sm:$0xff] %vm692, %v9551
      %9588 = vst.msk [vmem:[#allocation4 + $0xe0] sm:$0xff] %vm692, %v9552
      %9589 = vst.msk [vmem:[#allocation4 + $0xe8] sm:$0xff] %vm692, %v9553
      %9590 = vst.msk [vmem:[#allocation4 + $0xf0] sm:$0xff] %vm692, %v9554
      %9591 = vst.msk [vmem:[#allocation4 + $0xf8] sm:$0xff] %vm692, %v9555
      %9592 = vst.msk [vmem:[#allocation4 + $0x100] sm:$0xff] %vm692, %v9556
      %9593 = vst.msk [vmem:[#allocation4 + $0x108] sm:$0xff] %vm692, %v9557
      %9594 = vst.msk [vmem:[#allocation4 + $0x110] sm:$0xff] %vm692, %v9558
      %9595 = vst.msk [vmem:[#allocation4 + $0x118] sm:$0xff] %vm692, %v9559
      %v9596 = vld [vmem:[#allocation4] sm:$0xff]
      %v9597 = vld [vmem:[#allocation4 + $0x8] sm:$0xff]
      %v9598 = vld [vmem:[#allocation4 + $0x10] sm:$0xff]
      %v9599 = vld [vmem:[#allocation4 + $0x18] sm:$0xff]
      %v9600 = vld [vmem:[#allocation4 + $0x20] sm:$0xff]
      %v9601 = vld [vmem:[#allocation4 + $0x28] sm:$0xff]
      %v9602 = vld [vmem:[#allocation4 + $0x30] sm:$0xff]
      %v9603 = vld [vmem:[#allocation4 + $0x38] sm:$0xff]
      %v9604 = vld [vmem:[#allocation4 + $0x40] sm:$0xff]
      %v9605 = vld [vmem:[#allocation4 + $0x48] sm:$0xff]
      %v9606 = vld [vmem:[#allocation4 + $0x50] sm:$0xff]
      %v9607 = vld [vmem:[#allocation4 + $0x58] sm:$0xff]
      %v9608 = vld [vmem:[#allocation4 + $0x60] sm:$0xff]
      %v9609 = vld [vmem:[#allocation4 + $0x68] sm:$0xff]
      %v9610 = vld [vmem:[#allocation4 + $0x70] sm:$0xff]
      %v9611 = vld [vmem:[#allocation4 + $0x78] sm:$0xff]
      %v9612 = vld [vmem:[#allocation4 + $0x80] sm:$0xff]
      %v9613 = vld [vmem:[#allocation4 + $0x88] sm:$0xff]
      %v9614 = vld [vmem:[#allocation4 + $0x90] sm:$0xff]
      %v9615 = vld [vmem:[#allocation4 + $0x98] sm:$0xff]
      %v9616 = vld [vmem:[#allocation4 + $0xa0] sm:$0xff]
      %v9617 = vld [vmem:[#allocation4 + $0xa8] sm:$0xff]
      %v9618 = vld [vmem:[#allocation4 + $0xb0] sm:$0xff]
      %v9619 = vld [vmem:[#allocation4 + $0xb8] sm:$0xff]
      %v9620 = vld [vmem:[#allocation4 + $0xc0] sm:$0xff]
      %v9621 = vld [vmem:[#allocation4 + $0xc8] sm:$0xff]
      %v9622 = vld [vmem:[#allocation4 + $0xd0] sm:$0xff]
      %v9623 = vld [vmem:[#allocation4 + $0xd8] sm:$0xff]
      %v9624 = vld [vmem:[#allocation4 + $0xe0] sm:$0xff]
      %v9625 = vld [vmem:[#allocation4 + $0xe8] sm:$0xff]
      %v9626 = vld [vmem:[#allocation4 + $0xf0] sm:$0xff]
      %v9627 = vld [vmem:[#allocation4 + $0xf8] sm:$0xff]
      %v9628 = vld [vmem:[#allocation4 + $0x100] sm:$0xff]
      %v9629 = vld [vmem:[#allocation4 + $0x108] sm:$0xff]
      %v9630 = vld [vmem:[#allocation4 + $0x110] sm:$0xff]
      %v9631 = vld [vmem:[#allocation4 + $0x118] sm:$0xff]
      %v9632 = vld [vmem:[%s6] sm:$0x1]
      %v9634 = vperm.slane %v9632, 0
      %v9636 = vadd.f32 %v9596, %v9634
      %v9637 = vadd.f32 %v9597, %v9634
      %v9638 = vadd.f32 %v9598, %v9634
      %v9639 = vadd.f32 %v9599, %v9634
      %v9640 = vadd.f32 %v9600, %v9634
      %v9641 = vadd.f32 %v9601, %v9634
      %v9642 = vadd.f32 %v9602, %v9634
      %v9643 = vadd.f32 %v9603, %v9634
      %v9644 = vadd.f32 %v9604, %v9634
      %v9645 = vadd.f32 %v9605, %v9634
      %v9646 = vadd.f32 %v9606, %v9634
      %v9647 = vadd.f32 %v9607, %v9634
      %v9648 = vadd.f32 %v9608, %v9634
      %v9649 = vadd.f32 %v9609, %v9634
      %v9650 = vadd.f32 %v9610, %v9634
      %v9651 = vadd.f32 %v9611, %v9634
      %v9652 = vadd.f32 %v9612, %v9634
      %v9653 = vadd.f32 %v9613, %v9634
      %v9654 = vadd.f32 %v9614, %v9634
      %v9655 = vadd.f32 %v9615, %v9634
      %v9656 = vadd.f32 %v9616, %v9634
      %v9657 = vadd.f32 %v9617, %v9634
      %v9658 = vadd.f32 %v9618, %v9634
      %v9659 = vadd.f32 %v9619, %v9634
      %v9660 = vadd.f32 %v9620, %v9634
      %v9661 = vadd.f32 %v9621, %v9634
      %v9662 = vadd.f32 %v9622, %v9634
      %v9663 = vadd.f32 %v9623, %v9634
      %v9664 = vadd.f32 %v9624, %v9634
      %v9665 = vadd.f32 %v9625, %v9634
      %v9666 = vadd.f32 %v9626, %v9634
      %v9667 = vadd.f32 %v9627, %v9634
      %v9668 = vadd.f32 %v9628, %v9634
      %v9669 = vadd.f32 %v9629, %v9634
      %v9670 = vadd.f32 %v9630, %v9634
      %v9671 = vadd.f32 %v9631, %v9634
      %v9672 = vld [vmem:[#allocation2 + $0x8] sm:$0xe]
      %v9673 = vld [vmem:[#allocation2 + $0xc] sm:$0xf]
      %v9674 = vld [vmem:[#allocation2 + $0x10] sm:$0xf]
      %v9675 = vld [vmem:[#allocation2 + $0x14] sm:$0xf]
      %v9676 = vld [vmem:[#allocation2 + $0x18] sm:$0xf]
      %v9677 = vld [vmem:[#allocation2 + $0x1c] sm:$0xf]
      %v9678 = vld [vmem:[#allocation2 + $0x20] sm:$0xf]
      %v9679 = vld [vmem:[#allocation2 + $0x24] sm:$0xf]
      %v9680 = vld [vmem:[#allocation2 + $0x28] sm:$0xf]
      %v9681 = vld [vmem:[#allocation2 + $0x2c] sm:$0xf]
      %v9682 = vld [vmem:[#allocation2 + $0x30] sm:$0xf]
      %v9683 = vld [vmem:[#allocation2 + $0x34] sm:$0xf]
      %v9684 = vld [vmem:[#allocation2 + $0x38] sm:$0xf]
      %v9685 = vld [vmem:[#allocation2 + $0x3c] sm:$0xf]
      %v9686 = vld [vmem:[#allocation2 + $0x40] sm:$0xf]
      %v9687 = vld [vmem:[#allocation2 + $0x44] sm:$0xf]
      %v9688 = vld [vmem:[#allocation2 + $0x48] sm:$0xf]
      %v9689 = vld [vmem:[#allocation2 + $0x4c] sm:$0xf]
      %v9690 = vld [vmem:[#allocation2 + $0x50] sm:$0xf]
      %v9691 = vld [vmem:[#allocation2 + $0x54] sm:$0xf]
      %v9692 = vld [vmem:[#allocation2 + $0x58] sm:$0xf]
      %v9693 = vld [vmem:[#allocation2 + $0x5c] sm:$0xf]
      %v9694 = vld [vmem:[#allocation2 + $0x60] sm:$0xf]
      %v9695 = vld [vmem:[#allocation2 + $0x64] sm:$0xf]
      %v9696 = vld [vmem:[#allocation2 + $0x68] sm:$0xf]
      %v9697 = vld [vmem:[#allocation2 + $0x6c] sm:$0xf]
      %v9698 = vld [vmem:[#allocation2 + $0x70] sm:$0xf]
      %v9699 = vld [vmem:[#allocation2 + $0x74] sm:$0xf]
      %v9700 = vld [vmem:[#allocation2 + $0x78] sm:$0xf]
      %v9701 = vld [vmem:[#allocation2 + $0x7c] sm:$0xf]
      %v9702 = vld [vmem:[#allocation2 + $0x80] sm:$0xf]
      %v9703 = vld [vmem:[#allocation2 + $0x84] sm:$0xf]
      %v9704 = vld [vmem:[#allocation2 + $0x88] sm:$0xf]
      %v9705 = vld [vmem:[#allocation2 + $0x8c] sm:$0xf]
      %v9706 = vld [vmem:[#allocation2 + $0x90] sm:$0xf]
      %v9707 = vld [vmem:[#allocation2 + $0x94] sm:$0xf]
      %v9708 = vld [vmem:[#allocation2 + $0x98] sm:$0x3]
      %v9709 = vld [vmem:[%s5] sm:$0x3]
      %v9747 = vunpack.c.l.b16 %v9672
      %v9748 = vunpack.c.l.b16 %v9673
      %v9749 = vunpack.c.l.b16 %v9674
      %v9750 = vunpack.c.l.b16 %v9675
      %v9751 = vunpack.c.l.b16 %v9676
      %v9752 = vunpack.c.l.b16 %v9677
      %v9753 = vunpack.c.l.b16 %v9678
      %v9754 = vunpack.c.l.b16 %v9679
      %v9755 = vunpack.c.l.b16 %v9680
      %v9756 = vunpack.c.l.b16 %v9681
      %v9757 = vunpack.c.l.b16 %v9682
      %v9758 = vunpack.c.l.b16 %v9683
      %v9759 = vunpack.c.l.b16 %v9684
      %v9760 = vunpack.c.l.b16 %v9685
      %v9761 = vunpack.c.l.b16 %v9686
      %v9762 = vunpack.c.l.b16 %v9687
      %v9763 = vunpack.c.l.b16 %v9688
      %v9764 = vunpack.c.l.b16 %v9689
      %v9765 = vunpack.c.l.b16 %v9690
      %v9766 = vunpack.c.l.b16 %v9691
      %v9767 = vunpack.c.l.b16 %v9692
      %v9768 = vunpack.c.l.b16 %v9693
      %v9769 = vunpack.c.l.b16 %v9694
      %v9770 = vunpack.c.l.b16 %v9695
      %v9771 = vunpack.c.l.b16 %v9696
      %v9772 = vunpack.c.l.b16 %v9697
      %v9773 = vunpack.c.l.b16 %v9698
      %v9774 = vunpack.c.l.b16 %v9699
      %v9775 = vunpack.c.l.b16 %v9700
      %v9776 = vunpack.c.l.b16 %v9701
      %v9777 = vunpack.c.l.b16 %v9702
      %v9778 = vunpack.c.l.b16 %v9703
      %v9779 = vunpack.c.l.b16 %v9704
      %v9780 = vunpack.c.l.b16 %v9705
      %v9781 = vunpack.c.l.b16 %v9706
      %v9782 = vunpack.c.l.b16 %v9707
      %v9783 = vunpack.c.l.b16 %v9708
      %v9784 = vpack.c.b16 %v9748, %v9747
      %v9785 = vpack.c.b16 %v9750, %v9749
      %v9786 = vpack.c.b16 %v9752, %v9751
      %v9787 = vpack.c.b16 %v9754, %v9753
      %v9788 = vpack.c.b16 %v9756, %v9755
      %v9789 = vpack.c.b16 %v9758, %v9757
      %v9790 = vpack.c.b16 %v9760, %v9759
      %v9791 = vpack.c.b16 %v9762, %v9761
      %v9792 = vpack.c.b16 %v9764, %v9763
      %v9793 = vpack.c.b16 %v9766, %v9765
      %v9794 = vpack.c.b16 %v9768, %v9767
      %v9795 = vpack.c.b16 %v9770, %v9769
      %v9796 = vpack.c.b16 %v9772, %v9771
      %v9797 = vpack.c.b16 %v9774, %v9773
      %v9798 = vpack.c.b16 %v9776, %v9775
      %v9799 = vpack.c.b16 %v9778, %v9777
      %v9800 = vpack.c.b16 %v9780, %v9779
      %v9801 = vpack.c.b16 %v9782, %v9781
      %v9802 = vpack.c.b16 %v9783, %v9783
      %v9804 = vshrl.u32 %v9784, 16
      %v9806 = vrot.slane %v9804, 1
      %v9807 = vshll.u32 %v9784, 16
      %v9809 = vrot.slane %v9807, 2
      %v9810 = vor.u32 %v9806, %v9809
      %v9812 = vshrl.u32 %v9785, 16
      %v9814 = vrot.slane %v9812, 1
      %v9815 = vshll.u32 %v9785, 16
      %v9817 = vrot.slane %v9815, 2
      %v9818 = vor.u32 %v9814, %v9817
      %v9819 = vsel %vm2309, %v9810, %v9818
      %v9821 = vshrl.u32 %v9786, 16
      %v9823 = vrot.slane %v9821, 1
      %v9824 = vshll.u32 %v9786, 16
      %v9826 = vrot.slane %v9824, 2
      %v9827 = vor.u32 %v9823, %v9826
      %v9828 = vsel %vm2309, %v9818, %v9827
      %v9830 = vshrl.u32 %v9787, 16
      %v9832 = vrot.slane %v9830, 1
      %v9833 = vshll.u32 %v9787, 16
      %v9835 = vrot.slane %v9833, 2
      %v9836 = vor.u32 %v9832, %v9835
      %v9837 = vsel %vm2309, %v9827, %v9836
      %v9839 = vshrl.u32 %v9788, 16
      %v9841 = vrot.slane %v9839, 1
      %v9842 = vshll.u32 %v9788, 16
      %v9844 = vrot.slane %v9842, 2
      %v9845 = vor.u32 %v9841, %v9844
      %v9846 = vsel %vm2309, %v9836, %v9845
      %v9848 = vshrl.u32 %v9789, 16
      %v9850 = vrot.slane %v9848, 1
      %v9851 = vshll.u32 %v9789, 16
      %v9853 = vrot.slane %v9851, 2
      %v9854 = vor.u32 %v9850, %v9853
      %v9855 = vsel %vm2309, %v9845, %v9854
      %v9857 = vshrl.u32 %v9790, 16
      %v9859 = vrot.slane %v9857, 1
      %v9860 = vshll.u32 %v9790, 16
      %v9862 = vrot.slane %v9860, 2
      %v9863 = vor.u32 %v9859, %v9862
      %v9864 = vsel %vm2309, %v9854, %v9863
      %v9866 = vshrl.u32 %v9791, 16
      %v9868 = vrot.slane %v9866, 1
      %v9869 = vshll.u32 %v9791, 16
      %v9871 = vrot.slane %v9869, 2
      %v9872 = vor.u32 %v9868, %v9871
      %v9873 = vsel %vm2309, %v9863, %v9872
      %v9875 = vshrl.u32 %v9792, 16
      %v9877 = vrot.slane %v9875, 1
      %v9878 = vshll.u32 %v9792, 16
      %v9880 = vrot.slane %v9878, 2
      %v9881 = vor.u32 %v9877, %v9880
      %v9882 = vsel %vm2309, %v9872, %v9881
      %v9884 = vshrl.u32 %v9793, 16
      %v9886 = vrot.slane %v9884, 1
      %v9887 = vshll.u32 %v9793, 16
      %v9889 = vrot.slane %v9887, 2
      %v9890 = vor.u32 %v9886, %v9889
      %v9891 = vsel %vm2309, %v9881, %v9890
      %v9893 = vshrl.u32 %v9794, 16
      %v9895 = vrot.slane %v9893, 1
      %v9896 = vshll.u32 %v9794, 16
      %v9898 = vrot.slane %v9896, 2
      %v9899 = vor.u32 %v9895, %v9898
      %v9900 = vsel %vm2309, %v9890, %v9899
      %v9902 = vshrl.u32 %v9795, 16
      %v9904 = vrot.slane %v9902, 1
      %v9905 = vshll.u32 %v9795, 16
      %v9907 = vrot.slane %v9905, 2
      %v9908 = vor.u32 %v9904, %v9907
      %v9909 = vsel %vm2309, %v9899, %v9908
      %v9911 = vshrl.u32 %v9796, 16
      %v9913 = vrot.slane %v9911, 1
      %v9914 = vshll.u32 %v9796, 16
      %v9916 = vrot.slane %v9914, 2
      %v9917 = vor.u32 %v9913, %v9916
      %v9918 = vsel %vm2309, %v9908, %v9917
      %v9920 = vshrl.u32 %v9797, 16
      %v9922 = vrot.slane %v9920, 1
      %v9923 = vshll.u32 %v9797, 16
      %v9925 = vrot.slane %v9923, 2
      %v9926 = vor.u32 %v9922, %v9925
      %v9927 = vsel %vm2309, %v9917, %v9926
      %v9929 = vshrl.u32 %v9798, 16
      %v9931 = vrot.slane %v9929, 1
      %v9932 = vshll.u32 %v9798, 16
      %v9934 = vrot.slane %v9932, 2
      %v9935 = vor.u32 %v9931, %v9934
      %v9936 = vsel %vm2309, %v9926, %v9935
      %v9938 = vshrl.u32 %v9799, 16
      %v9940 = vrot.slane %v9938, 1
      %v9941 = vshll.u32 %v9799, 16
      %v9943 = vrot.slane %v9941, 2
      %v9944 = vor.u32 %v9940, %v9943
      %v9945 = vsel %vm2309, %v9935, %v9944
      %v9947 = vshrl.u32 %v9800, 16
      %v9949 = vrot.slane %v9947, 1
      %v9950 = vshll.u32 %v9800, 16
      %v9952 = vrot.slane %v9950, 2
      %v9953 = vor.u32 %v9949, %v9952
      %v9954 = vsel %vm2309, %v9944, %v9953
      %v9956 = vshrl.u32 %v9801, 16
      %v9958 = vrot.slane %v9956, 1
      %v9959 = vshll.u32 %v9801, 16
      %v9961 = vrot.slane %v9959, 2
      %v9962 = vor.u32 %v9958, %v9961
      %v9963 = vsel %vm2309, %v9953, %v9962
      %v9965 = vshrl.u32 %v9802, 16
      %v9967 = vrot.slane %v9965, 1
      %v9968 = vshll.u32 %v9802, 16
      %v9970 = vrot.slane %v9968, 2
      %v9971 = vor.u32 %v9967, %v9970
      %v9972 = vsel %vm2309, %v9962, %v9971
      %v9974 = vsel %vm534, %v9819, 0
      %v9977 = vsel %vm534, %v9828, 0
      %v9980 = vsel %vm534, %v9837, 0
      %v9983 = vsel %vm534, %v9846, 0
      %v9986 = vsel %vm534, %v9855, 0
      %v9989 = vsel %vm534, %v9864, 0
      %v9992 = vsel %vm534, %v9873, 0
      %v9995 = vsel %vm534, %v9882, 0
      %v9998 = vsel %vm534, %v9891, 0
      %v10001 = vsel %vm534, %v9900, 0
      %v10004 = vsel %vm534, %v9909, 0
      %v10007 = vsel %vm534, %v9918, 0
      %v10010 = vsel %vm534, %v9927, 0
      %v10013 = vsel %vm534, %v9936, 0
      %v10016 = vsel %vm534, %v9945, 0
      %v10019 = vsel %vm534, %v9954, 0
      %v10022 = vsel %vm534, %v9963, 0
      %v10025 = vsel %vm534, %v9972, 0
      %v10028 = vsel %vm589, %v9709, 0
      %10030 = vmatpush.bf16.msra.mxu0 0
      %10031 = vmatpush.bf16.msra.mxu0 0
      %10032 = vmatpush.bf16.msra.mxu0 0
      %10033 = vmatpush.bf16.msra.mxu0 0
      %10034 = vmatpush.bf16.msra.mxu0 0
      %10035 = vmatpush.bf16.msra.mxu0 0
      %10036 = vmatpush.bf16.msra.mxu0 0
      %10037 = vmatpush.bf16.msra.mxu0 %v10028
      %10038 = vmatmul.bf16.gmra.mxu0 %v9974
      %v10039 = vpop.f32.mrf.mxu0
      %v10040 = vadd.f32 0.0, %v10039
      %v10041 = vpop.f32.mrf.mxu0
      %v10042 = vadd.f32 0.0, %v10041
      %10043 = vmatmul.bf16.gmra.mxu0 %v9977
      %v10044 = vpop.f32.mrf.mxu0
      %v10045 = vadd.f32 0.0, %v10044
      %v10046 = vpop.f32.mrf.mxu0
      %v10047 = vadd.f32 0.0, %v10046
      %10048 = vmatmul.bf16.gmra.mxu0 %v9980
      %v10049 = vpop.f32.mrf.mxu0
      %v10050 = vadd.f32 0.0, %v10049
      %v10051 = vpop.f32.mrf.mxu0
      %v10052 = vadd.f32 0.0, %v10051
      %10053 = vmatmul.bf16.gmra.mxu0 %v9983
      %v10054 = vpop.f32.mrf.mxu0
      %v10055 = vadd.f32 0.0, %v10054
      %v10056 = vpop.f32.mrf.mxu0
      %v10057 = vadd.f32 0.0, %v10056
      %10058 = vmatmul.bf16.gmra.mxu0 %v9986
      %v10059 = vpop.f32.mrf.mxu0
      %v10060 = vadd.f32 0.0, %v10059
      %v10061 = vpop.f32.mrf.mxu0
      %v10062 = vadd.f32 0.0, %v10061
      %10063 = vmatmul.bf16.gmra.mxu0 %v9989
      %v10064 = vpop.f32.mrf.mxu0
      %v10065 = vadd.f32 0.0, %v10064
      %v10066 = vpop.f32.mrf.mxu0
      %v10067 = vadd.f32 0.0, %v10066
      %10068 = vmatmul.bf16.gmra.mxu0 %v9992
      %v10069 = vpop.f32.mrf.mxu0
      %v10070 = vadd.f32 0.0, %v10069
      %v10071 = vpop.f32.mrf.mxu0
      %v10072 = vadd.f32 0.0, %v10071
      %10073 = vmatmul.bf16.gmra.mxu0 %v9995
      %v10074 = vpop.f32.mrf.mxu0
      %v10075 = vadd.f32 0.0, %v10074
      %v10076 = vpop.f32.mrf.mxu0
      %v10077 = vadd.f32 0.0, %v10076
      %10078 = vmatmul.bf16.gmra.mxu0 %v9998
      %v10079 = vpop.f32.mrf.mxu0
      %v10080 = vadd.f32 0.0, %v10079
      %v10081 = vpop.f32.mrf.mxu0
      %v10082 = vadd.f32 0.0, %v10081
      %10083 = vmatmul.bf16.gmra.mxu0 %v10001
      %v10084 = vpop.f32.mrf.mxu0
      %v10085 = vadd.f32 0.0, %v10084
      %v10086 = vpop.f32.mrf.mxu0
      %v10087 = vadd.f32 0.0, %v10086
      %10088 = vmatmul.bf16.gmra.mxu0 %v10004
      %v10089 = vpop.f32.mrf.mxu0
      %v10090 = vadd.f32 0.0, %v10089
      %v10091 = vpop.f32.mrf.mxu0
      %v10092 = vadd.f32 0.0, %v10091
      %10093 = vmatmul.bf16.gmra.mxu0 %v10007
      %v10094 = vpop.f32.mrf.mxu0
      %v10095 = vadd.f32 0.0, %v10094
      %v10096 = vpop.f32.mrf.mxu0
      %v10097 = vadd.f32 0.0, %v10096
      %10098 = vmatmul.bf16.gmra.mxu0 %v10010
      %v10099 = vpop.f32.mrf.mxu0
      %v10100 = vadd.f32 0.0, %v10099
      %v10101 = vpop.f32.mrf.mxu0
      %v10102 = vadd.f32 0.0, %v10101
      %10103 = vmatmul.bf16.gmra.mxu0 %v10013
      %v10104 = vpop.f32.mrf.mxu0
      %v10105 = vadd.f32 0.0, %v10104
      %v10106 = vpop.f32.mrf.mxu0
      %v10107 = vadd.f32 0.0, %v10106
      %10108 = vmatmul.bf16.gmra.mxu0 %v10016
      %v10109 = vpop.f32.mrf.mxu0
      %v10110 = vadd.f32 0.0, %v10109
      %v10111 = vpop.f32.mrf.mxu0
      %v10112 = vadd.f32 0.0, %v10111
      %10113 = vmatmul.bf16.gmra.mxu0 %v10019
      %v10114 = vpop.f32.mrf.mxu0
      %v10115 = vadd.f32 0.0, %v10114
      %v10116 = vpop.f32.mrf.mxu0
      %v10117 = vadd.f32 0.0, %v10116
      %10118 = vmatmul.bf16.gmra.mxu0 %v10022
      %v10119 = vpop.f32.mrf.mxu0
      %v10120 = vadd.f32 0.0, %v10119
      %v10121 = vpop.f32.mrf.mxu0
      %v10122 = vadd.f32 0.0, %v10121
      %10123 = vmatmul.bf16.gmra.mxu0 %v10025
      %v10124 = vpop.f32.mrf.mxu0
      %v10125 = vadd.f32 0.0, %v10124
      %v10126 = vpop.f32.mrf.mxu0
      %v10127 = vadd.f32 0.0, %v10126
      %10128 = vdwg.mxu0
      %v10129 = vadd.f32 %v9636, %v10040
      %v10130 = vadd.f32 %v9637, %v10042
      %v10131 = vadd.f32 %v9638, %v10045
      %v10132 = vadd.f32 %v9639, %v10047
      %v10133 = vadd.f32 %v9640, %v10050
      %v10134 = vadd.f32 %v9641, %v10052
      %v10135 = vadd.f32 %v9642, %v10055
      %v10136 = vadd.f32 %v9643, %v10057
      %v10137 = vadd.f32 %v9644, %v10060
      %v10138 = vadd.f32 %v9645, %v10062
      %v10139 = vadd.f32 %v9646, %v10065
      %v10140 = vadd.f32 %v9647, %v10067
      %v10141 = vadd.f32 %v9648, %v10070
      %v10142 = vadd.f32 %v9649, %v10072
      %v10143 = vadd.f32 %v9650, %v10075
      %v10144 = vadd.f32 %v9651, %v10077
      %v10145 = vadd.f32 %v9652, %v10080
      %v10146 = vadd.f32 %v9653, %v10082
      %v10147 = vadd.f32 %v9654, %v10085
      %v10148 = vadd.f32 %v9655, %v10087
      %v10149 = vadd.f32 %v9656, %v10090
      %v10150 = vadd.f32 %v9657, %v10092
      %v10151 = vadd.f32 %v9658, %v10095
      %v10152 = vadd.f32 %v9659, %v10097
      %v10153 = vadd.f32 %v9660, %v10100
      %v10154 = vadd.f32 %v9661, %v10102
      %v10155 = vadd.f32 %v9662, %v10105
      %v10156 = vadd.f32 %v9663, %v10107
      %v10157 = vadd.f32 %v9664, %v10110
      %v10158 = vadd.f32 %v9665, %v10112
      %v10159 = vadd.f32 %v9666, %v10115
      %v10160 = vadd.f32 %v9667, %v10117
      %v10161 = vadd.f32 %v9668, %v10120
      %v10162 = vadd.f32 %v9669, %v10122
      %v10163 = vadd.f32 %v9670, %v10125
      %v10164 = vadd.f32 %v9671, %v10127
      %v10165 = vmax.f32 %v10129, 0.0
      %v10166 = vmax.f32 %v10130, 0.0
      %v10167 = vmax.f32 %v10131, 0.0
      %v10168 = vmax.f32 %v10132, 0.0
      %v10169 = vmax.f32 %v10133, 0.0
      %v10170 = vmax.f32 %v10134, 0.0
      %v10171 = vmax.f32 %v10135, 0.0
      %v10172 = vmax.f32 %v10136, 0.0
      %v10173 = vmax.f32 %v10137, 0.0
      %v10174 = vmax.f32 %v10138, 0.0
      %v10175 = vmax.f32 %v10139, 0.0
      %v10176 = vmax.f32 %v10140, 0.0
      %v10177 = vmax.f32 %v10141, 0.0
      %v10178 = vmax.f32 %v10142, 0.0
      %v10179 = vmax.f32 %v10143, 0.0
      %v10180 = vmax.f32 %v10144, 0.0
      %v10181 = vmax.f32 %v10145, 0.0
      %v10182 = vmax.f32 %v10146, 0.0
      %v10183 = vmax.f32 %v10147, 0.0
      %v10184 = vmax.f32 %v10148, 0.0
      %v10185 = vmax.f32 %v10149, 0.0
      %v10186 = vmax.f32 %v10150, 0.0
      %v10187 = vmax.f32 %v10151, 0.0
      %v10188 = vmax.f32 %v10152, 0.0
      %v10189 = vmax.f32 %v10153, 0.0
      %v10190 = vmax.f32 %v10154, 0.0
      %v10191 = vmax.f32 %v10155, 0.0
      %v10192 = vmax.f32 %v10156, 0.0
      %v10193 = vmax.f32 %v10157, 0.0
      %v10194 = vmax.f32 %v10158, 0.0
      %v10195 = vmax.f32 %v10159, 0.0
      %v10196 = vmax.f32 %v10160, 0.0
      %v10197 = vmax.f32 %v10161, 0.0
      %v10198 = vmax.f32 %v10162, 0.0
      %v10199 = vmax.f32 %v10163, 0.0
      %v10200 = vmax.f32 %v10164, 0.0
      %10201 = vst.msk [vmem:[%s278] sm:$0xff] %vm692, %v10165
      %10202 = vst.msk [vmem:[%s278 + $0x8] sm:$0xff] %vm692, %v10166
      %10203 = vst.msk [vmem:[%s278 + $0x10] sm:$0xff] %vm692, %v10167
      %10204 = vst.msk [vmem:[%s278 + $0x18] sm:$0xff] %vm692, %v10168
      %10205 = vst.msk [vmem:[%s278 + $0x20] sm:$0xff] %vm692, %v10169
      %10206 = vst.msk [vmem:[%s278 + $0x28] sm:$0xff] %vm692, %v10170
      %10207 = vst.msk [vmem:[%s278 + $0x30] sm:$0xff] %vm692, %v10171
      %10208 = vst.msk [vmem:[%s278 + $0x38] sm:$0xff] %vm692, %v10172
      %10209 = vst.msk [vmem:[%s278 + $0x40] sm:$0xff] %vm692, %v10173
      %10210 = vst.msk [vmem:[%s278 + $0x48] sm:$0xff] %vm692, %v10174
      %10211 = vst.msk [vmem:[%s278 + $0x50] sm:$0xff] %vm692, %v10175
      %10212 = vst.msk [vmem:[%s278 + $0x58] sm:$0xff] %vm692, %v10176
      %10213 = vst.msk [vmem:[%s278 + $0x60] sm:$0xff] %vm692, %v10177
      %10214 = vst.msk [vmem:[%s278 + $0x68] sm:$0xff] %vm692, %v10178
      %10215 = vst.msk [vmem:[%s278 + $0x70] sm:$0xff] %vm692, %v10179
      %10216 = vst.msk [vmem:[%s278 + $0x78] sm:$0xff] %vm692, %v10180
      %10217 = vst.msk [vmem:[%s278 + $0x80] sm:$0xff] %vm692, %v10181
      %10218 = vst.msk [vmem:[%s278 + $0x88] sm:$0xff] %vm692, %v10182
      %10219 = vst.msk [vmem:[%s278 + $0x90] sm:$0xff] %vm692, %v10183
      %10220 = vst.msk [vmem:[%s278 + $0x98] sm:$0xff] %vm692, %v10184
      %10221 = vst.msk [vmem:[%s278 + $0xa0] sm:$0xff] %vm692, %v10185
      %10222 = vst.msk [vmem:[%s278 + $0xa8] sm:$0xff] %vm692, %v10186
      %10223 = vst.msk [vmem:[%s278 + $0xb0] sm:$0xff] %vm692, %v10187
      %10224 = vst.msk [vmem:[%s278 + $0xb8] sm:$0xff] %vm692, %v10188
      %10225 = vst.msk [vmem:[%s278 + $0xc0] sm:$0xff] %vm692, %v10189
      %10226 = vst.msk [vmem:[%s278 + $0xc8] sm:$0xff] %vm692, %v10190
      %10227 = vst.msk [vmem:[%s278 + $0xd0] sm:$0xff] %vm692, %v10191
      %10228 = vst.msk [vmem:[%s278 + $0xd8] sm:$0xff] %vm692, %v10192
      %10229 = vst.msk [vmem:[%s278 + $0xe0] sm:$0xff] %vm692, %v10193
      %10230 = vst.msk [vmem:[%s278 + $0xe8] sm:$0xff] %vm692, %v10194
      %10231 = vst.msk [vmem:[%s278 + $0xf0] sm:$0xff] %vm692, %v10195
      %10232 = vst.msk [vmem:[%s278 + $0xf8] sm:$0xff] %vm692, %v10196
      %10233 = vst.msk [vmem:[%s278 + $0x100] sm:$0xff] %vm692, %v10197
      %10234 = vst.msk [vmem:[%s278 + $0x108] sm:$0xff] %vm692, %v10198
      %10235 = vst.msk [vmem:[%s278 + $0x110] sm:$0xff] %vm692, %v10199
      %10236 = vst.msk [vmem:[%s278 + $0x118] sm:$0xff] %vm692, %v10200
      %p10237 = scmp.lt.s32.totalorder %s18, 1
      %s10238 = scalar_select %p10237, %s18, 1
      %s10239 = smul.addr %s10238, 36
      %s10240 = smul.addr %s10239, 8
      %s10241 = scalar_lea.vmem %s7, %s10240
      // Predicated region
      $region49: #{tpu_custom_call.1} parent=47 // pred_check
        %p10242 = pneg %p188
      $region50: #{tpu_custom_call.1} parent=47 // pred_check_branch
        %10244 = sbr.rel (%p10242) target = $region52
      $region51: #{tpu_custom_call.1} parent=47 // pred_region
        _
      $region52: #{tpu_custom_call.1} parent=47 // pred_fallthru
        _
    $region48: #{tpu_custom_call.1} parent=5 // pred_fallthru
      _
    %p10245 = scmp.le.s32.totalorder 2, %s13
    // Predicated region
    $region53: #{tpu_custom_call.1} parent=5 // pred_check
      %p10246 = pneg %p10245
    $region54: #{tpu_custom_call.1} parent=5 // pred_check_branch
      %10248 = sbr.rel (%p10246) target = $region56
    $region55: #{tpu_custom_call.1} parent=5 // pred_region
      %s10249 = ssub.s32 %s13, 2
      // Predicated region
      $region57: #{tpu_custom_call.1} parent=55 // pred_check
        %p10250 = pneg %p194
      $region58: #{tpu_custom_call.1} parent=55 // pred_check_branch
        %10252 = sbr.rel (%p10250) target = $region60
      $region59: #{tpu_custom_call.1} parent=55 // pred_region
        %p10253 = scmp.lt.s32.totalorder %s19, 1
        %s10254 = scalar_select %p10253, %s19, 1
        %s10255 = smul.addr %s10254, 36
        %s10256 = smul.addr %s10255, 8
        %s10257 = scalar_lea.vmem %s7, %s10256
      $region60: #{tpu_custom_call.1} parent=55 // pred_fallthru
        _
    $region56: #{tpu_custom_call.1} parent=5 // pred_fallthru
      _
  $region6: #{tpu_custom_call.1} parent=0 // loop_footer
    %s17 = sadd.s32 1, %s13
  $region7: #{tpu_custom_call.1} parent=0 // loop_footer_branch
    %12 = sbr.rel target = $region3
  $region8: #{tpu_custom_call.1} parent=0 // loop_exit
    _

</llo_original>
